<compile_context>
chip_gen: v7x
topology: tpu7x:2x2x1
jax: 0.10.0
libtpu: 0.0.40
codegen_flags: <defaults>
</compile_context>

<pallas_src>
import functools
import math

import jax
import jax.numpy as jnp
from jax.experimental import pallas as pl
from jax.experimental.pallas import tpu as pltpu


# ----------------------------- Fused Pallas kernel -----------------------------

def _ui_birnn_attn_kernel(x_ref, mtb_ref, layer_ref,
                          wih_ref, whh_ref, bg_ref,
                          wlin_ref, blin_ref, wq_ref, bq_ref,
                          summed_ref, res_ref, atts_ref, q_ref,
                          gx_scr, gmix_scr, m_scr, enc_scr, *, T, H):
    f32 = jnp.float32
    N = 2 * H          # natt == bidirectional hidden width
    G = 8 * H          # 4 gates x 2 directions (interleaved)
    B = x_ref.shape[1]

    # ---- fused ui2query: q = tanh(layer @ Wq^T + (bq + param)) ----
    q = jnp.tanh(jnp.dot(layer_ref[...], wq_ref[...],
                         preferred_element_type=f32) + bq_ref[...])        # [B, N]
    q_ref[...] = q

    # lane-constant selectors for the interleaved fwd/bwd gate layout
    lane_g = jax.lax.broadcasted_iota(jnp.int32, (1, G), 1)
    fwd_g = (lane_g % (2 * H)) < H                   # forward half of each gate
    lane_n = jax.lax.broadcasted_iota(jnp.int32, (1, N), 1)
    fwd_n = lane_n < H

    # ---- phase 1 (off the recurrent chain): input projection for ALL timesteps,
    #      fwd/bwd gate-input mixing, and per-step output/state masks ----
    wih = wih_ref[...]                               # [D, 8H]
    bg = bg_ref[...]                                 # [1, 8H]
    for t in range(T):                               # static unroll
        gx_scr[t] = jnp.dot(x_ref[t], wih, preferred_element_type=f32) + bg
    for s in range(T):
        srev = T - 1 - s
        gmix_scr[s] = jnp.where(fwd_g, gx_scr[s], gx_scr[srev])   # fwd @ s, bwd @ srev
        m_scr[s] = jnp.where(fwd_n, mtb_ref[s], mtb_ref[srev])    # [B, 2H] validity

    whh = whh_ref[...]                               # [2H, 8H], block-diag per direction
    h = jnp.zeros((B, N), f32)                       # [h_fwd | h_bwd]
    c = jnp.zeros((B, N), f32)

    # ---- phase 2: fused bidirectional recurrence (fully unrolled, T static/small) ----
    for s in range(T):
        srev = T - 1 - s
        gates = gmix_scr[s] + jnp.dot(h, whh, preferred_element_type=f32)   # [B, 8H]
        i_g = jax.nn.sigmoid(gates[:, 0 * N:1 * N])
        f_g = jax.nn.sigmoid(gates[:, 1 * N:2 * N])
        g_g = jnp.tanh(gates[:, 2 * N:3 * N])
        o_g = jax.nn.sigmoid(gates[:, 3 * N:4 * N])
        c_new = f_g * c + i_g * g_g
        h_new = o_g * jnp.tanh(c_new)
        m = m_scr[s]
        h_out = m * h_new                      # padded step -> 0 output (pad_packed_sequence)
        c = m * c_new + (1.0 - m) * c          # padded step -> carry state unchanged
        h = h_out + (1.0 - m) * h
        enc_scr[s, :, 0:H] = h_out[:, 0:H]         # forward output belongs to time s
        enc_scr[srev, :, H:N] = h_out[:, H:N]      # backward output belongs to time srev

    # ---- phase 3: query attention over all (t, b) rows, all in VMEM ----
    enc = jnp.tanh(enc_scr[...])                                   # [T, B, N]
    wlin = wlin_ref[...]
    blin = blin_ref[...]
    for t in range(T):                                             # shared lin, static unroll
        atts_ref[t] = jnp.tanh(jnp.dot(enc[t], wlin,
                                       preferred_element_type=f32) + blin)
    att_s = atts_ref[...]                                          # [T, B, N]
    att = jnp.sum(att_s * q[None, :, :], axis=-1, keepdims=True) / float(N)   # [T, B, 1]
    # Non-stable softmax (exp before masking) matches the reference semantics.
    e = jnp.exp(att) * mtb_ref[...]                                # [T, B, 1]
    ssum = jnp.sum(e, axis=0, keepdims=True) + 0.0001              # [1, B, 1]
    res = e / ssum                                                 # [T, B, 1]
    res_ref[...] = res
    summed_ref[...] = jnp.sum(enc * res, axis=0)                   # [B, N]


def ui_attentional_birnn(p, x_bf, lens, layer):
    """UIAttentionalBiRNN3.forward. x_bf: [B, T, D] batch-first, lens: [B], layer: [B, 2*ui]."""
    B, T, D = x_bf.shape
    H = p["whh"].shape[0] // 2
    N = 2 * H

    x_tm = jnp.transpose(x_bf, (1, 0, 2)).astype(jnp.float32)          # [T, B, D]
    t_idx = jnp.arange(T, dtype=jnp.int32)
    mask_bt = (t_idx[None, :] < lens[:, None]).astype(jnp.float32)     # [B, T]
    mask_tb = jnp.transpose(mask_bt)[:, :, None]                       # [T, B, 1]

    vmem = pl.BlockSpec(memory_space=pltpu.MemorySpace.VMEM)           # whole array in VMEM
    summed, res, att_s, q = pl.pallas_call(
        functools.partial(_ui_birnn_attn_kernel, T=T, H=H),
        out_shape=(jax.ShapeDtypeStruct((B, N), jnp.float32),      # summed
                   jax.ShapeDtypeStruct((T, B, 1), jnp.float32),   # attention weights
                   jax.ShapeDtypeStruct((T, B, N), jnp.float32),   # att_sents
                   jax.ShapeDtypeStruct((B, N), jnp.float32)),     # q
        in_specs=[vmem] * 10,
        out_specs=(vmem, vmem, vmem, vmem),
        scratch_shapes=[pltpu.VMEM((T, B, 8 * H), jnp.float32),    # hoisted x @ W_ih gates
                        pltpu.VMEM((T, B, 8 * H), jnp.float32),    # interleaved fwd/bwd gate inputs
                        pltpu.VMEM((T, B, N), jnp.float32),        # per-step output masks
                        pltpu.VMEM((T, B, N), jnp.float32)],       # bidirectional LSTM output
    )(x_tm, mask_tb, layer.astype(jnp.float32),
      p["wih"], p["whh"], p["bg"],
      p["lin_w_t"], p["lin_b"], p["ui2q_w_t"], p["ui2q_b_plus_param"])

    res_bt1 = jnp.transpose(res, (1, 0, 2))       # [B, T, 1]
    atts_btn = jnp.transpose(att_s, (1, 0, 2))    # [B, T, N]
    return summed, res_bt1, (q, atts_btn)


# ----------------------------- Module logic (glue) -----------------------------

def hnar_forward(P, batch_reviews, users, items, sent_order, ui_indexs, ls, lr):
    u = users[ui_indexs]
    it = items[ui_indexs]
    emb_w = P["embed"][batch_reviews]                    # [n_sents, T_w, emb]
    # TODO(synk): F.dropout reproduced in eval mode (identity); training-mode RNG dropout not emulated.
    emb_u = P["users"][u]
    emb_i = P["items"][it]
    # Tiny glue GEMMs (3..9 rows) stay in XLA: launch cost > compute.
    to_w = jnp.tanh(jnp.concatenate([emb_u, emb_i], axis=-1) @ P["lin0_w_t"] + P["lin0_b"])
    sent_embs, atw, qw = ui_attentional_birnn(P["word"], emb_w, ls, to_w)

    # _reorder_sent: prepend a zero row, gather by sent_order (0 == pad)
    padded = jnp.concatenate(
        [jnp.zeros((1, sent_embs.shape[1]), jnp.float32), sent_embs], axis=0)
    rev_embs = padded[sent_order.reshape(-1)].reshape(
        sent_order.shape[0], sent_order.shape[1], sent_embs.shape[1])

    emb_u2 = P["users"][users]
    emb_i2 = P["items"][items]
    a = jnp.tanh(jnp.concatenate([emb_u2, emb_i2], axis=-1) @ P["lin0_w_t"] + P["lin0_b"])
    to_s = jnp.tanh(a @ P["lin1_w_t"] + P["lin1_b"])
    doc_embs, ats, _ = ui_attentional_birnn(P["sent"], rev_embs, lr, to_s)

    out = doc_embs @ P["lin_out_w_t"] + P["lin_out_b"]
    pred_r = to_s @ P["lin2_w_t"] + P["lin2_b"]
    return out, pred_r, atw, ats, qw


# ----------------------------- Deterministic init -----------------------------

def _fuse_bidir_lstm(wih_f, whh_f, b_f, wih_b, whh_b, b_b, hid):
    """Pack PyTorch-layout LSTM weights (gate order i,f,g,o; weight_ih [4H,D],
    weight_hh [4H,H], combined bias [4H]) of both directions into the kernel's
    interleaved layout: columns [i_f,i_b,f_f,f_b,g_f,g_b,o_f,o_b], Whh block-diag."""
    H = hid
    zH = jnp.zeros((H, H), jnp.float32)
    wih_cols, whh_cols, b_cols = [], [], []
    for k in range(4):
        sl = slice(k * H, (k + 1) * H)
        wih_cols += [wih_f[sl].T, wih_b[sl].T]
        whh_cols += [jnp.concatenate([whh_f[sl].T, zH], axis=0),
                     jnp.concatenate([zH, whh_b[sl].T], axis=0)]
        b_cols += [b_f[sl], b_b[sl]]
    wih = jnp.concatenate(wih_cols, axis=1)       # [D, 8H]
    whh = jnp.concatenate(whh_cols, axis=1)       # [2H, 8H]
    bg = jnp.concatenate(b_cols)[None, :]         # [1, 8H]
    return wih, whh, bg


def init_params(key, ntoken, nusers, nitems, num_class, emb_size, hid_size):
    ui_size = 20
    keys = iter(jax.random.split(key, 64))
    nxt = lambda: next(keys)

    def linear_params(out_f, in_f):
        w = (jax.random.normal(nxt(), (out_f, in_f)) * 0.1).astype(jnp.float32)
        b = (jax.random.normal(nxt(), (1, out_f)) * 0.1).astype(jnp.float32)
        return w.T, b                               # weight stored transposed [in, out]

    def birnn_params(inp_size, hid):
        natt = hid * 2
        s = 1.0 / math.sqrt(hid)

        def unif(shape):
            return jax.random.uniform(nxt(), shape, minval=-s, maxval=s).astype(jnp.float32)

        per_dir = {}
        for d in ("f", "b"):                        # forward / reverse LSTM directions
            wih = unif((4 * hid, inp_size))
            whh = unif((4 * hid, hid))
            bih = unif((4 * hid,))
            bhh = unif((4 * hid,))
            per_dir[d] = (wih, whh, bih + bhh)
        wih_all, whh_all, bg = _fuse_bidir_lstm(*per_dir["f"], *per_dir["b"], hid)
        p = {"wih": wih_all, "whh": whh_all, "bg": bg}
        p["lin_w_t"], p["lin_b"] = linear_params(natt, natt)            # self.lin
        ui2q_w_t, ui2q_b = linear_params(natt, ui_size * 2)             # self.ui2query
        param = jax.random.uniform(nxt(), (1, natt)).astype(jnp.float32)  # self.param
        p["ui2q_w_t"] = ui2q_w_t
        p["ui2q_b_plus_param"] = ui2q_b + param     # q = tanh(param + ui2query(layer))
        return p

    P = {}
    embed = (jax.random.normal(nxt(), (ntoken, emb_size)) * 0.1).astype(jnp.float32)
    P["embed"] = embed.at[0].set(0.0)               # padding_idx=0
    P["lin_out_w_t"], P["lin_out_b"] = linear_params(num_class, hid_size * 2)
    P["lin0_w_t"], P["lin0_b"] = linear_params(ui_size * 2, ui_size * 2)
    P["lin1_w_t"], P["lin1_b"] = linear_params(ui_size * 2, ui_size * 2)
    P["lin2_w_t"], P["lin2_b"] = linear_params(1, ui_size * 2)
    P["users"] = (0.01 + 0.01 * jax.random.normal(nxt(), (nusers, ui_size))).astype(jnp.float32)
    P["items"] = (0.01 + 0.01 * jax.random.normal(nxt(), (nitems, ui_size))).astype(jnp.float32)
    P["word"] = birnn_params(emb_size, emb_size // 2)
    P["sent"] = birnn_params(emb_size, emb_size // 2)
    # HNAR.param, class_bias, ub, ib and registered buffers are unused in forward.
    return P


# ----------------------------- Example run -----------------------------

if __name__ == "__main__":
    key = jax.random.PRNGKey(0)
    ntoken, nusers, nitems, num_class = 50, 7, 9, 5
    emb_size = 32
    hid_size = emb_size // 2      # matches HNAR default relation emb = 2*hid
    n_rev, max_sents, T_w = 3, 4, 8

    k_par, k_tok, k_usr, k_itm = jax.random.split(key, 4)
    P = init_params(k_par, ntoken, nusers, nitems, num_class, emb_size, hid_size)

    lr = jnp.array([4, 3, 2], dtype=jnp.int32)                    # review lengths (sorted desc)
    ls = jnp.array([8, 7, 7, 6, 5, 4, 3, 2, 2], dtype=jnp.int32)  # sentence lengths (sorted desc)
    n_sents = int(ls.shape[0])

    tok = jax.random.randint(k_tok, (n_sents, T_w), 1, ntoken)
    wmask = jnp.arange(T_w)[None, :] < ls[:, None]
    batch_reviews = jnp.where(wmask, tok, 0).astype(jnp.int32)    # padded tokens -> 0

    users = jax.random.randint(k_usr, (n_rev,), 0, nusers).astype(jnp.int32)
    items = jax.random.randint(k_itm, (n_rev,), 0, nitems).astype(jnp.int32)

    ui_indexs = jnp.array([0, 0, 1, 0, 1, 2, 0, 1, 2], dtype=jnp.int32)   # sentence -> review
    sent_order = jnp.array([[1, 2, 4, 7],
                            [3, 5, 8, 0],
                            [6, 9, 0, 0]], dtype=jnp.int32)               # 0 = pad sentence

    fwd = jax.jit(hnar_forward)
    out, pred_r, atw, ats, qw = fwd(P, batch_reviews, users, items,
                                    sent_order, ui_indexs, ls, lr)
    jax.block_until_ready((out, pred_r, atw, ats, qw))

    assert out.shape == (n_rev, num_class)
    assert pred_r.shape == (n_rev, 1)
    assert atw.shape == (n_sents, T_w, 1)
    assert ats.shape == (n_rev, max_sents, 1)
    assert qw[0].shape == (n_sents, emb_size)
    assert qw[1].shape == (n_sents, T_w, emb_size)
    print("KERNEL_OK")
</pallas_src>

<mosaic_0001>
module attributes {stable_mosaic.version = 11 : i64} {
  func.func @_ui_birnn_attn_kernel(%arg0: memref<8x9x32xf32, #tpu.memory_space<vmem>>, %arg1: memref<8x9x1xf32, #tpu.memory_space<vmem>>, %arg2: memref<9x40xf32, #tpu.memory_space<vmem>>, %arg3: memref<32x128xf32, #tpu.memory_space<vmem>>, %arg4: memref<32x128xf32, #tpu.memory_space<vmem>>, %arg5: memref<1x128xf32, #tpu.memory_space<vmem>>, %arg6: memref<32x32xf32, #tpu.memory_space<vmem>>, %arg7: memref<1x32xf32, #tpu.memory_space<vmem>>, %arg8: memref<40x32xf32, #tpu.memory_space<vmem>>, %arg9: memref<1x32xf32, #tpu.memory_space<vmem>>, %arg10: memref<9x32xf32, #tpu.memory_space<vmem>>, %arg11: memref<8x9x1xf32, #tpu.memory_space<vmem>>, %arg12: memref<8x9x32xf32, #tpu.memory_space<vmem>>, %arg13: memref<9x32xf32, #tpu.memory_space<vmem>>, %arg14: memref<8x9x128xf32, #tpu.memory_space<vmem>>, %arg15: memref<8x9x128xf32, #tpu.memory_space<vmem>>, %arg16: memref<8x9x32xf32, #tpu.memory_space<vmem>>, %arg17: memref<8x9x32xf32, #tpu.memory_space<vmem>>) attributes {dimension_semantics = [], scalar_prefetch = 0 : i64, scratch_operands = 4 : i64, tpu.core_type = #tpu.core_type<tc>} {
    %c0 = arith.constant 0 : index
    %c0_0 = arith.constant 0 : index
    %0 = vector.load %arg2[%c0, %c0_0] : memref<9x40xf32, #tpu.memory_space<vmem>>, vector<9x40xf32>
    %c0_1 = arith.constant 0 : index
    %c0_2 = arith.constant 0 : index
    %1 = vector.load %arg8[%c0_1, %c0_2] : memref<40x32xf32, #tpu.memory_space<vmem>>, vector<40x32xf32>
    %cst = arith.constant dense<0.000000e+00> : vector<9x32xf32>
    %2 = tpu.matmul %0, %1, %cst {dimension_numbers = #tpu.dot_dimension_numbers<[1], [0], [0], [1], [0, 0, 1, 1], [], []>} : vector<9x40xf32>, vector<40x32xf32>, vector<9x32xf32> -> vector<9x32xf32>
    %c0_3 = arith.constant 0 : index
    %c0_4 = arith.constant 0 : index
    %3 = vector.load %arg9[%c0_3, %c0_4] : memref<1x32xf32, #tpu.memory_space<vmem>>, vector<1x32xf32>
    %4 = vector.broadcast %3 : vector<1x32xf32> to vector<9x32xf32>
    %5 = arith.addf %2, %4 : vector<9x32xf32>
    %6 = math.tanh %5 : vector<9x32xf32>
    %c0_5 = arith.constant 0 : index
    %c0_6 = arith.constant 0 : index
    %7 = vector.load %arg13[%c0_5, %c0_6] : memref<9x32xf32, #tpu.memory_space<vmem>>, vector<9x32xf32>
    tpu.vector_store %arg13[%c0_5, %c0_6], %6 {strides = array<i32>} : memref<9x32xf32, #tpu.memory_space<vmem>>, vector<9x32xf32>,
    %8 = tpu.iota {dimensions = array<i32: 1>} : vector<1x128xi32>
    %c32_i32 = arith.constant 32 : i32
    %c0_i32 = arith.constant 0 : i32
    %9 = arith.cmpi eq, %c32_i32, %c0_i32 : i32
    %c1_i32 = arith.constant 1 : i32
    %10 = arith.select %9, %c1_i32, %c32_i32 : i32
    %11 = vector.broadcast %10 : i32 to vector<1x128xi32>
    %12 = arith.remsi %8, %11 : vector<1x128xi32>
    %c0_i32_7 = arith.constant 0 : i32
    %13 = vector.broadcast %c0_i32_7 : i32 to vector<1x128xi32>
    %14 = arith.cmpi ne, %12, %13 : vector<1x128xi32>
    %c0_i32_8 = arith.constant 0 : i32
    %15 = vector.broadcast %c0_i32_8 : i32 to vector<1x128xi32>
    %16 = arith.cmpi slt, %12, %15 : vector<1x128xi32>
    %c0_i32_9 = arith.constant 0 : i32
    %17 = arith.cmpi slt, %10, %c0_i32_9 : i32
    %18 = vector.broadcast %17 : i1 to vector<1x128xi1>
    %19 = vector.broadcast %18 : vector<1x128xi1> to vector<1x128xi1>
    %20 = arith.xori %16, %19 : vector<1x128xi1>
    %21 = arith.andi %20, %14 : vector<1x128xi1>
    %22 = vector.broadcast %10 : i32 to vector<1x128xi32>
    %23 = arith.addi %12, %22 : vector<1x128xi32>
    %24 = arith.select %21, %23, %12 : vector<1x128xi1>, vector<1x128xi32>
    %c16_i32 = arith.constant 16 : i32
    %25 = vector.broadcast %c16_i32 : i32 to vector<1x128xi32>
    %26 = arith.cmpi slt, %24, %25 : vector<1x128xi32>
    %27 = tpu.iota {dimensions = array<i32: 1>} : vector<1x32xi32>
    %c16_i32_10 = arith.constant 16 : i32
    %28 = vector.broadcast %c16_i32_10 : i32 to vector<1x32xi32>
    %29 = arith.cmpi slt, %27, %28 : vector<1x32xi32>
    %c0_11 = arith.constant 0 : index
    %c0_12 = arith.constant 0 : index
    %30 = vector.load %arg3[%c0_11, %c0_12] : memref<32x128xf32, #tpu.memory_space<vmem>>, vector<32x128xf32>
    %c0_13 = arith.constant 0 : index
    %c0_14 = arith.constant 0 : index
    %31 = vector.load %arg5[%c0_13, %c0_14] : memref<1x128xf32, #tpu.memory_space<vmem>>, vector<1x128xf32>
    %c0_15 = arith.constant 0 : index
    %c0_16 = arith.constant 0 : index
    %c0_17 = arith.constant 0 : index
    %32 = vector.load %arg0[%c0_15, %c0_16, %c0_17] : memref<8x9x32xf32, #tpu.memory_space<vmem>>, vector<1x9x32xf32>
    %33 = vector.shape_cast %32 : vector<1x9x32xf32> to vector<9x32xf32>
    %cst_18 = arith.constant dense<0.000000e+00> : vector<9x128xf32>
    %34 = tpu.matmul %33, %30, %cst_18 {dimension_numbers = #tpu.dot_dimension_numbers<[1], [0], [0], [1], [0, 0, 1, 1], [], []>} : vector<9x32xf32>, vector<32x128xf32>, vector<9x128xf32> -> vector<9x128xf32>
    %35 = vector.broadcast %31 : vector<1x128xf32> to vector<9x128xf32>
    %36 = arith.addf %34, %35 : vector<9x128xf32>
    %c0_19 = arith.constant 0 : index
    %c0_20 = arith.constant 0 : index
    %c0_21 = arith.constant 0 : index
    %37 = vector.load %arg14[%c0_19, %c0_20, %c0_21] : memref<8x9x128xf32, #tpu.memory_space<vmem>>, vector<1x9x128xf32>
    %38 = vector.shape_cast %37 : vector<1x9x128xf32> to vector<9x128xf32>
    %39 = vector.shape_cast %36 : vector<9x128xf32> to vector<1x9x128xf32>
    tpu.vector_store %arg14[%c0_19, %c0_20, %c0_21], %39 {strides = array<i32>} : memref<8x9x128xf32, #tpu.memory_space<vmem>>, vector<1x9x128xf32>,
    %c1 = arith.constant 1 : index
    %c0_22 = arith.constant 0 : index
    %c0_23 = arith.constant 0 : index
    %40 = vector.load %arg0[%c1, %c0_22, %c0_23] : memref<8x9x32xf32, #tpu.memory_space<vmem>>, vector<1x9x32xf32>
    %41 = vector.shape_cast %40 : vector<1x9x32xf32> to vector<9x32xf32>
    %cst_24 = arith.constant dense<0.000000e+00> : vector<9x128xf32>
    %42 = tpu.matmul %41, %30, %cst_24 {dimension_numbers = #tpu.dot_dimension_numbers<[1], [0], [0], [1], [0, 0, 1, 1], [], []>} : vector<9x32xf32>, vector<32x128xf32>, vector<9x128xf32> -> vector<9x128xf32>
    %43 = vector.broadcast %31 : vector<1x128xf32> to vector<9x128xf32>
    %44 = arith.addf %42, %43 : vector<9x128xf32>
    %c1_25 = arith.constant 1 : index
    %c0_26 = arith.constant 0 : index
    %c0_27 = arith.constant 0 : index
    %45 = vector.load %arg14[%c1_25, %c0_26, %c0_27] : memref<8x9x128xf32, #tpu.memory_space<vmem>>, vector<1x9x128xf32>
    %46 = vector.shape_cast %45 : vector<1x9x128xf32> to vector<9x128xf32>
    %47 = vector.shape_cast %44 : vector<9x128xf32> to vector<1x9x128xf32>
    tpu.vector_store %arg14[%c1_25, %c0_26, %c0_27], %47 {strides = array<i32>} : memref<8x9x128xf32, #tpu.memory_space<vmem>>, vector<1x9x128xf32>,
    %c2 = arith.constant 2 : index
    %c0_28 = arith.constant 0 : index
    %c0_29 = arith.constant 0 : index
    %48 = vector.load %arg0[%c2, %c0_28, %c0_29] : memref<8x9x32xf32, #tpu.memory_space<vmem>>, vector<1x9x32xf32>
    %49 = vector.shape_cast %48 : vector<1x9x32xf32> to vector<9x32xf32>
    %cst_30 = arith.constant dense<0.000000e+00> : vector<9x128xf32>
    %50 = tpu.matmul %49, %30, %cst_30 {dimension_numbers = #tpu.dot_dimension_numbers<[1], [0], [0], [1], [0, 0, 1, 1], [], []>} : vector<9x32xf32>, vector<32x128xf32>, vector<9x128xf32> -> vector<9x128xf32>
    %51 = vector.broadcast %31 : vector<1x128xf32> to vector<9x128xf32>
    %52 = arith.addf %50, %51 : vector<9x128xf32>
    %c2_31 = arith.constant 2 : index
    %c0_32 = arith.constant 0 : index
    %c0_33 = arith.constant 0 : index
    %53 = vector.load %arg14[%c2_31, %c0_32, %c0_33] : memref<8x9x128xf32, #tpu.memory_space<vmem>>, vector<1x9x128xf32>
    %54 = vector.shape_cast %53 : vector<1x9x128xf32> to vector<9x128xf32>
    %55 = vector.shape_cast %52 : vector<9x128xf32> to vector<1x9x128xf32>
    tpu.vector_store %arg14[%c2_31, %c0_32, %c0_33], %55 {strides = array<i32>} : memref<8x9x128xf32, #tpu.memory_space<vmem>>, vector<1x9x128xf32>,
    %c3 = arith.constant 3 : index
    %c0_34 = arith.constant 0 : index
    %c0_35 = arith.constant 0 : index
    %56 = vector.load %arg0[%c3, %c0_34, %c0_35] : memref<8x9x32xf32, #tpu.memory_space<vmem>>, vector<1x9x32xf32>
    %57 = vector.shape_cast %56 : vector<1x9x32xf32> to vector<9x32xf32>
    %cst_36 = arith.constant dense<0.000000e+00> : vector<9x128xf32>
    %58 = tpu.matmul %57, %30, %cst_36 {dimension_numbers = #tpu.dot_dimension_numbers<[1], [0], [0], [1], [0, 0, 1, 1], [], []>} : vector<9x32xf32>, vector<32x128xf32>, vector<9x128xf32> -> vector<9x128xf32>
    %59 = vector.broadcast %31 : vector<1x128xf32> to vector<9x128xf32>
    %60 = arith.addf %58, %59 : vector<9x128xf32>
    %c3_37 = arith.constant 3 : index
    %c0_38 = arith.constant 0 : index
    %c0_39 = arith.constant 0 : index
    %61 = vector.load %arg14[%c3_37, %c0_38, %c0_39] : memref<8x9x128xf32, #tpu.memory_space<vmem>>, vector<1x9x128xf32>
    %62 = vector.shape_cast %61 : vector<1x9x128xf32> to vector<9x128xf32>
    %63 = vector.shape_cast %60 : vector<9x128xf32> to vector<1x9x128xf32>
    tpu.vector_store %arg14[%c3_37, %c0_38, %c0_39], %63 {strides = array<i32>} : memref<8x9x128xf32, #tpu.memory_space<vmem>>, vector<1x9x128xf32>,
    %c4 = arith.constant 4 : index
    %c0_40 = arith.constant 0 : index
    %c0_41 = arith.constant 0 : index
    %64 = vector.load %arg0[%c4, %c0_40, %c0_41] : memref<8x9x32xf32, #tpu.memory_space<vmem>>, vector<1x9x32xf32>
    %65 = vector.shape_cast %64 : vector<1x9x32xf32> to vector<9x32xf32>
    %cst_42 = arith.constant dense<0.000000e+00> : vector<9x128xf32>
    %66 = tpu.matmul %65, %30, %cst_42 {dimension_numbers = #tpu.dot_dimension_numbers<[1], [0], [0], [1], [0, 0, 1, 1], [], []>} : vector<9x32xf32>, vector<32x128xf32>, vector<9x128xf32> -> vector<9x128xf32>
    %67 = vector.broadcast %31 : vector<1x128xf32> to vector<9x128xf32>
    %68 = arith.addf %66, %67 : vector<9x128xf32>
    %c4_43 = arith.constant 4 : index
    %c0_44 = arith.constant 0 : index
    %c0_45 = arith.constant 0 : index
    %69 = vector.load %arg14[%c4_43, %c0_44, %c0_45] : memref<8x9x128xf32, #tpu.memory_space<vmem>>, vector<1x9x128xf32>
    %70 = vector.shape_cast %69 : vector<1x9x128xf32> to vector<9x128xf32>
    %71 = vector.shape_cast %68 : vector<9x128xf32> to vector<1x9x128xf32>
    tpu.vector_store %arg14[%c4_43, %c0_44, %c0_45], %71 {strides = array<i32>} : memref<8x9x128xf32, #tpu.memory_space<vmem>>, vector<1x9x128xf32>,
    %c5 = arith.constant 5 : index
    %c0_46 = arith.constant 0 : index
    %c0_47 = arith.constant 0 : index
    %72 = vector.load %arg0[%c5, %c0_46, %c0_47] : memref<8x9x32xf32, #tpu.memory_space<vmem>>, vector<1x9x32xf32>
    %73 = vector.shape_cast %72 : vector<1x9x32xf32> to vector<9x32xf32>
    %cst_48 = arith.constant dense<0.000000e+00> : vector<9x128xf32>
    %74 = tpu.matmul %73, %30, %cst_48 {dimension_numbers = #tpu.dot_dimension_numbers<[1], [0], [0], [1], [0, 0, 1, 1], [], []>} : vector<9x32xf32>, vector<32x128xf32>, vector<9x128xf32> -> vector<9x128xf32>
    %75 = vector.broadcast %31 : vector<1x128xf32> to vector<9x128xf32>
    %76 = arith.addf %74, %75 : vector<9x128xf32>
    %c5_49 = arith.constant 5 : index
    %c0_50 = arith.constant 0 : index
    %c0_51 = arith.constant 0 : index
    %77 = vector.load %arg14[%c5_49, %c0_50, %c0_51] : memref<8x9x128xf32, #tpu.memory_space<vmem>>, vector<1x9x128xf32>
    %78 = vector.shape_cast %77 : vector<1x9x128xf32> to vector<9x128xf32>
    %79 = vector.shape_cast %76 : vector<9x128xf32> to vector<1x9x128xf32>
    tpu.vector_store %arg14[%c5_49, %c0_50, %c0_51], %79 {strides = array<i32>} : memref<8x9x128xf32, #tpu.memory_space<vmem>>, vector<1x9x128xf32>,
    %c6 = arith.constant 6 : index
    %c0_52 = arith.constant 0 : index
    %c0_53 = arith.constant 0 : index
    %80 = vector.load %arg0[%c6, %c0_52, %c0_53] : memref<8x9x32xf32, #tpu.memory_space<vmem>>, vector<1x9x32xf32>
    %81 = vector.shape_cast %80 : vector<1x9x32xf32> to vector<9x32xf32>
    %cst_54 = arith.constant dense<0.000000e+00> : vector<9x128xf32>
    %82 = tpu.matmul %81, %30, %cst_54 {dimension_numbers = #tpu.dot_dimension_numbers<[1], [0], [0], [1], [0, 0, 1, 1], [], []>} : vector<9x32xf32>, vector<32x128xf32>, vector<9x128xf32> -> vector<9x128xf32>
    %83 = vector.broadcast %31 : vector<1x128xf32> to vector<9x128xf32>
    %84 = arith.addf %82, %83 : vector<9x128xf32>
    %c6_55 = arith.constant 6 : index
    %c0_56 = arith.constant 0 : index
    %c0_57 = arith.constant 0 : index
    %85 = vector.load %arg14[%c6_55, %c0_56, %c0_57] : memref<8x9x128xf32, #tpu.memory_space<vmem>>, vector<1x9x128xf32>
    %86 = vector.shape_cast %85 : vector<1x9x128xf32> to vector<9x128xf32>
    %87 = vector.shape_cast %84 : vector<9x128xf32> to vector<1x9x128xf32>
    tpu.vector_store %arg14[%c6_55, %c0_56, %c0_57], %87 {strides = array<i32>} : memref<8x9x128xf32, #tpu.memory_space<vmem>>, vector<1x9x128xf32>,
    %c7 = arith.constant 7 : index
    %c0_58 = arith.constant 0 : index
    %c0_59 = arith.constant 0 : index
    %88 = vector.load %arg0[%c7, %c0_58, %c0_59] : memref<8x9x32xf32, #tpu.memory_space<vmem>>, vector<1x9x32xf32>
    %89 = vector.shape_cast %88 : vector<1x9x32xf32> to vector<9x32xf32>
    %cst_60 = arith.constant dense<0.000000e+00> : vector<9x128xf32>
    %90 = tpu.matmul %89, %30, %cst_60 {dimension_numbers = #tpu.dot_dimension_numbers<[1], [0], [0], [1], [0, 0, 1, 1], [], []>} : vector<9x32xf32>, vector<32x128xf32>, vector<9x128xf32> -> vector<9x128xf32>
    %91 = vector.broadcast %31 : vector<1x128xf32> to vector<9x128xf32>
    %92 = arith.addf %90, %91 : vector<9x128xf32>
    %c7_61 = arith.constant 7 : index
    %c0_62 = arith.constant 0 : index
    %c0_63 = arith.constant 0 : index
    %93 = vector.load %arg14[%c7_61, %c0_62, %c0_63] : memref<8x9x128xf32, #tpu.memory_space<vmem>>, vector<1x9x128xf32>
    %94 = vector.shape_cast %93 : vector<1x9x128xf32> to vector<9x128xf32>
    %95 = vector.shape_cast %92 : vector<9x128xf32> to vector<1x9x128xf32>
    tpu.vector_store %arg14[%c7_61, %c0_62, %c0_63], %95 {strides = array<i32>} : memref<8x9x128xf32, #tpu.memory_space<vmem>>, vector<1x9x128xf32>,
    %c0_64 = arith.constant 0 : index
    %c0_65 = arith.constant 0 : index
    %c0_66 = arith.constant 0 : index
    %96 = vector.load %arg14[%c0_64, %c0_65, %c0_66] : memref<8x9x128xf32, #tpu.memory_space<vmem>>, vector<1x9x128xf32>
    %97 = vector.shape_cast %96 : vector<1x9x128xf32> to vector<9x128xf32>
    %c7_67 = arith.constant 7 : index
    %c0_68 = arith.constant 0 : index
    %c0_69 = arith.constant 0 : index
    %98 = vector.load %arg14[%c7_67, %c0_68, %c0_69] : memref<8x9x128xf32, #tpu.memory_space<vmem>>, vector<1x9x128xf32>
    %99 = vector.shape_cast %98 : vector<1x9x128xf32> to vector<9x128xf32>
    %100 = vector.shape_cast %26 : vector<1x128xi1> to vector<1x128xi1>
    %101 = vector.broadcast %100 : vector<1x128xi1> to vector<9x128xi1>
    %102 = arith.select %101, %97, %99 : vector<9x128xi1>, vector<9x128xf32>
    %c0_70 = arith.constant 0 : index
    %c0_71 = arith.constant 0 : index
    %c0_72 = arith.constant 0 : index
    %103 = vector.load %arg15[%c0_70, %c0_71, %c0_72] : memref<8x9x128xf32, #tpu.memory_space<vmem>>, vector<1x9x128xf32>
    %104 = vector.shape_cast %103 : vector<1x9x128xf32> to vector<9x128xf32>
    %105 = vector.shape_cast %102 : vector<9x128xf32> to vector<1x9x128xf32>
    tpu.vector_store %arg15[%c0_70, %c0_71, %c0_72], %105 {strides = array<i32>} : memref<8x9x128xf32, #tpu.memory_space<vmem>>, vector<1x9x128xf32>,
    %c0_73 = arith.constant 0 : index
    %c0_74 = arith.constant 0 : index
    %c0_75 = arith.constant 0 : index
    %106 = vector.load %arg1[%c0_73, %c0_74, %c0_75] : memref<8x9x1xf32, #tpu.memory_space<vmem>>, vector<1x9x1xf32>
    %107 = vector.shape_cast %106 : vector<1x9x1xf32> to vector<9x1xf32>
    %c7_76 = arith.constant 7 : index
    %c0_77 = arith.constant 0 : index
    %c0_78 = arith.constant 0 : index
    %108 = vector.load %arg1[%c7_76, %c0_77, %c0_78] : memref<8x9x1xf32, #tpu.memory_space<vmem>>, vector<1x9x1xf32>
    %109 = vector.shape_cast %108 : vector<1x9x1xf32> to vector<9x1xf32>
    %110 = vector.shape_cast %29 : vector<1x32xi1> to vector<1x32xi1>
    %111 = vector.broadcast %110 : vector<1x32xi1> to vector<9x32xi1>
    %112 = vector.shape_cast %107 : vector<9x1xf32> to vector<9x1xf32>
    %113 = vector.broadcast %112 : vector<9x1xf32> to vector<9x32xf32>
    %114 = vector.shape_cast %109 : vector<9x1xf32> to vector<9x1xf32>
    %115 = vector.broadcast %114 : vector<9x1xf32> to vector<9x32xf32>
    %116 = arith.select %111, %113, %115 : vector<9x32xi1>, vector<9x32xf32>
    %c0_79 = arith.constant 0 : index
    %c0_80 = arith.constant 0 : index
    %c0_81 = arith.constant 0 : index
    %117 = vector.load %arg16[%c0_79, %c0_80, %c0_81] : memref<8x9x32xf32, #tpu.memory_space<vmem>>, vector<1x9x32xf32>
    %118 = vector.shape_cast %117 : vector<1x9x32xf32> to vector<9x32xf32>
    %119 = vector.shape_cast %116 : vector<9x32xf32> to vector<1x9x32xf32>
    tpu.vector_store %arg16[%c0_79, %c0_80, %c0_81], %119 {strides = array<i32>} : memref<8x9x32xf32, #tpu.memory_space<vmem>>, vector<1x9x32xf32>,
    %c1_82 = arith.constant 1 : index
    %c0_83 = arith.constant 0 : index
    %c0_84 = arith.constant 0 : index
    %120 = vector.load %arg14[%c1_82, %c0_83, %c0_84] : memref<8x9x128xf32, #tpu.memory_space<vmem>>, vector<1x9x128xf32>
    %121 = vector.shape_cast %120 : vector<1x9x128xf32> to vector<9x128xf32>
    %c6_85 = arith.constant 6 : index
    %c0_86 = arith.constant 0 : index
    %c0_87 = arith.constant 0 : index
    %122 = vector.load %arg14[%c6_85, %c0_86, %c0_87] : memref<8x9x128xf32, #tpu.memory_space<vmem>>, vector<1x9x128xf32>
    %123 = vector.shape_cast %122 : vector<1x9x128xf32> to vector<9x128xf32>
    %124 = vector.shape_cast %26 : vector<1x128xi1> to vector<1x128xi1>
    %125 = vector.broadcast %124 : vector<1x128xi1> to vector<9x128xi1>
    %126 = arith.select %125, %121, %123 : vector<9x128xi1>, vector<9x128xf32>
    %c1_88 = arith.constant 1 : index
    %c0_89 = arith.constant 0 : index
    %c0_90 = arith.constant 0 : index
    %127 = vector.load %arg15[%c1_88, %c0_89, %c0_90] : memref<8x9x128xf32, #tpu.memory_space<vmem>>, vector<1x9x128xf32>
    %128 = vector.shape_cast %127 : vector<1x9x128xf32> to vector<9x128xf32>
    %129 = vector.shape_cast %126 : vector<9x128xf32> to vector<1x9x128xf32>
    tpu.vector_store %arg15[%c1_88, %c0_89, %c0_90], %129 {strides = array<i32>} : memref<8x9x128xf32, #tpu.memory_space<vmem>>, vector<1x9x128xf32>,
    %c1_91 = arith.constant 1 : index
    %c0_92 = arith.constant 0 : index
    %c0_93 = arith.constant 0 : index
    %130 = vector.load %arg1[%c1_91, %c0_92, %c0_93] : memref<8x9x1xf32, #tpu.memory_space<vmem>>, vector<1x9x1xf32>
    %131 = vector.shape_cast %130 : vector<1x9x1xf32> to vector<9x1xf32>
    %c6_94 = arith.constant 6 : index
    %c0_95 = arith.constant 0 : index
    %c0_96 = arith.constant 0 : index
    %132 = vector.load %arg1[%c6_94, %c0_95, %c0_96] : memref<8x9x1xf32, #tpu.memory_space<vmem>>, vector<1x9x1xf32>
    %133 = vector.shape_cast %132 : vector<1x9x1xf32> to vector<9x1xf32>
    %134 = vector.shape_cast %29 : vector<1x32xi1> to vector<1x32xi1>
    %135 = vector.broadcast %134 : vector<1x32xi1> to vector<9x32xi1>
    %136 = vector.shape_cast %131 : vector<9x1xf32> to vector<9x1xf32>
    %137 = vector.broadcast %136 : vector<9x1xf32> to vector<9x32xf32>
    %138 = vector.shape_cast %133 : vector<9x1xf32> to vector<9x1xf32>
    %139 = vector.broadcast %138 : vector<9x1xf32> to vector<9x32xf32>
    %140 = arith.select %135, %137, %139 : vector<9x32xi1>, vector<9x32xf32>
    %c1_97 = arith.constant 1 : index
    %c0_98 = arith.constant 0 : index
    %c0_99 = arith.constant 0 : index
    %141 = vector.load %arg16[%c1_97, %c0_98, %c0_99] : memref<8x9x32xf32, #tpu.memory_space<vmem>>, vector<1x9x32xf32>
    %142 = vector.shape_cast %141 : vector<1x9x32xf32> to vector<9x32xf32>
    %143 = vector.shape_cast %140 : vector<9x32xf32> to vector<1x9x32xf32>
    tpu.vector_store %arg16[%c1_97, %c0_98, %c0_99], %143 {strides = array<i32>} : memref<8x9x32xf32, #tpu.memory_space<vmem>>, vector<1x9x32xf32>,
    %c2_100 = arith.constant 2 : index
    %c0_101 = arith.constant 0 : index
    %c0_102 = arith.constant 0 : index
    %144 = vector.load %arg14[%c2_100, %c0_101, %c0_102] : memref<8x9x128xf32, #tpu.memory_space<vmem>>, vector<1x9x128xf32>
    %145 = vector.shape_cast %144 : vector<1x9x128xf32> to vector<9x128xf32>
    %c5_103 = arith.constant 5 : index
    %c0_104 = arith.constant 0 : index
    %c0_105 = arith.constant 0 : index
    %146 = vector.load %arg14[%c5_103, %c0_104, %c0_105] : memref<8x9x128xf32, #tpu.memory_space<vmem>>, vector<1x9x128xf32>
    %147 = vector.shape_cast %146 : vector<1x9x128xf32> to vector<9x128xf32>
    %148 = vector.shape_cast %26 : vector<1x128xi1> to vector<1x128xi1>
    %149 = vector.broadcast %148 : vector<1x128xi1> to vector<9x128xi1>
    %150 = arith.select %149, %145, %147 : vector<9x128xi1>, vector<9x128xf32>
    %c2_106 = arith.constant 2 : index
    %c0_107 = arith.constant 0 : index
    %c0_108 = arith.constant 0 : index
    %151 = vector.load %arg15[%c2_106, %c0_107, %c0_108] : memref<8x9x128xf32, #tpu.memory_space<vmem>>, vector<1x9x128xf32>
    %152 = vector.shape_cast %151 : vector<1x9x128xf32> to vector<9x128xf32>
    %153 = vector.shape_cast %150 : vector<9x128xf32> to vector<1x9x128xf32>
    tpu.vector_store %arg15[%c2_106, %c0_107, %c0_108], %153 {strides = array<i32>} : memref<8x9x128xf32, #tpu.memory_space<vmem>>, vector<1x9x128xf32>,
    %c2_109 = arith.constant 2 : index
    %c0_110 = arith.constant 0 : index
    %c0_111 = arith.constant 0 : index
    %154 = vector.load %arg1[%c2_109, %c0_110, %c0_111] : memref<8x9x1xf32, #tpu.memory_space<vmem>>, vector<1x9x1xf32>
    %155 = vector.shape_cast %154 : vector<1x9x1xf32> to vector<9x1xf32>
    %c5_112 = arith.constant 5 : index
    %c0_113 = arith.constant 0 : index
    %c0_114 = arith.constant 0 : index
    %156 = vector.load %arg1[%c5_112, %c0_113, %c0_114] : memref<8x9x1xf32, #tpu.memory_space<vmem>>, vector<1x9x1xf32>
    %157 = vector.shape_cast %156 : vector<1x9x1xf32> to vector<9x1xf32>
    %158 = vector.shape_cast %29 : vector<1x32xi1> to vector<1x32xi1>
    %159 = vector.broadcast %158 : vector<1x32xi1> to vector<9x32xi1>
    %160 = vector.shape_cast %155 : vector<9x1xf32> to vector<9x1xf32>
    %161 = vector.broadcast %160 : vector<9x1xf32> to vector<9x32xf32>
    %162 = vector.shape_cast %157 : vector<9x1xf32> to vector<9x1xf32>
    %163 = vector.broadcast %162 : vector<9x1xf32> to vector<9x32xf32>
    %164 = arith.select %159, %161, %163 : vector<9x32xi1>, vector<9x32xf32>
    %c2_115 = arith.constant 2 : index
    %c0_116 = arith.constant 0 : index
    %c0_117 = arith.constant 0 : index
    %165 = vector.load %arg16[%c2_115, %c0_116, %c0_117] : memref<8x9x32xf32, #tpu.memory_space<vmem>>, vector<1x9x32xf32>
    %166 = vector.shape_cast %165 : vector<1x9x32xf32> to vector<9x32xf32>
    %167 = vector.shape_cast %164 : vector<9x32xf32> to vector<1x9x32xf32>
    tpu.vector_store %arg16[%c2_115, %c0_116, %c0_117], %167 {strides = array<i32>} : memref<8x9x32xf32, #tpu.memory_space<vmem>>, vector<1x9x32xf32>,
    %c3_118 = arith.constant 3 : index
    %c0_119 = arith.constant 0 : index
    %c0_120 = arith.constant 0 : index
    %168 = vector.load %arg14[%c3_118, %c0_119, %c0_120] : memref<8x9x128xf32, #tpu.memory_space<vmem>>, vector<1x9x128xf32>
    %169 = vector.shape_cast %168 : vector<1x9x128xf32> to vector<9x128xf32>
    %c4_121 = arith.constant 4 : index
    %c0_122 = arith.constant 0 : index
    %c0_123 = arith.constant 0 : index
    %170 = vector.load %arg14[%c4_121, %c0_122, %c0_123] : memref<8x9x128xf32, #tpu.memory_space<vmem>>, vector<1x9x128xf32>
    %171 = vector.shape_cast %170 : vector<1x9x128xf32> to vector<9x128xf32>
    %172 = vector.shape_cast %26 : vector<1x128xi1> to vector<1x128xi1>
    %173 = vector.broadcast %172 : vector<1x128xi1> to vector<9x128xi1>
    %174 = arith.select %173, %169, %171 : vector<9x128xi1>, vector<9x128xf32>
    %c3_124 = arith.constant 3 : index
    %c0_125 = arith.constant 0 : index
    %c0_126 = arith.constant 0 : index
    %175 = vector.load %arg15[%c3_124, %c0_125, %c0_126] : memref<8x9x128xf32, #tpu.memory_space<vmem>>, vector<1x9x128xf32>
    %176 = vector.shape_cast %175 : vector<1x9x128xf32> to vector<9x128xf32>
    %177 = vector.shape_cast %174 : vector<9x128xf32> to vector<1x9x128xf32>
    tpu.vector_store %arg15[%c3_124, %c0_125, %c0_126], %177 {strides = array<i32>} : memref<8x9x128xf32, #tpu.memory_space<vmem>>, vector<1x9x128xf32>,
    %c3_127 = arith.constant 3 : index
    %c0_128 = arith.constant 0 : index
    %c0_129 = arith.constant 0 : index
    %178 = vector.load %arg1[%c3_127, %c0_128, %c0_129] : memref<8x9x1xf32, #tpu.memory_space<vmem>>, vector<1x9x1xf32>
    %179 = vector.shape_cast %178 : vector<1x9x1xf32> to vector<9x1xf32>
    %c4_130 = arith.constant 4 : index
    %c0_131 = arith.constant 0 : index
    %c0_132 = arith.constant 0 : index
    %180 = vector.load %arg1[%c4_130, %c0_131, %c0_132] : memref<8x9x1xf32, #tpu.memory_space<vmem>>, vector<1x9x1xf32>
    %181 = vector.shape_cast %180 : vector<1x9x1xf32> to vector<9x1xf32>
    %182 = vector.shape_cast %29 : vector<1x32xi1> to vector<1x32xi1>
    %183 = vector.broadcast %182 : vector<1x32xi1> to vector<9x32xi1>
    %184 = vector.shape_cast %179 : vector<9x1xf32> to vector<9x1xf32>
    %185 = vector.broadcast %184 : vector<9x1xf32> to vector<9x32xf32>
    %186 = vector.shape_cast %181 : vector<9x1xf32> to vector<9x1xf32>
    %187 = vector.broadcast %186 : vector<9x1xf32> to vector<9x32xf32>
    %188 = arith.select %183, %185, %187 : vector<9x32xi1>, vector<9x32xf32>
    %c3_133 = arith.constant 3 : index
    %c0_134 = arith.constant 0 : index
    %c0_135 = arith.constant 0 : index
    %189 = vector.load %arg16[%c3_133, %c0_134, %c0_135] : memref<8x9x32xf32, #tpu.memory_space<vmem>>, vector<1x9x32xf32>
    %190 = vector.shape_cast %189 : vector<1x9x32xf32> to vector<9x32xf32>
    %191 = vector.shape_cast %188 : vector<9x32xf32> to vector<1x9x32xf32>
    tpu.vector_store %arg16[%c3_133, %c0_134, %c0_135], %191 {strides = array<i32>} : memref<8x9x32xf32, #tpu.memory_space<vmem>>, vector<1x9x32xf32>,
    %c4_136 = arith.constant 4 : index
    %c0_137 = arith.constant 0 : index
    %c0_138 = arith.constant 0 : index
    %192 = vector.load %arg14[%c4_136, %c0_137, %c0_138] : memref<8x9x128xf32, #tpu.memory_space<vmem>>, vector<1x9x128xf32>
    %193 = vector.shape_cast %192 : vector<1x9x128xf32> to vector<9x128xf32>
    %c3_139 = arith.constant 3 : index
    %c0_140 = arith.constant 0 : index
    %c0_141 = arith.constant 0 : index
    %194 = vector.load %arg14[%c3_139, %c0_140, %c0_141] : memref<8x9x128xf32, #tpu.memory_space<vmem>>, vector<1x9x128xf32>
    %195 = vector.shape_cast %194 : vector<1x9x128xf32> to vector<9x128xf32>
    %196 = vector.shape_cast %26 : vector<1x128xi1> to vector<1x128xi1>
    %197 = vector.broadcast %196 : vector<1x128xi1> to vector<9x128xi1>
    %198 = arith.select %197, %193, %195 : vector<9x128xi1>, vector<9x128xf32>
    %c4_142 = arith.constant 4 : index
    %c0_143 = arith.constant 0 : index
    %c0_144 = arith.constant 0 : index
    %199 = vector.load %arg15[%c4_142, %c0_143, %c0_144] : memref<8x9x128xf32, #tpu.memory_space<vmem>>, vector<1x9x128xf32>
    %200 = vector.shape_cast %199 : vector<1x9x128xf32> to vector<9x128xf32>
    %201 = vector.shape_cast %198 : vector<9x128xf32> to vector<1x9x128xf32>
    tpu.vector_store %arg15[%c4_142, %c0_143, %c0_144], %201 {strides = array<i32>} : memref<8x9x128xf32, #tpu.memory_space<vmem>>, vector<1x9x128xf32>,
    %c4_145 = arith.constant 4 : index
    %c0_146 = arith.constant 0 : index
    %c0_147 = arith.constant 0 : index
    %202 = vector.load %arg1[%c4_145, %c0_146, %c0_147] : memref<8x9x1xf32, #tpu.memory_space<vmem>>, vector<1x9x1xf32>
    %203 = vector.shape_cast %202 : vector<1x9x1xf32> to vector<9x1xf32>
    %c3_148 = arith.constant 3 : index
    %c0_149 = arith.constant 0 : index
    %c0_150 = arith.constant 0 : index
    %204 = vector.load %arg1[%c3_148, %c0_149, %c0_150] : memref<8x9x1xf32, #tpu.memory_space<vmem>>, vector<1x9x1xf32>
    %205 = vector.shape_cast %204 : vector<1x9x1xf32> to vector<9x1xf32>
    %206 = vector.shape_cast %29 : vector<1x32xi1> to vector<1x32xi1>
    %207 = vector.broadcast %206 : vector<1x32xi1> to vector<9x32xi1>
    %208 = vector.shape_cast %203 : vector<9x1xf32> to vector<9x1xf32>
    %209 = vector.broadcast %208 : vector<9x1xf32> to vector<9x32xf32>
    %210 = vector.shape_cast %205 : vector<9x1xf32> to vector<9x1xf32>
    %211 = vector.broadcast %210 : vector<9x1xf32> to vector<9x32xf32>
    %212 = arith.select %207, %209, %211 : vector<9x32xi1>, vector<9x32xf32>
    %c4_151 = arith.constant 4 : index
    %c0_152 = arith.constant 0 : index
    %c0_153 = arith.constant 0 : index
    %213 = vector.load %arg16[%c4_151, %c0_152, %c0_153] : memref<8x9x32xf32, #tpu.memory_space<vmem>>, vector<1x9x32xf32>
    %214 = vector.shape_cast %213 : vector<1x9x32xf32> to vector<9x32xf32>
    %215 = vector.shape_cast %212 : vector<9x32xf32> to vector<1x9x32xf32>
    tpu.vector_store %arg16[%c4_151, %c0_152, %c0_153], %215 {strides = array<i32>} : memref<8x9x32xf32, #tpu.memory_space<vmem>>, vector<1x9x32xf32>,
    %c5_154 = arith.constant 5 : index
    %c0_155 = arith.constant 0 : index
    %c0_156 = arith.constant 0 : index
    %216 = vector.load %arg14[%c5_154, %c0_155, %c0_156] : memref<8x9x128xf32, #tpu.memory_space<vmem>>, vector<1x9x128xf32>
    %217 = vector.shape_cast %216 : vector<1x9x128xf32> to vector<9x128xf32>
    %c2_157 = arith.constant 2 : index
    %c0_158 = arith.constant 0 : index
    %c0_159 = arith.constant 0 : index
    %218 = vector.load %arg14[%c2_157, %c0_158, %c0_159] : memref<8x9x128xf32, #tpu.memory_space<vmem>>, vector<1x9x128xf32>
    %219 = vector.shape_cast %218 : vector<1x9x128xf32> to vector<9x128xf32>
    %220 = vector.shape_cast %26 : vector<1x128xi1> to vector<1x128xi1>
    %221 = vector.broadcast %220 : vector<1x128xi1> to vector<9x128xi1>
    %222 = arith.select %221, %217, %219 : vector<9x128xi1>, vector<9x128xf32>
    %c5_160 = arith.constant 5 : index
    %c0_161 = arith.constant 0 : index
    %c0_162 = arith.constant 0 : index
    %223 = vector.load %arg15[%c5_160, %c0_161, %c0_162] : memref<8x9x128xf32, #tpu.memory_space<vmem>>, vector<1x9x128xf32>
    %224 = vector.shape_cast %223 : vector<1x9x128xf32> to vector<9x128xf32>
    %225 = vector.shape_cast %222 : vector<9x128xf32> to vector<1x9x128xf32>
    tpu.vector_store %arg15[%c5_160, %c0_161, %c0_162], %225 {strides = array<i32>} : memref<8x9x128xf32, #tpu.memory_space<vmem>>, vector<1x9x128xf32>,
    %c5_163 = arith.constant 5 : index
    %c0_164 = arith.constant 0 : index
    %c0_165 = arith.constant 0 : index
    %226 = vector.load %arg1[%c5_163, %c0_164, %c0_165] : memref<8x9x1xf32, #tpu.memory_space<vmem>>, vector<1x9x1xf32>
    %227 = vector.shape_cast %226 : vector<1x9x1xf32> to vector<9x1xf32>
    %c2_166 = arith.constant 2 : index
    %c0_167 = arith.constant 0 : index
    %c0_168 = arith.constant 0 : index
    %228 = vector.load %arg1[%c2_166, %c0_167, %c0_168] : memref<8x9x1xf32, #tpu.memory_space<vmem>>, vector<1x9x1xf32>
    %229 = vector.shape_cast %228 : vector<1x9x1xf32> to vector<9x1xf32>
    %230 = vector.shape_cast %29 : vector<1x32xi1> to vector<1x32xi1>
    %231 = vector.broadcast %230 : vector<1x32xi1> to vector<9x32xi1>
    %232 = vector.shape_cast %227 : vector<9x1xf32> to vector<9x1xf32>
    %233 = vector.broadcast %232 : vector<9x1xf32> to vector<9x32xf32>
    %234 = vector.shape_cast %229 : vector<9x1xf32> to vector<9x1xf32>
    %235 = vector.broadcast %234 : vector<9x1xf32> to vector<9x32xf32>
    %236 = arith.select %231, %233, %235 : vector<9x32xi1>, vector<9x32xf32>
    %c5_169 = arith.constant 5 : index
    %c0_170 = arith.constant 0 : index
    %c0_171 = arith.constant 0 : index
    %237 = vector.load %arg16[%c5_169, %c0_170, %c0_171] : memref<8x9x32xf32, #tpu.memory_space<vmem>>, vector<1x9x32xf32>
    %238 = vector.shape_cast %237 : vector<1x9x32xf32> to vector<9x32xf32>
    %239 = vector.shape_cast %236 : vector<9x32xf32> to vector<1x9x32xf32>
    tpu.vector_store %arg16[%c5_169, %c0_170, %c0_171], %239 {strides = array<i32>} : memref<8x9x32xf32, #tpu.memory_space<vmem>>, vector<1x9x32xf32>,
    %c6_172 = arith.constant 6 : index
    %c0_173 = arith.constant 0 : index
    %c0_174 = arith.constant 0 : index
    %240 = vector.load %arg14[%c6_172, %c0_173, %c0_174] : memref<8x9x128xf32, #tpu.memory_space<vmem>>, vector<1x9x128xf32>
    %241 = vector.shape_cast %240 : vector<1x9x128xf32> to vector<9x128xf32>
    %c1_175 = arith.constant 1 : index
    %c0_176 = arith.constant 0 : index
    %c0_177 = arith.constant 0 : index
    %242 = vector.load %arg14[%c1_175, %c0_176, %c0_177] : memref<8x9x128xf32, #tpu.memory_space<vmem>>, vector<1x9x128xf32>
    %243 = vector.shape_cast %242 : vector<1x9x128xf32> to vector<9x128xf32>
    %244 = vector.shape_cast %26 : vector<1x128xi1> to vector<1x128xi1>
    %245 = vector.broadcast %244 : vector<1x128xi1> to vector<9x128xi1>
    %246 = arith.select %245, %241, %243 : vector<9x128xi1>, vector<9x128xf32>
    %c6_178 = arith.constant 6 : index
    %c0_179 = arith.constant 0 : index
    %c0_180 = arith.constant 0 : index
    %247 = vector.load %arg15[%c6_178, %c0_179, %c0_180] : memref<8x9x128xf32, #tpu.memory_space<vmem>>, vector<1x9x128xf32>
    %248 = vector.shape_cast %247 : vector<1x9x128xf32> to vector<9x128xf32>
    %249 = vector.shape_cast %246 : vector<9x128xf32> to vector<1x9x128xf32>
    tpu.vector_store %arg15[%c6_178, %c0_179, %c0_180], %249 {strides = array<i32>} : memref<8x9x128xf32, #tpu.memory_space<vmem>>, vector<1x9x128xf32>,
    %c6_181 = arith.constant 6 : index
    %c0_182 = arith.constant 0 : index
    %c0_183 = arith.constant 0 : index
    %250 = vector.load %arg1[%c6_181, %c0_182, %c0_183] : memref<8x9x1xf32, #tpu.memory_space<vmem>>, vector<1x9x1xf32>
    %251 = vector.shape_cast %250 : vector<1x9x1xf32> to vector<9x1xf32>
    %c1_184 = arith.constant 1 : index
    %c0_185 = arith.constant 0 : index
    %c0_186 = arith.constant 0 : index
    %252 = vector.load %arg1[%c1_184, %c0_185, %c0_186] : memref<8x9x1xf32, #tpu.memory_space<vmem>>, vector<1x9x1xf32>
    %253 = vector.shape_cast %252 : vector<1x9x1xf32> to vector<9x1xf32>
    %254 = vector.shape_cast %29 : vector<1x32xi1> to vector<1x32xi1>
    %255 = vector.broadcast %254 : vector<1x32xi1> to vector<9x32xi1>
    %256 = vector.shape_cast %251 : vector<9x1xf32> to vector<9x1xf32>
    %257 = vector.broadcast %256 : vector<9x1xf32> to vector<9x32xf32>
    %258 = vector.shape_cast %253 : vector<9x1xf32> to vector<9x1xf32>
    %259 = vector.broadcast %258 : vector<9x1xf32> to vector<9x32xf32>
    %260 = arith.select %255, %257, %259 : vector<9x32xi1>, vector<9x32xf32>
    %c6_187 = arith.constant 6 : index
    %c0_188 = arith.constant 0 : index
    %c0_189 = arith.constant 0 : index
    %261 = vector.load %arg16[%c6_187, %c0_188, %c0_189] : memref<8x9x32xf32, #tpu.memory_space<vmem>>, vector<1x9x32xf32>
    %262 = vector.shape_cast %261 : vector<1x9x32xf32> to vector<9x32xf32>
    %263 = vector.shape_cast %260 : vector<9x32xf32> to vector<1x9x32xf32>
    tpu.vector_store %arg16[%c6_187, %c0_188, %c0_189], %263 {strides = array<i32>} : memref<8x9x32xf32, #tpu.memory_space<vmem>>, vector<1x9x32xf32>,
    %c7_190 = arith.constant 7 : index
    %c0_191 = arith.constant 0 : index
    %c0_192 = arith.constant 0 : index
    %264 = vector.load %arg14[%c7_190, %c0_191, %c0_192] : memref<8x9x128xf32, #tpu.memory_space<vmem>>, vector<1x9x128xf32>
    %265 = vector.shape_cast %264 : vector<1x9x128xf32> to vector<9x128xf32>
    %c0_193 = arith.constant 0 : index
    %c0_194 = arith.constant 0 : index
    %c0_195 = arith.constant 0 : index
    %266 = vector.load %arg14[%c0_193, %c0_194, %c0_195] : memref<8x9x128xf32, #tpu.memory_space<vmem>>, vector<1x9x128xf32>
    %267 = vector.shape_cast %266 : vector<1x9x128xf32> to vector<9x128xf32>
    %268 = vector.shape_cast %26 : vector<1x128xi1> to vector<1x128xi1>
    %269 = vector.broadcast %268 : vector<1x128xi1> to vector<9x128xi1>
    %270 = arith.select %269, %265, %267 : vector<9x128xi1>, vector<9x128xf32>
    %c7_196 = arith.constant 7 : index
    %c0_197 = arith.constant 0 : index
    %c0_198 = arith.constant 0 : index
    %271 = vector.load %arg15[%c7_196, %c0_197, %c0_198] : memref<8x9x128xf32, #tpu.memory_space<vmem>>, vector<1x9x128xf32>
    %272 = vector.shape_cast %271 : vector<1x9x128xf32> to vector<9x128xf32>
    %273 = vector.shape_cast %270 : vector<9x128xf32> to vector<1x9x128xf32>
    tpu.vector_store %arg15[%c7_196, %c0_197, %c0_198], %273 {strides = array<i32>} : memref<8x9x128xf32, #tpu.memory_space<vmem>>, vector<1x9x128xf32>,
    %c7_199 = arith.constant 7 : index
    %c0_200 = arith.constant 0 : index
    %c0_201 = arith.constant 0 : index
    %274 = vector.load %arg1[%c7_199, %c0_200, %c0_201] : memref<8x9x1xf32, #tpu.memory_space<vmem>>, vector<1x9x1xf32>
    %275 = vector.shape_cast %274 : vector<1x9x1xf32> to vector<9x1xf32>
    %c0_202 = arith.constant 0 : index
    %c0_203 = arith.constant 0 : index
    %c0_204 = arith.constant 0 : index
    %276 = vector.load %arg1[%c0_202, %c0_203, %c0_204] : memref<8x9x1xf32, #tpu.memory_space<vmem>>, vector<1x9x1xf32>
    %277 = vector.shape_cast %276 : vector<1x9x1xf32> to vector<9x1xf32>
    %278 = vector.shape_cast %29 : vector<1x32xi1> to vector<1x32xi1>
    %279 = vector.broadcast %278 : vector<1x32xi1> to vector<9x32xi1>
    %280 = vector.shape_cast %275 : vector<9x1xf32> to vector<9x1xf32>
    %281 = vector.broadcast %280 : vector<9x1xf32> to vector<9x32xf32>
    %282 = vector.shape_cast %277 : vector<9x1xf32> to vector<9x1xf32>
    %283 = vector.broadcast %282 : vector<9x1xf32> to vector<9x32xf32>
    %284 = arith.select %279, %281, %283 : vector<9x32xi1>, vector<9x32xf32>
    %c7_205 = arith.constant 7 : index
    %c0_206 = arith.constant 0 : index
    %c0_207 = arith.constant 0 : index
    %285 = vector.load %arg16[%c7_205, %c0_206, %c0_207] : memref<8x9x32xf32, #tpu.memory_space<vmem>>, vector<1x9x32xf32>
    %286 = vector.shape_cast %285 : vector<1x9x32xf32> to vector<9x32xf32>
    %287 = vector.shape_cast %284 : vector<9x32xf32> to vector<1x9x32xf32>
    tpu.vector_store %arg16[%c7_205, %c0_206, %c0_207], %287 {strides = array<i32>} : memref<8x9x32xf32, #tpu.memory_space<vmem>>, vector<1x9x32xf32>,
    %c0_208 = arith.constant 0 : index
    %c0_209 = arith.constant 0 : index
    %288 = vector.load %arg4[%c0_208, %c0_209] : memref<32x128xf32, #tpu.memory_space<vmem>>, vector<32x128xf32>
    %cst_210 = arith.constant 0.000000e+00 : f32
    %289 = vector.broadcast %cst_210 : f32 to vector<9x32xf32>
    %cst_211 = arith.constant 0.000000e+00 : f32
    %290 = vector.broadcast %cst_211 : f32 to vector<9x32xf32>
    %c0_212 = arith.constant 0 : index
    %c0_213 = arith.constant 0 : index
    %c0_214 = arith.constant 0 : index
    %291 = vector.load %arg15[%c0_212, %c0_213, %c0_214] : memref<8x9x128xf32, #tpu.memory_space<vmem>>, vector<1x9x128xf32>
    %292 = vector.shape_cast %291 : vector<1x9x128xf32> to vector<9x128xf32>
    %cst_215 = arith.constant dense<0.000000e+00> : vector<9x128xf32>
    %293 = tpu.matmul %289, %288, %cst_215 {dimension_numbers = #tpu.dot_dimension_numbers<[1], [0], [0], [1], [0, 0, 1, 1], [], []>} : vector<9x32xf32>, vector<32x128xf32>, vector<9x128xf32> -> vector<9x128xf32>
    %294 = arith.addf %292, %293 : vector<9x128xf32>
    %295 = vector.extract_strided_slice %294 {offsets = [0, 0], sizes = [9, 32], strides = [1, 1]} : vector<9x128xf32> to vector<9x32xf32>
    %296 = arith.negf %295 : vector<9x32xf32>
    %297 = math.exp %296 : vector<9x32xf32>
    %cst_216 = arith.constant 1.000000e+00 : f32
    %298 = vector.broadcast %cst_216 : f32 to vector<9x32xf32>
    %299 = arith.addf %298, %297 : vector<9x32xf32>
    %300 = arith.divf %298, %299 : vector<9x32xf32>
    %301 = vector.extract_strided_slice %294 {offsets = [0, 32], sizes = [9, 32], strides = [1, 1]} : vector<9x128xf32> to vector<9x32xf32>
    %302 = arith.negf %301 : vector<9x32xf32>
    %303 = math.exp %302 : vector<9x32xf32>
    %cst_217 = arith.constant 1.000000e+00 : f32
    %304 = vector.broadcast %cst_217 : f32 to vector<9x32xf32>
    %305 = arith.addf %304, %303 : vector<9x32xf32>
    %306 = arith.divf %304, %305 : vector<9x32xf32>
    %307 = vector.extract_strided_slice %294 {offsets = [0, 64], sizes = [9, 32], strides = [1, 1]} : vector<9x128xf32> to vector<9x32xf32>
    %308 = math.tanh %307 : vector<9x32xf32>
    %309 = vector.extract_strided_slice %294 {offsets = [0, 96], sizes = [9, 32], strides = [1, 1]} : vector<9x128xf32> to vector<9x32xf32>
    %310 = arith.negf %309 : vector<9x32xf32>
    %311 = math.exp %310 : vector<9x32xf32>
    %cst_218 = arith.constant 1.000000e+00 : f32
    %312 = vector.broadcast %cst_218 : f32 to vector<9x32xf32>
    %313 = arith.addf %312, %311 : vector<9x32xf32>
    %314 = arith.divf %312, %313 : vector<9x32xf32>
    %315 = arith.mulf %306, %290 : vector<9x32xf32>
    %316 = arith.mulf %300, %308 : vector<9x32xf32>
    %317 = arith.addf %315, %316 : vector<9x32xf32>
    %318 = math.tanh %317 : vector<9x32xf32>
    %319 = arith.mulf %314, %318 : vector<9x32xf32>
    %c0_219 = arith.constant 0 : index
    %c0_220 = arith.constant 0 : index
    %c0_221 = arith.constant 0 : index
    %320 = vector.load %arg16[%c0_219, %c0_220, %c0_221] : memref<8x9x32xf32, #tpu.memory_space<vmem>>, vector<1x9x32xf32>
    %321 = vector.shape_cast %320 : vector<1x9x32xf32> to vector<9x32xf32>
    %322 = arith.mulf %321, %319 : vector<9x32xf32>
    %323 = arith.mulf %321, %317 : vector<9x32xf32>
    %cst_222 = arith.constant 1.000000e+00 : f32
    %324 = vector.broadcast %cst_222 : f32 to vector<9x32xf32>
    %325 = arith.subf %324, %321 : vector<9x32xf32>
    %326 = arith.mulf %325, %290 : vector<9x32xf32>
    %327 = arith.addf %323, %326 : vector<9x32xf32>
    %cst_223 = arith.constant 1.000000e+00 : f32
    %328 = vector.broadcast %cst_223 : f32 to vector<9x32xf32>
    %329 = arith.subf %328, %321 : vector<9x32xf32>
    %330 = arith.mulf %329, %289 : vector<9x32xf32>
    %331 = arith.addf %322, %330 : vector<9x32xf32>
    %332 = vector.extract_strided_slice %322 {offsets = [0, 0], sizes = [9, 16], strides = [1, 1]} : vector<9x32xf32> to vector<9x16xf32>
    %c0_224 = arith.constant 0 : index
    %c0_225 = arith.constant 0 : index
    %c0_226 = arith.constant 0 : index
    %333 = vector.load %arg17[%c0_224, %c0_225, %c0_226] : memref<8x9x32xf32, #tpu.memory_space<vmem>>, vector<1x9x16xf32>
    %334 = vector.shape_cast %333 : vector<1x9x16xf32> to vector<9x16xf32>
    %335 = vector.shape_cast %332 : vector<9x16xf32> to vector<1x9x16xf32>
    tpu.vector_store %arg17[%c0_224, %c0_225, %c0_226], %335 {strides = array<i32>} : memref<8x9x32xf32, #tpu.memory_space<vmem>>, vector<1x9x16xf32>,
    %336 = vector.extract_strided_slice %322 {offsets = [0, 16], sizes = [9, 16], strides = [1, 1]} : vector<9x32xf32> to vector<9x16xf32>
    %c7_227 = arith.constant 7 : index
    %c0_228 = arith.constant 0 : index
    %c16 = arith.constant 16 : index
    %337 = vector.load %arg17[%c7_227, %c0_228, %c16] : memref<8x9x32xf32, #tpu.memory_space<vmem>>, vector<1x9x16xf32>
    %338 = vector.shape_cast %337 : vector<1x9x16xf32> to vector<9x16xf32>
    %339 = vector.shape_cast %336 : vector<9x16xf32> to vector<1x9x16xf32>
    tpu.vector_store %arg17[%c7_227, %c0_228, %c16], %339 {strides = array<i32>} : memref<8x9x32xf32, #tpu.memory_space<vmem>>, vector<1x9x16xf32>,
    %c1_229 = arith.constant 1 : index
    %c0_230 = arith.constant 0 : index
    %c0_231 = arith.constant 0 : index
    %340 = vector.load %arg15[%c1_229, %c0_230, %c0_231] : memref<8x9x128xf32, #tpu.memory_space<vmem>>, vector<1x9x128xf32>
    %341 = vector.shape_cast %340 : vector<1x9x128xf32> to vector<9x128xf32>
    %cst_232 = arith.constant dense<0.000000e+00> : vector<9x128xf32>
    %342 = tpu.matmul %331, %288, %cst_232 {dimension_numbers = #tpu.dot_dimension_numbers<[1], [0], [0], [1], [0, 0, 1, 1], [], []>} : vector<9x32xf32>, vector<32x128xf32>, vector<9x128xf32> -> vector<9x128xf32>
    %343 = arith.addf %341, %342 : vector<9x128xf32>
    %344 = vector.extract_strided_slice %343 {offsets = [0, 0], sizes = [9, 32], strides = [1, 1]} : vector<9x128xf32> to vector<9x32xf32>
    %345 = arith.negf %344 : vector<9x32xf32>
    %346 = math.exp %345 : vector<9x32xf32>
    %cst_233 = arith.constant 1.000000e+00 : f32
    %347 = vector.broadcast %cst_233 : f32 to vector<9x32xf32>
    %348 = arith.addf %347, %346 : vector<9x32xf32>
    %349 = arith.divf %347, %348 : vector<9x32xf32>
    %350 = vector.extract_strided_slice %343 {offsets = [0, 32], sizes = [9, 32], strides = [1, 1]} : vector<9x128xf32> to vector<9x32xf32>
    %351 = arith.negf %350 : vector<9x32xf32>
    %352 = math.exp %351 : vector<9x32xf32>
    %cst_234 = arith.constant 1.000000e+00 : f32
    %353 = vector.broadcast %cst_234 : f32 to vector<9x32xf32>
    %354 = arith.addf %353, %352 : vector<9x32xf32>
    %355 = arith.divf %353, %354 : vector<9x32xf32>
    %356 = vector.extract_strided_slice %343 {offsets = [0, 64], sizes = [9, 32], strides = [1, 1]} : vector<9x128xf32> to vector<9x32xf32>
    %357 = math.tanh %356 : vector<9x32xf32>
    %358 = vector.extract_strided_slice %343 {offsets = [0, 96], sizes = [9, 32], strides = [1, 1]} : vector<9x128xf32> to vector<9x32xf32>
    %359 = arith.negf %358 : vector<9x32xf32>
    %360 = math.exp %359 : vector<9x32xf32>
    %cst_235 = arith.constant 1.000000e+00 : f32
    %361 = vector.broadcast %cst_235 : f32 to vector<9x32xf32>
    %362 = arith.addf %361, %360 : vector<9x32xf32>
    %363 = arith.divf %361, %362 : vector<9x32xf32>
    %364 = arith.mulf %355, %327 : vector<9x32xf32>
    %365 = arith.mulf %349, %357 : vector<9x32xf32>
    %366 = arith.addf %364, %365 : vector<9x32xf32>
    %367 = math.tanh %366 : vector<9x32xf32>
    %368 = arith.mulf %363, %367 : vector<9x32xf32>
    %c1_236 = arith.constant 1 : index
    %c0_237 = arith.constant 0 : index
    %c0_238 = arith.constant 0 : index
    %369 = vector.load %arg16[%c1_236, %c0_237, %c0_238] : memref<8x9x32xf32, #tpu.memory_space<vmem>>, vector<1x9x32xf32>
    %370 = vector.shape_cast %369 : vector<1x9x32xf32> to vector<9x32xf32>
    %371 = arith.mulf %370, %368 : vector<9x32xf32>
    %372 = arith.mulf %370, %366 : vector<9x32xf32>
    %cst_239 = arith.constant 1.000000e+00 : f32
    %373 = vector.broadcast %cst_239 : f32 to vector<9x32xf32>
    %374 = arith.subf %373, %370 : vector<9x32xf32>
    %375 = arith.mulf %374, %327 : vector<9x32xf32>
    %376 = arith.addf %372, %375 : vector<9x32xf32>
    %cst_240 = arith.constant 1.000000e+00 : f32
    %377 = vector.broadcast %cst_240 : f32 to vector<9x32xf32>
    %378 = arith.subf %377, %370 : vector<9x32xf32>
    %379 = arith.mulf %378, %331 : vector<9x32xf32>
    %380 = arith.addf %371, %379 : vector<9x32xf32>
    %381 = vector.extract_strided_slice %371 {offsets = [0, 0], sizes = [9, 16], strides = [1, 1]} : vector<9x32xf32> to vector<9x16xf32>
    %c1_241 = arith.constant 1 : index
    %c0_242 = arith.constant 0 : index
    %c0_243 = arith.constant 0 : index
    %382 = vector.load %arg17[%c1_241, %c0_242, %c0_243] : memref<8x9x32xf32, #tpu.memory_space<vmem>>, vector<1x9x16xf32>
    %383 = vector.shape_cast %382 : vector<1x9x16xf32> to vector<9x16xf32>
    %384 = vector.shape_cast %381 : vector<9x16xf32> to vector<1x9x16xf32>
    tpu.vector_store %arg17[%c1_241, %c0_242, %c0_243], %384 {strides = array<i32>} : memref<8x9x32xf32, #tpu.memory_space<vmem>>, vector<1x9x16xf32>,
    %385 = vector.extract_strided_slice %371 {offsets = [0, 16], sizes = [9, 16], strides = [1, 1]} : vector<9x32xf32> to vector<9x16xf32>
    %c6_244 = arith.constant 6 : index
    %c0_245 = arith.constant 0 : index
    %c16_246 = arith.constant 16 : index
    %386 = vector.load %arg17[%c6_244, %c0_245, %c16_246] : memref<8x9x32xf32, #tpu.memory_space<vmem>>, vector<1x9x16xf32>
    %387 = vector.shape_cast %386 : vector<1x9x16xf32> to vector<9x16xf32>
    %388 = vector.shape_cast %385 : vector<9x16xf32> to vector<1x9x16xf32>
    tpu.vector_store %arg17[%c6_244, %c0_245, %c16_246], %388 {strides = array<i32>} : memref<8x9x32xf32, #tpu.memory_space<vmem>>, vector<1x9x16xf32>,
    %c2_247 = arith.constant 2 : index
    %c0_248 = arith.constant 0 : index
    %c0_249 = arith.constant 0 : index
    %389 = vector.load %arg15[%c2_247, %c0_248, %c0_249] : memref<8x9x128xf32, #tpu.memory_space<vmem>>, vector<1x9x128xf32>
    %390 = vector.shape_cast %389 : vector<1x9x128xf32> to vector<9x128xf32>
    %cst_250 = arith.constant dense<0.000000e+00> : vector<9x128xf32>
    %391 = tpu.matmul %380, %288, %cst_250 {dimension_numbers = #tpu.dot_dimension_numbers<[1], [0], [0], [1], [0, 0, 1, 1], [], []>} : vector<9x32xf32>, vector<32x128xf32>, vector<9x128xf32> -> vector<9x128xf32>
    %392 = arith.addf %390, %391 : vector<9x128xf32>
    %393 = vector.extract_strided_slice %392 {offsets = [0, 0], sizes = [9, 32], strides = [1, 1]} : vector<9x128xf32> to vector<9x32xf32>
    %394 = arith.negf %393 : vector<9x32xf32>
    %395 = math.exp %394 : vector<9x32xf32>
    %cst_251 = arith.constant 1.000000e+00 : f32
    %396 = vector.broadcast %cst_251 : f32 to vector<9x32xf32>
    %397 = arith.addf %396, %395 : vector<9x32xf32>
    %398 = arith.divf %396, %397 : vector<9x32xf32>
    %399 = vector.extract_strided_slice %392 {offsets = [0, 32], sizes = [9, 32], strides = [1, 1]} : vector<9x128xf32> to vector<9x32xf32>
    %400 = arith.negf %399 : vector<9x32xf32>
    %401 = math.exp %400 : vector<9x32xf32>
    %cst_252 = arith.constant 1.000000e+00 : f32
    %402 = vector.broadcast %cst_252 : f32 to vector<9x32xf32>
    %403 = arith.addf %402, %401 : vector<9x32xf32>
    %404 = arith.divf %402, %403 : vector<9x32xf32>
    %405 = vector.extract_strided_slice %392 {offsets = [0, 64], sizes = [9, 32], strides = [1, 1]} : vector<9x128xf32> to vector<9x32xf32>
    %406 = math.tanh %405 : vector<9x32xf32>
    %407 = vector.extract_strided_slice %392 {offsets = [0, 96], sizes = [9, 32], strides = [1, 1]} : vector<9x128xf32> to vector<9x32xf32>
    %408 = arith.negf %407 : vector<9x32xf32>
    %409 = math.exp %408 : vector<9x32xf32>
    %cst_253 = arith.constant 1.000000e+00 : f32
    %410 = vector.broadcast %cst_253 : f32 to vector<9x32xf32>
    %411 = arith.addf %410, %409 : vector<9x32xf32>
    %412 = arith.divf %410, %411 : vector<9x32xf32>
    %413 = arith.mulf %404, %376 : vector<9x32xf32>
    %414 = arith.mulf %398, %406 : vector<9x32xf32>
    %415 = arith.addf %413, %414 : vector<9x32xf32>
    %416 = math.tanh %415 : vector<9x32xf32>
    %417 = arith.mulf %412, %416 : vector<9x32xf32>
    %c2_254 = arith.constant 2 : index
    %c0_255 = arith.constant 0 : index
    %c0_256 = arith.constant 0 : index
    %418 = vector.load %arg16[%c2_254, %c0_255, %c0_256] : memref<8x9x32xf32, #tpu.memory_space<vmem>>, vector<1x9x32xf32>
    %419 = vector.shape_cast %418 : vector<1x9x32xf32> to vector<9x32xf32>
    %420 = arith.mulf %419, %417 : vector<9x32xf32>
    %421 = arith.mulf %419, %415 : vector<9x32xf32>
    %cst_257 = arith.constant 1.000000e+00 : f32
    %422 = vector.broadcast %cst_257 : f32 to vector<9x32xf32>
    %423 = arith.subf %422, %419 : vector<9x32xf32>
    %424 = arith.mulf %423, %376 : vector<9x32xf32>
    %425 = arith.addf %421, %424 : vector<9x32xf32>
    %cst_258 = arith.constant 1.000000e+00 : f32
    %426 = vector.broadcast %cst_258 : f32 to vector<9x32xf32>
    %427 = arith.subf %426, %419 : vector<9x32xf32>
    %428 = arith.mulf %427, %380 : vector<9x32xf32>
    %429 = arith.addf %420, %428 : vector<9x32xf32>
    %430 = vector.extract_strided_slice %420 {offsets = [0, 0], sizes = [9, 16], strides = [1, 1]} : vector<9x32xf32> to vector<9x16xf32>
    %c2_259 = arith.constant 2 : index
    %c0_260 = arith.constant 0 : index
    %c0_261 = arith.constant 0 : index
    %431 = vector.load %arg17[%c2_259, %c0_260, %c0_261] : memref<8x9x32xf32, #tpu.memory_space<vmem>>, vector<1x9x16xf32>
    %432 = vector.shape_cast %431 : vector<1x9x16xf32> to vector<9x16xf32>
    %433 = vector.shape_cast %430 : vector<9x16xf32> to vector<1x9x16xf32>
    tpu.vector_store %arg17[%c2_259, %c0_260, %c0_261], %433 {strides = array<i32>} : memref<8x9x32xf32, #tpu.memory_space<vmem>>, vector<1x9x16xf32>,
    %434 = vector.extract_strided_slice %420 {offsets = [0, 16], sizes = [9, 16], strides = [1, 1]} : vector<9x32xf32> to vector<9x16xf32>
    %c5_262 = arith.constant 5 : index
    %c0_263 = arith.constant 0 : index
    %c16_264 = arith.constant 16 : index
    %435 = vector.load %arg17[%c5_262, %c0_263, %c16_264] : memref<8x9x32xf32, #tpu.memory_space<vmem>>, vector<1x9x16xf32>
    %436 = vector.shape_cast %435 : vector<1x9x16xf32> to vector<9x16xf32>
    %437 = vector.shape_cast %434 : vector<9x16xf32> to vector<1x9x16xf32>
    tpu.vector_store %arg17[%c5_262, %c0_263, %c16_264], %437 {strides = array<i32>} : memref<8x9x32xf32, #tpu.memory_space<vmem>>, vector<1x9x16xf32>,
    %c3_265 = arith.constant 3 : index
    %c0_266 = arith.constant 0 : index
    %c0_267 = arith.constant 0 : index
    %438 = vector.load %arg15[%c3_265, %c0_266, %c0_267] : memref<8x9x128xf32, #tpu.memory_space<vmem>>, vector<1x9x128xf32>
    %439 = vector.shape_cast %438 : vector<1x9x128xf32> to vector<9x128xf32>
    %cst_268 = arith.constant dense<0.000000e+00> : vector<9x128xf32>
    %440 = tpu.matmul %429, %288, %cst_268 {dimension_numbers = #tpu.dot_dimension_numbers<[1], [0], [0], [1], [0, 0, 1, 1], [], []>} : vector<9x32xf32>, vector<32x128xf32>, vector<9x128xf32> -> vector<9x128xf32>
    %441 = arith.addf %439, %440 : vector<9x128xf32>
    %442 = vector.extract_strided_slice %441 {offsets = [0, 0], sizes = [9, 32], strides = [1, 1]} : vector<9x128xf32> to vector<9x32xf32>
    %443 = arith.negf %442 : vector<9x32xf32>
    %444 = math.exp %443 : vector<9x32xf32>
    %cst_269 = arith.constant 1.000000e+00 : f32
    %445 = vector.broadcast %cst_269 : f32 to vector<9x32xf32>
    %446 = arith.addf %445, %444 : vector<9x32xf32>
    %447 = arith.divf %445, %446 : vector<9x32xf32>
    %448 = vector.extract_strided_slice %441 {offsets = [0, 32], sizes = [9, 32], strides = [1, 1]} : vector<9x128xf32> to vector<9x32xf32>
    %449 = arith.negf %448 : vector<9x32xf32>
    %450 = math.exp %449 : vector<9x32xf32>
    %cst_270 = arith.constant 1.000000e+00 : f32
    %451 = vector.broadcast %cst_270 : f32 to vector<9x32xf32>
    %452 = arith.addf %451, %450 : vector<9x32xf32>
    %453 = arith.divf %451, %452 : vector<9x32xf32>
    %454 = vector.extract_strided_slice %441 {offsets = [0, 64], sizes = [9, 32], strides = [1, 1]} : vector<9x128xf32> to vector<9x32xf32>
    %455 = math.tanh %454 : vector<9x32xf32>
    %456 = vector.extract_strided_slice %441 {offsets = [0, 96], sizes = [9, 32], strides = [1, 1]} : vector<9x128xf32> to vector<9x32xf32>
    %457 = arith.negf %456 : vector<9x32xf32>
    %458 = math.exp %457 : vector<9x32xf32>
    %cst_271 = arith.constant 1.000000e+00 : f32
    %459 = vector.broadcast %cst_271 : f32 to vector<9x32xf32>
    %460 = arith.addf %459, %458 : vector<9x32xf32>
    %461 = arith.divf %459, %460 : vector<9x32xf32>
    %462 = arith.mulf %453, %425 : vector<9x32xf32>
    %463 = arith.mulf %447, %455 : vector<9x32xf32>
    %464 = arith.addf %462, %463 : vector<9x32xf32>
    %465 = math.tanh %464 : vector<9x32xf32>
    %466 = arith.mulf %461, %465 : vector<9x32xf32>
    %c3_272 = arith.constant 3 : index
    %c0_273 = arith.constant 0 : index
    %c0_274 = arith.constant 0 : index
    %467 = vector.load %arg16[%c3_272, %c0_273, %c0_274] : memref<8x9x32xf32, #tpu.memory_space<vmem>>, vector<1x9x32xf32>
    %468 = vector.shape_cast %467 : vector<1x9x32xf32> to vector<9x32xf32>
    %469 = arith.mulf %468, %466 : vector<9x32xf32>
    %470 = arith.mulf %468, %464 : vector<9x32xf32>
    %cst_275 = arith.constant 1.000000e+00 : f32
    %471 = vector.broadcast %cst_275 : f32 to vector<9x32xf32>
    %472 = arith.subf %471, %468 : vector<9x32xf32>
    %473 = arith.mulf %472, %425 : vector<9x32xf32>
    %474 = arith.addf %470, %473 : vector<9x32xf32>
    %cst_276 = arith.constant 1.000000e+00 : f32
    %475 = vector.broadcast %cst_276 : f32 to vector<9x32xf32>
    %476 = arith.subf %475, %468 : vector<9x32xf32>
    %477 = arith.mulf %476, %429 : vector<9x32xf32>
    %478 = arith.addf %469, %477 : vector<9x32xf32>
    %479 = vector.extract_strided_slice %469 {offsets = [0, 0], sizes = [9, 16], strides = [1, 1]} : vector<9x32xf32> to vector<9x16xf32>
    %c3_277 = arith.constant 3 : index
    %c0_278 = arith.constant 0 : index
    %c0_279 = arith.constant 0 : index
    %480 = vector.load %arg17[%c3_277, %c0_278, %c0_279] : memref<8x9x32xf32, #tpu.memory_space<vmem>>, vector<1x9x16xf32>
    %481 = vector.shape_cast %480 : vector<1x9x16xf32> to vector<9x16xf32>
    %482 = vector.shape_cast %479 : vector<9x16xf32> to vector<1x9x16xf32>
    tpu.vector_store %arg17[%c3_277, %c0_278, %c0_279], %482 {strides = array<i32>} : memref<8x9x32xf32, #tpu.memory_space<vmem>>, vector<1x9x16xf32>,
    %483 = vector.extract_strided_slice %469 {offsets = [0, 16], sizes = [9, 16], strides = [1, 1]} : vector<9x32xf32> to vector<9x16xf32>
    %c4_280 = arith.constant 4 : index
    %c0_281 = arith.constant 0 : index
    %c16_282 = arith.constant 16 : index
    %484 = vector.load %arg17[%c4_280, %c0_281, %c16_282] : memref<8x9x32xf32, #tpu.memory_space<vmem>>, vector<1x9x16xf32>
    %485 = vector.shape_cast %484 : vector<1x9x16xf32> to vector<9x16xf32>
    %486 = vector.shape_cast %483 : vector<9x16xf32> to vector<1x9x16xf32>
    tpu.vector_store %arg17[%c4_280, %c0_281, %c16_282], %486 {strides = array<i32>} : memref<8x9x32xf32, #tpu.memory_space<vmem>>, vector<1x9x16xf32>,
    %c4_283 = arith.constant 4 : index
    %c0_284 = arith.constant 0 : index
    %c0_285 = arith.constant 0 : index
    %487 = vector.load %arg15[%c4_283, %c0_284, %c0_285] : memref<8x9x128xf32, #tpu.memory_space<vmem>>, vector<1x9x128xf32>
    %488 = vector.shape_cast %487 : vector<1x9x128xf32> to vector<9x128xf32>
    %cst_286 = arith.constant dense<0.000000e+00> : vector<9x128xf32>
    %489 = tpu.matmul %478, %288, %cst_286 {dimension_numbers = #tpu.dot_dimension_numbers<[1], [0], [0], [1], [0, 0, 1, 1], [], []>} : vector<9x32xf32>, vector<32x128xf32>, vector<9x128xf32> -> vector<9x128xf32>
    %490 = arith.addf %488, %489 : vector<9x128xf32>
    %491 = vector.extract_strided_slice %490 {offsets = [0, 0], sizes = [9, 32], strides = [1, 1]} : vector<9x128xf32> to vector<9x32xf32>
    %492 = arith.negf %491 : vector<9x32xf32>
    %493 = math.exp %492 : vector<9x32xf32>
    %cst_287 = arith.constant 1.000000e+00 : f32
    %494 = vector.broadcast %cst_287 : f32 to vector<9x32xf32>
    %495 = arith.addf %494, %493 : vector<9x32xf32>
    %496 = arith.divf %494, %495 : vector<9x32xf32>
    %497 = vector.extract_strided_slice %490 {offsets = [0, 32], sizes = [9, 32], strides = [1, 1]} : vector<9x128xf32> to vector<9x32xf32>
    %498 = arith.negf %497 : vector<9x32xf32>
    %499 = math.exp %498 : vector<9x32xf32>
    %cst_288 = arith.constant 1.000000e+00 : f32
    %500 = vector.broadcast %cst_288 : f32 to vector<9x32xf32>
    %501 = arith.addf %500, %499 : vector<9x32xf32>
    %502 = arith.divf %500, %501 : vector<9x32xf32>
    %503 = vector.extract_strided_slice %490 {offsets = [0, 64], sizes = [9, 32], strides = [1, 1]} : vector<9x128xf32> to vector<9x32xf32>
    %504 = math.tanh %503 : vector<9x32xf32>
    %505 = vector.extract_strided_slice %490 {offsets = [0, 96], sizes = [9, 32], strides = [1, 1]} : vector<9x128xf32> to vector<9x32xf32>
    %506 = arith.negf %505 : vector<9x32xf32>
    %507 = math.exp %506 : vector<9x32xf32>
    %cst_289 = arith.constant 1.000000e+00 : f32
    %508 = vector.broadcast %cst_289 : f32 to vector<9x32xf32>
    %509 = arith.addf %508, %507 : vector<9x32xf32>
    %510 = arith.divf %508, %509 : vector<9x32xf32>
    %511 = arith.mulf %502, %474 : vector<9x32xf32>
    %512 = arith.mulf %496, %504 : vector<9x32xf32>
    %513 = arith.addf %511, %512 : vector<9x32xf32>
    %514 = math.tanh %513 : vector<9x32xf32>
    %515 = arith.mulf %510, %514 : vector<9x32xf32>
    %c4_290 = arith.constant 4 : index
    %c0_291 = arith.constant 0 : index
    %c0_292 = arith.constant 0 : index
    %516 = vector.load %arg16[%c4_290, %c0_291, %c0_292] : memref<8x9x32xf32, #tpu.memory_space<vmem>>, vector<1x9x32xf32>
    %517 = vector.shape_cast %516 : vector<1x9x32xf32> to vector<9x32xf32>
    %518 = arith.mulf %517, %515 : vector<9x32xf32>
    %519 = arith.mulf %517, %513 : vector<9x32xf32>
    %cst_293 = arith.constant 1.000000e+00 : f32
    %520 = vector.broadcast %cst_293 : f32 to vector<9x32xf32>
    %521 = arith.subf %520, %517 : vector<9x32xf32>
    %522 = arith.mulf %521, %474 : vector<9x32xf32>
    %523 = arith.addf %519, %522 : vector<9x32xf32>
    %cst_294 = arith.constant 1.000000e+00 : f32
    %524 = vector.broadcast %cst_294 : f32 to vector<9x32xf32>
    %525 = arith.subf %524, %517 : vector<9x32xf32>
    %526 = arith.mulf %525, %478 : vector<9x32xf32>
    %527 = arith.addf %518, %526 : vector<9x32xf32>
    %528 = vector.extract_strided_slice %518 {offsets = [0, 0], sizes = [9, 16], strides = [1, 1]} : vector<9x32xf32> to vector<9x16xf32>
    %c4_295 = arith.constant 4 : index
    %c0_296 = arith.constant 0 : index
    %c0_297 = arith.constant 0 : index
    %529 = vector.load %arg17[%c4_295, %c0_296, %c0_297] : memref<8x9x32xf32, #tpu.memory_space<vmem>>, vector<1x9x16xf32>
    %530 = vector.shape_cast %529 : vector<1x9x16xf32> to vector<9x16xf32>
    %531 = vector.shape_cast %528 : vector<9x16xf32> to vector<1x9x16xf32>
    tpu.vector_store %arg17[%c4_295, %c0_296, %c0_297], %531 {strides = array<i32>} : memref<8x9x32xf32, #tpu.memory_space<vmem>>, vector<1x9x16xf32>,
    %532 = vector.extract_strided_slice %518 {offsets = [0, 16], sizes = [9, 16], strides = [1, 1]} : vector<9x32xf32> to vector<9x16xf32>
    %c3_298 = arith.constant 3 : index
    %c0_299 = arith.constant 0 : index
    %c16_300 = arith.constant 16 : index
    %533 = vector.load %arg17[%c3_298, %c0_299, %c16_300] : memref<8x9x32xf32, #tpu.memory_space<vmem>>, vector<1x9x16xf32>
    %534 = vector.shape_cast %533 : vector<1x9x16xf32> to vector<9x16xf32>
    %535 = vector.shape_cast %532 : vector<9x16xf32> to vector<1x9x16xf32>
    tpu.vector_store %arg17[%c3_298, %c0_299, %c16_300], %535 {strides = array<i32>} : memref<8x9x32xf32, #tpu.memory_space<vmem>>, vector<1x9x16xf32>,
    %c5_301 = arith.constant 5 : index
    %c0_302 = arith.constant 0 : index
    %c0_303 = arith.constant 0 : index
    %536 = vector.load %arg15[%c5_301, %c0_302, %c0_303] : memref<8x9x128xf32, #tpu.memory_space<vmem>>, vector<1x9x128xf32>
    %537 = vector.shape_cast %536 : vector<1x9x128xf32> to vector<9x128xf32>
    %cst_304 = arith.constant dense<0.000000e+00> : vector<9x128xf32>
    %538 = tpu.matmul %527, %288, %cst_304 {dimension_numbers = #tpu.dot_dimension_numbers<[1], [0], [0], [1], [0, 0, 1, 1], [], []>} : vector<9x32xf32>, vector<32x128xf32>, vector<9x128xf32> -> vector<9x128xf32>
    %539 = arith.addf %537, %538 : vector<9x128xf32>
    %540 = vector.extract_strided_slice %539 {offsets = [0, 0], sizes = [9, 32], strides = [1, 1]} : vector<9x128xf32> to vector<9x32xf32>
    %541 = arith.negf %540 : vector<9x32xf32>
    %542 = math.exp %541 : vector<9x32xf32>
    %cst_305 = arith.constant 1.000000e+00 : f32
    %543 = vector.broadcast %cst_305 : f32 to vector<9x32xf32>
    %544 = arith.addf %543, %542 : vector<9x32xf32>
    %545 = arith.divf %543, %544 : vector<9x32xf32>
    %546 = vector.extract_strided_slice %539 {offsets = [0, 32], sizes = [9, 32], strides = [1, 1]} : vector<9x128xf32> to vector<9x32xf32>
    %547 = arith.negf %546 : vector<9x32xf32>
    %548 = math.exp %547 : vector<9x32xf32>
    %cst_306 = arith.constant 1.000000e+00 : f32
    %549 = vector.broadcast %cst_306 : f32 to vector<9x32xf32>
    %550 = arith.addf %549, %548 : vector<9x32xf32>
    %551 = arith.divf %549, %550 : vector<9x32xf32>
    %552 = vector.extract_strided_slice %539 {offsets = [0, 64], sizes = [9, 32], strides = [1, 1]} : vector<9x128xf32> to vector<9x32xf32>
    %553 = math.tanh %552 : vector<9x32xf32>
    %554 = vector.extract_strided_slice %539 {offsets = [0, 96], sizes = [9, 32], strides = [1, 1]} : vector<9x128xf32> to vector<9x32xf32>
    %555 = arith.negf %554 : vector<9x32xf32>
    %556 = math.exp %555 : vector<9x32xf32>
    %cst_307 = arith.constant 1.000000e+00 : f32
    %557 = vector.broadcast %cst_307 : f32 to vector<9x32xf32>
    %558 = arith.addf %557, %556 : vector<9x32xf32>
    %559 = arith.divf %557, %558 : vector<9x32xf32>
    %560 = arith.mulf %551, %523 : vector<9x32xf32>
    %561 = arith.mulf %545, %553 : vector<9x32xf32>
    %562 = arith.addf %560, %561 : vector<9x32xf32>
    %563 = math.tanh %562 : vector<9x32xf32>
    %564 = arith.mulf %559, %563 : vector<9x32xf32>
    %c5_308 = arith.constant 5 : index
    %c0_309 = arith.constant 0 : index
    %c0_310 = arith.constant 0 : index
    %565 = vector.load %arg16[%c5_308, %c0_309, %c0_310] : memref<8x9x32xf32, #tpu.memory_space<vmem>>, vector<1x9x32xf32>
    %566 = vector.shape_cast %565 : vector<1x9x32xf32> to vector<9x32xf32>
    %567 = arith.mulf %566, %564 : vector<9x32xf32>
    %568 = arith.mulf %566, %562 : vector<9x32xf32>
    %cst_311 = arith.constant 1.000000e+00 : f32
    %569 = vector.broadcast %cst_311 : f32 to vector<9x32xf32>
    %570 = arith.subf %569, %566 : vector<9x32xf32>
    %571 = arith.mulf %570, %523 : vector<9x32xf32>
    %572 = arith.addf %568, %571 : vector<9x32xf32>
    %cst_312 = arith.constant 1.000000e+00 : f32
    %573 = vector.broadcast %cst_312 : f32 to vector<9x32xf32>
    %574 = arith.subf %573, %566 : vector<9x32xf32>
    %575 = arith.mulf %574, %527 : vector<9x32xf32>
    %576 = arith.addf %567, %575 : vector<9x32xf32>
    %577 = vector.extract_strided_slice %567 {offsets = [0, 0], sizes = [9, 16], strides = [1, 1]} : vector<9x32xf32> to vector<9x16xf32>
    %c5_313 = arith.constant 5 : index
    %c0_314 = arith.constant 0 : index
    %c0_315 = arith.constant 0 : index
    %578 = vector.load %arg17[%c5_313, %c0_314, %c0_315] : memref<8x9x32xf32, #tpu.memory_space<vmem>>, vector<1x9x16xf32>
    %579 = vector.shape_cast %578 : vector<1x9x16xf32> to vector<9x16xf32>
    %580 = vector.shape_cast %577 : vector<9x16xf32> to vector<1x9x16xf32>
    tpu.vector_store %arg17[%c5_313, %c0_314, %c0_315], %580 {strides = array<i32>} : memref<8x9x32xf32, #tpu.memory_space<vmem>>, vector<1x9x16xf32>,
    %581 = vector.extract_strided_slice %567 {offsets = [0, 16], sizes = [9, 16], strides = [1, 1]} : vector<9x32xf32> to vector<9x16xf32>
    %c2_316 = arith.constant 2 : index
    %c0_317 = arith.constant 0 : index
    %c16_318 = arith.constant 16 : index
    %582 = vector.load %arg17[%c2_316, %c0_317, %c16_318] : memref<8x9x32xf32, #tpu.memory_space<vmem>>, vector<1x9x16xf32>
    %583 = vector.shape_cast %582 : vector<1x9x16xf32> to vector<9x16xf32>
    %584 = vector.shape_cast %581 : vector<9x16xf32> to vector<1x9x16xf32>
    tpu.vector_store %arg17[%c2_316, %c0_317, %c16_318], %584 {strides = array<i32>} : memref<8x9x32xf32, #tpu.memory_space<vmem>>, vector<1x9x16xf32>,
    %c6_319 = arith.constant 6 : index
    %c0_320 = arith.constant 0 : index
    %c0_321 = arith.constant 0 : index
    %585 = vector.load %arg15[%c6_319, %c0_320, %c0_321] : memref<8x9x128xf32, #tpu.memory_space<vmem>>, vector<1x9x128xf32>
    %586 = vector.shape_cast %585 : vector<1x9x128xf32> to vector<9x128xf32>
    %cst_322 = arith.constant dense<0.000000e+00> : vector<9x128xf32>
    %587 = tpu.matmul %576, %288, %cst_322 {dimension_numbers = #tpu.dot_dimension_numbers<[1], [0], [0], [1], [0, 0, 1, 1], [], []>} : vector<9x32xf32>, vector<32x128xf32>, vector<9x128xf32> -> vector<9x128xf32>
    %588 = arith.addf %586, %587 : vector<9x128xf32>
    %589 = vector.extract_strided_slice %588 {offsets = [0, 0], sizes = [9, 32], strides = [1, 1]} : vector<9x128xf32> to vector<9x32xf32>
    %590 = arith.negf %589 : vector<9x32xf32>
    %591 = math.exp %590 : vector<9x32xf32>
    %cst_323 = arith.constant 1.000000e+00 : f32
    %592 = vector.broadcast %cst_323 : f32 to vector<9x32xf32>
    %593 = arith.addf %592, %591 : vector<9x32xf32>
    %594 = arith.divf %592, %593 : vector<9x32xf32>
    %595 = vector.extract_strided_slice %588 {offsets = [0, 32], sizes = [9, 32], strides = [1, 1]} : vector<9x128xf32> to vector<9x32xf32>
    %596 = arith.negf %595 : vector<9x32xf32>
    %597 = math.exp %596 : vector<9x32xf32>
    %cst_324 = arith.constant 1.000000e+00 : f32
    %598 = vector.broadcast %cst_324 : f32 to vector<9x32xf32>
    %599 = arith.addf %598, %597 : vector<9x32xf32>
    %600 = arith.divf %598, %599 : vector<9x32xf32>
    %601 = vector.extract_strided_slice %588 {offsets = [0, 64], sizes = [9, 32], strides = [1, 1]} : vector<9x128xf32> to vector<9x32xf32>
    %602 = math.tanh %601 : vector<9x32xf32>
    %603 = vector.extract_strided_slice %588 {offsets = [0, 96], sizes = [9, 32], strides = [1, 1]} : vector<9x128xf32> to vector<9x32xf32>
    %604 = arith.negf %603 : vector<9x32xf32>
    %605 = math.exp %604 : vector<9x32xf32>
    %cst_325 = arith.constant 1.000000e+00 : f32
    %606 = vector.broadcast %cst_325 : f32 to vector<9x32xf32>
    %607 = arith.addf %606, %605 : vector<9x32xf32>
    %608 = arith.divf %606, %607 : vector<9x32xf32>
    %609 = arith.mulf %600, %572 : vector<9x32xf32>
    %610 = arith.mulf %594, %602 : vector<9x32xf32>
    %611 = arith.addf %609, %610 : vector<9x32xf32>
    %612 = math.tanh %611 : vector<9x32xf32>
    %613 = arith.mulf %608, %612 : vector<9x32xf32>
    %c6_326 = arith.constant 6 : index
    %c0_327 = arith.constant 0 : index
    %c0_328 = arith.constant 0 : index
    %614 = vector.load %arg16[%c6_326, %c0_327, %c0_328] : memref<8x9x32xf32, #tpu.memory_space<vmem>>, vector<1x9x32xf32>
    %615 = vector.shape_cast %614 : vector<1x9x32xf32> to vector<9x32xf32>
    %616 = arith.mulf %615, %613 : vector<9x32xf32>
    %617 = arith.mulf %615, %611 : vector<9x32xf32>
    %cst_329 = arith.constant 1.000000e+00 : f32
    %618 = vector.broadcast %cst_329 : f32 to vector<9x32xf32>
    %619 = arith.subf %618, %615 : vector<9x32xf32>
    %620 = arith.mulf %619, %572 : vector<9x32xf32>
    %621 = arith.addf %617, %620 : vector<9x32xf32>
    %cst_330 = arith.constant 1.000000e+00 : f32
    %622 = vector.broadcast %cst_330 : f32 to vector<9x32xf32>
    %623 = arith.subf %622, %615 : vector<9x32xf32>
    %624 = arith.mulf %623, %576 : vector<9x32xf32>
    %625 = arith.addf %616, %624 : vector<9x32xf32>
    %626 = vector.extract_strided_slice %616 {offsets = [0, 0], sizes = [9, 16], strides = [1, 1]} : vector<9x32xf32> to vector<9x16xf32>
    %c6_331 = arith.constant 6 : index
    %c0_332 = arith.constant 0 : index
    %c0_333 = arith.constant 0 : index
    %627 = vector.load %arg17[%c6_331, %c0_332, %c0_333] : memref<8x9x32xf32, #tpu.memory_space<vmem>>, vector<1x9x16xf32>
    %628 = vector.shape_cast %627 : vector<1x9x16xf32> to vector<9x16xf32>
    %629 = vector.shape_cast %626 : vector<9x16xf32> to vector<1x9x16xf32>
    tpu.vector_store %arg17[%c6_331, %c0_332, %c0_333], %629 {strides = array<i32>} : memref<8x9x32xf32, #tpu.memory_space<vmem>>, vector<1x9x16xf32>,
    %630 = vector.extract_strided_slice %616 {offsets = [0, 16], sizes = [9, 16], strides = [1, 1]} : vector<9x32xf32> to vector<9x16xf32>
    %c1_334 = arith.constant 1 : index
    %c0_335 = arith.constant 0 : index
    %c16_336 = arith.constant 16 : index
    %631 = vector.load %arg17[%c1_334, %c0_335, %c16_336] : memref<8x9x32xf32, #tpu.memory_space<vmem>>, vector<1x9x16xf32>
    %632 = vector.shape_cast %631 : vector<1x9x16xf32> to vector<9x16xf32>
    %633 = vector.shape_cast %630 : vector<9x16xf32> to vector<1x9x16xf32>
    tpu.vector_store %arg17[%c1_334, %c0_335, %c16_336], %633 {strides = array<i32>} : memref<8x9x32xf32, #tpu.memory_space<vmem>>, vector<1x9x16xf32>,
    %c7_337 = arith.constant 7 : index
    %c0_338 = arith.constant 0 : index
    %c0_339 = arith.constant 0 : index
    %634 = vector.load %arg15[%c7_337, %c0_338, %c0_339] : memref<8x9x128xf32, #tpu.memory_space<vmem>>, vector<1x9x128xf32>
    %635 = vector.shape_cast %634 : vector<1x9x128xf32> to vector<9x128xf32>
    %cst_340 = arith.constant dense<0.000000e+00> : vector<9x128xf32>
    %636 = tpu.matmul %625, %288, %cst_340 {dimension_numbers = #tpu.dot_dimension_numbers<[1], [0], [0], [1], [0, 0, 1, 1], [], []>} : vector<9x32xf32>, vector<32x128xf32>, vector<9x128xf32> -> vector<9x128xf32>
    %637 = arith.addf %635, %636 : vector<9x128xf32>
    %638 = vector.extract_strided_slice %637 {offsets = [0, 0], sizes = [9, 32], strides = [1, 1]} : vector<9x128xf32> to vector<9x32xf32>
    %639 = arith.negf %638 : vector<9x32xf32>
    %640 = math.exp %639 : vector<9x32xf32>
    %cst_341 = arith.constant 1.000000e+00 : f32
    %641 = vector.broadcast %cst_341 : f32 to vector<9x32xf32>
    %642 = arith.addf %641, %640 : vector<9x32xf32>
    %643 = arith.divf %641, %642 : vector<9x32xf32>
    %644 = vector.extract_strided_slice %637 {offsets = [0, 32], sizes = [9, 32], strides = [1, 1]} : vector<9x128xf32> to vector<9x32xf32>
    %645 = arith.negf %644 : vector<9x32xf32>
    %646 = math.exp %645 : vector<9x32xf32>
    %cst_342 = arith.constant 1.000000e+00 : f32
    %647 = vector.broadcast %cst_342 : f32 to vector<9x32xf32>
    %648 = arith.addf %647, %646 : vector<9x32xf32>
    %649 = arith.divf %647, %648 : vector<9x32xf32>
    %650 = vector.extract_strided_slice %637 {offsets = [0, 64], sizes = [9, 32], strides = [1, 1]} : vector<9x128xf32> to vector<9x32xf32>
    %651 = math.tanh %650 : vector<9x32xf32>
    %652 = vector.extract_strided_slice %637 {offsets = [0, 96], sizes = [9, 32], strides = [1, 1]} : vector<9x128xf32> to vector<9x32xf32>
    %653 = arith.negf %652 : vector<9x32xf32>
    %654 = math.exp %653 : vector<9x32xf32>
    %cst_343 = arith.constant 1.000000e+00 : f32
    %655 = vector.broadcast %cst_343 : f32 to vector<9x32xf32>
    %656 = arith.addf %655, %654 : vector<9x32xf32>
    %657 = arith.divf %655, %656 : vector<9x32xf32>
    %658 = arith.mulf %649, %621 : vector<9x32xf32>
    %659 = arith.mulf %643, %651 : vector<9x32xf32>
    %660 = arith.addf %658, %659 : vector<9x32xf32>
    %661 = math.tanh %660 : vector<9x32xf32>
    %662 = arith.mulf %657, %661 : vector<9x32xf32>
    %c7_344 = arith.constant 7 : index
    %c0_345 = arith.constant 0 : index
    %c0_346 = arith.constant 0 : index
    %663 = vector.load %arg16[%c7_344, %c0_345, %c0_346] : memref<8x9x32xf32, #tpu.memory_space<vmem>>, vector<1x9x32xf32>
    %664 = vector.shape_cast %663 : vector<1x9x32xf32> to vector<9x32xf32>
    %665 = arith.mulf %664, %662 : vector<9x32xf32>
    %666 = vector.extract_strided_slice %665 {offsets = [0, 0], sizes = [9, 16], strides = [1, 1]} : vector<9x32xf32> to vector<9x16xf32>
    %c7_347 = arith.constant 7 : index
    %c0_348 = arith.constant 0 : index
    %c0_349 = arith.constant 0 : index
    %667 = vector.load %arg17[%c7_347, %c0_348, %c0_349] : memref<8x9x32xf32, #tpu.memory_space<vmem>>, vector<1x9x16xf32>
    %668 = vector.shape_cast %667 : vector<1x9x16xf32> to vector<9x16xf32>
    %669 = vector.shape_cast %666 : vector<9x16xf32> to vector<1x9x16xf32>
    tpu.vector_store %arg17[%c7_347, %c0_348, %c0_349], %669 {strides = array<i32>} : memref<8x9x32xf32, #tpu.memory_space<vmem>>, vector<1x9x16xf32>,
    %670 = vector.extract_strided_slice %665 {offsets = [0, 16], sizes = [9, 16], strides = [1, 1]} : vector<9x32xf32> to vector<9x16xf32>
    %c0_350 = arith.constant 0 : index
    %c0_351 = arith.constant 0 : index
    %c16_352 = arith.constant 16 : index
    %671 = vector.load %arg17[%c0_350, %c0_351, %c16_352] : memref<8x9x32xf32, #tpu.memory_space<vmem>>, vector<1x9x16xf32>
    %672 = vector.shape_cast %671 : vector<1x9x16xf32> to vector<9x16xf32>
    %673 = vector.shape_cast %670 : vector<9x16xf32> to vector<1x9x16xf32>
    tpu.vector_store %arg17[%c0_350, %c0_351, %c16_352], %673 {strides = array<i32>} : memref<8x9x32xf32, #tpu.memory_space<vmem>>, vector<1x9x16xf32>,
    %c0_353 = arith.constant 0 : index
    %c0_354 = arith.constant 0 : index
    %c0_355 = arith.constant 0 : index
    %674 = vector.load %arg17[%c0_353, %c0_354, %c0_355] : memref<8x9x32xf32, #tpu.memory_space<vmem>>, vector<8x9x32xf32>
    %675 = math.tanh %674 : vector<8x9x32xf32>
    %c0_356 = arith.constant 0 : index
    %c0_357 = arith.constant 0 : index
    %676 = vector.load %arg6[%c0_356, %c0_357] : memref<32x32xf32, #tpu.memory_space<vmem>>, vector<32x32xf32>
    %c0_358 = arith.constant 0 : index
    %c0_359 = arith.constant 0 : index
    %677 = vector.load %arg7[%c0_358, %c0_359] : memref<1x32xf32, #tpu.memory_space<vmem>>, vector<1x32xf32>
    %678 = vector.extract_strided_slice %675 {offsets = [0, 0, 0], sizes = [1, 9, 32], strides = [1, 1, 1]} : vector<8x9x32xf32> to vector<1x9x32xf32>
    %679 = vector.shape_cast %678 : vector<1x9x32xf32> to vector<9x32xf32>
    %cst_360 = arith.constant dense<0.000000e+00> : vector<9x32xf32>
    %680 = tpu.matmul %679, %676, %cst_360 {dimension_numbers = #tpu.dot_dimension_numbers<[1], [0], [0], [1], [0, 0, 1, 1], [], []>} : vector<9x32xf32>, vector<32x32xf32>, vector<9x32xf32> -> vector<9x32xf32>
    %681 = vector.broadcast %677 : vector<1x32xf32> to vector<9x32xf32>
    %682 = arith.addf %680, %681 : vector<9x32xf32>
    %683 = math.tanh %682 : vector<9x32xf32>
    %c0_361 = arith.constant 0 : index
    %c0_362 = arith.constant 0 : index
    %c0_363 = arith.constant 0 : index
    %684 = vector.load %arg12[%c0_361, %c0_362, %c0_363] : memref<8x9x32xf32, #tpu.memory_space<vmem>>, vector<1x9x32xf32>
    %685 = vector.shape_cast %684 : vector<1x9x32xf32> to vector<9x32xf32>
    %686 = vector.shape_cast %683 : vector<9x32xf32> to vector<1x9x32xf32>
    tpu.vector_store %arg12[%c0_361, %c0_362, %c0_363], %686 {strides = array<i32>} : memref<8x9x32xf32, #tpu.memory_space<vmem>>, vector<1x9x32xf32>,
    %687 = vector.extract_strided_slice %675 {offsets = [1, 0, 0], sizes = [1, 9, 32], strides = [1, 1, 1]} : vector<8x9x32xf32> to vector<1x9x32xf32>
    %688 = vector.shape_cast %687 : vector<1x9x32xf32> to vector<9x32xf32>
    %cst_364 = arith.constant dense<0.000000e+00> : vector<9x32xf32>
    %689 = tpu.matmul %688, %676, %cst_364 {dimension_numbers = #tpu.dot_dimension_numbers<[1], [0], [0], [1], [0, 0, 1, 1], [], []>} : vector<9x32xf32>, vector<32x32xf32>, vector<9x32xf32> -> vector<9x32xf32>
    %690 = vector.broadcast %677 : vector<1x32xf32> to vector<9x32xf32>
    %691 = arith.addf %689, %690 : vector<9x32xf32>
    %692 = math.tanh %691 : vector<9x32xf32>
    %c1_365 = arith.constant 1 : index
    %c0_366 = arith.constant 0 : index
    %c0_367 = arith.constant 0 : index
    %693 = vector.load %arg12[%c1_365, %c0_366, %c0_367] : memref<8x9x32xf32, #tpu.memory_space<vmem>>, vector<1x9x32xf32>
    %694 = vector.shape_cast %693 : vector<1x9x32xf32> to vector<9x32xf32>
    %695 = vector.shape_cast %692 : vector<9x32xf32> to vector<1x9x32xf32>
    tpu.vector_store %arg12[%c1_365, %c0_366, %c0_367], %695 {strides = array<i32>} : memref<8x9x32xf32, #tpu.memory_space<vmem>>, vector<1x9x32xf32>,
    %696 = vector.extract_strided_slice %675 {offsets = [2, 0, 0], sizes = [1, 9, 32], strides = [1, 1, 1]} : vector<8x9x32xf32> to vector<1x9x32xf32>
    %697 = vector.shape_cast %696 : vector<1x9x32xf32> to vector<9x32xf32>
    %cst_368 = arith.constant dense<0.000000e+00> : vector<9x32xf32>
    %698 = tpu.matmul %697, %676, %cst_368 {dimension_numbers = #tpu.dot_dimension_numbers<[1], [0], [0], [1], [0, 0, 1, 1], [], []>} : vector<9x32xf32>, vector<32x32xf32>, vector<9x32xf32> -> vector<9x32xf32>
    %699 = vector.broadcast %677 : vector<1x32xf32> to vector<9x32xf32>
    %700 = arith.addf %698, %699 : vector<9x32xf32>
    %701 = math.tanh %700 : vector<9x32xf32>
    %c2_369 = arith.constant 2 : index
    %c0_370 = arith.constant 0 : index
    %c0_371 = arith.constant 0 : index
    %702 = vector.load %arg12[%c2_369, %c0_370, %c0_371] : memref<8x9x32xf32, #tpu.memory_space<vmem>>, vector<1x9x32xf32>
    %703 = vector.shape_cast %702 : vector<1x9x32xf32> to vector<9x32xf32>
    %704 = vector.shape_cast %701 : vector<9x32xf32> to vector<1x9x32xf32>
    tpu.vector_store %arg12[%c2_369, %c0_370, %c0_371], %704 {strides = array<i32>} : memref<8x9x32xf32, #tpu.memory_space<vmem>>, vector<1x9x32xf32>,
    %705 = vector.extract_strided_slice %675 {offsets = [3, 0, 0], sizes = [1, 9, 32], strides = [1, 1, 1]} : vector<8x9x32xf32> to vector<1x9x32xf32>
    %706 = vector.shape_cast %705 : vector<1x9x32xf32> to vector<9x32xf32>
    %cst_372 = arith.constant dense<0.000000e+00> : vector<9x32xf32>
    %707 = tpu.matmul %706, %676, %cst_372 {dimension_numbers = #tpu.dot_dimension_numbers<[1], [0], [0], [1], [0, 0, 1, 1], [], []>} : vector<9x32xf32>, vector<32x32xf32>, vector<9x32xf32> -> vector<9x32xf32>
    %708 = vector.broadcast %677 : vector<1x32xf32> to vector<9x32xf32>
    %709 = arith.addf %707, %708 : vector<9x32xf32>
    %710 = math.tanh %709 : vector<9x32xf32>
    %c3_373 = arith.constant 3 : index
    %c0_374 = arith.constant 0 : index
    %c0_375 = arith.constant 0 : index
    %711 = vector.load %arg12[%c3_373, %c0_374, %c0_375] : memref<8x9x32xf32, #tpu.memory_space<vmem>>, vector<1x9x32xf32>
    %712 = vector.shape_cast %711 : vector<1x9x32xf32> to vector<9x32xf32>
    %713 = vector.shape_cast %710 : vector<9x32xf32> to vector<1x9x32xf32>
    tpu.vector_store %arg12[%c3_373, %c0_374, %c0_375], %713 {strides = array<i32>} : memref<8x9x32xf32, #tpu.memory_space<vmem>>, vector<1x9x32xf32>,
    %714 = vector.extract_strided_slice %675 {offsets = [4, 0, 0], sizes = [1, 9, 32], strides = [1, 1, 1]} : vector<8x9x32xf32> to vector<1x9x32xf32>
    %715 = vector.shape_cast %714 : vector<1x9x32xf32> to vector<9x32xf32>
    %cst_376 = arith.constant dense<0.000000e+00> : vector<9x32xf32>
    %716 = tpu.matmul %715, %676, %cst_376 {dimension_numbers = #tpu.dot_dimension_numbers<[1], [0], [0], [1], [0, 0, 1, 1], [], []>} : vector<9x32xf32>, vector<32x32xf32>, vector<9x32xf32> -> vector<9x32xf32>
    %717 = vector.broadcast %677 : vector<1x32xf32> to vector<9x32xf32>
    %718 = arith.addf %716, %717 : vector<9x32xf32>
    %719 = math.tanh %718 : vector<9x32xf32>
    %c4_377 = arith.constant 4 : index
    %c0_378 = arith.constant 0 : index
    %c0_379 = arith.constant 0 : index
    %720 = vector.load %arg12[%c4_377, %c0_378, %c0_379] : memref<8x9x32xf32, #tpu.memory_space<vmem>>, vector<1x9x32xf32>
    %721 = vector.shape_cast %720 : vector<1x9x32xf32> to vector<9x32xf32>
    %722 = vector.shape_cast %719 : vector<9x32xf32> to vector<1x9x32xf32>
    tpu.vector_store %arg12[%c4_377, %c0_378, %c0_379], %722 {strides = array<i32>} : memref<8x9x32xf32, #tpu.memory_space<vmem>>, vector<1x9x32xf32>,
    %723 = vector.extract_strided_slice %675 {offsets = [5, 0, 0], sizes = [1, 9, 32], strides = [1, 1, 1]} : vector<8x9x32xf32> to vector<1x9x32xf32>
    %724 = vector.shape_cast %723 : vector<1x9x32xf32> to vector<9x32xf32>
    %cst_380 = arith.constant dense<0.000000e+00> : vector<9x32xf32>
    %725 = tpu.matmul %724, %676, %cst_380 {dimension_numbers = #tpu.dot_dimension_numbers<[1], [0], [0], [1], [0, 0, 1, 1], [], []>} : vector<9x32xf32>, vector<32x32xf32>, vector<9x32xf32> -> vector<9x32xf32>
    %726 = vector.broadcast %677 : vector<1x32xf32> to vector<9x32xf32>
    %727 = arith.addf %725, %726 : vector<9x32xf32>
    %728 = math.tanh %727 : vector<9x32xf32>
    %c5_381 = arith.constant 5 : index
    %c0_382 = arith.constant 0 : index
    %c0_383 = arith.constant 0 : index
    %729 = vector.load %arg12[%c5_381, %c0_382, %c0_383] : memref<8x9x32xf32, #tpu.memory_space<vmem>>, vector<1x9x32xf32>
    %730 = vector.shape_cast %729 : vector<1x9x32xf32> to vector<9x32xf32>
    %731 = vector.shape_cast %728 : vector<9x32xf32> to vector<1x9x32xf32>
    tpu.vector_store %arg12[%c5_381, %c0_382, %c0_383], %731 {strides = array<i32>} : memref<8x9x32xf32, #tpu.memory_space<vmem>>, vector<1x9x32xf32>,
    %732 = vector.extract_strided_slice %675 {offsets = [6, 0, 0], sizes = [1, 9, 32], strides = [1, 1, 1]} : vector<8x9x32xf32> to vector<1x9x32xf32>
    %733 = vector.shape_cast %732 : vector<1x9x32xf32> to vector<9x32xf32>
    %cst_384 = arith.constant dense<0.000000e+00> : vector<9x32xf32>
    %734 = tpu.matmul %733, %676, %cst_384 {dimension_numbers = #tpu.dot_dimension_numbers<[1], [0], [0], [1], [0, 0, 1, 1], [], []>} : vector<9x32xf32>, vector<32x32xf32>, vector<9x32xf32> -> vector<9x32xf32>
    %735 = vector.broadcast %677 : vector<1x32xf32> to vector<9x32xf32>
    %736 = arith.addf %734, %735 : vector<9x32xf32>
    %737 = math.tanh %736 : vector<9x32xf32>
    %c6_385 = arith.constant 6 : index
    %c0_386 = arith.constant 0 : index
    %c0_387 = arith.constant 0 : index
    %738 = vector.load %arg12[%c6_385, %c0_386, %c0_387] : memref<8x9x32xf32, #tpu.memory_space<vmem>>, vector<1x9x32xf32>
    %739 = vector.shape_cast %738 : vector<1x9x32xf32> to vector<9x32xf32>
    %740 = vector.shape_cast %737 : vector<9x32xf32> to vector<1x9x32xf32>
    tpu.vector_store %arg12[%c6_385, %c0_386, %c0_387], %740 {strides = array<i32>} : memref<8x9x32xf32, #tpu.memory_space<vmem>>, vector<1x9x32xf32>,
    %741 = vector.extract_strided_slice %675 {offsets = [7, 0, 0], sizes = [1, 9, 32], strides = [1, 1, 1]} : vector<8x9x32xf32> to vector<1x9x32xf32>
    %742 = vector.shape_cast %741 : vector<1x9x32xf32> to vector<9x32xf32>
    %cst_388 = arith.constant dense<0.000000e+00> : vector<9x32xf32>
    %743 = tpu.matmul %742, %676, %cst_388 {dimension_numbers = #tpu.dot_dimension_numbers<[1], [0], [0], [1], [0, 0, 1, 1], [], []>} : vector<9x32xf32>, vector<32x32xf32>, vector<9x32xf32> -> vector<9x32xf32>
    %744 = vector.broadcast %677 : vector<1x32xf32> to vector<9x32xf32>
    %745 = arith.addf %743, %744 : vector<9x32xf32>
    %746 = math.tanh %745 : vector<9x32xf32>
    %c7_389 = arith.constant 7 : index
    %c0_390 = arith.constant 0 : index
    %c0_391 = arith.constant 0 : index
    %747 = vector.load %arg12[%c7_389, %c0_390, %c0_391] : memref<8x9x32xf32, #tpu.memory_space<vmem>>, vector<1x9x32xf32>
    %748 = vector.shape_cast %747 : vector<1x9x32xf32> to vector<9x32xf32>
    %749 = vector.shape_cast %746 : vector<9x32xf32> to vector<1x9x32xf32>
    tpu.vector_store %arg12[%c7_389, %c0_390, %c0_391], %749 {strides = array<i32>} : memref<8x9x32xf32, #tpu.memory_space<vmem>>, vector<1x9x32xf32>,
    %c0_392 = arith.constant 0 : index
    %c0_393 = arith.constant 0 : index
    %c0_394 = arith.constant 0 : index
    %750 = vector.load %arg12[%c0_392, %c0_393, %c0_394] : memref<8x9x32xf32, #tpu.memory_space<vmem>>, vector<8x9x32xf32>
    %751 = vector.shape_cast %6 : vector<9x32xf32> to vector<1x9x32xf32>
    %752 = vector.broadcast %751 : vector<1x9x32xf32> to vector<8x9x32xf32>
    %753 = arith.mulf %750, %752 : vector<8x9x32xf32>
    %cst_395 = arith.constant dense<0.000000e+00> : vector<8x9xf32>
    %754 = vector.multi_reduction <add>, %753, %cst_395 [2] : vector<8x9x32xf32> to vector<8x9xf32>
    %755 = vector.shape_cast %754 : vector<8x9xf32> to vector<8x9x1xf32>
    %cst_396 = arith.constant 3.200000e+01 : f32
    %756 = vector.broadcast %cst_396 : f32 to vector<8x9x1xf32>
    %757 = arith.divf %755, %756 : vector<8x9x1xf32>
    %758 = math.exp %757 : vector<8x9x1xf32>
    %c0_397 = arith.constant 0 : index
    %c0_398 = arith.constant 0 : index
    %c0_399 = arith.constant 0 : index
    %759 = vector.load %arg1[%c0_397, %c0_398, %c0_399] : memref<8x9x1xf32, #tpu.memory_space<vmem>>, vector<8x9x1xf32>
    %760 = arith.mulf %758, %759 : vector<8x9x1xf32>
    %cst_400 = arith.constant dense<0.000000e+00> : vector<9x1xf32>
    %761 = vector.multi_reduction <add>, %760, %cst_400 [0] : vector<8x9x1xf32> to vector<9x1xf32>
    %762 = vector.shape_cast %761 : vector<9x1xf32> to vector<1x9x1xf32>
    %cst_401 = arith.constant 9.99999974E-5 : f32
    %763 = vector.broadcast %cst_401 : f32 to vector<1x9x1xf32>
    %764 = arith.addf %762, %763 : vector<1x9x1xf32>
    %765 = vector.broadcast %764 : vector<1x9x1xf32> to vector<8x9x1xf32>
    %766 = arith.divf %760, %765 : vector<8x9x1xf32>
    %c0_402 = arith.constant 0 : index
    %c0_403 = arith.constant 0 : index
    %c0_404 = arith.constant 0 : index
    %767 = vector.load %arg11[%c0_402, %c0_403, %c0_404] : memref<8x9x1xf32, #tpu.memory_space<vmem>>, vector<8x9x1xf32>
    tpu.vector_store %arg11[%c0_402, %c0_403, %c0_404], %766 {strides = array<i32>} : memref<8x9x1xf32, #tpu.memory_space<vmem>>, vector<8x9x1xf32>,
    %768 = vector.broadcast %766 : vector<8x9x1xf32> to vector<8x9x32xf32>
    %769 = arith.mulf %675, %768 : vector<8x9x32xf32>
    %cst_405 = arith.constant dense<0.000000e+00> : vector<9x32xf32>
    %770 = vector.multi_reduction <add>, %769, %cst_405 [0] : vector<8x9x32xf32> to vector<9x32xf32>
    %c0_406 = arith.constant 0 : index
    %c0_407 = arith.constant 0 : index
    %771 = vector.load %arg10[%c0_406, %c0_407] : memref<9x32xf32, #tpu.memory_space<vmem>>, vector<9x32xf32>
    tpu.vector_store %arg10[%c0_406, %c0_407], %770 {strides = array<i32>} : memref<9x32xf32, #tpu.memory_space<vmem>>, vector<9x32xf32>,
    return
  }
}

module attributes {stable_mosaic.version = 11 : i64} {
  func.func @_ui_birnn_attn_kernel(%arg0: memref<4x3x32xf32, #tpu.memory_space<vmem>>, %arg1: memref<4x3x1xf32, #tpu.memory_space<vmem>>, %arg2: memref<3x40xf32, #tpu.memory_space<vmem>>, %arg3: memref<32x128xf32, #tpu.memory_space<vmem>>, %arg4: memref<32x128xf32, #tpu.memory_space<vmem>>, %arg5: memref<1x128xf32, #tpu.memory_space<vmem>>, %arg6: memref<32x32xf32, #tpu.memory_space<vmem>>, %arg7: memref<1x32xf32, #tpu.memory_space<vmem>>, %arg8: memref<40x32xf32, #tpu.memory_space<vmem>>, %arg9: memref<1x32xf32, #tpu.memory_space<vmem>>, %arg10: memref<3x32xf32, #tpu.memory_space<vmem>>, %arg11: memref<4x3x1xf32, #tpu.memory_space<vmem>>, %arg12: memref<4x3x32xf32, #tpu.memory_space<vmem>>, %arg13: memref<3x32xf32, #tpu.memory_space<vmem>>, %arg14: memref<4x3x128xf32, #tpu.memory_space<vmem>>, %arg15: memref<4x3x128xf32, #tpu.memory_space<vmem>>, %arg16: memref<4x3x32xf32, #tpu.memory_space<vmem>>, %arg17: memref<4x3x32xf32, #tpu.memory_space<vmem>>) attributes {dimension_semantics = [], scalar_prefetch = 0 : i64, scratch_operands = 4 : i64, tpu.core_type = #tpu.core_type<tc>} {
    %c0 = arith.constant 0 : index
    %c0_0 = arith.constant 0 : index
    %0 = vector.load %arg2[%c0, %c0_0] : memref<3x40xf32, #tpu.memory_space<vmem>>, vector<3x40xf32>
    %c0_1 = arith.constant 0 : index
    %c0_2 = arith.constant 0 : index
    %1 = vector.load %arg8[%c0_1, %c0_2] : memref<40x32xf32, #tpu.memory_space<vmem>>, vector<40x32xf32>
    %cst = arith.constant dense<0.000000e+00> : vector<3x32xf32>
    %2 = tpu.matmul %0, %1, %cst {dimension_numbers = #tpu.dot_dimension_numbers<[1], [0], [0], [1], [0, 0, 1, 1], [], []>} : vector<3x40xf32>, vector<40x32xf32>, vector<3x32xf32> -> vector<3x32xf32>
    %c0_3 = arith.constant 0 : index
    %c0_4 = arith.constant 0 : index
    %3 = vector.load %arg9[%c0_3, %c0_4] : memref<1x32xf32, #tpu.memory_space<vmem>>, vector<1x32xf32>
    %4 = vector.broadcast %3 : vector<1x32xf32> to vector<3x32xf32>
    %5 = arith.addf %2, %4 : vector<3x32xf32>
    %6 = math.tanh %5 : vector<3x32xf32>
    %c0_5 = arith.constant 0 : index
    %c0_6 = arith.constant 0 : index
    %7 = vector.load %arg13[%c0_5, %c0_6] : memref<3x32xf32, #tpu.memory_space<vmem>>, vector<3x32xf32>
    tpu.vector_store %arg13[%c0_5, %c0_6], %6 {strides = array<i32>} : memref<3x32xf32, #tpu.memory_space<vmem>>, vector<3x32xf32>,
    %8 = tpu.iota {dimensions = array<i32: 1>} : vector<1x128xi32>
    %c32_i32 = arith.constant 32 : i32
    %c0_i32 = arith.constant 0 : i32
    %9 = arith.cmpi eq, %c32_i32, %c0_i32 : i32
    %c1_i32 = arith.constant 1 : i32
    %10 = arith.select %9, %c1_i32, %c32_i32 : i32
    %11 = vector.broadcast %10 : i32 to vector<1x128xi32>
    %12 = arith.remsi %8, %11 : vector<1x128xi32>
    %c0_i32_7 = arith.constant 0 : i32
    %13 = vector.broadcast %c0_i32_7 : i32 to vector<1x128xi32>
    %14 = arith.cmpi ne, %12, %13 : vector<1x128xi32>
    %c0_i32_8 = arith.constant 0 : i32
    %15 = vector.broadcast %c0_i32_8 : i32 to vector<1x128xi32>
    %16 = arith.cmpi slt, %12, %15 : vector<1x128xi32>
    %c0_i32_9 = arith.constant 0 : i32
    %17 = arith.cmpi slt, %10, %c0_i32_9 : i32
    %18 = vector.broadcast %17 : i1 to vector<1x128xi1>
    %19 = vector.broadcast %18 : vector<1x128xi1> to vector<1x128xi1>
    %20 = arith.xori %16, %19 : vector<1x128xi1>
    %21 = arith.andi %20, %14 : vector<1x128xi1>
    %22 = vector.broadcast %10 : i32 to vector<1x128xi32>
    %23 = arith.addi %12, %22 : vector<1x128xi32>
    %24 = arith.select %21, %23, %12 : vector<1x128xi1>, vector<1x128xi32>
    %c16_i32 = arith.constant 16 : i32
    %25 = vector.broadcast %c16_i32 : i32 to vector<1x128xi32>
    %26 = arith.cmpi slt, %24, %25 : vector<1x128xi32>
    %27 = tpu.iota {dimensions = array<i32: 1>} : vector<1x32xi32>
    %c16_i32_10 = arith.constant 16 : i32
    %28 = vector.broadcast %c16_i32_10 : i32 to vector<1x32xi32>
    %29 = arith.cmpi slt, %27, %28 : vector<1x32xi32>
    %c0_11 = arith.constant 0 : index
    %c0_12 = arith.constant 0 : index
    %30 = vector.load %arg3[%c0_11, %c0_12] : memref<32x128xf32, #tpu.memory_space<vmem>>, vector<32x128xf32>
    %c0_13 = arith.constant 0 : index
    %c0_14 = arith.constant 0 : index
    %31 = vector.load %arg5[%c0_13, %c0_14] : memref<1x128xf32, #tpu.memory_space<vmem>>, vector<1x128xf32>
    %c0_15 = arith.constant 0 : index
    %c0_16 = arith.constant 0 : index
    %c0_17 = arith.constant 0 : index
    %32 = vector.load %arg0[%c0_15, %c0_16, %c0_17] : memref<4x3x32xf32, #tpu.memory_space<vmem>>, vector<1x3x32xf32>
    %33 = vector.shape_cast %32 : vector<1x3x32xf32> to vector<3x32xf32>
    %cst_18 = arith.constant dense<0.000000e+00> : vector<3x128xf32>
    %34 = tpu.matmul %33, %30, %cst_18 {dimension_numbers = #tpu.dot_dimension_numbers<[1], [0], [0], [1], [0, 0, 1, 1], [], []>} : vector<3x32xf32>, vector<32x128xf32>, vector<3x128xf32> -> vector<3x128xf32>
    %35 = vector.broadcast %31 : vector<1x128xf32> to vector<3x128xf32>
    %36 = arith.addf %34, %35 : vector<3x128xf32>
    %c0_19 = arith.constant 0 : index
    %c0_20 = arith.constant 0 : index
    %c0_21 = arith.constant 0 : index
    %37 = vector.load %arg14[%c0_19, %c0_20, %c0_21] : memref<4x3x128xf32, #tpu.memory_space<vmem>>, vector<1x3x128xf32>
    %38 = vector.shape_cast %37 : vector<1x3x128xf32> to vector<3x128xf32>
    %39 = vector.shape_cast %36 : vector<3x128xf32> to vector<1x3x128xf32>
    tpu.vector_store %arg14[%c0_19, %c0_20, %c0_21], %39 {strides = array<i32>} : memref<4x3x128xf32, #tpu.memory_space<vmem>>, vector<1x3x128xf32>,
    %c1 = arith.constant 1 : index
    %c0_22 = arith.constant 0 : index
    %c0_23 = arith.constant 0 : index
    %40 = vector.load %arg0[%c1, %c0_22, %c0_23] : memref<4x3x32xf32, #tpu.memory_space<vmem>>, vector<1x3x32xf32>
    %41 = vector.shape_cast %40 : vector<1x3x32xf32> to vector<3x32xf32>
    %cst_24 = arith.constant dense<0.000000e+00> : vector<3x128xf32>
    %42 = tpu.matmul %41, %30, %cst_24 {dimension_numbers = #tpu.dot_dimension_numbers<[1], [0], [0], [1], [0, 0, 1, 1], [], []>} : vector<3x32xf32>, vector<32x128xf32>, vector<3x128xf32> -> vector<3x128xf32>
    %43 = vector.broadcast %31 : vector<1x128xf32> to vector<3x128xf32>
    %44 = arith.addf %42, %43 : vector<3x128xf32>
    %c1_25 = arith.constant 1 : index
    %c0_26 = arith.constant 0 : index
    %c0_27 = arith.constant 0 : index
    %45 = vector.load %arg14[%c1_25, %c0_26, %c0_27] : memref<4x3x128xf32, #tpu.memory_space<vmem>>, vector<1x3x128xf32>
    %46 = vector.shape_cast %45 : vector<1x3x128xf32> to vector<3x128xf32>
    %47 = vector.shape_cast %44 : vector<3x128xf32> to vector<1x3x128xf32>
    tpu.vector_store %arg14[%c1_25, %c0_26, %c0_27], %47 {strides = array<i32>} : memref<4x3x128xf32, #tpu.memory_space<vmem>>, vector<1x3x128xf32>,
    %c2 = arith.constant 2 : index
    %c0_28 = arith.constant 0 : index
    %c0_29 = arith.constant 0 : index
    %48 = vector.load %arg0[%c2, %c0_28, %c0_29] : memref<4x3x32xf32, #tpu.memory_space<vmem>>, vector<1x3x32xf32>
    %49 = vector.shape_cast %48 : vector<1x3x32xf32> to vector<3x32xf32>
    %cst_30 = arith.constant dense<0.000000e+00> : vector<3x128xf32>
    %50 = tpu.matmul %49, %30, %cst_30 {dimension_numbers = #tpu.dot_dimension_numbers<[1], [0], [0], [1], [0, 0, 1, 1], [], []>} : vector<3x32xf32>, vector<32x128xf32>, vector<3x128xf32> -> vector<3x128xf32>
    %51 = vector.broadcast %31 : vector<1x128xf32> to vector<3x128xf32>
    %52 = arith.addf %50, %51 : vector<3x128xf32>
    %c2_31 = arith.constant 2 : index
    %c0_32 = arith.constant 0 : index
    %c0_33 = arith.constant 0 : index
    %53 = vector.load %arg14[%c2_31, %c0_32, %c0_33] : memref<4x3x128xf32, #tpu.memory_space<vmem>>, vector<1x3x128xf32>
    %54 = vector.shape_cast %53 : vector<1x3x128xf32> to vector<3x128xf32>
    %55 = vector.shape_cast %52 : vector<3x128xf32> to vector<1x3x128xf32>
    tpu.vector_store %arg14[%c2_31, %c0_32, %c0_33], %55 {strides = array<i32>} : memref<4x3x128xf32, #tpu.memory_space<vmem>>, vector<1x3x128xf32>,
    %c3 = arith.constant 3 : index
    %c0_34 = arith.constant 0 : index
    %c0_35 = arith.constant 0 : index
    %56 = vector.load %arg0[%c3, %c0_34, %c0_35] : memref<4x3x32xf32, #tpu.memory_space<vmem>>, vector<1x3x32xf32>
    %57 = vector.shape_cast %56 : vector<1x3x32xf32> to vector<3x32xf32>
    %cst_36 = arith.constant dense<0.000000e+00> : vector<3x128xf32>
    %58 = tpu.matmul %57, %30, %cst_36 {dimension_numbers = #tpu.dot_dimension_numbers<[1], [0], [0], [1], [0, 0, 1, 1], [], []>} : vector<3x32xf32>, vector<32x128xf32>, vector<3x128xf32> -> vector<3x128xf32>
    %59 = vector.broadcast %31 : vector<1x128xf32> to vector<3x128xf32>
    %60 = arith.addf %58, %59 : vector<3x128xf32>
    %c3_37 = arith.constant 3 : index
    %c0_38 = arith.constant 0 : index
    %c0_39 = arith.constant 0 : index
    %61 = vector.load %arg14[%c3_37, %c0_38, %c0_39] : memref<4x3x128xf32, #tpu.memory_space<vmem>>, vector<1x3x128xf32>
    %62 = vector.shape_cast %61 : vector<1x3x128xf32> to vector<3x128xf32>
    %63 = vector.shape_cast %60 : vector<3x128xf32> to vector<1x3x128xf32>
    tpu.vector_store %arg14[%c3_37, %c0_38, %c0_39], %63 {strides = array<i32>} : memref<4x3x128xf32, #tpu.memory_space<vmem>>, vector<1x3x128xf32>,
    %c0_40 = arith.constant 0 : index
    %c0_41 = arith.constant 0 : index
    %c0_42 = arith.constant 0 : index
    %64 = vector.load %arg14[%c0_40, %c0_41, %c0_42] : memref<4x3x128xf32, #tpu.memory_space<vmem>>, vector<1x3x128xf32>
    %65 = vector.shape_cast %64 : vector<1x3x128xf32> to vector<3x128xf32>
    %c3_43 = arith.constant 3 : index
    %c0_44 = arith.constant 0 : index
    %c0_45 = arith.constant 0 : index
    %66 = vector.load %arg14[%c3_43, %c0_44, %c0_45] : memref<4x3x128xf32, #tpu.memory_space<vmem>>, vector<1x3x128xf32>
    %67 = vector.shape_cast %66 : vector<1x3x128xf32> to vector<3x128xf32>
    %68 = vector.shape_cast %26 : vector<1x128xi1> to vector<1x128xi1>
    %69 = vector.broadcast %68 : vector<1x128xi1> to vector<3x128xi1>
    %70 = arith.select %69, %65, %67 : vector<3x128xi1>, vector<3x128xf32>
    %c0_46 = arith.constant 0 : index
    %c0_47 = arith.constant 0 : index
    %c0_48 = arith.constant 0 : index
    %71 = vector.load %arg15[%c0_46, %c0_47, %c0_48] : memref<4x3x128xf32, #tpu.memory_space<vmem>>, vector<1x3x128xf32>
    %72 = vector.shape_cast %71 : vector<1x3x128xf32> to vector<3x128xf32>
    %73 = vector.shape_cast %70 : vector<3x128xf32> to vector<1x3x128xf32>
    tpu.vector_store %arg15[%c0_46, %c0_47, %c0_48], %73 {strides = array<i32>} : memref<4x3x128xf32, #tpu.memory_space<vmem>>, vector<1x3x128xf32>,
    %c0_49 = arith.constant 0 : index
    %c0_50 = arith.constant 0 : index
    %c0_51 = arith.constant 0 : index
    %74 = vector.load %arg1[%c0_49, %c0_50, %c0_51] : memref<4x3x1xf32, #tpu.memory_space<vmem>>, vector<1x3x1xf32>
    %75 = vector.shape_cast %74 : vector<1x3x1xf32> to vector<3x1xf32>
    %c3_52 = arith.constant 3 : index
    %c0_53 = arith.constant 0 : index
    %c0_54 = arith.constant 0 : index
    %76 = vector.load %arg1[%c3_52, %c0_53, %c0_54] : memref<4x3x1xf32, #tpu.memory_space<vmem>>, vector<1x3x1xf32>
    %77 = vector.shape_cast %76 : vector<1x3x1xf32> to vector<3x1xf32>
    %78 = vector.shape_cast %29 : vector<1x32xi1> to vector<1x32xi1>
    %79 = vector.broadcast %78 : vector<1x32xi1> to vector<3x32xi1>
    %80 = vector.shape_cast %75 : vector<3x1xf32> to vector<3x1xf32>
    %81 = vector.broadcast %80 : vector<3x1xf32> to vector<3x32xf32>
    %82 = vector.shape_cast %77 : vector<3x1xf32> to vector<3x1xf32>
    %83 = vector.broadcast %82 : vector<3x1xf32> to vector<3x32xf32>
    %84 = arith.select %79, %81, %83 : vector<3x32xi1>, vector<3x32xf32>
    %c0_55 = arith.constant 0 : index
    %c0_56 = arith.constant 0 : index
    %c0_57 = arith.constant 0 : index
    %85 = vector.load %arg16[%c0_55, %c0_56, %c0_57] : memref<4x3x32xf32, #tpu.memory_space<vmem>>, vector<1x3x32xf32>
    %86 = vector.shape_cast %85 : vector<1x3x32xf32> to vector<3x32xf32>
    %87 = vector.shape_cast %84 : vector<3x32xf32> to vector<1x3x32xf32>
    tpu.vector_store %arg16[%c0_55, %c0_56, %c0_57], %87 {strides = array<i32>} : memref<4x3x32xf32, #tpu.memory_space<vmem>>, vector<1x3x32xf32>,
    %c1_58 = arith.constant 1 : index
    %c0_59 = arith.constant 0 : index
    %c0_60 = arith.constant 0 : index
    %88 = vector.load %arg14[%c1_58, %c0_59, %c0_60] : memref<4x3x128xf32, #tpu.memory_space<vmem>>, vector<1x3x128xf32>
    %89 = vector.shape_cast %88 : vector<1x3x128xf32> to vector<3x128xf32>
    %c2_61 = arith.constant 2 : index
    %c0_62 = arith.constant 0 : index
    %c0_63 = arith.constant 0 : index
    %90 = vector.load %arg14[%c2_61, %c0_62, %c0_63] : memref<4x3x128xf32, #tpu.memory_space<vmem>>, vector<1x3x128xf32>
    %91 = vector.shape_cast %90 : vector<1x3x128xf32> to vector<3x128xf32>
    %92 = vector.shape_cast %26 : vector<1x128xi1> to vector<1x128xi1>
    %93 = vector.broadcast %92 : vector<1x128xi1> to vector<3x128xi1>
    %94 = arith.select %93, %89, %91 : vector<3x128xi1>, vector<3x128xf32>
    %c1_64 = arith.constant 1 : index
    %c0_65 = arith.constant 0 : index
    %c0_66 = arith.constant 0 : index
    %95 = vector.load %arg15[%c1_64, %c0_65, %c0_66] : memref<4x3x128xf32, #tpu.memory_space<vmem>>, vector<1x3x128xf32>
    %96 = vector.shape_cast %95 : vector<1x3x128xf32> to vector<3x128xf32>
    %97 = vector.shape_cast %94 : vector<3x128xf32> to vector<1x3x128xf32>
    tpu.vector_store %arg15[%c1_64, %c0_65, %c0_66], %97 {strides = array<i32>} : memref<4x3x128xf32, #tpu.memory_space<vmem>>, vector<1x3x128xf32>,
    %c1_67 = arith.constant 1 : index
    %c0_68 = arith.constant 0 : index
    %c0_69 = arith.constant 0 : index
    %98 = vector.load %arg1[%c1_67, %c0_68, %c0_69] : memref<4x3x1xf32, #tpu.memory_space<vmem>>, vector<1x3x1xf32>
    %99 = vector.shape_cast %98 : vector<1x3x1xf32> to vector<3x1xf32>
    %c2_70 = arith.constant 2 : index
    %c0_71 = arith.constant 0 : index
    %c0_72 = arith.constant 0 : index
    %100 = vector.load %arg1[%c2_70, %c0_71, %c0_72] : memref<4x3x1xf32, #tpu.memory_space<vmem>>, vector<1x3x1xf32>
    %101 = vector.shape_cast %100 : vector<1x3x1xf32> to vector<3x1xf32>
    %102 = vector.shape_cast %29 : vector<1x32xi1> to vector<1x32xi1>
    %103 = vector.broadcast %102 : vector<1x32xi1> to vector<3x32xi1>
    %104 = vector.shape_cast %99 : vector<3x1xf32> to vector<3x1xf32>
    %105 = vector.broadcast %104 : vector<3x1xf32> to vector<3x32xf32>
    %106 = vector.shape_cast %101 : vector<3x1xf32> to vector<3x1xf32>
    %107 = vector.broadcast %106 : vector<3x1xf32> to vector<3x32xf32>
    %108 = arith.select %103, %105, %107 : vector<3x32xi1>, vector<3x32xf32>
    %c1_73 = arith.constant 1 : index
    %c0_74 = arith.constant 0 : index
    %c0_75 = arith.constant 0 : index
    %109 = vector.load %arg16[%c1_73, %c0_74, %c0_75] : memref<4x3x32xf32, #tpu.memory_space<vmem>>, vector<1x3x32xf32>
    %110 = vector.shape_cast %109 : vector<1x3x32xf32> to vector<3x32xf32>
    %111 = vector.shape_cast %108 : vector<3x32xf32> to vector<1x3x32xf32>
    tpu.vector_store %arg16[%c1_73, %c0_74, %c0_75], %111 {strides = array<i32>} : memref<4x3x32xf32, #tpu.memory_space<vmem>>, vector<1x3x32xf32>,
    %c2_76 = arith.constant 2 : index
    %c0_77 = arith.constant 0 : index
    %c0_78 = arith.constant 0 : index
    %112 = vector.load %arg14[%c2_76, %c0_77, %c0_78] : memref<4x3x128xf32, #tpu.memory_space<vmem>>, vector<1x3x128xf32>
    %113 = vector.shape_cast %112 : vector<1x3x128xf32> to vector<3x128xf32>
    %c1_79 = arith.constant 1 : index
    %c0_80 = arith.constant 0 : index
    %c0_81 = arith.constant 0 : index
    %114 = vector.load %arg14[%c1_79, %c0_80, %c0_81] : memref<4x3x128xf32, #tpu.memory_space<vmem>>, vector<1x3x128xf32>
    %115 = vector.shape_cast %114 : vector<1x3x128xf32> to vector<3x128xf32>
    %116 = vector.shape_cast %26 : vector<1x128xi1> to vector<1x128xi1>
    %117 = vector.broadcast %116 : vector<1x128xi1> to vector<3x128xi1>
    %118 = arith.select %117, %113, %115 : vector<3x128xi1>, vector<3x128xf32>
    %c2_82 = arith.constant 2 : index
    %c0_83 = arith.constant 0 : index
    %c0_84 = arith.constant 0 : index
    %119 = vector.load %arg15[%c2_82, %c0_83, %c0_84] : memref<4x3x128xf32, #tpu.memory_space<vmem>>, vector<1x3x128xf32>
    %120 = vector.shape_cast %119 : vector<1x3x128xf32> to vector<3x128xf32>
    %121 = vector.shape_cast %118 : vector<3x128xf32> to vector<1x3x128xf32>
    tpu.vector_store %arg15[%c2_82, %c0_83, %c0_84], %121 {strides = array<i32>} : memref<4x3x128xf32, #tpu.memory_space<vmem>>, vector<1x3x128xf32>,
    %c2_85 = arith.constant 2 : index
    %c0_86 = arith.constant 0 : index
    %c0_87 = arith.constant 0 : index
    %122 = vector.load %arg1[%c2_85, %c0_86, %c0_87] : memref<4x3x1xf32, #tpu.memory_space<vmem>>, vector<1x3x1xf32>
    %123 = vector.shape_cast %122 : vector<1x3x1xf32> to vector<3x1xf32>
    %c1_88 = arith.constant 1 : index
    %c0_89 = arith.constant 0 : index
    %c0_90 = arith.constant 0 : index
    %124 = vector.load %arg1[%c1_88, %c0_89, %c0_90] : memref<4x3x1xf32, #tpu.memory_space<vmem>>, vector<1x3x1xf32>
    %125 = vector.shape_cast %124 : vector<1x3x1xf32> to vector<3x1xf32>
    %126 = vector.shape_cast %29 : vector<1x32xi1> to vector<1x32xi1>
    %127 = vector.broadcast %126 : vector<1x32xi1> to vector<3x32xi1>
    %128 = vector.shape_cast %123 : vector<3x1xf32> to vector<3x1xf32>
    %129 = vector.broadcast %128 : vector<3x1xf32> to vector<3x32xf32>
    %130 = vector.shape_cast %125 : vector<3x1xf32> to vector<3x1xf32>
    %131 = vector.broadcast %130 : vector<3x1xf32> to vector<3x32xf32>
    %132 = arith.select %127, %129, %131 : vector<3x32xi1>, vector<3x32xf32>
    %c2_91 = arith.constant 2 : index
    %c0_92 = arith.constant 0 : index
    %c0_93 = arith.constant 0 : index
    %133 = vector.load %arg16[%c2_91, %c0_92, %c0_93] : memref<4x3x32xf32, #tpu.memory_space<vmem>>, vector<1x3x32xf32>
    %134 = vector.shape_cast %133 : vector<1x3x32xf32> to vector<3x32xf32>
    %135 = vector.shape_cast %132 : vector<3x32xf32> to vector<1x3x32xf32>
    tpu.vector_store %arg16[%c2_91, %c0_92, %c0_93], %135 {strides = array<i32>} : memref<4x3x32xf32, #tpu.memory_space<vmem>>, vector<1x3x32xf32>,
    %c3_94 = arith.constant 3 : index
    %c0_95 = arith.constant 0 : index
    %c0_96 = arith.constant 0 : index
    %136 = vector.load %arg14[%c3_94, %c0_95, %c0_96] : memref<4x3x128xf32, #tpu.memory_space<vmem>>, vector<1x3x128xf32>
    %137 = vector.shape_cast %136 : vector<1x3x128xf32> to vector<3x128xf32>
    %c0_97 = arith.constant 0 : index
    %c0_98 = arith.constant 0 : index
    %c0_99 = arith.constant 0 : index
    %138 = vector.load %arg14[%c0_97, %c0_98, %c0_99] : memref<4x3x128xf32, #tpu.memory_space<vmem>>, vector<1x3x128xf32>
    %139 = vector.shape_cast %138 : vector<1x3x128xf32> to vector<3x128xf32>
    %140 = vector.shape_cast %26 : vector<1x128xi1> to vector<1x128xi1>
    %141 = vector.broadcast %140 : vector<1x128xi1> to vector<3x128xi1>
    %142 = arith.select %141, %137, %139 : vector<3x128xi1>, vector<3x128xf32>
    %c3_100 = arith.constant 3 : index
    %c0_101 = arith.constant 0 : index
    %c0_102 = arith.constant 0 : index
    %143 = vector.load %arg15[%c3_100, %c0_101, %c0_102] : memref<4x3x128xf32, #tpu.memory_space<vmem>>, vector<1x3x128xf32>
    %144 = vector.shape_cast %143 : vector<1x3x128xf32> to vector<3x128xf32>
    %145 = vector.shape_cast %142 : vector<3x128xf32> to vector<1x3x128xf32>
    tpu.vector_store %arg15[%c3_100, %c0_101, %c0_102], %145 {strides = array<i32>} : memref<4x3x128xf32, #tpu.memory_space<vmem>>, vector<1x3x128xf32>,
    %c3_103 = arith.constant 3 : index
    %c0_104 = arith.constant 0 : index
    %c0_105 = arith.constant 0 : index
    %146 = vector.load %arg1[%c3_103, %c0_104, %c0_105] : memref<4x3x1xf32, #tpu.memory_space<vmem>>, vector<1x3x1xf32>
    %147 = vector.shape_cast %146 : vector<1x3x1xf32> to vector<3x1xf32>
    %c0_106 = arith.constant 0 : index
    %c0_107 = arith.constant 0 : index
    %c0_108 = arith.constant 0 : index
    %148 = vector.load %arg1[%c0_106, %c0_107, %c0_108] : memref<4x3x1xf32, #tpu.memory_space<vmem>>, vector<1x3x1xf32>
    %149 = vector.shape_cast %148 : vector<1x3x1xf32> to vector<3x1xf32>
    %150 = vector.shape_cast %29 : vector<1x32xi1> to vector<1x32xi1>
    %151 = vector.broadcast %150 : vector<1x32xi1> to vector<3x32xi1>
    %152 = vector.shape_cast %147 : vector<3x1xf32> to vector<3x1xf32>
    %153 = vector.broadcast %152 : vector<3x1xf32> to vector<3x32xf32>
    %154 = vector.shape_cast %149 : vector<3x1xf32> to vector<3x1xf32>
    %155 = vector.broadcast %154 : vector<3x1xf32> to vector<3x32xf32>
    %156 = arith.select %151, %153, %155 : vector<3x32xi1>, vector<3x32xf32>
    %c3_109 = arith.constant 3 : index
    %c0_110 = arith.constant 0 : index
    %c0_111 = arith.constant 0 : index
    %157 = vector.load %arg16[%c3_109, %c0_110, %c0_111] : memref<4x3x32xf32, #tpu.memory_space<vmem>>, vector<1x3x32xf32>
    %158 = vector.shape_cast %157 : vector<1x3x32xf32> to vector<3x32xf32>
    %159 = vector.shape_cast %156 : vector<3x32xf32> to vector<1x3x32xf32>
    tpu.vector_store %arg16[%c3_109, %c0_110, %c0_111], %159 {strides = array<i32>} : memref<4x3x32xf32, #tpu.memory_space<vmem>>, vector<1x3x32xf32>,
    %c0_112 = arith.constant 0 : index
    %c0_113 = arith.constant 0 : index
    %160 = vector.load %arg4[%c0_112, %c0_113] : memref<32x128xf32, #tpu.memory_space<vmem>>, vector<32x128xf32>
    %cst_114 = arith.constant 0.000000e+00 : f32
    %161 = vector.broadcast %cst_114 : f32 to vector<3x32xf32>
    %cst_115 = arith.constant 0.000000e+00 : f32
    %162 = vector.broadcast %cst_115 : f32 to vector<3x32xf32>
    %c0_116 = arith.constant 0 : index
    %c0_117 = arith.constant 0 : index
    %c0_118 = arith.constant 0 : index
    %163 = vector.load %arg15[%c0_116, %c0_117, %c0_118] : memref<4x3x128xf32, #tpu.memory_space<vmem>>, vector<1x3x128xf32>
    %164 = vector.shape_cast %163 : vector<1x3x128xf32> to vector<3x128xf32>
    %cst_119 = arith.constant dense<0.000000e+00> : vector<3x128xf32>
    %165 = tpu.matmul %161, %160, %cst_119 {dimension_numbers = #tpu.dot_dimension_numbers<[1], [0], [0], [1], [0, 0, 1, 1], [], []>} : vector<3x32xf32>, vector<32x128xf32>, vector<3x128xf32> -> vector<3x128xf32>
    %166 = arith.addf %164, %165 : vector<3x128xf32>
    %167 = vector.extract_strided_slice %166 {offsets = [0, 0], sizes = [3, 32], strides = [1, 1]} : vector<3x128xf32> to vector<3x32xf32>
    %168 = arith.negf %167 : vector<3x32xf32>
    %169 = math.exp %168 : vector<3x32xf32>
    %cst_120 = arith.constant 1.000000e+00 : f32
    %170 = vector.broadcast %cst_120 : f32 to vector<3x32xf32>
    %171 = arith.addf %170, %169 : vector<3x32xf32>
    %172 = arith.divf %170, %171 : vector<3x32xf32>
    %173 = vector.extract_strided_slice %166 {offsets = [0, 32], sizes = [3, 32], strides = [1, 1]} : vector<3x128xf32> to vector<3x32xf32>
    %174 = arith.negf %173 : vector<3x32xf32>
    %175 = math.exp %174 : vector<3x32xf32>
    %cst_121 = arith.constant 1.000000e+00 : f32
    %176 = vector.broadcast %cst_121 : f32 to vector<3x32xf32>
    %177 = arith.addf %176, %175 : vector<3x32xf32>
    %178 = arith.divf %176, %177 : vector<3x32xf32>
    %179 = vector.extract_strided_slice %166 {offsets = [0, 64], sizes = [3, 32], strides = [1, 1]} : vector<3x128xf32> to vector<3x32xf32>
    %180 = math.tanh %179 : vector<3x32xf32>
    %181 = vector.extract_strided_slice %166 {offsets = [0, 96], sizes = [3, 32], strides = [1, 1]} : vector<3x128xf32> to vector<3x32xf32>
    %182 = arith.negf %181 : vector<3x32xf32>
    %183 = math.exp %182 : vector<3x32xf32>
    %cst_122 = arith.constant 1.000000e+00 : f32
    %184 = vector.broadcast %cst_122 : f32 to vector<3x32xf32>
    %185 = arith.addf %184, %183 : vector<3x32xf32>
    %186 = arith.divf %184, %185 : vector<3x32xf32>
    %187 = arith.mulf %178, %162 : vector<3x32xf32>
    %188 = arith.mulf %172, %180 : vector<3x32xf32>
    %189 = arith.addf %187, %188 : vector<3x32xf32>
    %190 = math.tanh %189 : vector<3x32xf32>
    %191 = arith.mulf %186, %190 : vector<3x32xf32>
    %c0_123 = arith.constant 0 : index
    %c0_124 = arith.constant 0 : index
    %c0_125 = arith.constant 0 : index
    %192 = vector.load %arg16[%c0_123, %c0_124, %c0_125] : memref<4x3x32xf32, #tpu.memory_space<vmem>>, vector<1x3x32xf32>
    %193 = vector.shape_cast %192 : vector<1x3x32xf32> to vector<3x32xf32>
    %194 = arith.mulf %193, %191 : vector<3x32xf32>
    %195 = arith.mulf %193, %189 : vector<3x32xf32>
    %cst_126 = arith.constant 1.000000e+00 : f32
    %196 = vector.broadcast %cst_126 : f32 to vector<3x32xf32>
    %197 = arith.subf %196, %193 : vector<3x32xf32>
    %198 = arith.mulf %197, %162 : vector<3x32xf32>
    %199 = arith.addf %195, %198 : vector<3x32xf32>
    %cst_127 = arith.constant 1.000000e+00 : f32
    %200 = vector.broadcast %cst_127 : f32 to vector<3x32xf32>
    %201 = arith.subf %200, %193 : vector<3x32xf32>
    %202 = arith.mulf %201, %161 : vector<3x32xf32>
    %203 = arith.addf %194, %202 : vector<3x32xf32>
    %204 = vector.extract_strided_slice %194 {offsets = [0, 0], sizes = [3, 16], strides = [1, 1]} : vector<3x32xf32> to vector<3x16xf32>
    %c0_128 = arith.constant 0 : index
    %c0_129 = arith.constant 0 : index
    %c0_130 = arith.constant 0 : index
    %205 = vector.load %arg17[%c0_128, %c0_129, %c0_130] : memref<4x3x32xf32, #tpu.memory_space<vmem>>, vector<1x3x16xf32>
    %206 = vector.shape_cast %205 : vector<1x3x16xf32> to vector<3x16xf32>
    %207 = vector.shape_cast %204 : vector<3x16xf32> to vector<1x3x16xf32>
    tpu.vector_store %arg17[%c0_128, %c0_129, %c0_130], %207 {strides = array<i32>} : memref<4x3x32xf32, #tpu.memory_space<vmem>>, vector<1x3x16xf32>,
    %208 = vector.extract_strided_slice %194 {offsets = [0, 16], sizes = [3, 16], strides = [1, 1]} : vector<3x32xf32> to vector<3x16xf32>
    %c3_131 = arith.constant 3 : index
    %c0_132 = arith.constant 0 : index
    %c16 = arith.constant 16 : index
    %209 = vector.load %arg17[%c3_131, %c0_132, %c16] : memref<4x3x32xf32, #tpu.memory_space<vmem>>, vector<1x3x16xf32>
    %210 = vector.shape_cast %209 : vector<1x3x16xf32> to vector<3x16xf32>
    %211 = vector.shape_cast %208 : vector<3x16xf32> to vector<1x3x16xf32>
    tpu.vector_store %arg17[%c3_131, %c0_132, %c16], %211 {strides = array<i32>} : memref<4x3x32xf32, #tpu.memory_space<vmem>>, vector<1x3x16xf32>,
    %c1_133 = arith.constant 1 : index
    %c0_134 = arith.constant 0 : index
    %c0_135 = arith.constant 0 : index
    %212 = vector.load %arg15[%c1_133, %c0_134, %c0_135] : memref<4x3x128xf32, #tpu.memory_space<vmem>>, vector<1x3x128xf32>
    %213 = vector.shape_cast %212 : vector<1x3x128xf32> to vector<3x128xf32>
    %cst_136 = arith.constant dense<0.000000e+00> : vector<3x128xf32>
    %214 = tpu.matmul %203, %160, %cst_136 {dimension_numbers = #tpu.dot_dimension_numbers<[1], [0], [0], [1], [0, 0, 1, 1], [], []>} : vector<3x32xf32>, vector<32x128xf32>, vector<3x128xf32> -> vector<3x128xf32>
    %215 = arith.addf %213, %214 : vector<3x128xf32>
    %216 = vector.extract_strided_slice %215 {offsets = [0, 0], sizes = [3, 32], strides = [1, 1]} : vector<3x128xf32> to vector<3x32xf32>
    %217 = arith.negf %216 : vector<3x32xf32>
    %218 = math.exp %217 : vector<3x32xf32>
    %cst_137 = arith.constant 1.000000e+00 : f32
    %219 = vector.broadcast %cst_137 : f32 to vector<3x32xf32>
    %220 = arith.addf %219, %218 : vector<3x32xf32>
    %221 = arith.divf %219, %220 : vector<3x32xf32>
    %222 = vector.extract_strided_slice %215 {offsets = [0, 32], sizes = [3, 32], strides = [1, 1]} : vector<3x128xf32> to vector<3x32xf32>
    %223 = arith.negf %222 : vector<3x32xf32>
    %224 = math.exp %223 : vector<3x32xf32>
    %cst_138 = arith.constant 1.000000e+00 : f32
    %225 = vector.broadcast %cst_138 : f32 to vector<3x32xf32>
    %226 = arith.addf %225, %224 : vector<3x32xf32>
    %227 = arith.divf %225, %226 : vector<3x32xf32>
    %228 = vector.extract_strided_slice %215 {offsets = [0, 64], sizes = [3, 32], strides = [1, 1]} : vector<3x128xf32> to vector<3x32xf32>
    %229 = math.tanh %228 : vector<3x32xf32>
    %230 = vector.extract_strided_slice %215 {offsets = [0, 96], sizes = [3, 32], strides = [1, 1]} : vector<3x128xf32> to vector<3x32xf32>
    %231 = arith.negf %230 : vector<3x32xf32>
    %232 = math.exp %231 : vector<3x32xf32>
    %cst_139 = arith.constant 1.000000e+00 : f32
    %233 = vector.broadcast %cst_139 : f32 to vector<3x32xf32>
    %234 = arith.addf %233, %232 : vector<3x32xf32>
    %235 = arith.divf %233, %234 : vector<3x32xf32>
    %236 = arith.mulf %227, %199 : vector<3x32xf32>
    %237 = arith.mulf %221, %229 : vector<3x32xf32>
    %238 = arith.addf %236, %237 : vector<3x32xf32>
    %239 = math.tanh %238 : vector<3x32xf32>
    %240 = arith.mulf %235, %239 : vector<3x32xf32>
    %c1_140 = arith.constant 1 : index
    %c0_141 = arith.constant 0 : index
    %c0_142 = arith.constant 0 : index
    %241 = vector.load %arg16[%c1_140, %c0_141, %c0_142] : memref<4x3x32xf32, #tpu.memory_space<vmem>>, vector<1x3x32xf32>
    %242 = vector.shape_cast %241 : vector<1x3x32xf32> to vector<3x32xf32>
    %243 = arith.mulf %242, %240 : vector<3x32xf32>
    %244 = arith.mulf %242, %238 : vector<3x32xf32>
    %cst_143 = arith.constant 1.000000e+00 : f32
    %245 = vector.broadcast %cst_143 : f32 to vector<3x32xf32>
    %246 = arith.subf %245, %242 : vector<3x32xf32>
    %247 = arith.mulf %246, %199 : vector<3x32xf32>
    %248 = arith.addf %244, %247 : vector<3x32xf32>
    %cst_144 = arith.constant 1.000000e+00 : f32
    %249 = vector.broadcast %cst_144 : f32 to vector<3x32xf32>
    %250 = arith.subf %249, %242 : vector<3x32xf32>
    %251 = arith.mulf %250, %203 : vector<3x32xf32>
    %252 = arith.addf %243, %251 : vector<3x32xf32>
    %253 = vector.extract_strided_slice %243 {offsets = [0, 0], sizes = [3, 16], strides = [1, 1]} : vector<3x32xf32> to vector<3x16xf32>
    %c1_145 = arith.constant 1 : index
    %c0_146 = arith.constant 0 : index
    %c0_147 = arith.constant 0 : index
    %254 = vector.load %arg17[%c1_145, %c0_146, %c0_147] : memref<4x3x32xf32, #tpu.memory_space<vmem>>, vector<1x3x16xf32>
    %255 = vector.shape_cast %254 : vector<1x3x16xf32> to vector<3x16xf32>
    %256 = vector.shape_cast %253 : vector<3x16xf32> to vector<1x3x16xf32>
    tpu.vector_store %arg17[%c1_145, %c0_146, %c0_147], %256 {strides = array<i32>} : memref<4x3x32xf32, #tpu.memory_space<vmem>>, vector<1x3x16xf32>,
    %257 = vector.extract_strided_slice %243 {offsets = [0, 16], sizes = [3, 16], strides = [1, 1]} : vector<3x32xf32> to vector<3x16xf32>
    %c2_148 = arith.constant 2 : index
    %c0_149 = arith.constant 0 : index
    %c16_150 = arith.constant 16 : index
    %258 = vector.load %arg17[%c2_148, %c0_149, %c16_150] : memref<4x3x32xf32, #tpu.memory_space<vmem>>, vector<1x3x16xf32>
    %259 = vector.shape_cast %258 : vector<1x3x16xf32> to vector<3x16xf32>
    %260 = vector.shape_cast %257 : vector<3x16xf32> to vector<1x3x16xf32>
    tpu.vector_store %arg17[%c2_148, %c0_149, %c16_150], %260 {strides = array<i32>} : memref<4x3x32xf32, #tpu.memory_space<vmem>>, vector<1x3x16xf32>,
    %c2_151 = arith.constant 2 : index
    %c0_152 = arith.constant 0 : index
    %c0_153 = arith.constant 0 : index
    %261 = vector.load %arg15[%c2_151, %c0_152, %c0_153] : memref<4x3x128xf32, #tpu.memory_space<vmem>>, vector<1x3x128xf32>
    %262 = vector.shape_cast %261 : vector<1x3x128xf32> to vector<3x128xf32>
    %cst_154 = arith.constant dense<0.000000e+00> : vector<3x128xf32>
    %263 = tpu.matmul %252, %160, %cst_154 {dimension_numbers = #tpu.dot_dimension_numbers<[1], [0], [0], [1], [0, 0, 1, 1], [], []>} : vector<3x32xf32>, vector<32x128xf32>, vector<3x128xf32> -> vector<3x128xf32>
    %264 = arith.addf %262, %263 : vector<3x128xf32>
    %265 = vector.extract_strided_slice %264 {offsets = [0, 0], sizes = [3, 32], strides = [1, 1]} : vector<3x128xf32> to vector<3x32xf32>
    %266 = arith.negf %265 : vector<3x32xf32>
    %267 = math.exp %266 : vector<3x32xf32>
    %cst_155 = arith.constant 1.000000e+00 : f32
    %268 = vector.broadcast %cst_155 : f32 to vector<3x32xf32>
    %269 = arith.addf %268, %267 : vector<3x32xf32>
    %270 = arith.divf %268, %269 : vector<3x32xf32>
    %271 = vector.extract_strided_slice %264 {offsets = [0, 32], sizes = [3, 32], strides = [1, 1]} : vector<3x128xf32> to vector<3x32xf32>
    %272 = arith.negf %271 : vector<3x32xf32>
    %273 = math.exp %272 : vector<3x32xf32>
    %cst_156 = arith.constant 1.000000e+00 : f32
    %274 = vector.broadcast %cst_156 : f32 to vector<3x32xf32>
    %275 = arith.addf %274, %273 : vector<3x32xf32>
    %276 = arith.divf %274, %275 : vector<3x32xf32>
    %277 = vector.extract_strided_slice %264 {offsets = [0, 64], sizes = [3, 32], strides = [1, 1]} : vector<3x128xf32> to vector<3x32xf32>
    %278 = math.tanh %277 : vector<3x32xf32>
    %279 = vector.extract_strided_slice %264 {offsets = [0, 96], sizes = [3, 32], strides = [1, 1]} : vector<3x128xf32> to vector<3x32xf32>
    %280 = arith.negf %279 : vector<3x32xf32>
    %281 = math.exp %280 : vector<3x32xf32>
    %cst_157 = arith.constant 1.000000e+00 : f32
    %282 = vector.broadcast %cst_157 : f32 to vector<3x32xf32>
    %283 = arith.addf %282, %281 : vector<3x32xf32>
    %284 = arith.divf %282, %283 : vector<3x32xf32>
    %285 = arith.mulf %276, %248 : vector<3x32xf32>
    %286 = arith.mulf %270, %278 : vector<3x32xf32>
    %287 = arith.addf %285, %286 : vector<3x32xf32>
    %288 = math.tanh %287 : vector<3x32xf32>
    %289 = arith.mulf %284, %288 : vector<3x32xf32>
    %c2_158 = arith.constant 2 : index
    %c0_159 = arith.constant 0 : index
    %c0_160 = arith.constant 0 : index
    %290 = vector.load %arg16[%c2_158, %c0_159, %c0_160] : memref<4x3x32xf32, #tpu.memory_space<vmem>>, vector<1x3x32xf32>
    %291 = vector.shape_cast %290 : vector<1x3x32xf32> to vector<3x32xf32>
    %292 = arith.mulf %291, %289 : vector<3x32xf32>
    %293 = arith.mulf %291, %287 : vector<3x32xf32>
    %cst_161 = arith.constant 1.000000e+00 : f32
    %294 = vector.broadcast %cst_161 : f32 to vector<3x32xf32>
    %295 = arith.subf %294, %291 : vector<3x32xf32>
    %296 = arith.mulf %295, %248 : vector<3x32xf32>
    %297 = arith.addf %293, %296 : vector<3x32xf32>
    %cst_162 = arith.constant 1.000000e+00 : f32
    %298 = vector.broadcast %cst_162 : f32 to vector<3x32xf32>
    %299 = arith.subf %298, %291 : vector<3x32xf32>
    %300 = arith.mulf %299, %252 : vector<3x32xf32>
    %301 = arith.addf %292, %300 : vector<3x32xf32>
    %302 = vector.extract_strided_slice %292 {offsets = [0, 0], sizes = [3, 16], strides = [1, 1]} : vector<3x32xf32> to vector<3x16xf32>
    %c2_163 = arith.constant 2 : index
    %c0_164 = arith.constant 0 : index
    %c0_165 = arith.constant 0 : index
    %303 = vector.load %arg17[%c2_163, %c0_164, %c0_165] : memref<4x3x32xf32, #tpu.memory_space<vmem>>, vector<1x3x16xf32>
    %304 = vector.shape_cast %303 : vector<1x3x16xf32> to vector<3x16xf32>
    %305 = vector.shape_cast %302 : vector<3x16xf32> to vector<1x3x16xf32>
    tpu.vector_store %arg17[%c2_163, %c0_164, %c0_165], %305 {strides = array<i32>} : memref<4x3x32xf32, #tpu.memory_space<vmem>>, vector<1x3x16xf32>,
    %306 = vector.extract_strided_slice %292 {offsets = [0, 16], sizes = [3, 16], strides = [1, 1]} : vector<3x32xf32> to vector<3x16xf32>
    %c1_166 = arith.constant 1 : index
    %c0_167 = arith.constant 0 : index
    %c16_168 = arith.constant 16 : index
    %307 = vector.load %arg17[%c1_166, %c0_167, %c16_168] : memref<4x3x32xf32, #tpu.memory_space<vmem>>, vector<1x3x16xf32>
    %308 = vector.shape_cast %307 : vector<1x3x16xf32> to vector<3x16xf32>
    %309 = vector.shape_cast %306 : vector<3x16xf32> to vector<1x3x16xf32>
    tpu.vector_store %arg17[%c1_166, %c0_167, %c16_168], %309 {strides = array<i32>} : memref<4x3x32xf32, #tpu.memory_space<vmem>>, vector<1x3x16xf32>,
    %c3_169 = arith.constant 3 : index
    %c0_170 = arith.constant 0 : index
    %c0_171 = arith.constant 0 : index
    %310 = vector.load %arg15[%c3_169, %c0_170, %c0_171] : memref<4x3x128xf32, #tpu.memory_space<vmem>>, vector<1x3x128xf32>
    %311 = vector.shape_cast %310 : vector<1x3x128xf32> to vector<3x128xf32>
    %cst_172 = arith.constant dense<0.000000e+00> : vector<3x128xf32>
    %312 = tpu.matmul %301, %160, %cst_172 {dimension_numbers = #tpu.dot_dimension_numbers<[1], [0], [0], [1], [0, 0, 1, 1], [], []>} : vector<3x32xf32>, vector<32x128xf32>, vector<3x128xf32> -> vector<3x128xf32>
    %313 = arith.addf %311, %312 : vector<3x128xf32>
    %314 = vector.extract_strided_slice %313 {offsets = [0, 0], sizes = [3, 32], strides = [1, 1]} : vector<3x128xf32> to vector<3x32xf32>
    %315 = arith.negf %314 : vector<3x32xf32>
    %316 = math.exp %315 : vector<3x32xf32>
    %cst_173 = arith.constant 1.000000e+00 : f32
    %317 = vector.broadcast %cst_173 : f32 to vector<3x32xf32>
    %318 = arith.addf %317, %316 : vector<3x32xf32>
    %319 = arith.divf %317, %318 : vector<3x32xf32>
    %320 = vector.extract_strided_slice %313 {offsets = [0, 32], sizes = [3, 32], strides = [1, 1]} : vector<3x128xf32> to vector<3x32xf32>
    %321 = arith.negf %320 : vector<3x32xf32>
    %322 = math.exp %321 : vector<3x32xf32>
    %cst_174 = arith.constant 1.000000e+00 : f32
    %323 = vector.broadcast %cst_174 : f32 to vector<3x32xf32>
    %324 = arith.addf %323, %322 : vector<3x32xf32>
    %325 = arith.divf %323, %324 : vector<3x32xf32>
    %326 = vector.extract_strided_slice %313 {offsets = [0, 64], sizes = [3, 32], strides = [1, 1]} : vector<3x128xf32> to vector<3x32xf32>
    %327 = math.tanh %326 : vector<3x32xf32>
    %328 = vector.extract_strided_slice %313 {offsets = [0, 96], sizes = [3, 32], strides = [1, 1]} : vector<3x128xf32> to vector<3x32xf32>
    %329 = arith.negf %328 : vector<3x32xf32>
    %330 = math.exp %329 : vector<3x32xf32>
    %cst_175 = arith.constant 1.000000e+00 : f32
    %331 = vector.broadcast %cst_175 : f32 to vector<3x32xf32>
    %332 = arith.addf %331, %330 : vector<3x32xf32>
    %333 = arith.divf %331, %332 : vector<3x32xf32>
    %334 = arith.mulf %325, %297 : vector<3x32xf32>
    %335 = arith.mulf %319, %327 : vector<3x32xf32>
    %336 = arith.addf %334, %335 : vector<3x32xf32>
    %337 = math.tanh %336 : vector<3x32xf32>
    %338 = arith.mulf %333, %337 : vector<3x32xf32>
    %c3_176 = arith.constant 3 : index
    %c0_177 = arith.constant 0 : index
    %c0_178 = arith.constant 0 : index
    %339 = vector.load %arg16[%c3_176, %c0_177, %c0_178] : memref<4x3x32xf32, #tpu.memory_space<vmem>>, vector<1x3x32xf32>
    %340 = vector.shape_cast %339 : vector<1x3x32xf32> to vector<3x32xf32>
    %341 = arith.mulf %340, %338 : vector<3x32xf32>
    %342 = vector.extract_strided_slice %341 {offsets = [0, 0], sizes = [3, 16], strides = [1, 1]} : vector<3x32xf32> to vector<3x16xf32>
    %c3_179 = arith.constant 3 : index
    %c0_180 = arith.constant 0 : index
    %c0_181 = arith.constant 0 : index
    %343 = vector.load %arg17[%c3_179, %c0_180, %c0_181] : memref<4x3x32xf32, #tpu.memory_space<vmem>>, vector<1x3x16xf32>
    %344 = vector.shape_cast %343 : vector<1x3x16xf32> to vector<3x16xf32>
    %345 = vector.shape_cast %342 : vector<3x16xf32> to vector<1x3x16xf32>
    tpu.vector_store %arg17[%c3_179, %c0_180, %c0_181], %345 {strides = array<i32>} : memref<4x3x32xf32, #tpu.memory_space<vmem>>, vector<1x3x16xf32>,
    %346 = vector.extract_strided_slice %341 {offsets = [0, 16], sizes = [3, 16], strides = [1, 1]} : vector<3x32xf32> to vector<3x16xf32>
    %c0_182 = arith.constant 0 : index
    %c0_183 = arith.constant 0 : index
    %c16_184 = arith.constant 16 : index
    %347 = vector.load %arg17[%c0_182, %c0_183, %c16_184] : memref<4x3x32xf32, #tpu.memory_space<vmem>>, vector<1x3x16xf32>
    %348 = vector.shape_cast %347 : vector<1x3x16xf32> to vector<3x16xf32>
    %349 = vector.shape_cast %346 : vector<3x16xf32> to vector<1x3x16xf32>
    tpu.vector_store %arg17[%c0_182, %c0_183, %c16_184], %349 {strides = array<i32>} : memref<4x3x32xf32, #tpu.memory_space<vmem>>, vector<1x3x16xf32>,
    %c0_185 = arith.constant 0 : index
    %c0_186 = arith.constant 0 : index
    %c0_187 = arith.constant 0 : index
    %350 = vector.load %arg17[%c0_185, %c0_186, %c0_187] : memref<4x3x32xf32, #tpu.memory_space<vmem>>, vector<4x3x32xf32>
    %351 = math.tanh %350 : vector<4x3x32xf32>
    %c0_188 = arith.constant 0 : index
    %c0_189 = arith.constant 0 : index
    %352 = vector.load %arg6[%c0_188, %c0_189] : memref<32x32xf32, #tpu.memory_space<vmem>>, vector<32x32xf32>
    %c0_190 = arith.constant 0 : index
    %c0_191 = arith.constant 0 : index
    %353 = vector.load %arg7[%c0_190, %c0_191] : memref<1x32xf32, #tpu.memory_space<vmem>>, vector<1x32xf32>
    %354 = vector.extract_strided_slice %351 {offsets = [0, 0, 0], sizes = [1, 3, 32], strides = [1, 1, 1]} : vector<4x3x32xf32> to vector<1x3x32xf32>
    %355 = vector.shape_cast %354 : vector<1x3x32xf32> to vector<3x32xf32>
    %cst_192 = arith.constant dense<0.000000e+00> : vector<3x32xf32>
    %356 = tpu.matmul %355, %352, %cst_192 {dimension_numbers = #tpu.dot_dimension_numbers<[1], [0], [0], [1], [0, 0, 1, 1], [], []>} : vector<3x32xf32>, vector<32x32xf32>, vector<3x32xf32> -> vector<3x32xf32>
    %357 = vector.broadcast %353 : vector<1x32xf32> to vector<3x32xf32>
    %358 = arith.addf %356, %357 : vector<3x32xf32>
    %359 = math.tanh %358 : vector<3x32xf32>
    %c0_193 = arith.constant 0 : index
    %c0_194 = arith.constant 0 : index
    %c0_195 = arith.constant 0 : index
    %360 = vector.load %arg12[%c0_193, %c0_194, %c0_195] : memref<4x3x32xf32, #tpu.memory_space<vmem>>, vector<1x3x32xf32>
    %361 = vector.shape_cast %360 : vector<1x3x32xf32> to vector<3x32xf32>
    %362 = vector.shape_cast %359 : vector<3x32xf32> to vector<1x3x32xf32>
    tpu.vector_store %arg12[%c0_193, %c0_194, %c0_195], %362 {strides = array<i32>} : memref<4x3x32xf32, #tpu.memory_space<vmem>>, vector<1x3x32xf32>,
    %363 = vector.extract_strided_slice %351 {offsets = [1, 0, 0], sizes = [1, 3, 32], strides = [1, 1, 1]} : vector<4x3x32xf32> to vector<1x3x32xf32>
    %364 = vector.shape_cast %363 : vector<1x3x32xf32> to vector<3x32xf32>
    %cst_196 = arith.constant dense<0.000000e+00> : vector<3x32xf32>
    %365 = tpu.matmul %364, %352, %cst_196 {dimension_numbers = #tpu.dot_dimension_numbers<[1], [0], [0], [1], [0, 0, 1, 1], [], []>} : vector<3x32xf32>, vector<32x32xf32>, vector<3x32xf32> -> vector<3x32xf32>
    %366 = vector.broadcast %353 : vector<1x32xf32> to vector<3x32xf32>
    %367 = arith.addf %365, %366 : vector<3x32xf32>
    %368 = math.tanh %367 : vector<3x32xf32>
    %c1_197 = arith.constant 1 : index
    %c0_198 = arith.constant 0 : index
    %c0_199 = arith.constant 0 : index
    %369 = vector.load %arg12[%c1_197, %c0_198, %c0_199] : memref<4x3x32xf32, #tpu.memory_space<vmem>>, vector<1x3x32xf32>
    %370 = vector.shape_cast %369 : vector<1x3x32xf32> to vector<3x32xf32>
    %371 = vector.shape_cast %368 : vector<3x32xf32> to vector<1x3x32xf32>
    tpu.vector_store %arg12[%c1_197, %c0_198, %c0_199], %371 {strides = array<i32>} : memref<4x3x32xf32, #tpu.memory_space<vmem>>, vector<1x3x32xf32>,
    %372 = vector.extract_strided_slice %351 {offsets = [2, 0, 0], sizes = [1, 3, 32], strides = [1, 1, 1]} : vector<4x3x32xf32> to vector<1x3x32xf32>
    %373 = vector.shape_cast %372 : vector<1x3x32xf32> to vector<3x32xf32>
    %cst_200 = arith.constant dense<0.000000e+00> : vector<3x32xf32>
    %374 = tpu.matmul %373, %352, %cst_200 {dimension_numbers = #tpu.dot_dimension_numbers<[1], [0], [0], [1], [0, 0, 1, 1], [], []>} : vector<3x32xf32>, vector<32x32xf32>, vector<3x32xf32> -> vector<3x32xf32>
    %375 = vector.broadcast %353 : vector<1x32xf32> to vector<3x32xf32>
    %376 = arith.addf %374, %375 : vector<3x32xf32>
    %377 = math.tanh %376 : vector<3x32xf32>
    %c2_201 = arith.constant 2 : index
    %c0_202 = arith.constant 0 : index
    %c0_203 = arith.constant 0 : index
    %378 = vector.load %arg12[%c2_201, %c0_202, %c0_203] : memref<4x3x32xf32, #tpu.memory_space<vmem>>, vector<1x3x32xf32>
    %379 = vector.shape_cast %378 : vector<1x3x32xf32> to vector<3x32xf32>
    %380 = vector.shape_cast %377 : vector<3x32xf32> to vector<1x3x32xf32>
    tpu.vector_store %arg12[%c2_201, %c0_202, %c0_203], %380 {strides = array<i32>} : memref<4x3x32xf32, #tpu.memory_space<vmem>>, vector<1x3x32xf32>,
    %381 = vector.extract_strided_slice %351 {offsets = [3, 0, 0], sizes = [1, 3, 32], strides = [1, 1, 1]} : vector<4x3x32xf32> to vector<1x3x32xf32>
    %382 = vector.shape_cast %381 : vector<1x3x32xf32> to vector<3x32xf32>
    %cst_204 = arith.constant dense<0.000000e+00> : vector<3x32xf32>
    %383 = tpu.matmul %382, %352, %cst_204 {dimension_numbers = #tpu.dot_dimension_numbers<[1], [0], [0], [1], [0, 0, 1, 1], [], []>} : vector<3x32xf32>, vector<32x32xf32>, vector<3x32xf32> -> vector<3x32xf32>
    %384 = vector.broadcast %353 : vector<1x32xf32> to vector<3x32xf32>
    %385 = arith.addf %383, %384 : vector<3x32xf32>
    %386 = math.tanh %385 : vector<3x32xf32>
    %c3_205 = arith.constant 3 : index
    %c0_206 = arith.constant 0 : index
    %c0_207 = arith.constant 0 : index
    %387 = vector.load %arg12[%c3_205, %c0_206, %c0_207] : memref<4x3x32xf32, #tpu.memory_space<vmem>>, vector<1x3x32xf32>
    %388 = vector.shape_cast %387 : vector<1x3x32xf32> to vector<3x32xf32>
    %389 = vector.shape_cast %386 : vector<3x32xf32> to vector<1x3x32xf32>
    tpu.vector_store %arg12[%c3_205, %c0_206, %c0_207], %389 {strides = array<i32>} : memref<4x3x32xf32, #tpu.memory_space<vmem>>, vector<1x3x32xf32>,
    %c0_208 = arith.constant 0 : index
    %c0_209 = arith.constant 0 : index
    %c0_210 = arith.constant 0 : index
    %390 = vector.load %arg12[%c0_208, %c0_209, %c0_210] : memref<4x3x32xf32, #tpu.memory_space<vmem>>, vector<4x3x32xf32>
    %391 = vector.shape_cast %6 : vector<3x32xf32> to vector<1x3x32xf32>
    %392 = vector.broadcast %391 : vector<1x3x32xf32> to vector<4x3x32xf32>
    %393 = arith.mulf %390, %392 : vector<4x3x32xf32>
    %cst_211 = arith.constant dense<0.000000e+00> : vector<4x3xf32>
    %394 = vector.multi_reduction <add>, %393, %cst_211 [2] : vector<4x3x32xf32> to vector<4x3xf32>
    %395 = vector.shape_cast %394 : vector<4x3xf32> to vector<4x3x1xf32>
    %cst_212 = arith.constant 3.200000e+01 : f32
    %396 = vector.broadcast %cst_212 : f32 to vector<4x3x1xf32>
    %397 = arith.divf %395, %396 : vector<4x3x1xf32>
    %398 = math.exp %397 : vector<4x3x1xf32>
    %c0_213 = arith.constant 0 : index
    %c0_214 = arith.constant 0 : index
    %c0_215 = arith.constant 0 : index
    %399 = vector.load %arg1[%c0_213, %c0_214, %c0_215] : memref<4x3x1xf32, #tpu.memory_space<vmem>>, vector<4x3x1xf32>
    %400 = arith.mulf %398, %399 : vector<4x3x1xf32>
    %cst_216 = arith.constant dense<0.000000e+00> : vector<3x1xf32>
    %401 = vector.multi_reduction <add>, %400, %cst_216 [0] : vector<4x3x1xf32> to vector<3x1xf32>
    %402 = vector.shape_cast %401 : vector<3x1xf32> to vector<1x3x1xf32>
    %cst_217 = arith.constant 9.99999974E-5 : f32
    %403 = vector.broadcast %cst_217 : f32 to vector<1x3x1xf32>
    %404 = arith.addf %402, %403 : vector<1x3x1xf32>
    %405 = vector.broadcast %404 : vector<1x3x1xf32> to vector<4x3x1xf32>
    %406 = arith.divf %400, %405 : vector<4x3x1xf32>
    %c0_218 = arith.constant 0 : index
    %c0_219 = arith.constant 0 : index
    %c0_220 = arith.constant 0 : index
    %407 = vector.load %arg11[%c0_218, %c0_219, %c0_220] : memref<4x3x1xf32, #tpu.memory_space<vmem>>, vector<4x3x1xf32>
    tpu.vector_store %arg11[%c0_218, %c0_219, %c0_220], %406 {strides = array<i32>} : memref<4x3x1xf32, #tpu.memory_space<vmem>>, vector<4x3x1xf32>,
    %408 = vector.broadcast %406 : vector<4x3x1xf32> to vector<4x3x32xf32>
    %409 = arith.mulf %351, %408 : vector<4x3x32xf32>
    %cst_221 = arith.constant dense<0.000000e+00> : vector<3x32xf32>
    %410 = vector.multi_reduction <add>, %409, %cst_221 [0] : vector<4x3x32xf32> to vector<3x32xf32>
    %c0_222 = arith.constant 0 : index
    %c0_223 = arith.constant 0 : index
    %411 = vector.load %arg10[%c0_222, %c0_223] : memref<3x32xf32, #tpu.memory_space<vmem>>, vector<3x32xf32>
    tpu.vector_store %arg10[%c0_222, %c0_223], %410 {strides = array<i32>} : memref<3x32xf32, #tpu.memory_space<vmem>>, vector<3x32xf32>,
    return
  }
}

</mosaic_0001>

<llo_original>
// kernel: hnar_forward.3
$region0: #{hnar_forward.3}
  #allocation0 [shape = 'u32[]', space=smem, size = 0x4, offset = 0x4, fixed_abs, tag = 'smem constant byte address 0x4 - core index']
  #allocation1 [shape = 'u32[144,128]{1,0:T(1,128)}', space=vmem, size = 0x12000, scoped, tag = 'internal scratch']
  #allocation2 [shape = 'f32[4,3,128]{2,1,0:T(4,128)}', space=vmem, size = 0x2000, scoped, tag = 'scratch operand']
  #allocation3 [shape = 'f32[4,3,128]{2,1,0:T(4,128)}', space=vmem, size = 0x2000, scoped, tag = 'scratch operand']
  #allocation4 [shape = 'f32[4,3,32]{2,1,0:T(4,128)}', space=vmem, size = 0x2000, scoped, tag = 'scratch operand']
  #allocation5 [shape = 'f32[4,3,32]{2,1,0:T(4,128)}', space=vmem, size = 0x2000, scoped, tag = 'scratch operand']
  %s0 = inlined_call_operand.vmem [shape: f32[4,3,32], index: 0, kind: input, shape index: {}]
  %s1 = inlined_call_operand.vmem [shape: f32[4,3,1], index: 1, kind: input, shape index: {}]
  %s2 = inlined_call_operand.vmem [shape: f32[3,40], index: 2, kind: input, shape index: {}]
  %s3 = inlined_call_operand.vmem [shape: f32[32,128], index: 3, kind: input, shape index: {}]
  %s4 = inlined_call_operand.vmem [shape: f32[32,128], index: 4, kind: input, shape index: {}]
  %s5 = inlined_call_operand.vmem [shape: f32[1,128], index: 5, kind: input, shape index: {}]
  %s6 = inlined_call_operand.vmem [shape: f32[32,32], index: 6, kind: input, shape index: {}]
  %s7 = inlined_call_operand.vmem [shape: f32[1,32], index: 7, kind: input, shape index: {}]
  %s8 = inlined_call_operand.vmem [shape: f32[40,32], index: 8, kind: input, shape index: {}]
  %s9 = inlined_call_operand.vmem [shape: f32[1,32], index: 9, kind: input, shape index: {}]
  %s10 = inlined_call_operand.vmem [shape: f32[3,32], index: 10, kind: output, shape index: {0}]
  %s11 = inlined_call_operand.vmem [shape: f32[4,3,1], index: 11, kind: output, shape index: {1}]
  %s12 = inlined_call_operand.hbm [shape: f32[4,3,32], index: 12, kind: output, shape index: {2}]
  %s13 = inlined_call_operand.hbm [shape: f32[3,32], index: 13, kind: output, shape index: {3}]
  %14 = xla_tuple %s10, %s11, %s12, %s13
  %s15 = sld [smem:[#allocation0]]
  $region74: #{hnar_forward.3} parent=0
    _
  %s17 = ssub.s32 1, %s15
  %s18 = scalar_select 0, %s17, %s15
  $region1: #{hnar_forward.3} parent=0
    #allocation6 [shape = 'u8[8192]{0}', space=vmem, size = 0x2000, scoped, tag = 'output window, operand 2, single buffered']
    #allocation7 [shape = 's32[1]{0}', space=sflag, size = 0x4, scoped, tag = 'scoped memory for hnar_forward.3']
    #allocation8 [shape = 'u8[2048]{0}', space=vmem, size = 0x800, scoped, tag = 'output window, operand 3, single buffered']
    #allocation9 [shape = 's32[1]{0}', space=sflag, size = 0x4, scoped, tag = 'scoped memory for hnar_forward.3']
    %19 = vsyncpa [#allocation7], 0
    %20 = vsyncpa [#allocation9], 0
    // Predicated region
    $region2: #{hnar_forward.3} parent=1 // pred_check
      _
    $region3: #{hnar_forward.3} parent=1 // pred_check_branch
      %22 = sbr.rel (0) target = $region5
    $region4: #{hnar_forward.3} parent=1 // pred_region
      _
    $region5: #{hnar_forward.3} parent=1 // pred_fallthru
      _
    // Predicated region
    $region6: #{hnar_forward.3} parent=1 // pred_check
      _
    $region7: #{hnar_forward.3} parent=1 // pred_check_branch
      %24 = sbr.rel (0) target = $region9
    $region8: #{hnar_forward.3} parent=1 // pred_region
      _
    $region9: #{hnar_forward.3} parent=1 // pred_fallthru
      _
    // Predicated region
    $region10: #{hnar_forward.3} parent=1 // pred_check
      _
    $region11: #{hnar_forward.3} parent=1 // pred_check_branch
      %26 = sbr.rel (0) target = $region13
    $region12: #{hnar_forward.3} parent=1 // pred_region
      _
    $region13: #{hnar_forward.3} parent=1 // pred_fallthru
      _
    // Predicated region
    $region14: #{hnar_forward.3} parent=1 // pred_check
      _
    $region15: #{hnar_forward.3} parent=1 // pred_check_branch
      %28 = sbr.rel (0) target = $region17
    $region16: #{hnar_forward.3} parent=1 // pred_region
      _
    $region17: #{hnar_forward.3} parent=1 // pred_fallthru
      _
    // Predicated region
    $region18: #{hnar_forward.3} parent=1 // pred_check
      _
    $region19: #{hnar_forward.3} parent=1 // pred_check_branch
      %30 = sbr.rel (0) target = $region21
    $region20: #{hnar_forward.3} parent=1 // pred_region
      _
    $region21: #{hnar_forward.3} parent=1 // pred_fallthru
      _
    // Predicated region
    $region22: #{hnar_forward.3} parent=1 // pred_check
      _
    $region23: #{hnar_forward.3} parent=1 // pred_check_branch
      %32 = sbr.rel (0) target = $region25
    $region24: #{hnar_forward.3} parent=1 // pred_region
      _
    $region25: #{hnar_forward.3} parent=1 // pred_fallthru
      _
    // Predicated region
    $region26: #{hnar_forward.3} parent=1 // pred_check
      _
    $region27: #{hnar_forward.3} parent=1 // pred_check_branch
      %34 = sbr.rel (0) target = $region29
    $region28: #{hnar_forward.3} parent=1 // pred_region
      _
    $region29: #{hnar_forward.3} parent=1 // pred_fallthru
      _
    // Predicated region
    $region30: #{hnar_forward.3} parent=1 // pred_check
      _
    $region31: #{hnar_forward.3} parent=1 // pred_check_branch
      %36 = sbr.rel (0) target = $region33
    $region32: #{hnar_forward.3} parent=1 // pred_region
      _
    $region33: #{hnar_forward.3} parent=1 // pred_fallthru
      _
    // Predicated region
    $region34: #{hnar_forward.3} parent=1 // pred_check
      _
    $region35: #{hnar_forward.3} parent=1 // pred_check_branch
      %38 = sbr.rel (0) target = $region37
    $region36: #{hnar_forward.3} parent=1 // pred_region
      _
    $region37: #{hnar_forward.3} parent=1 // pred_fallthru
      _
    // Predicated region
    $region38: #{hnar_forward.3} parent=1 // pred_check
      _
    $region39: #{hnar_forward.3} parent=1 // pred_check_branch
      %40 = sbr.rel (0) target = $region41
    $region40: #{hnar_forward.3} parent=1 // pred_region
      _
    $region41: #{hnar_forward.3} parent=1 // pred_fallthru
      _
    %v41 = vld [vmem:[%s2] sm:$0x7]
    %v42 = vld [vmem:[%s8] sm:$0xff]
    %v43 = vld [vmem:[%s8 + $0x8] sm:$0xff]
    %v44 = vld [vmem:[%s8 + $0x10] sm:$0xff]
    %v45 = vld [vmem:[%s8 + $0x18] sm:$0xff]
    %v46 = vld [vmem:[%s8 + $0x20] sm:$0xff]
    %v47 = vld [vmem:[%s9] sm:$0x1]
    %v49 = vlaneseq
    %v50 = vshrl.u32 %v49, 7
    %v51 = vsub.s32 0, %v50
    %v52 = vrot.slane %v47, %v51
    %vm54 = vcmask 326656
    %v56 = vsel %vm54, %v41, 0
    %58 = vmatprep.subr.mxu0 0.0
    %59 = vmatpush1.msra.mxu0 %v42
    %60 = vmatprep.subr.mxu0 0.0
    %61 = vmatpush1.msra.mxu0 %v43
    %62 = vmatprep.subr.mxu0 0.0
    %63 = vmatpush1.msra.mxu0 %v44
    %64 = vmatprep.subr.mxu0 0.0
    %65 = vmatpush1.msra.mxu0 %v45
    %66 = vmatprep.subr.mxu0 0.0
    %67 = vmatpush1.msra.mxu0 %v46
    %68 = vmatprep.subr.mxu0 0.0
    %69 = vmatpush1.msra.mxu0 0.0
    %70 = vmatprep.subr.mxu0 0.0
    %71 = vmatpush1.msra.mxu0 0.0
    %72 = vmatprep.subr.mxu0 0.0
    %73 = vmatpush1.msra.mxu0 0.0
    %74 = vmatprep.subr.mxu0 0.0
    %75 = vmatpush1.msra.mxu0 0.0
    %76 = vmatprep.subr.mxu0 0.0
    %77 = vmatpush1.msra.mxu0 0.0
    %78 = vmatprep.subr.mxu0 0.0
    %79 = vmatpush1.msra.mxu0 0.0
    %80 = vmatprep.subr.mxu0 0.0
    %81 = vmatpush1.msra.mxu0 0.0
    %82 = vmatprep.subr.mxu0 0.0
    %83 = vmatpush1.msra.mxu0 0.0
    %84 = vmatprep.subr.mxu0 0.0
    %85 = vmatpush1.msra.mxu0 0.0
    %86 = vmatprep.subr.mxu0 0.0
    %87 = vmatpush1.msra.mxu0 0.0
    %88 = vmatprep.subr.mxu0 0.0
    %89 = vmatpush1.msra.mxu0 0.0
    %90 = vmatprep.subr.mxu0 0.0
    %91 = vmatpush1.msra.mxu0 0.0
    %92 = vmatprep.subr.mxu0 0.0
    %93 = vmatpush1.msra.mxu0 0.0
    %94 = vmatprep.subr.mxu0 0.0
    %95 = vmatpush1.msra.mxu0 0.0
    %96 = vmatprep.subr.mxu0 0.0
    %97 = vmatpush1.msra.mxu0 0.0
    %98 = vmatprep.subr.mxu0 0.0
    %99 = vmatpush1.msra.mxu0 0.0
    %100 = vmatprep.subr.mxu0 0.0
    %101 = vmatpush1.msra.mxu0 0.0
    %102 = vmatprep.subr.mxu0 0.0
    %103 = vmatpush1.msra.mxu0 0.0
    %104 = vmatprep.subr.mxu0 0.0
    %105 = vmatpush1.msra.mxu0 0.0
    %106 = vmatprep.subr.mxu0 0.0
    %107 = vmatpush1.msra.mxu0 0.0
    %108 = vmatprep.subr.mxu0 0.0
    %109 = vmatpush1.msra.mxu0 0.0
    %110 = vmatprep.subr.mxu0 0.0
    %111 = vmatpush1.msra.mxu0 0.0
    %112 = vmatprep.subr.mxu0 0.0
    %113 = vmatpush1.msra.mxu0 0.0
    %114 = vmatprep.subr.mxu0 0.0
    %115 = vmatpush1.msra.mxu0 0.0
    %116 = vmatprep.subr.mxu0 0.0
    %117 = vmatpush1.msra.mxu0 0.0
    %118 = vmatprep.subr.mxu0 0.0
    %119 = vmatpush1.msra.mxu0 0.0
    %120 = vmatprep.subr.mxu0 0.0
    %121 = vmatpush1.msra.mxu0 0.0
    %122 = vmatprep.mubr.f32.mxu0 0.0
    %123 = vmatmul.mubr.f32.gmra.mrb[0].mxu0 %v56
    %v124 = vpop.f32.mrb[0].mxu0
    %v125 = vadd.f32 %v52, %v124
    %v126 = vpop.f32.mrb[0].mxu0
    %127 = vdwg.mxu0
    %v128 = vtanh.pop %v125
    %vm129 = vcmask 256000
    %130 = vst.msk [vmem:[#allocation8] sm:$0x7] %vm129, %v128
    %v131 = vlaneseq
    %v132 = vand.u32 %v131, 127
    %vm133 = vcmp.lt.s32.totalorder %v132, 0
    %v134 = vsub.s32 0, %v132
    %v135 = vsel %vm133, %v134, %v132
    %v136 = vshrl.u32 %v135, 5
    %v137 = vand.u32 %v135, 31
    %v138 = vsub.s32 0, %v137
    %v139 = vsel %vm133, %v138, %v137
    %vm140 = vcmp.ne.s32.totalorder %v139, 0
    %vm141 = vcmp.lt.s32.totalorder %v139, 0
    %vm142 = vmand %vm141, %vm140
    %v143 = vadd.s32 %v139, 32
    %v144 = vsel %vm142, %v143, %v139
    %vm145 = vcmp.lt.s32.totalorder %v144, 16
    %vm146 = vcmp.lt.s32.totalorder %v132, 16
    %v147 = vld [vmem:[%s3] sm:$0xff]
    %v148 = vld [vmem:[%s3 + $0x8] sm:$0xff]
    %v149 = vld [vmem:[%s3 + $0x10] sm:$0xff]
    %v150 = vld [vmem:[%s3 + $0x18] sm:$0xff]
    %v151 = vld [vmem:[%s5] sm:$0x1]
    %v152 = vld [vmem:[%s0] sm:$0x7]
    %v154 = vlaneseq
    %v155 = vshrl.u32 %v154, 7
    %v156 = vsub.s32 0, %v155
    %v157 = vrot.slane %v151, %v156
    %vm159 = vcmask 261120
    %v161 = vsel %vm159, %v152, 0
    %163 = vmatprep.subr.mxu0 0.0
    %164 = vmatpush1.msra.mxu0 %v147
    %165 = vmatprep.subr.mxu0 0.0
    %166 = vmatpush1.msra.mxu0 %v148
    %167 = vmatprep.subr.mxu0 0.0
    %168 = vmatpush1.msra.mxu0 %v149
    %169 = vmatprep.subr.mxu0 0.0
    %170 = vmatpush1.msra.mxu0 %v150
    %171 = vmatprep.subr.mxu0 0.0
    %172 = vmatpush1.msra.mxu0 0.0
    %173 = vmatprep.subr.mxu0 0.0
    %174 = vmatpush1.msra.mxu0 0.0
    %175 = vmatprep.subr.mxu0 0.0
    %176 = vmatpush1.msra.mxu0 0.0
    %177 = vmatprep.subr.mxu0 0.0
    %178 = vmatpush1.msra.mxu0 0.0
    %179 = vmatprep.subr.mxu0 0.0
    %180 = vmatpush1.msra.mxu0 0.0
    %181 = vmatprep.subr.mxu0 0.0
    %182 = vmatpush1.msra.mxu0 0.0
    %183 = vmatprep.subr.mxu0 0.0
    %184 = vmatpush1.msra.mxu0 0.0
    %185 = vmatprep.subr.mxu0 0.0
    %186 = vmatpush1.msra.mxu0 0.0
    %187 = vmatprep.subr.mxu0 0.0
    %188 = vmatpush1.msra.mxu0 0.0
    %189 = vmatprep.subr.mxu0 0.0
    %190 = vmatpush1.msra.mxu0 0.0
    %191 = vmatprep.subr.mxu0 0.0
    %192 = vmatpush1.msra.mxu0 0.0
    %193 = vmatprep.subr.mxu0 0.0
    %194 = vmatpush1.msra.mxu0 0.0
    %195 = vmatprep.subr.mxu0 0.0
    %196 = vmatpush1.msra.mxu0 0.0
    %197 = vmatprep.subr.mxu0 0.0
    %198 = vmatpush1.msra.mxu0 0.0
    %199 = vmatprep.subr.mxu0 0.0
    %200 = vmatpush1.msra.mxu0 0.0
    %201 = vmatprep.subr.mxu0 0.0
    %202 = vmatpush1.msra.mxu0 0.0
    %203 = vmatprep.subr.mxu0 0.0
    %204 = vmatpush1.msra.mxu0 0.0
    %205 = vmatprep.subr.mxu0 0.0
    %206 = vmatpush1.msra.mxu0 0.0
    %207 = vmatprep.subr.mxu0 0.0
    %208 = vmatpush1.msra.mxu0 0.0
    %209 = vmatprep.subr.mxu0 0.0
    %210 = vmatpush1.msra.mxu0 0.0
    %211 = vmatprep.subr.mxu0 0.0
    %212 = vmatpush1.msra.mxu0 0.0
    %213 = vmatprep.subr.mxu0 0.0
    %214 = vmatpush1.msra.mxu0 0.0
    %215 = vmatprep.subr.mxu0 0.0
    %216 = vmatpush1.msra.mxu0 0.0
    %217 = vmatprep.subr.mxu0 0.0
    %218 = vmatpush1.msra.mxu0 0.0
    %219 = vmatprep.subr.mxu0 0.0
    %220 = vmatpush1.msra.mxu0 0.0
    %221 = vmatprep.subr.mxu0 0.0
    %222 = vmatpush1.msra.mxu0 0.0
    %223 = vmatprep.subr.mxu0 0.0
    %224 = vmatpush1.msra.mxu0 0.0
    %225 = vmatprep.subr.mxu0 0.0
    %226 = vmatpush1.msra.mxu0 0.0
    %227 = vmatprep.mubr.f32.mxu0 0.0
    %228 = vmatmul.mubr.f32.gmra.mrb[0].mxu0 %v161
    %v229 = vpop.f32.mrb[0].mxu0
    %v230 = vadd.f32 %v157, %v229
    %v231 = vpop.f32.mrb[0].mxu0
    %232 = vdwg.mxu0
    %233 = vst [vmem:[#allocation2] sm:$0x7] %v230
    %s234 = scalar_lea.vmem %s0, 4
    %v235 = vld [vmem:[%s234] sm:$0x7]
    %v237 = vsel %vm159, %v235, 0
    %239 = vmatprep.subr.mxu0 0.0
    %240 = vmatpush1.msra.mxu0 %v147
    %241 = vmatprep.subr.mxu0 0.0
    %242 = vmatpush1.msra.mxu0 %v148
    %243 = vmatprep.subr.mxu0 0.0
    %244 = vmatpush1.msra.mxu0 %v149
    %245 = vmatprep.subr.mxu0 0.0
    %246 = vmatpush1.msra.mxu0 %v150
    %247 = vmatprep.subr.mxu0 0.0
    %248 = vmatpush1.msra.mxu0 0.0
    %249 = vmatprep.subr.mxu0 0.0
    %250 = vmatpush1.msra.mxu0 0.0
    %251 = vmatprep.subr.mxu0 0.0
    %252 = vmatpush1.msra.mxu0 0.0
    %253 = vmatprep.subr.mxu0 0.0
    %254 = vmatpush1.msra.mxu0 0.0
    %255 = vmatprep.subr.mxu0 0.0
    %256 = vmatpush1.msra.mxu0 0.0
    %257 = vmatprep.subr.mxu0 0.0
    %258 = vmatpush1.msra.mxu0 0.0
    %259 = vmatprep.subr.mxu0 0.0
    %260 = vmatpush1.msra.mxu0 0.0
    %261 = vmatprep.subr.mxu0 0.0
    %262 = vmatpush1.msra.mxu0 0.0
    %263 = vmatprep.subr.mxu0 0.0
    %264 = vmatpush1.msra.mxu0 0.0
    %265 = vmatprep.subr.mxu0 0.0
    %266 = vmatpush1.msra.mxu0 0.0
    %267 = vmatprep.subr.mxu0 0.0
    %268 = vmatpush1.msra.mxu0 0.0
    %269 = vmatprep.subr.mxu0 0.0
    %270 = vmatpush1.msra.mxu0 0.0
    %271 = vmatprep.subr.mxu0 0.0
    %272 = vmatpush1.msra.mxu0 0.0
    %273 = vmatprep.subr.mxu0 0.0
    %274 = vmatpush1.msra.mxu0 0.0
    %275 = vmatprep.subr.mxu0 0.0
    %276 = vmatpush1.msra.mxu0 0.0
    %277 = vmatprep.subr.mxu0 0.0
    %278 = vmatpush1.msra.mxu0 0.0
    %279 = vmatprep.subr.mxu0 0.0
    %280 = vmatpush1.msra.mxu0 0.0
    %281 = vmatprep.subr.mxu0 0.0
    %282 = vmatpush1.msra.mxu0 0.0
    %283 = vmatprep.subr.mxu0 0.0
    %284 = vmatpush1.msra.mxu0 0.0
    %285 = vmatprep.subr.mxu0 0.0
    %286 = vmatpush1.msra.mxu0 0.0
    %287 = vmatprep.subr.mxu0 0.0
    %288 = vmatpush1.msra.mxu0 0.0
    %289 = vmatprep.subr.mxu0 0.0
    %290 = vmatpush1.msra.mxu0 0.0
    %291 = vmatprep.subr.mxu0 0.0
    %292 = vmatpush1.msra.mxu0 0.0
    %293 = vmatprep.subr.mxu0 0.0
    %294 = vmatpush1.msra.mxu0 0.0
    %295 = vmatprep.subr.mxu0 0.0
    %296 = vmatpush1.msra.mxu0 0.0
    %297 = vmatprep.subr.mxu0 0.0
    %298 = vmatpush1.msra.mxu0 0.0
    %299 = vmatprep.subr.mxu0 0.0
    %300 = vmatpush1.msra.mxu0 0.0
    %301 = vmatprep.subr.mxu0 0.0
    %302 = vmatpush1.msra.mxu0 0.0
    %303 = vmatprep.mubr.f32.mxu0 0.0
    %304 = vmatmul.mubr.f32.gmra.mrb[0].mxu0 %v237
    %v305 = vpop.f32.mrb[0].mxu0
    %v306 = vadd.f32 %v157, %v305
    %v307 = vpop.f32.mrb[0].mxu0
    %308 = vdwg.mxu0
    %s309 = scalar_lea.vmem [#allocation2], 4
    %310 = vst [vmem:[%s309] sm:$0x7] %v306
    %s311 = scalar_lea.vmem %s0, 8
    %v312 = vld [vmem:[%s311] sm:$0x7]
    %v314 = vsel %vm159, %v312, 0
    %316 = vmatprep.subr.mxu0 0.0
    %317 = vmatpush1.msra.mxu0 %v147
    %318 = vmatprep.subr.mxu0 0.0
    %319 = vmatpush1.msra.mxu0 %v148
    %320 = vmatprep.subr.mxu0 0.0
    %321 = vmatpush1.msra.mxu0 %v149
    %322 = vmatprep.subr.mxu0 0.0
    %323 = vmatpush1.msra.mxu0 %v150
    %324 = vmatprep.subr.mxu0 0.0
    %325 = vmatpush1.msra.mxu0 0.0
    %326 = vmatprep.subr.mxu0 0.0
    %327 = vmatpush1.msra.mxu0 0.0
    %328 = vmatprep.subr.mxu0 0.0
    %329 = vmatpush1.msra.mxu0 0.0
    %330 = vmatprep.subr.mxu0 0.0
    %331 = vmatpush1.msra.mxu0 0.0
    %332 = vmatprep.subr.mxu0 0.0
    %333 = vmatpush1.msra.mxu0 0.0
    %334 = vmatprep.subr.mxu0 0.0
    %335 = vmatpush1.msra.mxu0 0.0
    %336 = vmatprep.subr.mxu0 0.0
    %337 = vmatpush1.msra.mxu0 0.0
    %338 = vmatprep.subr.mxu0 0.0
    %339 = vmatpush1.msra.mxu0 0.0
    %340 = vmatprep.subr.mxu0 0.0
    %341 = vmatpush1.msra.mxu0 0.0
    %342 = vmatprep.subr.mxu0 0.0
    %343 = vmatpush1.msra.mxu0 0.0
    %344 = vmatprep.subr.mxu0 0.0
    %345 = vmatpush1.msra.mxu0 0.0
    %346 = vmatprep.subr.mxu0 0.0
    %347 = vmatpush1.msra.mxu0 0.0
    %348 = vmatprep.subr.mxu0 0.0
    %349 = vmatpush1.msra.mxu0 0.0
    %350 = vmatprep.subr.mxu0 0.0
    %351 = vmatpush1.msra.mxu0 0.0
    %352 = vmatprep.subr.mxu0 0.0
    %353 = vmatpush1.msra.mxu0 0.0
    %354 = vmatprep.subr.mxu0 0.0
    %355 = vmatpush1.msra.mxu0 0.0
    %356 = vmatprep.subr.mxu0 0.0
    %357 = vmatpush1.msra.mxu0 0.0
    %358 = vmatprep.subr.mxu0 0.0
    %359 = vmatpush1.msra.mxu0 0.0
    %360 = vmatprep.subr.mxu0 0.0
    %361 = vmatpush1.msra.mxu0 0.0
    %362 = vmatprep.subr.mxu0 0.0
    %363 = vmatpush1.msra.mxu0 0.0
    %364 = vmatprep.subr.mxu0 0.0
    %365 = vmatpush1.msra.mxu0 0.0
    %366 = vmatprep.subr.mxu0 0.0
    %367 = vmatpush1.msra.mxu0 0.0
    %368 = vmatprep.subr.mxu0 0.0
    %369 = vmatpush1.msra.mxu0 0.0
    %370 = vmatprep.subr.mxu0 0.0
    %371 = vmatpush1.msra.mxu0 0.0
    %372 = vmatprep.subr.mxu0 0.0
    %373 = vmatpush1.msra.mxu0 0.0
    %374 = vmatprep.subr.mxu0 0.0
    %375 = vmatpush1.msra.mxu0 0.0
    %376 = vmatprep.subr.mxu0 0.0
    %377 = vmatpush1.msra.mxu0 0.0
    %378 = vmatprep.subr.mxu0 0.0
    %379 = vmatpush1.msra.mxu0 0.0
    %380 = vmatprep.mubr.f32.mxu0 0.0
    %381 = vmatmul.mubr.f32.gmra.mrb[0].mxu0 %v314
    %v382 = vpop.f32.mrb[0].mxu0
    %v383 = vadd.f32 %v157, %v382
    %v384 = vpop.f32.mrb[0].mxu0
    %385 = vdwg.mxu0
    %s386 = scalar_lea.vmem [#allocation2], 8
    %387 = vst [vmem:[%s386] sm:$0x7] %v383
    %s388 = scalar_lea.vmem %s0, 12
    %v389 = vld [vmem:[%s388] sm:$0x7]
    %v391 = vsel %vm159, %v389, 0
    %393 = vmatprep.subr.mxu0 0.0
    %394 = vmatpush1.msra.mxu0 %v147
    %395 = vmatprep.subr.mxu0 0.0
    %396 = vmatpush1.msra.mxu0 %v148
    %397 = vmatprep.subr.mxu0 0.0
    %398 = vmatpush1.msra.mxu0 %v149
    %399 = vmatprep.subr.mxu0 0.0
    %400 = vmatpush1.msra.mxu0 %v150
    %401 = vmatprep.subr.mxu0 0.0
    %402 = vmatpush1.msra.mxu0 0.0
    %403 = vmatprep.subr.mxu0 0.0
    %404 = vmatpush1.msra.mxu0 0.0
    %405 = vmatprep.subr.mxu0 0.0
    %406 = vmatpush1.msra.mxu0 0.0
    %407 = vmatprep.subr.mxu0 0.0
    %408 = vmatpush1.msra.mxu0 0.0
    %409 = vmatprep.subr.mxu0 0.0
    %410 = vmatpush1.msra.mxu0 0.0
    %411 = vmatprep.subr.mxu0 0.0
    %412 = vmatpush1.msra.mxu0 0.0
    %413 = vmatprep.subr.mxu0 0.0
    %414 = vmatpush1.msra.mxu0 0.0
    %415 = vmatprep.subr.mxu0 0.0
    %416 = vmatpush1.msra.mxu0 0.0
    %417 = vmatprep.subr.mxu0 0.0
    %418 = vmatpush1.msra.mxu0 0.0
    %419 = vmatprep.subr.mxu0 0.0
    %420 = vmatpush1.msra.mxu0 0.0
    %421 = vmatprep.subr.mxu0 0.0
    %422 = vmatpush1.msra.mxu0 0.0
    %423 = vmatprep.subr.mxu0 0.0
    %424 = vmatpush1.msra.mxu0 0.0
    %425 = vmatprep.subr.mxu0 0.0
    %426 = vmatpush1.msra.mxu0 0.0
    %427 = vmatprep.subr.mxu0 0.0
    %428 = vmatpush1.msra.mxu0 0.0
    %429 = vmatprep.subr.mxu0 0.0
    %430 = vmatpush1.msra.mxu0 0.0
    %431 = vmatprep.subr.mxu0 0.0
    %432 = vmatpush1.msra.mxu0 0.0
    %433 = vmatprep.subr.mxu0 0.0
    %434 = vmatpush1.msra.mxu0 0.0
    %435 = vmatprep.subr.mxu0 0.0
    %436 = vmatpush1.msra.mxu0 0.0
    %437 = vmatprep.subr.mxu0 0.0
    %438 = vmatpush1.msra.mxu0 0.0
    %439 = vmatprep.subr.mxu0 0.0
    %440 = vmatpush1.msra.mxu0 0.0
    %441 = vmatprep.subr.mxu0 0.0
    %442 = vmatpush1.msra.mxu0 0.0
    %443 = vmatprep.subr.mxu0 0.0
    %444 = vmatpush1.msra.mxu0 0.0
    %445 = vmatprep.subr.mxu0 0.0
    %446 = vmatpush1.msra.mxu0 0.0
    %447 = vmatprep.subr.mxu0 0.0
    %448 = vmatpush1.msra.mxu0 0.0
    %449 = vmatprep.subr.mxu0 0.0
    %450 = vmatpush1.msra.mxu0 0.0
    %451 = vmatprep.subr.mxu0 0.0
    %452 = vmatpush1.msra.mxu0 0.0
    %453 = vmatprep.subr.mxu0 0.0
    %454 = vmatpush1.msra.mxu0 0.0
    %455 = vmatprep.subr.mxu0 0.0
    %456 = vmatpush1.msra.mxu0 0.0
    %457 = vmatprep.mubr.f32.mxu0 0.0
    %458 = vmatmul.mubr.f32.gmra.mrb[0].mxu0 %v391
    %v459 = vpop.f32.mrb[0].mxu0
    %v460 = vadd.f32 %v157, %v459
    %v461 = vpop.f32.mrb[0].mxu0
    %462 = vdwg.mxu0
    %s463 = scalar_lea.vmem [#allocation2], 12
    %464 = vst [vmem:[%s463] sm:$0x7] %v460
    %v465 = vld [vmem:[#allocation2] sm:$0x7]
    %v466 = vld [vmem:[%s463] sm:$0x7]
    %v467 = vsel %vm145, 1, 0
    %vm468 = vcmp.eq.s32.totalorder %v467, 1
    %v469 = vsel %vm468, %v465, %v466
    %470 = vst [vmem:[#allocation3] sm:$0x7] %v469
    %v471 = vld [vmem:[%s1] sm:$0x7]
    %s472 = scalar_lea.vmem %s1, 12
    %v473 = vld [vmem:[%s472] sm:$0x7]
    %v474 = vsel %vm146, 1, 0
    %vm475 = vcmp.eq.s32.totalorder %v474, 1
    %477 = vset.pattern.permute.xlu0 0
    %478 = vperm.xlu0 %477, %v471
    %v479 = vpop.permute.xlu0 %478
    %482 = vset.pattern.permute.xlu0 0
    %483 = vperm.xlu0 %482, %v473
    %v484 = vpop.permute.xlu0 %483
    %v486 = vsel %vm475, %v479, %v484
    %487 = vst.msk [vmem:[#allocation4] sm:$0x7] %vm129, %v486
    %v488 = vld [vmem:[%s309] sm:$0x7]
    %v489 = vld [vmem:[%s386] sm:$0x7]
    %v490 = vsel %vm468, %v488, %v489
    %s491 = scalar_lea.vmem [#allocation3], 4
    %492 = vst [vmem:[%s491] sm:$0x7] %v490
    %s493 = scalar_lea.vmem %s1, 4
    %v494 = vld [vmem:[%s493] sm:$0x7]
    %s495 = scalar_lea.vmem %s1, 8
    %v496 = vld [vmem:[%s495] sm:$0x7]
    %498 = vset.pattern.permute.xlu0 0
    %499 = vperm.xlu0 %498, %v494
    %v500 = vpop.permute.xlu0 %499
    %503 = vset.pattern.permute.xlu0 0
    %504 = vperm.xlu0 %503, %v496
    %v505 = vpop.permute.xlu0 %504
    %v507 = vsel %vm475, %v500, %v505
    %s508 = scalar_lea.vmem [#allocation4], 4
    %509 = vst.msk [vmem:[%s508] sm:$0x7] %vm129, %v507
    %v510 = vld [vmem:[%s386] sm:$0x7]
    %v511 = vld [vmem:[%s309] sm:$0x7]
    %v512 = vsel %vm468, %v510, %v511
    %s513 = scalar_lea.vmem [#allocation3], 8
    %514 = vst [vmem:[%s513] sm:$0x7] %v512
    %v515 = vld [vmem:[%s495] sm:$0x7]
    %v516 = vld [vmem:[%s493] sm:$0x7]
    %518 = vset.pattern.permute.xlu0 0
    %519 = vperm.xlu0 %518, %v515
    %v520 = vpop.permute.xlu0 %519
    %523 = vset.pattern.permute.xlu0 0
    %524 = vperm.xlu0 %523, %v516
    %v525 = vpop.permute.xlu0 %524
    %v527 = vsel %vm475, %v520, %v525
    %s528 = scalar_lea.vmem [#allocation4], 8
    %529 = vst.msk [vmem:[%s528] sm:$0x7] %vm129, %v527
    %v530 = vld [vmem:[%s463] sm:$0x7]
    %v531 = vld [vmem:[#allocation2] sm:$0x7]
    %v532 = vsel %vm468, %v530, %v531
    %s533 = scalar_lea.vmem [#allocation3], 12
    %534 = vst [vmem:[%s533] sm:$0x7] %v532
    %v535 = vld [vmem:[%s472] sm:$0x7]
    %v536 = vld [vmem:[%s1] sm:$0x7]
    %538 = vset.pattern.permute.xlu0 0
    %539 = vperm.xlu0 %538, %v535
    %v540 = vpop.permute.xlu0 %539
    %543 = vset.pattern.permute.xlu0 0
    %544 = vperm.xlu0 %543, %v536
    %v545 = vpop.permute.xlu0 %544
    %v547 = vsel %vm475, %v540, %v545
    %s548 = scalar_lea.vmem [#allocation4], 12
    %549 = vst.msk [vmem:[%s548] sm:$0x7] %vm129, %v547
    %v550 = vld [vmem:[%s4] sm:$0xff]
    %v551 = vld [vmem:[%s4 + $0x8] sm:$0xff]
    %v552 = vld [vmem:[%s4 + $0x10] sm:$0xff]
    %v553 = vld [vmem:[%s4 + $0x18] sm:$0xff]
    %v554 = vld [vmem:[#allocation3] sm:$0x7]
    %v556 = vsel %vm159, 0.0, 0
    %558 = vmatprep.subr.mxu0 0.0
    %559 = vmatpush1.msra.mxu0 %v550
    %560 = vmatprep.subr.mxu0 0.0
    %561 = vmatpush1.msra.mxu0 %v551
    %562 = vmatprep.subr.mxu0 0.0
    %563 = vmatpush1.msra.mxu0 %v552
    %564 = vmatprep.subr.mxu0 0.0
    %565 = vmatpush1.msra.mxu0 %v553
    %566 = vmatprep.subr.mxu0 0.0
    %567 = vmatpush1.msra.mxu0 0.0
    %568 = vmatprep.subr.mxu0 0.0
    %569 = vmatpush1.msra.mxu0 0.0
    %570 = vmatprep.subr.mxu0 0.0
    %571 = vmatpush1.msra.mxu0 0.0
    %572 = vmatprep.subr.mxu0 0.0
    %573 = vmatpush1.msra.mxu0 0.0
    %574 = vmatprep.subr.mxu0 0.0
    %575 = vmatpush1.msra.mxu0 0.0
    %576 = vmatprep.subr.mxu0 0.0
    %577 = vmatpush1.msra.mxu0 0.0
    %578 = vmatprep.subr.mxu0 0.0
    %579 = vmatpush1.msra.mxu0 0.0
    %580 = vmatprep.subr.mxu0 0.0
    %581 = vmatpush1.msra.mxu0 0.0
    %582 = vmatprep.subr.mxu0 0.0
    %583 = vmatpush1.msra.mxu0 0.0
    %584 = vmatprep.subr.mxu0 0.0
    %585 = vmatpush1.msra.mxu0 0.0
    %586 = vmatprep.subr.mxu0 0.0
    %587 = vmatpush1.msra.mxu0 0.0
    %588 = vmatprep.subr.mxu0 0.0
    %589 = vmatpush1.msra.mxu0 0.0
    %590 = vmatprep.subr.mxu0 0.0
    %591 = vmatpush1.msra.mxu0 0.0
    %592 = vmatprep.subr.mxu0 0.0
    %593 = vmatpush1.msra.mxu0 0.0
    %594 = vmatprep.subr.mxu0 0.0
    %595 = vmatpush1.msra.mxu0 0.0
    %596 = vmatprep.subr.mxu0 0.0
    %597 = vmatpush1.msra.mxu0 0.0
    %598 = vmatprep.subr.mxu0 0.0
    %599 = vmatpush1.msra.mxu0 0.0
    %600 = vmatprep.subr.mxu0 0.0
    %601 = vmatpush1.msra.mxu0 0.0
    %602 = vmatprep.subr.mxu0 0.0
    %603 = vmatpush1.msra.mxu0 0.0
    %604 = vmatprep.subr.mxu0 0.0
    %605 = vmatpush1.msra.mxu0 0.0
    %606 = vmatprep.subr.mxu0 0.0
    %607 = vmatpush1.msra.mxu0 0.0
    %608 = vmatprep.subr.mxu0 0.0
    %609 = vmatpush1.msra.mxu0 0.0
    %610 = vmatprep.subr.mxu0 0.0
    %611 = vmatpush1.msra.mxu0 0.0
    %612 = vmatprep.subr.mxu0 0.0
    %613 = vmatpush1.msra.mxu0 0.0
    %614 = vmatprep.subr.mxu0 0.0
    %615 = vmatpush1.msra.mxu0 0.0
    %616 = vmatprep.subr.mxu0 0.0
    %617 = vmatpush1.msra.mxu0 0.0
    %618 = vmatprep.subr.mxu0 0.0
    %619 = vmatpush1.msra.mxu0 0.0
    %620 = vmatprep.subr.mxu0 0.0
    %621 = vmatpush1.msra.mxu0 0.0
    %622 = vmatprep.mubr.f32.mxu0 0.0
    %623 = vmatmul.mubr.f32.gmra.mrb[0].mxu0 %v556
    %v624 = vpop.f32.mrb[0].mxu0
    %v625 = vadd.f32 0.0, %v624
    %v626 = vpop.f32.mrb[0].mxu0
    %627 = vdwg.mxu0
    %v628 = vadd.f32 %v554, %v625
    %v629 = vxor.u32 %v628, 2147483648
    %v630 = vmul.f32 %v629, 1.442695
    %v631 = vpow.pop %v630
    %v632 = vadd.f32 %v631, 1.0
    %v633 = vrcp.pop %v632
    %v634 = vmul.f32 1.0, %v633
    %v635 = vtanh.pop %v628
    %v636 = vmul.f32 %v634, 0.0
    %638 = vrot.lane.b32.xlu0 %v635, 64
    %v639 = vpop.permute.xlu0 %638
    %v641 = vmul.f32 %v634, %v639
    %643 = vrot.lane.b32.xlu0 %v641, 32
    %v644 = vpop.permute.xlu0 %643
    %v646 = vadd.f32 %v636, %v644
    %v647 = vtanh.pop %v646
    %649 = vrot.lane.b32.xlu0 %v647, 64
    %v650 = vpop.permute.xlu0 %649
    %v652 = vmul.f32 %v634, %v650
    %v653 = vld [vmem:[#allocation4] sm:$0x7]
    %655 = vrot.lane.b32.xlu0 %v652, 32
    %v656 = vpop.permute.xlu0 %655
    %v658 = vmul.f32 %v653, %v656
    %660 = vrot.lane.b32.xlu0 %v646, 96
    %v661 = vpop.permute.xlu0 %660
    %v663 = vmul.f32 %v653, %v661
    %v664 = vsub.f32 1.0, %v653
    %v665 = vmul.f32 %v664, 0.0
    %v666 = vadd.f32 %v663, %v665
    %v667 = vadd.f32 %v658, %v665
    %vm668 = vcmask 124928
    %669 = vst.msk [vmem:[#allocation5] sm:$0x7] %vm668, %v658
    %s670 = scalar_lea.vmem [#allocation5], 12
    %vm671 = vcmask 256128
    %672 = vst.msk [vmem:[%s670] sm:$0x7] %vm671, %v658
    %v673 = vld [vmem:[%s491] sm:$0x7]
    %v675 = vsel %vm159, %v667, 0
    %677 = vmatprep.subr.mxu0 0.0
    %678 = vmatpush1.msra.mxu0 %v550
    %679 = vmatprep.subr.mxu0 0.0
    %680 = vmatpush1.msra.mxu0 %v551
    %681 = vmatprep.subr.mxu0 0.0
    %682 = vmatpush1.msra.mxu0 %v552
    %683 = vmatprep.subr.mxu0 0.0
    %684 = vmatpush1.msra.mxu0 %v553
    %685 = vmatprep.subr.mxu0 0.0
    %686 = vmatpush1.msra.mxu0 0.0
    %687 = vmatprep.subr.mxu0 0.0
    %688 = vmatpush1.msra.mxu0 0.0
    %689 = vmatprep.subr.mxu0 0.0
    %690 = vmatpush1.msra.mxu0 0.0
    %691 = vmatprep.subr.mxu0 0.0
    %692 = vmatpush1.msra.mxu0 0.0
    %693 = vmatprep.subr.mxu0 0.0
    %694 = vmatpush1.msra.mxu0 0.0
    %695 = vmatprep.subr.mxu0 0.0
    %696 = vmatpush1.msra.mxu0 0.0
    %697 = vmatprep.subr.mxu0 0.0
    %698 = vmatpush1.msra.mxu0 0.0
    %699 = vmatprep.subr.mxu0 0.0
    %700 = vmatpush1.msra.mxu0 0.0
    %701 = vmatprep.subr.mxu0 0.0
    %702 = vmatpush1.msra.mxu0 0.0
    %703 = vmatprep.subr.mxu0 0.0
    %704 = vmatpush1.msra.mxu0 0.0
    %705 = vmatprep.subr.mxu0 0.0
    %706 = vmatpush1.msra.mxu0 0.0
    %707 = vmatprep.subr.mxu0 0.0
    %708 = vmatpush1.msra.mxu0 0.0
    %709 = vmatprep.subr.mxu0 0.0
    %710 = vmatpush1.msra.mxu0 0.0
    %711 = vmatprep.subr.mxu0 0.0
    %712 = vmatpush1.msra.mxu0 0.0
    %713 = vmatprep.subr.mxu0 0.0
    %714 = vmatpush1.msra.mxu0 0.0
    %715 = vmatprep.subr.mxu0 0.0
    %716 = vmatpush1.msra.mxu0 0.0
    %717 = vmatprep.subr.mxu0 0.0
    %718 = vmatpush1.msra.mxu0 0.0
    %719 = vmatprep.subr.mxu0 0.0
    %720 = vmatpush1.msra.mxu0 0.0
    %721 = vmatprep.subr.mxu0 0.0
    %722 = vmatpush1.msra.mxu0 0.0
    %723 = vmatprep.subr.mxu0 0.0
    %724 = vmatpush1.msra.mxu0 0.0
    %725 = vmatprep.subr.mxu0 0.0
    %726 = vmatpush1.msra.mxu0 0.0
    %727 = vmatprep.subr.mxu0 0.0
    %728 = vmatpush1.msra.mxu0 0.0
    %729 = vmatprep.subr.mxu0 0.0
    %730 = vmatpush1.msra.mxu0 0.0
    %731 = vmatprep.subr.mxu0 0.0
    %732 = vmatpush1.msra.mxu0 0.0
    %733 = vmatprep.subr.mxu0 0.0
    %734 = vmatpush1.msra.mxu0 0.0
    %735 = vmatprep.subr.mxu0 0.0
    %736 = vmatpush1.msra.mxu0 0.0
    %737 = vmatprep.subr.mxu0 0.0
    %738 = vmatpush1.msra.mxu0 0.0
    %739 = vmatprep.subr.mxu0 0.0
    %740 = vmatpush1.msra.mxu0 0.0
    %741 = vmatprep.mubr.f32.mxu0 0.0
    %742 = vmatmul.mubr.f32.gmra.mrb[0].mxu0 %v675
    %v743 = vpop.f32.mrb[0].mxu0
    %v744 = vadd.f32 0.0, %v743
    %v745 = vpop.f32.mrb[0].mxu0
    %746 = vdwg.mxu0
    %v747 = vadd.f32 %v673, %v744
    %v748 = vxor.u32 %v747, 2147483648
    %v749 = vmul.f32 %v748, 1.442695
    %v750 = vpow.pop %v749
    %v751 = vadd.f32 %v750, 1.0
    %v752 = vrcp.pop %v751
    %v753 = vmul.f32 1.0, %v752
    %v754 = vtanh.pop %v747
    %756 = vrot.lane.b32.xlu0 %v666, 32
    %v757 = vpop.permute.xlu0 %756
    %v759 = vmul.f32 %v753, %v757
    %761 = vrot.lane.b32.xlu0 %v754, 64
    %v762 = vpop.permute.xlu0 %761
    %v764 = vmul.f32 %v753, %v762
    %766 = vrot.lane.b32.xlu0 %v764, 32
    %v767 = vpop.permute.xlu0 %766
    %v769 = vadd.f32 %v759, %v767
    %v770 = vtanh.pop %v769
    %772 = vrot.lane.b32.xlu0 %v770, 64
    %v773 = vpop.permute.xlu0 %772
    %v775 = vmul.f32 %v753, %v773
    %v776 = vld [vmem:[%s508] sm:$0x7]
    %778 = vrot.lane.b32.xlu0 %v775, 32
    %v779 = vpop.permute.xlu0 %778
    %v781 = vmul.f32 %v776, %v779
    %783 = vrot.lane.b32.xlu0 %v769, 96
    %v784 = vpop.permute.xlu0 %783
    %v786 = vmul.f32 %v776, %v784
    %v787 = vsub.f32 1.0, %v776
    %v788 = vmul.f32 %v787, %v666
    %v789 = vadd.f32 %v786, %v788
    %v790 = vmul.f32 %v787, %v667
    %v791 = vadd.f32 %v781, %v790
    %s792 = scalar_lea.vmem [#allocation5], 4
    %793 = vst.msk [vmem:[%s792] sm:$0x7] %vm668, %v781
    %s794 = scalar_lea.vmem [#allocation5], 8
    %795 = vst.msk [vmem:[%s794] sm:$0x7] %vm671, %v781
    %v796 = vld [vmem:[%s513] sm:$0x7]
    %v798 = vsel %vm159, %v791, 0
    %800 = vmatprep.subr.mxu0 0.0
    %801 = vmatpush1.msra.mxu0 %v550
    %802 = vmatprep.subr.mxu0 0.0
    %803 = vmatpush1.msra.mxu0 %v551
    %804 = vmatprep.subr.mxu0 0.0
    %805 = vmatpush1.msra.mxu0 %v552
    %806 = vmatprep.subr.mxu0 0.0
    %807 = vmatpush1.msra.mxu0 %v553
    %808 = vmatprep.subr.mxu0 0.0
    %809 = vmatpush1.msra.mxu0 0.0
    %810 = vmatprep.subr.mxu0 0.0
    %811 = vmatpush1.msra.mxu0 0.0
    %812 = vmatprep.subr.mxu0 0.0
    %813 = vmatpush1.msra.mxu0 0.0
    %814 = vmatprep.subr.mxu0 0.0
    %815 = vmatpush1.msra.mxu0 0.0
    %816 = vmatprep.subr.mxu0 0.0
    %817 = vmatpush1.msra.mxu0 0.0
    %818 = vmatprep.subr.mxu0 0.0
    %819 = vmatpush1.msra.mxu0 0.0
    %820 = vmatprep.subr.mxu0 0.0
    %821 = vmatpush1.msra.mxu0 0.0
    %822 = vmatprep.subr.mxu0 0.0
    %823 = vmatpush1.msra.mxu0 0.0
    %824 = vmatprep.subr.mxu0 0.0
    %825 = vmatpush1.msra.mxu0 0.0
    %826 = vmatprep.subr.mxu0 0.0
    %827 = vmatpush1.msra.mxu0 0.0
    %828 = vmatprep.subr.mxu0 0.0
    %829 = vmatpush1.msra.mxu0 0.0
    %830 = vmatprep.subr.mxu0 0.0
    %831 = vmatpush1.msra.mxu0 0.0
    %832 = vmatprep.subr.mxu0 0.0
    %833 = vmatpush1.msra.mxu0 0.0
    %834 = vmatprep.subr.mxu0 0.0
    %835 = vmatpush1.msra.mxu0 0.0
    %836 = vmatprep.subr.mxu0 0.0
    %837 = vmatpush1.msra.mxu0 0.0
    %838 = vmatprep.subr.mxu0 0.0
    %839 = vmatpush1.msra.mxu0 0.0
    %840 = vmatprep.subr.mxu0 0.0
    %841 = vmatpush1.msra.mxu0 0.0
    %842 = vmatprep.subr.mxu0 0.0
    %843 = vmatpush1.msra.mxu0 0.0
    %844 = vmatprep.subr.mxu0 0.0
    %845 = vmatpush1.msra.mxu0 0.0
    %846 = vmatprep.subr.mxu0 0.0
    %847 = vmatpush1.msra.mxu0 0.0
    %848 = vmatprep.subr.mxu0 0.0
    %849 = vmatpush1.msra.mxu0 0.0
    %850 = vmatprep.subr.mxu0 0.0
    %851 = vmatpush1.msra.mxu0 0.0
    %852 = vmatprep.subr.mxu0 0.0
    %853 = vmatpush1.msra.mxu0 0.0
    %854 = vmatprep.subr.mxu0 0.0
    %855 = vmatpush1.msra.mxu0 0.0
    %856 = vmatprep.subr.mxu0 0.0
    %857 = vmatpush1.msra.mxu0 0.0
    %858 = vmatprep.subr.mxu0 0.0
    %859 = vmatpush1.msra.mxu0 0.0
    %860 = vmatprep.subr.mxu0 0.0
    %861 = vmatpush1.msra.mxu0 0.0
    %862 = vmatprep.subr.mxu0 0.0
    %863 = vmatpush1.msra.mxu0 0.0
    %864 = vmatprep.mubr.f32.mxu0 0.0
    %865 = vmatmul.mubr.f32.gmra.mrb[0].mxu0 %v798
    %v866 = vpop.f32.mrb[0].mxu0
    %v867 = vadd.f32 0.0, %v866
    %v868 = vpop.f32.mrb[0].mxu0
    %869 = vdwg.mxu0
    %v870 = vadd.f32 %v796, %v867
    %v871 = vxor.u32 %v870, 2147483648
    %v872 = vmul.f32 %v871, 1.442695
    %v873 = vpow.pop %v872
    %v874 = vadd.f32 %v873, 1.0
    %v875 = vrcp.pop %v874
    %v876 = vmul.f32 1.0, %v875
    %v877 = vtanh.pop %v870
    %879 = vrot.lane.b32.xlu0 %v789, 32
    %v880 = vpop.permute.xlu0 %879
    %v882 = vmul.f32 %v876, %v880
    %884 = vrot.lane.b32.xlu0 %v877, 64
    %v885 = vpop.permute.xlu0 %884
    %v887 = vmul.f32 %v876, %v885
    %889 = vrot.lane.b32.xlu0 %v887, 32
    %v890 = vpop.permute.xlu0 %889
    %v892 = vadd.f32 %v882, %v890
    %v893 = vtanh.pop %v892
    %895 = vrot.lane.b32.xlu0 %v893, 64
    %v896 = vpop.permute.xlu0 %895
    %v898 = vmul.f32 %v876, %v896
    %v899 = vld [vmem:[%s528] sm:$0x7]
    %901 = vrot.lane.b32.xlu0 %v898, 32
    %v902 = vpop.permute.xlu0 %901
    %v904 = vmul.f32 %v899, %v902
    %906 = vrot.lane.b32.xlu0 %v892, 96
    %v907 = vpop.permute.xlu0 %906
    %v909 = vmul.f32 %v899, %v907
    %v910 = vsub.f32 1.0, %v899
    %v911 = vmul.f32 %v910, %v789
    %v912 = vadd.f32 %v909, %v911
    %v913 = vmul.f32 %v910, %v791
    %v914 = vadd.f32 %v904, %v913
    %915 = vst.msk [vmem:[%s794] sm:$0x7] %vm668, %v904
    %916 = vst.msk [vmem:[%s792] sm:$0x7] %vm671, %v904
    %v917 = vld [vmem:[%s533] sm:$0x7]
    %v919 = vsel %vm159, %v914, 0
    %921 = vmatprep.subr.mxu0 0.0
    %922 = vmatpush1.msra.mxu0 %v550
    %923 = vmatprep.subr.mxu0 0.0
    %924 = vmatpush1.msra.mxu0 %v551
    %925 = vmatprep.subr.mxu0 0.0
    %926 = vmatpush1.msra.mxu0 %v552
    %927 = vmatprep.subr.mxu0 0.0
    %928 = vmatpush1.msra.mxu0 %v553
    %929 = vmatprep.subr.mxu0 0.0
    %930 = vmatpush1.msra.mxu0 0.0
    %931 = vmatprep.subr.mxu0 0.0
    %932 = vmatpush1.msra.mxu0 0.0
    %933 = vmatprep.subr.mxu0 0.0
    %934 = vmatpush1.msra.mxu0 0.0
    %935 = vmatprep.subr.mxu0 0.0
    %936 = vmatpush1.msra.mxu0 0.0
    %937 = vmatprep.subr.mxu0 0.0
    %938 = vmatpush1.msra.mxu0 0.0
    %939 = vmatprep.subr.mxu0 0.0
    %940 = vmatpush1.msra.mxu0 0.0
    %941 = vmatprep.subr.mxu0 0.0
    %942 = vmatpush1.msra.mxu0 0.0
    %943 = vmatprep.subr.mxu0 0.0
    %944 = vmatpush1.msra.mxu0 0.0
    %945 = vmatprep.subr.mxu0 0.0
    %946 = vmatpush1.msra.mxu0 0.0
    %947 = vmatprep.subr.mxu0 0.0
    %948 = vmatpush1.msra.mxu0 0.0
    %949 = vmatprep.subr.mxu0 0.0
    %950 = vmatpush1.msra.mxu0 0.0
    %951 = vmatprep.subr.mxu0 0.0
    %952 = vmatpush1.msra.mxu0 0.0
    %953 = vmatprep.subr.mxu0 0.0
    %954 = vmatpush1.msra.mxu0 0.0
    %955 = vmatprep.subr.mxu0 0.0
    %956 = vmatpush1.msra.mxu0 0.0
    %957 = vmatprep.subr.mxu0 0.0
    %958 = vmatpush1.msra.mxu0 0.0
    %959 = vmatprep.subr.mxu0 0.0
    %960 = vmatpush1.msra.mxu0 0.0
    %961 = vmatprep.subr.mxu0 0.0
    %962 = vmatpush1.msra.mxu0 0.0
    %963 = vmatprep.subr.mxu0 0.0
    %964 = vmatpush1.msra.mxu0 0.0
    %965 = vmatprep.subr.mxu0 0.0
    %966 = vmatpush1.msra.mxu0 0.0
    %967 = vmatprep.subr.mxu0 0.0
    %968 = vmatpush1.msra.mxu0 0.0
    %969 = vmatprep.subr.mxu0 0.0
    %970 = vmatpush1.msra.mxu0 0.0
    %971 = vmatprep.subr.mxu0 0.0
    %972 = vmatpush1.msra.mxu0 0.0
    %973 = vmatprep.subr.mxu0 0.0
    %974 = vmatpush1.msra.mxu0 0.0
    %975 = vmatprep.subr.mxu0 0.0
    %976 = vmatpush1.msra.mxu0 0.0
    %977 = vmatprep.subr.mxu0 0.0
    %978 = vmatpush1.msra.mxu0 0.0
    %979 = vmatprep.subr.mxu0 0.0
    %980 = vmatpush1.msra.mxu0 0.0
    %981 = vmatprep.subr.mxu0 0.0
    %982 = vmatpush1.msra.mxu0 0.0
    %983 = vmatprep.subr.mxu0 0.0
    %984 = vmatpush1.msra.mxu0 0.0
    %985 = vmatprep.mubr.f32.mxu0 0.0
    %986 = vmatmul.mubr.f32.gmra.mrb[0].mxu0 %v919
    %v987 = vpop.f32.mrb[0].mxu0
    %v988 = vadd.f32 0.0, %v987
    %v989 = vpop.f32.mrb[0].mxu0
    %990 = vdwg.mxu0
    %v991 = vadd.f32 %v917, %v988
    %v992 = vxor.u32 %v991, 2147483648
    %v993 = vmul.f32 %v992, 1.442695
    %v994 = vpow.pop %v993
    %v995 = vadd.f32 %v994, 1.0
    %v996 = vrcp.pop %v995
    %v997 = vmul.f32 1.0, %v996
    %v998 = vtanh.pop %v991
    %1000 = vrot.lane.b32.xlu0 %v912, 32
    %v1001 = vpop.permute.xlu0 %1000
    %v1003 = vmul.f32 %v997, %v1001
    %1005 = vrot.lane.b32.xlu0 %v998, 64
    %v1006 = vpop.permute.xlu0 %1005
    %v1008 = vmul.f32 %v997, %v1006
    %1010 = vrot.lane.b32.xlu0 %v1008, 32
    %v1011 = vpop.permute.xlu0 %1010
    %v1013 = vadd.f32 %v1003, %v1011
    %v1014 = vtanh.pop %v1013
    %1016 = vrot.lane.b32.xlu0 %v1014, 64
    %v1017 = vpop.permute.xlu0 %1016
    %v1019 = vmul.f32 %v997, %v1017
    %v1020 = vld [vmem:[%s548] sm:$0x7]
    %1022 = vrot.lane.b32.xlu0 %v1019, 32
    %v1023 = vpop.permute.xlu0 %1022
    %v1025 = vmul.f32 %v1020, %v1023
    %1026 = vst.msk [vmem:[%s670] sm:$0x7] %vm668, %v1025
    %1027 = vst.msk [vmem:[#allocation5] sm:$0x7] %vm671, %v1025
    %v1028 = vld [vmem:[#allocation5] sm:$0x7]
    %v1029 = vld [vmem:[#allocation5 + $0x4] sm:$0x7]
    %v1030 = vld [vmem:[#allocation5 + $0x8] sm:$0x7]
    %v1031 = vld [vmem:[#allocation5 + $0xc] sm:$0x7]
    %v1032 = vtanh.pop %v1028
    %v1033 = vtanh.pop %v1029
    %v1034 = vtanh.pop %v1030
    %v1035 = vtanh.pop %v1031
    %v1036 = vld [vmem:[%s6] sm:$0xff]
    %v1037 = vld [vmem:[%s6 + $0x8] sm:$0xff]
    %v1038 = vld [vmem:[%s6 + $0x10] sm:$0xff]
    %v1039 = vld [vmem:[%s6 + $0x18] sm:$0xff]
    %v1040 = vld [vmem:[%s7] sm:$0x1]
    %v1042 = vlaneseq
    %v1043 = vshrl.u32 %v1042, 7
    %v1044 = vsub.s32 0, %v1043
    %v1045 = vrot.slane %v1040, %v1044
    %v1048 = vsel %vm159, %v1032, 0
    %1050 = vmatprep.subr.mxu0 0.0
    %1051 = vmatpush1.msra.mxu0 %v1036
    %1052 = vmatprep.subr.mxu0 0.0
    %1053 = vmatpush1.msra.mxu0 %v1037
    %1054 = vmatprep.subr.mxu0 0.0
    %1055 = vmatpush1.msra.mxu0 %v1038
    %1056 = vmatprep.subr.mxu0 0.0
    %1057 = vmatpush1.msra.mxu0 %v1039
    %1058 = vmatprep.subr.mxu0 0.0
    %1059 = vmatpush1.msra.mxu0 0.0
    %1060 = vmatprep.subr.mxu0 0.0
    %1061 = vmatpush1.msra.mxu0 0.0
    %1062 = vmatprep.subr.mxu0 0.0
    %1063 = vmatpush1.msra.mxu0 0.0
    %1064 = vmatprep.subr.mxu0 0.0
    %1065 = vmatpush1.msra.mxu0 0.0
    %1066 = vmatprep.subr.mxu0 0.0
    %1067 = vmatpush1.msra.mxu0 0.0
    %1068 = vmatprep.subr.mxu0 0.0
    %1069 = vmatpush1.msra.mxu0 0.0
    %1070 = vmatprep.subr.mxu0 0.0
    %1071 = vmatpush1.msra.mxu0 0.0
    %1072 = vmatprep.subr.mxu0 0.0
    %1073 = vmatpush1.msra.mxu0 0.0
    %1074 = vmatprep.subr.mxu0 0.0
    %1075 = vmatpush1.msra.mxu0 0.0
    %1076 = vmatprep.subr.mxu0 0.0
    %1077 = vmatpush1.msra.mxu0 0.0
    %1078 = vmatprep.subr.mxu0 0.0
    %1079 = vmatpush1.msra.mxu0 0.0
    %1080 = vmatprep.subr.mxu0 0.0
    %1081 = vmatpush1.msra.mxu0 0.0
    %1082 = vmatprep.subr.mxu0 0.0
    %1083 = vmatpush1.msra.mxu0 0.0
    %1084 = vmatprep.subr.mxu0 0.0
    %1085 = vmatpush1.msra.mxu0 0.0
    %1086 = vmatprep.subr.mxu0 0.0
    %1087 = vmatpush1.msra.mxu0 0.0
    %1088 = vmatprep.subr.mxu0 0.0
    %1089 = vmatpush1.msra.mxu0 0.0
    %1090 = vmatprep.subr.mxu0 0.0
    %1091 = vmatpush1.msra.mxu0 0.0
    %1092 = vmatprep.subr.mxu0 0.0
    %1093 = vmatpush1.msra.mxu0 0.0
    %1094 = vmatprep.subr.mxu0 0.0
    %1095 = vmatpush1.msra.mxu0 0.0
    %1096 = vmatprep.subr.mxu0 0.0
    %1097 = vmatpush1.msra.mxu0 0.0
    %1098 = vmatprep.subr.mxu0 0.0
    %1099 = vmatpush1.msra.mxu0 0.0
    %1100 = vmatprep.subr.mxu0 0.0
    %1101 = vmatpush1.msra.mxu0 0.0
    %1102 = vmatprep.subr.mxu0 0.0
    %1103 = vmatpush1.msra.mxu0 0.0
    %1104 = vmatprep.subr.mxu0 0.0
    %1105 = vmatpush1.msra.mxu0 0.0
    %1106 = vmatprep.subr.mxu0 0.0
    %1107 = vmatpush1.msra.mxu0 0.0
    %1108 = vmatprep.subr.mxu0 0.0
    %1109 = vmatpush1.msra.mxu0 0.0
    %1110 = vmatprep.subr.mxu0 0.0
    %1111 = vmatpush1.msra.mxu0 0.0
    %1112 = vmatprep.subr.mxu0 0.0
    %1113 = vmatpush1.msra.mxu0 0.0
    %1114 = vmatprep.mubr.f32.mxu0 0.0
    %1115 = vmatmul.mubr.f32.gmra.mrb[0].mxu0 %v1048
    %v1116 = vpop.f32.mrb[0].mxu0
    %v1117 = vadd.f32 %v1045, %v1116
    %v1118 = vpop.f32.mrb[0].mxu0
    %1119 = vdwg.mxu0
    %v1120 = vtanh.pop %v1117
    %1121 = vst.msk [vmem:[#allocation6] sm:$0x7] %vm129, %v1120
    %v1123 = vsel %vm159, %v1033, 0
    %1125 = vmatprep.subr.mxu0 0.0
    %1126 = vmatpush1.msra.mxu0 %v1036
    %1127 = vmatprep.subr.mxu0 0.0
    %1128 = vmatpush1.msra.mxu0 %v1037
    %1129 = vmatprep.subr.mxu0 0.0
    %1130 = vmatpush1.msra.mxu0 %v1038
    %1131 = vmatprep.subr.mxu0 0.0
    %1132 = vmatpush1.msra.mxu0 %v1039
    %1133 = vmatprep.subr.mxu0 0.0
    %1134 = vmatpush1.msra.mxu0 0.0
    %1135 = vmatprep.subr.mxu0 0.0
    %1136 = vmatpush1.msra.mxu0 0.0
    %1137 = vmatprep.subr.mxu0 0.0
    %1138 = vmatpush1.msra.mxu0 0.0
    %1139 = vmatprep.subr.mxu0 0.0
    %1140 = vmatpush1.msra.mxu0 0.0
    %1141 = vmatprep.subr.mxu0 0.0
    %1142 = vmatpush1.msra.mxu0 0.0
    %1143 = vmatprep.subr.mxu0 0.0
    %1144 = vmatpush1.msra.mxu0 0.0
    %1145 = vmatprep.subr.mxu0 0.0
    %1146 = vmatpush1.msra.mxu0 0.0
    %1147 = vmatprep.subr.mxu0 0.0
    %1148 = vmatpush1.msra.mxu0 0.0
    %1149 = vmatprep.subr.mxu0 0.0
    %1150 = vmatpush1.msra.mxu0 0.0
    %1151 = vmatprep.subr.mxu0 0.0
    %1152 = vmatpush1.msra.mxu0 0.0
    %1153 = vmatprep.subr.mxu0 0.0
    %1154 = vmatpush1.msra.mxu0 0.0
    %1155 = vmatprep.subr.mxu0 0.0
    %1156 = vmatpush1.msra.mxu0 0.0
    %1157 = vmatprep.subr.mxu0 0.0
    %1158 = vmatpush1.msra.mxu0 0.0
    %1159 = vmatprep.subr.mxu0 0.0
    %1160 = vmatpush1.msra.mxu0 0.0
    %1161 = vmatprep.subr.mxu0 0.0
    %1162 = vmatpush1.msra.mxu0 0.0
    %1163 = vmatprep.subr.mxu0 0.0
    %1164 = vmatpush1.msra.mxu0 0.0
    %1165 = vmatprep.subr.mxu0 0.0
    %1166 = vmatpush1.msra.mxu0 0.0
    %1167 = vmatprep.subr.mxu0 0.0
    %1168 = vmatpush1.msra.mxu0 0.0
    %1169 = vmatprep.subr.mxu0 0.0
    %1170 = vmatpush1.msra.mxu0 0.0
    %1171 = vmatprep.subr.mxu0 0.0
    %1172 = vmatpush1.msra.mxu0 0.0
    %1173 = vmatprep.subr.mxu0 0.0
    %1174 = vmatpush1.msra.mxu0 0.0
    %1175 = vmatprep.subr.mxu0 0.0
    %1176 = vmatpush1.msra.mxu0 0.0
    %1177 = vmatprep.subr.mxu0 0.0
    %1178 = vmatpush1.msra.mxu0 0.0
    %1179 = vmatprep.subr.mxu0 0.0
    %1180 = vmatpush1.msra.mxu0 0.0
    %1181 = vmatprep.subr.mxu0 0.0
    %1182 = vmatpush1.msra.mxu0 0.0
    %1183 = vmatprep.subr.mxu0 0.0
    %1184 = vmatpush1.msra.mxu0 0.0
    %1185 = vmatprep.subr.mxu0 0.0
    %1186 = vmatpush1.msra.mxu0 0.0
    %1187 = vmatprep.subr.mxu0 0.0
    %1188 = vmatpush1.msra.mxu0 0.0
    %1189 = vmatprep.mubr.f32.mxu0 0.0
    %1190 = vmatmul.mubr.f32.gmra.mrb[0].mxu0 %v1123
    %v1191 = vpop.f32.mrb[0].mxu0
    %v1192 = vadd.f32 %v1045, %v1191
    %v1193 = vpop.f32.mrb[0].mxu0
    %1194 = vdwg.mxu0
    %v1195 = vtanh.pop %v1192
    %s1196 = scalar_lea.vmem [#allocation6], 4
    %1197 = vst.msk [vmem:[%s1196] sm:$0x7] %vm129, %v1195
    %v1199 = vsel %vm159, %v1034, 0
    %1201 = vmatprep.subr.mxu0 0.0
    %1202 = vmatpush1.msra.mxu0 %v1036
    %1203 = vmatprep.subr.mxu0 0.0
    %1204 = vmatpush1.msra.mxu0 %v1037
    %1205 = vmatprep.subr.mxu0 0.0
    %1206 = vmatpush1.msra.mxu0 %v1038
    %1207 = vmatprep.subr.mxu0 0.0
    %1208 = vmatpush1.msra.mxu0 %v1039
    %1209 = vmatprep.subr.mxu0 0.0
    %1210 = vmatpush1.msra.mxu0 0.0
    %1211 = vmatprep.subr.mxu0 0.0
    %1212 = vmatpush1.msra.mxu0 0.0
    %1213 = vmatprep.subr.mxu0 0.0
    %1214 = vmatpush1.msra.mxu0 0.0
    %1215 = vmatprep.subr.mxu0 0.0
    %1216 = vmatpush1.msra.mxu0 0.0
    %1217 = vmatprep.subr.mxu0 0.0
    %1218 = vmatpush1.msra.mxu0 0.0
    %1219 = vmatprep.subr.mxu0 0.0
    %1220 = vmatpush1.msra.mxu0 0.0
    %1221 = vmatprep.subr.mxu0 0.0
    %1222 = vmatpush1.msra.mxu0 0.0
    %1223 = vmatprep.subr.mxu0 0.0
    %1224 = vmatpush1.msra.mxu0 0.0
    %1225 = vmatprep.subr.mxu0 0.0
    %1226 = vmatpush1.msra.mxu0 0.0
    %1227 = vmatprep.subr.mxu0 0.0
    %1228 = vmatpush1.msra.mxu0 0.0
    %1229 = vmatprep.subr.mxu0 0.0
    %1230 = vmatpush1.msra.mxu0 0.0
    %1231 = vmatprep.subr.mxu0 0.0
    %1232 = vmatpush1.msra.mxu0 0.0
    %1233 = vmatprep.subr.mxu0 0.0
    %1234 = vmatpush1.msra.mxu0 0.0
    %1235 = vmatprep.subr.mxu0 0.0
    %1236 = vmatpush1.msra.mxu0 0.0
    %1237 = vmatprep.subr.mxu0 0.0
    %1238 = vmatpush1.msra.mxu0 0.0
    %1239 = vmatprep.subr.mxu0 0.0
    %1240 = vmatpush1.msra.mxu0 0.0
    %1241 = vmatprep.subr.mxu0 0.0
    %1242 = vmatpush1.msra.mxu0 0.0
    %1243 = vmatprep.subr.mxu0 0.0
    %1244 = vmatpush1.msra.mxu0 0.0
    %1245 = vmatprep.subr.mxu0 0.0
    %1246 = vmatpush1.msra.mxu0 0.0
    %1247 = vmatprep.subr.mxu0 0.0
    %1248 = vmatpush1.msra.mxu0 0.0
    %1249 = vmatprep.subr.mxu0 0.0
    %1250 = vmatpush1.msra.mxu0 0.0
    %1251 = vmatprep.subr.mxu0 0.0
    %1252 = vmatpush1.msra.mxu0 0.0
    %1253 = vmatprep.subr.mxu0 0.0
    %1254 = vmatpush1.msra.mxu0 0.0
    %1255 = vmatprep.subr.mxu0 0.0
    %1256 = vmatpush1.msra.mxu0 0.0
    %1257 = vmatprep.subr.mxu0 0.0
    %1258 = vmatpush1.msra.mxu0 0.0
    %1259 = vmatprep.subr.mxu0 0.0
    %1260 = vmatpush1.msra.mxu0 0.0
    %1261 = vmatprep.subr.mxu0 0.0
    %1262 = vmatpush1.msra.mxu0 0.0
    %1263 = vmatprep.subr.mxu0 0.0
    %1264 = vmatpush1.msra.mxu0 0.0
    %1265 = vmatprep.mubr.f32.mxu0 0.0
    %1266 = vmatmul.mubr.f32.gmra.mrb[0].mxu0 %v1199
    %v1267 = vpop.f32.mrb[0].mxu0
    %v1268 = vadd.f32 %v1045, %v1267
    %v1269 = vpop.f32.mrb[0].mxu0
    %1270 = vdwg.mxu0
    %v1271 = vtanh.pop %v1268
    %s1272 = scalar_lea.vmem [#allocation6], 8
    %1273 = vst.msk [vmem:[%s1272] sm:$0x7] %vm129, %v1271
    %v1275 = vsel %vm159, %v1035, 0
    %1277 = vmatprep.subr.mxu0 0.0
    %1278 = vmatpush1.msra.mxu0 %v1036
    %1279 = vmatprep.subr.mxu0 0.0
    %1280 = vmatpush1.msra.mxu0 %v1037
    %1281 = vmatprep.subr.mxu0 0.0
    %1282 = vmatpush1.msra.mxu0 %v1038
    %1283 = vmatprep.subr.mxu0 0.0
    %1284 = vmatpush1.msra.mxu0 %v1039
    %1285 = vmatprep.subr.mxu0 0.0
    %1286 = vmatpush1.msra.mxu0 0.0
    %1287 = vmatprep.subr.mxu0 0.0
    %1288 = vmatpush1.msra.mxu0 0.0
    %1289 = vmatprep.subr.mxu0 0.0
    %1290 = vmatpush1.msra.mxu0 0.0
    %1291 = vmatprep.subr.mxu0 0.0
    %1292 = vmatpush1.msra.mxu0 0.0
    %1293 = vmatprep.subr.mxu0 0.0
    %1294 = vmatpush1.msra.mxu0 0.0
    %1295 = vmatprep.subr.mxu0 0.0
    %1296 = vmatpush1.msra.mxu0 0.0
    %1297 = vmatprep.subr.mxu0 0.0
    %1298 = vmatpush1.msra.mxu0 0.0
    %1299 = vmatprep.subr.mxu0 0.0
    %1300 = vmatpush1.msra.mxu0 0.0
    %1301 = vmatprep.subr.mxu0 0.0
    %1302 = vmatpush1.msra.mxu0 0.0
    %1303 = vmatprep.subr.mxu0 0.0
    %1304 = vmatpush1.msra.mxu0 0.0
    %1305 = vmatprep.subr.mxu0 0.0
    %1306 = vmatpush1.msra.mxu0 0.0
    %1307 = vmatprep.subr.mxu0 0.0
    %1308 = vmatpush1.msra.mxu0 0.0
    %1309 = vmatprep.subr.mxu0 0.0
    %1310 = vmatpush1.msra.mxu0 0.0
    %1311 = vmatprep.subr.mxu0 0.0
    %1312 = vmatpush1.msra.mxu0 0.0
    %1313 = vmatprep.subr.mxu0 0.0
    %1314 = vmatpush1.msra.mxu0 0.0
    %1315 = vmatprep.subr.mxu0 0.0
    %1316 = vmatpush1.msra.mxu0 0.0
    %1317 = vmatprep.subr.mxu0 0.0
    %1318 = vmatpush1.msra.mxu0 0.0
    %1319 = vmatprep.subr.mxu0 0.0
    %1320 = vmatpush1.msra.mxu0 0.0
    %1321 = vmatprep.subr.mxu0 0.0
    %1322 = vmatpush1.msra.mxu0 0.0
    %1323 = vmatprep.subr.mxu0 0.0
    %1324 = vmatpush1.msra.mxu0 0.0
    %1325 = vmatprep.subr.mxu0 0.0
    %1326 = vmatpush1.msra.mxu0 0.0
    %1327 = vmatprep.subr.mxu0 0.0
    %1328 = vmatpush1.msra.mxu0 0.0
    %1329 = vmatprep.subr.mxu0 0.0
    %1330 = vmatpush1.msra.mxu0 0.0
    %1331 = vmatprep.subr.mxu0 0.0
    %1332 = vmatpush1.msra.mxu0 0.0
    %1333 = vmatprep.subr.mxu0 0.0
    %1334 = vmatpush1.msra.mxu0 0.0
    %1335 = vmatprep.subr.mxu0 0.0
    %1336 = vmatpush1.msra.mxu0 0.0
    %1337 = vmatprep.subr.mxu0 0.0
    %1338 = vmatpush1.msra.mxu0 0.0
    %1339 = vmatprep.subr.mxu0 0.0
    %1340 = vmatpush1.msra.mxu0 0.0
    %1341 = vmatprep.mubr.f32.mxu0 0.0
    %1342 = vmatmul.mubr.f32.gmra.mrb[0].mxu0 %v1275
    %v1343 = vpop.f32.mrb[0].mxu0
    %v1344 = vadd.f32 %v1045, %v1343
    %v1345 = vpop.f32.mrb[0].mxu0
    %1346 = vdwg.mxu0
    %v1347 = vtanh.pop %v1344
    %s1348 = scalar_lea.vmem [#allocation6], 12
    %1349 = vst.msk [vmem:[%s1348] sm:$0x7] %vm129, %v1347
    %v1350 = vld [vmem:[#allocation6] sm:$0x7]
    %v1351 = vld [vmem:[#allocation6 + $0x4] sm:$0x7]
    %v1352 = vld [vmem:[#allocation6 + $0x8] sm:$0x7]
    %v1353 = vld [vmem:[#allocation6 + $0xc] sm:$0x7]
    %v1354 = vmul.f32 %v1350, %v128
    %v1355 = vmul.f32 %v1351, %v128
    %v1356 = vmul.f32 %v1352, %v128
    %v1357 = vmul.f32 %v1353, %v128
    %v1358 = vsel %vm129, %v1354, 0.0
    %1359 = vadd.xlane.f32.xlu0 %v1358
    %v1360 = vpop.xlane.xlu0 %1359
    %v1361 = vsel %vm129, %v1355, 0.0
    %1362 = vadd.xlane.f32.xlu0 %v1361
    %v1363 = vpop.xlane.xlu0 %1362
    %v1364 = vsel %vm129, %v1356, 0.0
    %1365 = vadd.xlane.f32.xlu0 %v1364
    %v1366 = vpop.xlane.xlu0 %1365
    %v1367 = vsel %vm129, %v1357, 0.0
    %1368 = vadd.xlane.f32.xlu0 %v1367
    %v1369 = vpop.xlane.xlu0 %1368
    %v1370 = vrcp.pop 32.0
    %v1371 = vmul.f32 %v1360, %v1370
    %v1372 = vmul.f32 %v1363, %v1370
    %v1373 = vmul.f32 %v1366, %v1370
    %v1374 = vmul.f32 %v1369, %v1370
    %v1375 = vmul.f32 %v1371, 1.442695
    %v1376 = vpow.pop %v1375
    %v1377 = vmul.f32 %v1372, 1.442695
    %v1378 = vpow.pop %v1377
    %v1379 = vmul.f32 %v1373, 1.442695
    %v1380 = vpow.pop %v1379
    %v1381 = vmul.f32 %v1374, 1.442695
    %v1382 = vpow.pop %v1381
    %v1383 = vld [vmem:[%s1] sm:$0x7]
    %v1384 = vld [vmem:[%s1 + $0x4] sm:$0x7]
    %v1385 = vld [vmem:[%s1 + $0x8] sm:$0x7]
    %v1386 = vld [vmem:[%s1 + $0xc] sm:$0x7]
    %v1387 = vmul.f32 %v1376, %v1383
    %v1388 = vmul.f32 %v1378, %v1384
    %v1389 = vmul.f32 %v1380, %v1385
    %v1390 = vmul.f32 %v1382, %v1386
    %vm1391 = vcmask 2048
    %v1392 = vsel %vm1391, %v1387, 0.0
    %v1393 = vsel %vm1391, %v1388, 0.0
    %v1394 = vadd.f32 %v1392, %v1393
    %v1395 = vsel %vm1391, %v1389, 0.0
    %v1396 = vadd.f32 %v1394, %v1395
    %v1397 = vsel %vm1391, %v1390, 0.0
    %v1398 = vadd.f32 %v1396, %v1397
    %v1399 = vadd.f32 %v1398, 0.0001
    %v1400 = vrcp.pop %v1399
    %v1401 = vmul.f32 %v1387, %v1400
    %v1402 = vmul.f32 %v1388, %v1400
    %v1403 = vmul.f32 %v1389, %v1400
    %v1404 = vmul.f32 %v1390, %v1400
    %1405 = vst.msk [vmem:[%s11] sm:$0x7] %vm1391, %v1401
    %1406 = vst.msk [vmem:[%s11 + $0x4] sm:$0x7] %vm1391, %v1402
    %1407 = vst.msk [vmem:[%s11 + $0x8] sm:$0x7] %vm1391, %v1403
    %1408 = vst.msk [vmem:[%s11 + $0xc] sm:$0x7] %vm1391, %v1404
    %1410 = vset.pattern.permute.xlu0 0
    %1411 = vperm.xlu0 %1410, %v1401
    %v1412 = vpop.permute.xlu0 %1411
    %1415 = vset.pattern.permute.xlu0 0
    %1416 = vperm.xlu0 %1415, %v1402
    %v1417 = vpop.permute.xlu0 %1416
    %1420 = vset.pattern.permute.xlu0 0
    %1421 = vperm.xlu0 %1420, %v1403
    %v1422 = vpop.permute.xlu0 %1421
    %1425 = vset.pattern.permute.xlu0 0
    %1426 = vperm.xlu0 %1425, %v1404
    %v1427 = vpop.permute.xlu0 %1426
    %v1429 = vmul.f32 %v1032, %v1412
    %v1430 = vmul.f32 %v1033, %v1417
    %v1431 = vmul.f32 %v1034, %v1422
    %v1432 = vmul.f32 %v1035, %v1427
    %v1433 = vsel %vm129, %v1429, 0.0
    %v1434 = vsel %vm129, %v1430, 0.0
    %v1435 = vadd.f32 %v1433, %v1434
    %v1436 = vsel %vm129, %v1431, 0.0
    %v1437 = vadd.f32 %v1435, %v1436
    %v1438 = vsel %vm129, %v1432, 0.0
    %v1439 = vadd.f32 %v1437, %v1438
    %1440 = vst.msk [vmem:[%s10] sm:$0x7] %vm129, %v1439
    // Predicated region
    $region42: #{hnar_forward.3} parent=1 // pred_check
      _
    $region43: #{hnar_forward.3} parent=1 // pred_check_branch
      %1442 = sbr.rel (0) target = $region45
    $region44: #{hnar_forward.3} parent=1 // pred_region
      _
    $region45: #{hnar_forward.3} parent=1 // pred_fallthru
      _
    // Predicated region
    $region46: #{hnar_forward.3} parent=1 // pred_check
      _
    $region47: #{hnar_forward.3} parent=1 // pred_check_branch
      %1444 = sbr.rel (0) target = $region49
    $region48: #{hnar_forward.3} parent=1 // pred_region
      _
    $region49: #{hnar_forward.3} parent=1 // pred_fallthru
      _
    // Predicated region
    $region50: #{hnar_forward.3} parent=1 // pred_check
      _
    $region51: #{hnar_forward.3} parent=1 // pred_check_branch
      %1446 = sbr.rel (0) target = $region53
    $region52: #{hnar_forward.3} parent=1 // pred_region
      %s1448 = ssub.s32 256, 256
      %1449 = vsyncadd [#allocation7], %s1448
      %s1450 = sshll.u32 [#allocation6], 4
      %s1451 = int_to_ptr.vmem [resolvable:$true] %s1450
      %1456 = dma.vmem_to_hbm [thread:$0]  %s1451, 256, %s12, [#allocation7], 64, 64, 4
    $region53: #{hnar_forward.3} parent=1 // pred_fallthru
      _
    // Predicated region
    $region54: #{hnar_forward.3} parent=1 // pred_check
      _
    $region55: #{hnar_forward.3} parent=1 // pred_check_branch
      %1458 = sbr.rel (0) target = $region57
    $region56: #{hnar_forward.3} parent=1 // pred_region
      %s1460 = ssub.s32 64, 64
      %1461 = vsyncadd [#allocation9], %s1460
      %s1463 = sshll.u32 [#allocation8], 4
      %s1464 = int_to_ptr.vmem [resolvable:$true] %s1463
      %1466 = dma.vmem_to_hbm [thread:$0]  %s1464, 64, %s13, [#allocation9]
    $region57: #{hnar_forward.3} parent=1 // pred_fallthru
      _
    // Predicated region
    $region58: #{hnar_forward.3} parent=1 // pred_check
      _
    $region59: #{hnar_forward.3} parent=1 // pred_check_branch
      %1468 = sbr.rel (0) target = $region61
    $region60: #{hnar_forward.3} parent=1 // pred_region
      _
    $region61: #{hnar_forward.3} parent=1 // pred_fallthru
      _
    // Predicated region
    $region62: #{hnar_forward.3} parent=1 // pred_check
      _
    $region63: #{hnar_forward.3} parent=1 // pred_check_branch
      %1470 = sbr.rel (0) target = $region65
    $region64: #{hnar_forward.3} parent=1 // pred_region
      _
    $region65: #{hnar_forward.3} parent=1 // pred_fallthru
      _
    // Predicated region
    $region66: #{hnar_forward.3} parent=1 // pred_check
      _
    $region67: #{hnar_forward.3} parent=1 // pred_check_branch
      %1472 = sbr.rel (0) target = $region69
    $region68: #{hnar_forward.3} parent=1 // pred_region
      %1473 = dma.done [#allocation7], 256
    $region69: #{hnar_forward.3} parent=1 // pred_fallthru
      _
    // Predicated region
    $region70: #{hnar_forward.3} parent=1 // pred_check
      _
    $region71: #{hnar_forward.3} parent=1 // pred_check_branch
      %1475 = sbr.rel (0) target = $region73
    $region72: #{hnar_forward.3} parent=1 // pred_region
      %1476 = dma.done [#allocation9], 64
    $region73: #{hnar_forward.3} parent=1 // pred_fallthru
      _
    %1477 = vsyncpa [#allocation7], 1
    %1478 = vsyncpa [#allocation9], 1

// kernel: hnar_forward.2
$region0: #{hnar_forward.2}
  #allocation0 [shape = 'u32[]', space=smem, size = 0x4, offset = 0x4, fixed_abs, tag = 'smem constant byte address 0x4 - core index']
  #allocation1 [shape = 'u32[144,128]{1,0:T(1,128)}', space=vmem, size = 0x12000, scoped, tag = 'internal scratch']
  #allocation2 [shape = 'f32[8,9,128]{2,1,0:T(8,128)}', space=vmem, size = 0x10000, scoped, tag = 'scratch operand']
  #allocation3 [shape = 'f32[8,9,128]{2,1,0:T(8,128)}', space=vmem, size = 0x10000, scoped, tag = 'scratch operand']
  #allocation4 [shape = 'f32[8,9,32]{2,1,0:T(8,128)}', space=vmem, size = 0x10000, scoped, tag = 'scratch operand']
  #allocation5 [shape = 'f32[8,9,32]{2,1,0:T(8,128)}', space=vmem, size = 0x10000, scoped, tag = 'scratch operand']
  %s0 = inlined_call_operand.vmem [shape: f32[8,9,32], index: 0, kind: input, shape index: {}]
  %s1 = inlined_call_operand.vmem [shape: f32[8,9,1], index: 1, kind: input, shape index: {}]
  %s2 = inlined_call_operand.vmem [shape: f32[9,40], index: 2, kind: input, shape index: {}]
  %s3 = inlined_call_operand.vmem [shape: f32[32,128], index: 3, kind: input, shape index: {}]
  %s4 = inlined_call_operand.vmem [shape: f32[32,128], index: 4, kind: input, shape index: {}]
  %s5 = inlined_call_operand.vmem [shape: f32[1,128], index: 5, kind: input, shape index: {}]
  %s6 = inlined_call_operand.vmem [shape: f32[32,32], index: 6, kind: input, shape index: {}]
  %s7 = inlined_call_operand.vmem [shape: f32[1,32], index: 7, kind: input, shape index: {}]
  %s8 = inlined_call_operand.vmem [shape: f32[40,32], index: 8, kind: input, shape index: {}]
  %s9 = inlined_call_operand.vmem [shape: f32[1,32], index: 9, kind: input, shape index: {}]
  %s10 = inlined_call_operand.vmem [shape: f32[9,32], index: 10, kind: output, shape index: {0}]
  %s11 = inlined_call_operand.vmem [shape: f32[8,9,1], index: 11, kind: output, shape index: {1}]
  %s12 = inlined_call_operand.vmem [shape: f32[8,9,32], index: 12, kind: output, shape index: {2}]
  %s13 = inlined_call_operand.hbm [shape: f32[9,32], index: 13, kind: output, shape index: {3}]
  %14 = xla_tuple %s10, %s11, %s12, %s13
  %s15 = sld [smem:[#allocation0]]
  $region74: #{hnar_forward.2} parent=0
    _
  %s17 = ssub.s32 1, %s15
  %s18 = scalar_select 0, %s17, %s15
  $region1: #{hnar_forward.2} parent=0
    #allocation6 [shape = 'u8[8192]{0}', space=vmem, size = 0x2000, scoped, tag = 'output window, operand 3, single buffered']
    #allocation7 [shape = 's32[1]{0}', space=sflag, size = 0x4, scoped, tag = 'scoped memory for hnar_forward.2']
    %19 = vsyncpa [#allocation7], 0
    // Predicated region
    $region2: #{hnar_forward.2} parent=1 // pred_check
      _
    $region3: #{hnar_forward.2} parent=1 // pred_check_branch
      %21 = sbr.rel (0) target = $region5
    $region4: #{hnar_forward.2} parent=1 // pred_region
      _
    $region5: #{hnar_forward.2} parent=1 // pred_fallthru
      _
    // Predicated region
    $region6: #{hnar_forward.2} parent=1 // pred_check
      _
    $region7: #{hnar_forward.2} parent=1 // pred_check_branch
      %23 = sbr.rel (0) target = $region9
    $region8: #{hnar_forward.2} parent=1 // pred_region
      _
    $region9: #{hnar_forward.2} parent=1 // pred_fallthru
      _
    // Predicated region
    $region10: #{hnar_forward.2} parent=1 // pred_check
      _
    $region11: #{hnar_forward.2} parent=1 // pred_check_branch
      %25 = sbr.rel (0) target = $region13
    $region12: #{hnar_forward.2} parent=1 // pred_region
      _
    $region13: #{hnar_forward.2} parent=1 // pred_fallthru
      _
    // Predicated region
    $region14: #{hnar_forward.2} parent=1 // pred_check
      _
    $region15: #{hnar_forward.2} parent=1 // pred_check_branch
      %27 = sbr.rel (0) target = $region17
    $region16: #{hnar_forward.2} parent=1 // pred_region
      _
    $region17: #{hnar_forward.2} parent=1 // pred_fallthru
      _
    // Predicated region
    $region18: #{hnar_forward.2} parent=1 // pred_check
      _
    $region19: #{hnar_forward.2} parent=1 // pred_check_branch
      %29 = sbr.rel (0) target = $region21
    $region20: #{hnar_forward.2} parent=1 // pred_region
      _
    $region21: #{hnar_forward.2} parent=1 // pred_fallthru
      _
    // Predicated region
    $region22: #{hnar_forward.2} parent=1 // pred_check
      _
    $region23: #{hnar_forward.2} parent=1 // pred_check_branch
      %31 = sbr.rel (0) target = $region25
    $region24: #{hnar_forward.2} parent=1 // pred_region
      _
    $region25: #{hnar_forward.2} parent=1 // pred_fallthru
      _
    // Predicated region
    $region26: #{hnar_forward.2} parent=1 // pred_check
      _
    $region27: #{hnar_forward.2} parent=1 // pred_check_branch
      %33 = sbr.rel (0) target = $region29
    $region28: #{hnar_forward.2} parent=1 // pred_region
      _
    $region29: #{hnar_forward.2} parent=1 // pred_fallthru
      _
    // Predicated region
    $region30: #{hnar_forward.2} parent=1 // pred_check
      _
    $region31: #{hnar_forward.2} parent=1 // pred_check_branch
      %35 = sbr.rel (0) target = $region33
    $region32: #{hnar_forward.2} parent=1 // pred_region
      _
    $region33: #{hnar_forward.2} parent=1 // pred_fallthru
      _
    // Predicated region
    $region34: #{hnar_forward.2} parent=1 // pred_check
      _
    $region35: #{hnar_forward.2} parent=1 // pred_check_branch
      %37 = sbr.rel (0) target = $region37
    $region36: #{hnar_forward.2} parent=1 // pred_region
      _
    $region37: #{hnar_forward.2} parent=1 // pred_fallthru
      _
    // Predicated region
    $region38: #{hnar_forward.2} parent=1 // pred_check
      _
    $region39: #{hnar_forward.2} parent=1 // pred_check_branch
      %39 = sbr.rel (0) target = $region41
    $region40: #{hnar_forward.2} parent=1 // pred_region
      _
    $region41: #{hnar_forward.2} parent=1 // pred_fallthru
      _
    %v40 = vld [vmem:[%s2] sm:$0xff]
    %v41 = vld [vmem:[%s2 + $0x8] sm:$0x1]
    %v42 = vld [vmem:[%s8] sm:$0xff]
    %v43 = vld [vmem:[%s8 + $0x8] sm:$0xff]
    %v44 = vld [vmem:[%s8 + $0x10] sm:$0xff]
    %v45 = vld [vmem:[%s8 + $0x18] sm:$0xff]
    %v46 = vld [vmem:[%s8 + $0x20] sm:$0xff]
    %v47 = vld [vmem:[%s9] sm:$0x1]
    %v49 = vlaneseq
    %v50 = vshrl.u32 %v49, 7
    %v51 = vsub.s32 0, %v50
    %v52 = vrot.slane %v47, %v51
    %vm54 = vcmask 326656
    %v56 = vsel %vm54, %v40, 0
    %v59 = vsel %vm54, %v41, 0
    %61 = vmatprep.subr.mxu0 0.0
    %62 = vmatpush1.msra.mxu0 %v42
    %63 = vmatprep.subr.mxu0 0.0
    %64 = vmatpush1.msra.mxu0 %v43
    %65 = vmatprep.subr.mxu0 0.0
    %66 = vmatpush1.msra.mxu0 %v44
    %67 = vmatprep.subr.mxu0 0.0
    %68 = vmatpush1.msra.mxu0 %v45
    %69 = vmatprep.subr.mxu0 0.0
    %70 = vmatpush1.msra.mxu0 %v46
    %71 = vmatprep.subr.mxu0 0.0
    %72 = vmatpush1.msra.mxu0 0.0
    %73 = vmatprep.subr.mxu0 0.0
    %74 = vmatpush1.msra.mxu0 0.0
    %75 = vmatprep.subr.mxu0 0.0
    %76 = vmatpush1.msra.mxu0 0.0
    %77 = vmatprep.subr.mxu0 0.0
    %78 = vmatpush1.msra.mxu0 0.0
    %79 = vmatprep.subr.mxu0 0.0
    %80 = vmatpush1.msra.mxu0 0.0
    %81 = vmatprep.subr.mxu0 0.0
    %82 = vmatpush1.msra.mxu0 0.0
    %83 = vmatprep.subr.mxu0 0.0
    %84 = vmatpush1.msra.mxu0 0.0
    %85 = vmatprep.subr.mxu0 0.0
    %86 = vmatpush1.msra.mxu0 0.0
    %87 = vmatprep.subr.mxu0 0.0
    %88 = vmatpush1.msra.mxu0 0.0
    %89 = vmatprep.subr.mxu0 0.0
    %90 = vmatpush1.msra.mxu0 0.0
    %91 = vmatprep.subr.mxu0 0.0
    %92 = vmatpush1.msra.mxu0 0.0
    %93 = vmatprep.subr.mxu0 0.0
    %94 = vmatpush1.msra.mxu0 0.0
    %95 = vmatprep.subr.mxu0 0.0
    %96 = vmatpush1.msra.mxu0 0.0
    %97 = vmatprep.subr.mxu0 0.0
    %98 = vmatpush1.msra.mxu0 0.0
    %99 = vmatprep.subr.mxu0 0.0
    %100 = vmatpush1.msra.mxu0 0.0
    %101 = vmatprep.subr.mxu0 0.0
    %102 = vmatpush1.msra.mxu0 0.0
    %103 = vmatprep.subr.mxu0 0.0
    %104 = vmatpush1.msra.mxu0 0.0
    %105 = vmatprep.subr.mxu0 0.0
    %106 = vmatpush1.msra.mxu0 0.0
    %107 = vmatprep.subr.mxu0 0.0
    %108 = vmatpush1.msra.mxu0 0.0
    %109 = vmatprep.subr.mxu0 0.0
    %110 = vmatpush1.msra.mxu0 0.0
    %111 = vmatprep.subr.mxu0 0.0
    %112 = vmatpush1.msra.mxu0 0.0
    %113 = vmatprep.subr.mxu0 0.0
    %114 = vmatpush1.msra.mxu0 0.0
    %115 = vmatprep.subr.mxu0 0.0
    %116 = vmatpush1.msra.mxu0 0.0
    %117 = vmatprep.subr.mxu0 0.0
    %118 = vmatpush1.msra.mxu0 0.0
    %119 = vmatprep.subr.mxu0 0.0
    %120 = vmatpush1.msra.mxu0 0.0
    %121 = vmatprep.subr.mxu0 0.0
    %122 = vmatpush1.msra.mxu0 0.0
    %123 = vmatprep.subr.mxu0 0.0
    %124 = vmatpush1.msra.mxu0 0.0
    %125 = vmatprep.mubr.f32.mxu0 0.0
    %126 = vmatmul.mubr.f32.gmra.mrb[0].mxu0 %v56
    %v127 = vpop.f32.mrb[0].mxu0
    %v128 = vadd.f32 %v52, %v127
    %v129 = vpop.f32.mrb[0].mxu0
    %130 = vmatprep.mubr.f32.mxu0 0.0
    %131 = vmatmul.mubr.f32.gmra.mrb[0].mxu0 %v59
    %v132 = vpop.f32.mrb[0].mxu0
    %v133 = vadd.f32 %v52, %v132
    %v134 = vpop.f32.mrb[0].mxu0
    %135 = vdwg.mxu0
    %v136 = vtanh.pop %v128
    %v137 = vtanh.pop %v133
    %vm138 = vcmask 261120
    %139 = vst.msk [vmem:[#allocation6] sm:$0xff] %vm138, %v136
    %vm140 = vcmask 253952
    %141 = vst.msk [vmem:[#allocation6 + $0x8] sm:$0x1] %vm140, %v137
    %v142 = vlaneseq
    %v143 = vand.u32 %v142, 127
    %vm144 = vcmp.lt.s32.totalorder %v143, 0
    %v145 = vsub.s32 0, %v143
    %v146 = vsel %vm144, %v145, %v143
    %v147 = vshrl.u32 %v146, 5
    %v148 = vand.u32 %v146, 31
    %v149 = vsub.s32 0, %v148
    %v150 = vsel %vm144, %v149, %v148
    %vm151 = vcmp.ne.s32.totalorder %v150, 0
    %vm152 = vcmp.lt.s32.totalorder %v150, 0
    %vm153 = vmand %vm152, %vm151
    %v154 = vadd.s32 %v150, 32
    %v155 = vsel %vm153, %v154, %v150
    %vm156 = vcmp.lt.s32.totalorder %v155, 16
    %vm157 = vcmp.lt.s32.totalorder %v143, 16
    %v158 = vld [vmem:[%s3] sm:$0xff]
    %v159 = vld [vmem:[%s3 + $0x8] sm:$0xff]
    %v160 = vld [vmem:[%s3 + $0x10] sm:$0xff]
    %v161 = vld [vmem:[%s3 + $0x18] sm:$0xff]
    %v162 = vld [vmem:[%s5] sm:$0x1]
    %v163 = vld [vmem:[%s0] sm:$0xff]
    %v164 = vld [vmem:[%s0 + $0x8] sm:$0x1]
    %v166 = vlaneseq
    %v167 = vshrl.u32 %v166, 7
    %v168 = vsub.s32 0, %v167
    %v169 = vrot.slane %v162, %v168
    %v172 = vsel %vm138, %v163, 0
    %v175 = vsel %vm138, %v164, 0
    %177 = vmatprep.subr.mxu0 0.0
    %178 = vmatpush1.msra.mxu0 %v158
    %179 = vmatprep.subr.mxu0 0.0
    %180 = vmatpush1.msra.mxu0 %v159
    %181 = vmatprep.subr.mxu0 0.0
    %182 = vmatpush1.msra.mxu0 %v160
    %183 = vmatprep.subr.mxu0 0.0
    %184 = vmatpush1.msra.mxu0 %v161
    %185 = vmatprep.subr.mxu0 0.0
    %186 = vmatpush1.msra.mxu0 0.0
    %187 = vmatprep.subr.mxu0 0.0
    %188 = vmatpush1.msra.mxu0 0.0
    %189 = vmatprep.subr.mxu0 0.0
    %190 = vmatpush1.msra.mxu0 0.0
    %191 = vmatprep.subr.mxu0 0.0
    %192 = vmatpush1.msra.mxu0 0.0
    %193 = vmatprep.subr.mxu0 0.0
    %194 = vmatpush1.msra.mxu0 0.0
    %195 = vmatprep.subr.mxu0 0.0
    %196 = vmatpush1.msra.mxu0 0.0
    %197 = vmatprep.subr.mxu0 0.0
    %198 = vmatpush1.msra.mxu0 0.0
    %199 = vmatprep.subr.mxu0 0.0
    %200 = vmatpush1.msra.mxu0 0.0
    %201 = vmatprep.subr.mxu0 0.0
    %202 = vmatpush1.msra.mxu0 0.0
    %203 = vmatprep.subr.mxu0 0.0
    %204 = vmatpush1.msra.mxu0 0.0
    %205 = vmatprep.subr.mxu0 0.0
    %206 = vmatpush1.msra.mxu0 0.0
    %207 = vmatprep.subr.mxu0 0.0
    %208 = vmatpush1.msra.mxu0 0.0
    %209 = vmatprep.subr.mxu0 0.0
    %210 = vmatpush1.msra.mxu0 0.0
    %211 = vmatprep.subr.mxu0 0.0
    %212 = vmatpush1.msra.mxu0 0.0
    %213 = vmatprep.subr.mxu0 0.0
    %214 = vmatpush1.msra.mxu0 0.0
    %215 = vmatprep.subr.mxu0 0.0
    %216 = vmatpush1.msra.mxu0 0.0
    %217 = vmatprep.subr.mxu0 0.0
    %218 = vmatpush1.msra.mxu0 0.0
    %219 = vmatprep.subr.mxu0 0.0
    %220 = vmatpush1.msra.mxu0 0.0
    %221 = vmatprep.subr.mxu0 0.0
    %222 = vmatpush1.msra.mxu0 0.0
    %223 = vmatprep.subr.mxu0 0.0
    %224 = vmatpush1.msra.mxu0 0.0
    %225 = vmatprep.subr.mxu0 0.0
    %226 = vmatpush1.msra.mxu0 0.0
    %227 = vmatprep.subr.mxu0 0.0
    %228 = vmatpush1.msra.mxu0 0.0
    %229 = vmatprep.subr.mxu0 0.0
    %230 = vmatpush1.msra.mxu0 0.0
    %231 = vmatprep.subr.mxu0 0.0
    %232 = vmatpush1.msra.mxu0 0.0
    %233 = vmatprep.subr.mxu0 0.0
    %234 = vmatpush1.msra.mxu0 0.0
    %235 = vmatprep.subr.mxu0 0.0
    %236 = vmatpush1.msra.mxu0 0.0
    %237 = vmatprep.subr.mxu0 0.0
    %238 = vmatpush1.msra.mxu0 0.0
    %239 = vmatprep.subr.mxu0 0.0
    %240 = vmatpush1.msra.mxu0 0.0
    %241 = vmatprep.mubr.f32.mxu0 0.0
    %242 = vmatmul.mubr.f32.gmra.mrb[0].mxu0 %v172
    %v243 = vpop.f32.mrb[0].mxu0
    %v244 = vadd.f32 %v169, %v243
    %v245 = vpop.f32.mrb[0].mxu0
    %246 = vmatprep.mubr.f32.mxu0 0.0
    %247 = vmatmul.mubr.f32.gmra.mrb[0].mxu0 %v175
    %v248 = vpop.f32.mrb[0].mxu0
    %v249 = vadd.f32 %v169, %v248
    %v250 = vpop.f32.mrb[0].mxu0
    %251 = vdwg.mxu0
    %252 = vst [vmem:[#allocation2] sm:$0xff] %v244
    %253 = vst [vmem:[#allocation2 + $0x8] sm:$0x1] %v249
    %s254 = scalar_lea.vmem %s0, 16
    %v255 = vld [vmem:[%s254] sm:$0xff]
    %v256 = vld [vmem:[%s254 + $0x8] sm:$0x1]
    %v258 = vsel %vm138, %v255, 0
    %v261 = vsel %vm138, %v256, 0
    %263 = vmatprep.subr.mxu0 0.0
    %264 = vmatpush1.msra.mxu0 %v158
    %265 = vmatprep.subr.mxu0 0.0
    %266 = vmatpush1.msra.mxu0 %v159
    %267 = vmatprep.subr.mxu0 0.0
    %268 = vmatpush1.msra.mxu0 %v160
    %269 = vmatprep.subr.mxu0 0.0
    %270 = vmatpush1.msra.mxu0 %v161
    %271 = vmatprep.subr.mxu0 0.0
    %272 = vmatpush1.msra.mxu0 0.0
    %273 = vmatprep.subr.mxu0 0.0
    %274 = vmatpush1.msra.mxu0 0.0
    %275 = vmatprep.subr.mxu0 0.0
    %276 = vmatpush1.msra.mxu0 0.0
    %277 = vmatprep.subr.mxu0 0.0
    %278 = vmatpush1.msra.mxu0 0.0
    %279 = vmatprep.subr.mxu0 0.0
    %280 = vmatpush1.msra.mxu0 0.0
    %281 = vmatprep.subr.mxu0 0.0
    %282 = vmatpush1.msra.mxu0 0.0
    %283 = vmatprep.subr.mxu0 0.0
    %284 = vmatpush1.msra.mxu0 0.0
    %285 = vmatprep.subr.mxu0 0.0
    %286 = vmatpush1.msra.mxu0 0.0
    %287 = vmatprep.subr.mxu0 0.0
    %288 = vmatpush1.msra.mxu0 0.0
    %289 = vmatprep.subr.mxu0 0.0
    %290 = vmatpush1.msra.mxu0 0.0
    %291 = vmatprep.subr.mxu0 0.0
    %292 = vmatpush1.msra.mxu0 0.0
    %293 = vmatprep.subr.mxu0 0.0
    %294 = vmatpush1.msra.mxu0 0.0
    %295 = vmatprep.subr.mxu0 0.0
    %296 = vmatpush1.msra.mxu0 0.0
    %297 = vmatprep.subr.mxu0 0.0
    %298 = vmatpush1.msra.mxu0 0.0
    %299 = vmatprep.subr.mxu0 0.0
    %300 = vmatpush1.msra.mxu0 0.0
    %301 = vmatprep.subr.mxu0 0.0
    %302 = vmatpush1.msra.mxu0 0.0
    %303 = vmatprep.subr.mxu0 0.0
    %304 = vmatpush1.msra.mxu0 0.0
    %305 = vmatprep.subr.mxu0 0.0
    %306 = vmatpush1.msra.mxu0 0.0
    %307 = vmatprep.subr.mxu0 0.0
    %308 = vmatpush1.msra.mxu0 0.0
    %309 = vmatprep.subr.mxu0 0.0
    %310 = vmatpush1.msra.mxu0 0.0
    %311 = vmatprep.subr.mxu0 0.0
    %312 = vmatpush1.msra.mxu0 0.0
    %313 = vmatprep.subr.mxu0 0.0
    %314 = vmatpush1.msra.mxu0 0.0
    %315 = vmatprep.subr.mxu0 0.0
    %316 = vmatpush1.msra.mxu0 0.0
    %317 = vmatprep.subr.mxu0 0.0
    %318 = vmatpush1.msra.mxu0 0.0
    %319 = vmatprep.subr.mxu0 0.0
    %320 = vmatpush1.msra.mxu0 0.0
    %321 = vmatprep.subr.mxu0 0.0
    %322 = vmatpush1.msra.mxu0 0.0
    %323 = vmatprep.subr.mxu0 0.0
    %324 = vmatpush1.msra.mxu0 0.0
    %325 = vmatprep.subr.mxu0 0.0
    %326 = vmatpush1.msra.mxu0 0.0
    %327 = vmatprep.mubr.f32.mxu0 0.0
    %328 = vmatmul.mubr.f32.gmra.mrb[0].mxu0 %v258
    %v329 = vpop.f32.mrb[0].mxu0
    %v330 = vadd.f32 %v169, %v329
    %v331 = vpop.f32.mrb[0].mxu0
    %332 = vmatprep.mubr.f32.mxu0 0.0
    %333 = vmatmul.mubr.f32.gmra.mrb[0].mxu0 %v261
    %v334 = vpop.f32.mrb[0].mxu0
    %v335 = vadd.f32 %v169, %v334
    %v336 = vpop.f32.mrb[0].mxu0
    %337 = vdwg.mxu0
    %s338 = scalar_lea.vmem [#allocation2], 16
    %339 = vst [vmem:[%s338] sm:$0xff] %v330
    %340 = vst [vmem:[%s338 + $0x8] sm:$0x1] %v335
    %s341 = scalar_lea.vmem %s0, 32
    %v342 = vld [vmem:[%s341] sm:$0xff]
    %v343 = vld [vmem:[%s341 + $0x8] sm:$0x1]
    %v345 = vsel %vm138, %v342, 0
    %v348 = vsel %vm138, %v343, 0
    %350 = vmatprep.subr.mxu0 0.0
    %351 = vmatpush1.msra.mxu0 %v158
    %352 = vmatprep.subr.mxu0 0.0
    %353 = vmatpush1.msra.mxu0 %v159
    %354 = vmatprep.subr.mxu0 0.0
    %355 = vmatpush1.msra.mxu0 %v160
    %356 = vmatprep.subr.mxu0 0.0
    %357 = vmatpush1.msra.mxu0 %v161
    %358 = vmatprep.subr.mxu0 0.0
    %359 = vmatpush1.msra.mxu0 0.0
    %360 = vmatprep.subr.mxu0 0.0
    %361 = vmatpush1.msra.mxu0 0.0
    %362 = vmatprep.subr.mxu0 0.0
    %363 = vmatpush1.msra.mxu0 0.0
    %364 = vmatprep.subr.mxu0 0.0
    %365 = vmatpush1.msra.mxu0 0.0
    %366 = vmatprep.subr.mxu0 0.0
    %367 = vmatpush1.msra.mxu0 0.0
    %368 = vmatprep.subr.mxu0 0.0
    %369 = vmatpush1.msra.mxu0 0.0
    %370 = vmatprep.subr.mxu0 0.0
    %371 = vmatpush1.msra.mxu0 0.0
    %372 = vmatprep.subr.mxu0 0.0
    %373 = vmatpush1.msra.mxu0 0.0
    %374 = vmatprep.subr.mxu0 0.0
    %375 = vmatpush1.msra.mxu0 0.0
    %376 = vmatprep.subr.mxu0 0.0
    %377 = vmatpush1.msra.mxu0 0.0
    %378 = vmatprep.subr.mxu0 0.0
    %379 = vmatpush1.msra.mxu0 0.0
    %380 = vmatprep.subr.mxu0 0.0
    %381 = vmatpush1.msra.mxu0 0.0
    %382 = vmatprep.subr.mxu0 0.0
    %383 = vmatpush1.msra.mxu0 0.0
    %384 = vmatprep.subr.mxu0 0.0
    %385 = vmatpush1.msra.mxu0 0.0
    %386 = vmatprep.subr.mxu0 0.0
    %387 = vmatpush1.msra.mxu0 0.0
    %388 = vmatprep.subr.mxu0 0.0
    %389 = vmatpush1.msra.mxu0 0.0
    %390 = vmatprep.subr.mxu0 0.0
    %391 = vmatpush1.msra.mxu0 0.0
    %392 = vmatprep.subr.mxu0 0.0
    %393 = vmatpush1.msra.mxu0 0.0
    %394 = vmatprep.subr.mxu0 0.0
    %395 = vmatpush1.msra.mxu0 0.0
    %396 = vmatprep.subr.mxu0 0.0
    %397 = vmatpush1.msra.mxu0 0.0
    %398 = vmatprep.subr.mxu0 0.0
    %399 = vmatpush1.msra.mxu0 0.0
    %400 = vmatprep.subr.mxu0 0.0
    %401 = vmatpush1.msra.mxu0 0.0
    %402 = vmatprep.subr.mxu0 0.0
    %403 = vmatpush1.msra.mxu0 0.0
    %404 = vmatprep.subr.mxu0 0.0
    %405 = vmatpush1.msra.mxu0 0.0
    %406 = vmatprep.subr.mxu0 0.0
    %407 = vmatpush1.msra.mxu0 0.0
    %408 = vmatprep.subr.mxu0 0.0
    %409 = vmatpush1.msra.mxu0 0.0
    %410 = vmatprep.subr.mxu0 0.0
    %411 = vmatpush1.msra.mxu0 0.0
    %412 = vmatprep.subr.mxu0 0.0
    %413 = vmatpush1.msra.mxu0 0.0
    %414 = vmatprep.mubr.f32.mxu0 0.0
    %415 = vmatmul.mubr.f32.gmra.mrb[0].mxu0 %v345
    %v416 = vpop.f32.mrb[0].mxu0
    %v417 = vadd.f32 %v169, %v416
    %v418 = vpop.f32.mrb[0].mxu0
    %419 = vmatprep.mubr.f32.mxu0 0.0
    %420 = vmatmul.mubr.f32.gmra.mrb[0].mxu0 %v348
    %v421 = vpop.f32.mrb[0].mxu0
    %v422 = vadd.f32 %v169, %v421
    %v423 = vpop.f32.mrb[0].mxu0
    %424 = vdwg.mxu0
    %s425 = scalar_lea.vmem [#allocation2], 32
    %426 = vst [vmem:[%s425] sm:$0xff] %v417
    %427 = vst [vmem:[%s425 + $0x8] sm:$0x1] %v422
    %s428 = scalar_lea.vmem %s0, 48
    %v429 = vld [vmem:[%s428] sm:$0xff]
    %v430 = vld [vmem:[%s428 + $0x8] sm:$0x1]
    %v432 = vsel %vm138, %v429, 0
    %v435 = vsel %vm138, %v430, 0
    %437 = vmatprep.subr.mxu0 0.0
    %438 = vmatpush1.msra.mxu0 %v158
    %439 = vmatprep.subr.mxu0 0.0
    %440 = vmatpush1.msra.mxu0 %v159
    %441 = vmatprep.subr.mxu0 0.0
    %442 = vmatpush1.msra.mxu0 %v160
    %443 = vmatprep.subr.mxu0 0.0
    %444 = vmatpush1.msra.mxu0 %v161
    %445 = vmatprep.subr.mxu0 0.0
    %446 = vmatpush1.msra.mxu0 0.0
    %447 = vmatprep.subr.mxu0 0.0
    %448 = vmatpush1.msra.mxu0 0.0
    %449 = vmatprep.subr.mxu0 0.0
    %450 = vmatpush1.msra.mxu0 0.0
    %451 = vmatprep.subr.mxu0 0.0
    %452 = vmatpush1.msra.mxu0 0.0
    %453 = vmatprep.subr.mxu0 0.0
    %454 = vmatpush1.msra.mxu0 0.0
    %455 = vmatprep.subr.mxu0 0.0
    %456 = vmatpush1.msra.mxu0 0.0
    %457 = vmatprep.subr.mxu0 0.0
    %458 = vmatpush1.msra.mxu0 0.0
    %459 = vmatprep.subr.mxu0 0.0
    %460 = vmatpush1.msra.mxu0 0.0
    %461 = vmatprep.subr.mxu0 0.0
    %462 = vmatpush1.msra.mxu0 0.0
    %463 = vmatprep.subr.mxu0 0.0
    %464 = vmatpush1.msra.mxu0 0.0
    %465 = vmatprep.subr.mxu0 0.0
    %466 = vmatpush1.msra.mxu0 0.0
    %467 = vmatprep.subr.mxu0 0.0
    %468 = vmatpush1.msra.mxu0 0.0
    %469 = vmatprep.subr.mxu0 0.0
    %470 = vmatpush1.msra.mxu0 0.0
    %471 = vmatprep.subr.mxu0 0.0
    %472 = vmatpush1.msra.mxu0 0.0
    %473 = vmatprep.subr.mxu0 0.0
    %474 = vmatpush1.msra.mxu0 0.0
    %475 = vmatprep.subr.mxu0 0.0
    %476 = vmatpush1.msra.mxu0 0.0
    %477 = vmatprep.subr.mxu0 0.0
    %478 = vmatpush1.msra.mxu0 0.0
    %479 = vmatprep.subr.mxu0 0.0
    %480 = vmatpush1.msra.mxu0 0.0
    %481 = vmatprep.subr.mxu0 0.0
    %482 = vmatpush1.msra.mxu0 0.0
    %483 = vmatprep.subr.mxu0 0.0
    %484 = vmatpush1.msra.mxu0 0.0
    %485 = vmatprep.subr.mxu0 0.0
    %486 = vmatpush1.msra.mxu0 0.0
    %487 = vmatprep.subr.mxu0 0.0
    %488 = vmatpush1.msra.mxu0 0.0
    %489 = vmatprep.subr.mxu0 0.0
    %490 = vmatpush1.msra.mxu0 0.0
    %491 = vmatprep.subr.mxu0 0.0
    %492 = vmatpush1.msra.mxu0 0.0
    %493 = vmatprep.subr.mxu0 0.0
    %494 = vmatpush1.msra.mxu0 0.0
    %495 = vmatprep.subr.mxu0 0.0
    %496 = vmatpush1.msra.mxu0 0.0
    %497 = vmatprep.subr.mxu0 0.0
    %498 = vmatpush1.msra.mxu0 0.0
    %499 = vmatprep.subr.mxu0 0.0
    %500 = vmatpush1.msra.mxu0 0.0
    %501 = vmatprep.mubr.f32.mxu0 0.0
    %502 = vmatmul.mubr.f32.gmra.mrb[0].mxu0 %v432
    %v503 = vpop.f32.mrb[0].mxu0
    %v504 = vadd.f32 %v169, %v503
    %v505 = vpop.f32.mrb[0].mxu0
    %506 = vmatprep.mubr.f32.mxu0 0.0
    %507 = vmatmul.mubr.f32.gmra.mrb[0].mxu0 %v435
    %v508 = vpop.f32.mrb[0].mxu0
    %v509 = vadd.f32 %v169, %v508
    %v510 = vpop.f32.mrb[0].mxu0
    %511 = vdwg.mxu0
    %s512 = scalar_lea.vmem [#allocation2], 48
    %513 = vst [vmem:[%s512] sm:$0xff] %v504
    %514 = vst [vmem:[%s512 + $0x8] sm:$0x1] %v509
    %s515 = scalar_lea.vmem %s0, 64
    %v516 = vld [vmem:[%s515] sm:$0xff]
    %v517 = vld [vmem:[%s515 + $0x8] sm:$0x1]
    %v519 = vsel %vm138, %v516, 0
    %v522 = vsel %vm138, %v517, 0
    %524 = vmatprep.subr.mxu0 0.0
    %525 = vmatpush1.msra.mxu0 %v158
    %526 = vmatprep.subr.mxu0 0.0
    %527 = vmatpush1.msra.mxu0 %v159
    %528 = vmatprep.subr.mxu0 0.0
    %529 = vmatpush1.msra.mxu0 %v160
    %530 = vmatprep.subr.mxu0 0.0
    %531 = vmatpush1.msra.mxu0 %v161
    %532 = vmatprep.subr.mxu0 0.0
    %533 = vmatpush1.msra.mxu0 0.0
    %534 = vmatprep.subr.mxu0 0.0
    %535 = vmatpush1.msra.mxu0 0.0
    %536 = vmatprep.subr.mxu0 0.0
    %537 = vmatpush1.msra.mxu0 0.0
    %538 = vmatprep.subr.mxu0 0.0
    %539 = vmatpush1.msra.mxu0 0.0
    %540 = vmatprep.subr.mxu0 0.0
    %541 = vmatpush1.msra.mxu0 0.0
    %542 = vmatprep.subr.mxu0 0.0
    %543 = vmatpush1.msra.mxu0 0.0
    %544 = vmatprep.subr.mxu0 0.0
    %545 = vmatpush1.msra.mxu0 0.0
    %546 = vmatprep.subr.mxu0 0.0
    %547 = vmatpush1.msra.mxu0 0.0
    %548 = vmatprep.subr.mxu0 0.0
    %549 = vmatpush1.msra.mxu0 0.0
    %550 = vmatprep.subr.mxu0 0.0
    %551 = vmatpush1.msra.mxu0 0.0
    %552 = vmatprep.subr.mxu0 0.0
    %553 = vmatpush1.msra.mxu0 0.0
    %554 = vmatprep.subr.mxu0 0.0
    %555 = vmatpush1.msra.mxu0 0.0
    %556 = vmatprep.subr.mxu0 0.0
    %557 = vmatpush1.msra.mxu0 0.0
    %558 = vmatprep.subr.mxu0 0.0
    %559 = vmatpush1.msra.mxu0 0.0
    %560 = vmatprep.subr.mxu0 0.0
    %561 = vmatpush1.msra.mxu0 0.0
    %562 = vmatprep.subr.mxu0 0.0
    %563 = vmatpush1.msra.mxu0 0.0
    %564 = vmatprep.subr.mxu0 0.0
    %565 = vmatpush1.msra.mxu0 0.0
    %566 = vmatprep.subr.mxu0 0.0
    %567 = vmatpush1.msra.mxu0 0.0
    %568 = vmatprep.subr.mxu0 0.0
    %569 = vmatpush1.msra.mxu0 0.0
    %570 = vmatprep.subr.mxu0 0.0
    %571 = vmatpush1.msra.mxu0 0.0
    %572 = vmatprep.subr.mxu0 0.0
    %573 = vmatpush1.msra.mxu0 0.0
    %574 = vmatprep.subr.mxu0 0.0
    %575 = vmatpush1.msra.mxu0 0.0
    %576 = vmatprep.subr.mxu0 0.0
    %577 = vmatpush1.msra.mxu0 0.0
    %578 = vmatprep.subr.mxu0 0.0
    %579 = vmatpush1.msra.mxu0 0.0
    %580 = vmatprep.subr.mxu0 0.0
    %581 = vmatpush1.msra.mxu0 0.0
    %582 = vmatprep.subr.mxu0 0.0
    %583 = vmatpush1.msra.mxu0 0.0
    %584 = vmatprep.subr.mxu0 0.0
    %585 = vmatpush1.msra.mxu0 0.0
    %586 = vmatprep.subr.mxu0 0.0
    %587 = vmatpush1.msra.mxu0 0.0
    %588 = vmatprep.mubr.f32.mxu0 0.0
    %589 = vmatmul.mubr.f32.gmra.mrb[0].mxu0 %v519
    %v590 = vpop.f32.mrb[0].mxu0
    %v591 = vadd.f32 %v169, %v590
    %v592 = vpop.f32.mrb[0].mxu0
    %593 = vmatprep.mubr.f32.mxu0 0.0
    %594 = vmatmul.mubr.f32.gmra.mrb[0].mxu0 %v522
    %v595 = vpop.f32.mrb[0].mxu0
    %v596 = vadd.f32 %v169, %v595
    %v597 = vpop.f32.mrb[0].mxu0
    %598 = vdwg.mxu0
    %s599 = scalar_lea.vmem [#allocation2], 64
    %600 = vst [vmem:[%s599] sm:$0xff] %v591
    %601 = vst [vmem:[%s599 + $0x8] sm:$0x1] %v596
    %s602 = scalar_lea.vmem %s0, 80
    %v603 = vld [vmem:[%s602] sm:$0xff]
    %v604 = vld [vmem:[%s602 + $0x8] sm:$0x1]
    %v606 = vsel %vm138, %v603, 0
    %v609 = vsel %vm138, %v604, 0
    %611 = vmatprep.subr.mxu0 0.0
    %612 = vmatpush1.msra.mxu0 %v158
    %613 = vmatprep.subr.mxu0 0.0
    %614 = vmatpush1.msra.mxu0 %v159
    %615 = vmatprep.subr.mxu0 0.0
    %616 = vmatpush1.msra.mxu0 %v160
    %617 = vmatprep.subr.mxu0 0.0
    %618 = vmatpush1.msra.mxu0 %v161
    %619 = vmatprep.subr.mxu0 0.0
    %620 = vmatpush1.msra.mxu0 0.0
    %621 = vmatprep.subr.mxu0 0.0
    %622 = vmatpush1.msra.mxu0 0.0
    %623 = vmatprep.subr.mxu0 0.0
    %624 = vmatpush1.msra.mxu0 0.0
    %625 = vmatprep.subr.mxu0 0.0
    %626 = vmatpush1.msra.mxu0 0.0
    %627 = vmatprep.subr.mxu0 0.0
    %628 = vmatpush1.msra.mxu0 0.0
    %629 = vmatprep.subr.mxu0 0.0
    %630 = vmatpush1.msra.mxu0 0.0
    %631 = vmatprep.subr.mxu0 0.0
    %632 = vmatpush1.msra.mxu0 0.0
    %633 = vmatprep.subr.mxu0 0.0
    %634 = vmatpush1.msra.mxu0 0.0
    %635 = vmatprep.subr.mxu0 0.0
    %636 = vmatpush1.msra.mxu0 0.0
    %637 = vmatprep.subr.mxu0 0.0
    %638 = vmatpush1.msra.mxu0 0.0
    %639 = vmatprep.subr.mxu0 0.0
    %640 = vmatpush1.msra.mxu0 0.0
    %641 = vmatprep.subr.mxu0 0.0
    %642 = vmatpush1.msra.mxu0 0.0
    %643 = vmatprep.subr.mxu0 0.0
    %644 = vmatpush1.msra.mxu0 0.0
    %645 = vmatprep.subr.mxu0 0.0
    %646 = vmatpush1.msra.mxu0 0.0
    %647 = vmatprep.subr.mxu0 0.0
    %648 = vmatpush1.msra.mxu0 0.0
    %649 = vmatprep.subr.mxu0 0.0
    %650 = vmatpush1.msra.mxu0 0.0
    %651 = vmatprep.subr.mxu0 0.0
    %652 = vmatpush1.msra.mxu0 0.0
    %653 = vmatprep.subr.mxu0 0.0
    %654 = vmatpush1.msra.mxu0 0.0
    %655 = vmatprep.subr.mxu0 0.0
    %656 = vmatpush1.msra.mxu0 0.0
    %657 = vmatprep.subr.mxu0 0.0
    %658 = vmatpush1.msra.mxu0 0.0
    %659 = vmatprep.subr.mxu0 0.0
    %660 = vmatpush1.msra.mxu0 0.0
    %661 = vmatprep.subr.mxu0 0.0
    %662 = vmatpush1.msra.mxu0 0.0
    %663 = vmatprep.subr.mxu0 0.0
    %664 = vmatpush1.msra.mxu0 0.0
    %665 = vmatprep.subr.mxu0 0.0
    %666 = vmatpush1.msra.mxu0 0.0
    %667 = vmatprep.subr.mxu0 0.0
    %668 = vmatpush1.msra.mxu0 0.0
    %669 = vmatprep.subr.mxu0 0.0
    %670 = vmatpush1.msra.mxu0 0.0
    %671 = vmatprep.subr.mxu0 0.0
    %672 = vmatpush1.msra.mxu0 0.0
    %673 = vmatprep.subr.mxu0 0.0
    %674 = vmatpush1.msra.mxu0 0.0
    %675 = vmatprep.mubr.f32.mxu0 0.0
    %676 = vmatmul.mubr.f32.gmra.mrb[0].mxu0 %v606
    %v677 = vpop.f32.mrb[0].mxu0
    %v678 = vadd.f32 %v169, %v677
    %v679 = vpop.f32.mrb[0].mxu0
    %680 = vmatprep.mubr.f32.mxu0 0.0
    %681 = vmatmul.mubr.f32.gmra.mrb[0].mxu0 %v609
    %v682 = vpop.f32.mrb[0].mxu0
    %v683 = vadd.f32 %v169, %v682
    %v684 = vpop.f32.mrb[0].mxu0
    %685 = vdwg.mxu0
    %s686 = scalar_lea.vmem [#allocation2], 80
    %687 = vst [vmem:[%s686] sm:$0xff] %v678
    %688 = vst [vmem:[%s686 + $0x8] sm:$0x1] %v683
    %s689 = scalar_lea.vmem %s0, 96
    %v690 = vld [vmem:[%s689] sm:$0xff]
    %v691 = vld [vmem:[%s689 + $0x8] sm:$0x1]
    %v693 = vsel %vm138, %v690, 0
    %v696 = vsel %vm138, %v691, 0
    %698 = vmatprep.subr.mxu0 0.0
    %699 = vmatpush1.msra.mxu0 %v158
    %700 = vmatprep.subr.mxu0 0.0
    %701 = vmatpush1.msra.mxu0 %v159
    %702 = vmatprep.subr.mxu0 0.0
    %703 = vmatpush1.msra.mxu0 %v160
    %704 = vmatprep.subr.mxu0 0.0
    %705 = vmatpush1.msra.mxu0 %v161
    %706 = vmatprep.subr.mxu0 0.0
    %707 = vmatpush1.msra.mxu0 0.0
    %708 = vmatprep.subr.mxu0 0.0
    %709 = vmatpush1.msra.mxu0 0.0
    %710 = vmatprep.subr.mxu0 0.0
    %711 = vmatpush1.msra.mxu0 0.0
    %712 = vmatprep.subr.mxu0 0.0
    %713 = vmatpush1.msra.mxu0 0.0
    %714 = vmatprep.subr.mxu0 0.0
    %715 = vmatpush1.msra.mxu0 0.0
    %716 = vmatprep.subr.mxu0 0.0
    %717 = vmatpush1.msra.mxu0 0.0
    %718 = vmatprep.subr.mxu0 0.0
    %719 = vmatpush1.msra.mxu0 0.0
    %720 = vmatprep.subr.mxu0 0.0
    %721 = vmatpush1.msra.mxu0 0.0
    %722 = vmatprep.subr.mxu0 0.0
    %723 = vmatpush1.msra.mxu0 0.0
    %724 = vmatprep.subr.mxu0 0.0
    %725 = vmatpush1.msra.mxu0 0.0
    %726 = vmatprep.subr.mxu0 0.0
    %727 = vmatpush1.msra.mxu0 0.0
    %728 = vmatprep.subr.mxu0 0.0
    %729 = vmatpush1.msra.mxu0 0.0
    %730 = vmatprep.subr.mxu0 0.0
    %731 = vmatpush1.msra.mxu0 0.0
    %732 = vmatprep.subr.mxu0 0.0
    %733 = vmatpush1.msra.mxu0 0.0
    %734 = vmatprep.subr.mxu0 0.0
    %735 = vmatpush1.msra.mxu0 0.0
    %736 = vmatprep.subr.mxu0 0.0
    %737 = vmatpush1.msra.mxu0 0.0
    %738 = vmatprep.subr.mxu0 0.0
    %739 = vmatpush1.msra.mxu0 0.0
    %740 = vmatprep.subr.mxu0 0.0
    %741 = vmatpush1.msra.mxu0 0.0
    %742 = vmatprep.subr.mxu0 0.0
    %743 = vmatpush1.msra.mxu0 0.0
    %744 = vmatprep.subr.mxu0 0.0
    %745 = vmatpush1.msra.mxu0 0.0
    %746 = vmatprep.subr.mxu0 0.0
    %747 = vmatpush1.msra.mxu0 0.0
    %748 = vmatprep.subr.mxu0 0.0
    %749 = vmatpush1.msra.mxu0 0.0
    %750 = vmatprep.subr.mxu0 0.0
    %751 = vmatpush1.msra.mxu0 0.0
    %752 = vmatprep.subr.mxu0 0.0
    %753 = vmatpush1.msra.mxu0 0.0
    %754 = vmatprep.subr.mxu0 0.0
    %755 = vmatpush1.msra.mxu0 0.0
    %756 = vmatprep.subr.mxu0 0.0
    %757 = vmatpush1.msra.mxu0 0.0
    %758 = vmatprep.subr.mxu0 0.0
    %759 = vmatpush1.msra.mxu0 0.0
    %760 = vmatprep.subr.mxu0 0.0
    %761 = vmatpush1.msra.mxu0 0.0
    %762 = vmatprep.mubr.f32.mxu0 0.0
    %763 = vmatmul.mubr.f32.gmra.mrb[0].mxu0 %v693
    %v764 = vpop.f32.mrb[0].mxu0
    %v765 = vadd.f32 %v169, %v764
    %v766 = vpop.f32.mrb[0].mxu0
    %767 = vmatprep.mubr.f32.mxu0 0.0
    %768 = vmatmul.mubr.f32.gmra.mrb[0].mxu0 %v696
    %v769 = vpop.f32.mrb[0].mxu0
    %v770 = vadd.f32 %v169, %v769
    %v771 = vpop.f32.mrb[0].mxu0
    %772 = vdwg.mxu0
    %s773 = scalar_lea.vmem [#allocation2], 96
    %774 = vst [vmem:[%s773] sm:$0xff] %v765
    %775 = vst [vmem:[%s773 + $0x8] sm:$0x1] %v770
    %s776 = scalar_lea.vmem %s0, 112
    %v777 = vld [vmem:[%s776] sm:$0xff]
    %v778 = vld [vmem:[%s776 + $0x8] sm:$0x1]
    %v780 = vsel %vm138, %v777, 0
    %v783 = vsel %vm138, %v778, 0
    %785 = vmatprep.subr.mxu0 0.0
    %786 = vmatpush1.msra.mxu0 %v158
    %787 = vmatprep.subr.mxu0 0.0
    %788 = vmatpush1.msra.mxu0 %v159
    %789 = vmatprep.subr.mxu0 0.0
    %790 = vmatpush1.msra.mxu0 %v160
    %791 = vmatprep.subr.mxu0 0.0
    %792 = vmatpush1.msra.mxu0 %v161
    %793 = vmatprep.subr.mxu0 0.0
    %794 = vmatpush1.msra.mxu0 0.0
    %795 = vmatprep.subr.mxu0 0.0
    %796 = vmatpush1.msra.mxu0 0.0
    %797 = vmatprep.subr.mxu0 0.0
    %798 = vmatpush1.msra.mxu0 0.0
    %799 = vmatprep.subr.mxu0 0.0
    %800 = vmatpush1.msra.mxu0 0.0
    %801 = vmatprep.subr.mxu0 0.0
    %802 = vmatpush1.msra.mxu0 0.0
    %803 = vmatprep.subr.mxu0 0.0
    %804 = vmatpush1.msra.mxu0 0.0
    %805 = vmatprep.subr.mxu0 0.0
    %806 = vmatpush1.msra.mxu0 0.0
    %807 = vmatprep.subr.mxu0 0.0
    %808 = vmatpush1.msra.mxu0 0.0
    %809 = vmatprep.subr.mxu0 0.0
    %810 = vmatpush1.msra.mxu0 0.0
    %811 = vmatprep.subr.mxu0 0.0
    %812 = vmatpush1.msra.mxu0 0.0
    %813 = vmatprep.subr.mxu0 0.0
    %814 = vmatpush1.msra.mxu0 0.0
    %815 = vmatprep.subr.mxu0 0.0
    %816 = vmatpush1.msra.mxu0 0.0
    %817 = vmatprep.subr.mxu0 0.0
    %818 = vmatpush1.msra.mxu0 0.0
    %819 = vmatprep.subr.mxu0 0.0
    %820 = vmatpush1.msra.mxu0 0.0
    %821 = vmatprep.subr.mxu0 0.0
    %822 = vmatpush1.msra.mxu0 0.0
    %823 = vmatprep.subr.mxu0 0.0
    %824 = vmatpush1.msra.mxu0 0.0
    %825 = vmatprep.subr.mxu0 0.0
    %826 = vmatpush1.msra.mxu0 0.0
    %827 = vmatprep.subr.mxu0 0.0
    %828 = vmatpush1.msra.mxu0 0.0
    %829 = vmatprep.subr.mxu0 0.0
    %830 = vmatpush1.msra.mxu0 0.0
    %831 = vmatprep.subr.mxu0 0.0
    %832 = vmatpush1.msra.mxu0 0.0
    %833 = vmatprep.subr.mxu0 0.0
    %834 = vmatpush1.msra.mxu0 0.0
    %835 = vmatprep.subr.mxu0 0.0
    %836 = vmatpush1.msra.mxu0 0.0
    %837 = vmatprep.subr.mxu0 0.0
    %838 = vmatpush1.msra.mxu0 0.0
    %839 = vmatprep.subr.mxu0 0.0
    %840 = vmatpush1.msra.mxu0 0.0
    %841 = vmatprep.subr.mxu0 0.0
    %842 = vmatpush1.msra.mxu0 0.0
    %843 = vmatprep.subr.mxu0 0.0
    %844 = vmatpush1.msra.mxu0 0.0
    %845 = vmatprep.subr.mxu0 0.0
    %846 = vmatpush1.msra.mxu0 0.0
    %847 = vmatprep.subr.mxu0 0.0
    %848 = vmatpush1.msra.mxu0 0.0
    %849 = vmatprep.mubr.f32.mxu0 0.0
    %850 = vmatmul.mubr.f32.gmra.mrb[0].mxu0 %v780
    %v851 = vpop.f32.mrb[0].mxu0
    %v852 = vadd.f32 %v169, %v851
    %v853 = vpop.f32.mrb[0].mxu0
    %854 = vmatprep.mubr.f32.mxu0 0.0
    %855 = vmatmul.mubr.f32.gmra.mrb[0].mxu0 %v783
    %v856 = vpop.f32.mrb[0].mxu0
    %v857 = vadd.f32 %v169, %v856
    %v858 = vpop.f32.mrb[0].mxu0
    %859 = vdwg.mxu0
    %s860 = scalar_lea.vmem [#allocation2], 112
    %861 = vst [vmem:[%s860] sm:$0xff] %v852
    %862 = vst [vmem:[%s860 + $0x8] sm:$0x1] %v857
    %v863 = vld [vmem:[#allocation2] sm:$0xff]
    %v864 = vld [vmem:[#allocation2 + $0x8] sm:$0x1]
    %v865 = vld [vmem:[%s860] sm:$0xff]
    %v866 = vld [vmem:[%s860 + $0x8] sm:$0x1]
    %v867 = vsel %vm156, 1, 0
    %vm868 = vcmp.eq.s32.totalorder %v867, 1
    %v869 = vsel %vm868, %v863, %v865
    %v870 = vsel %vm868, %v864, %v866
    %871 = vst [vmem:[#allocation3] sm:$0xff] %v869
    %872 = vst [vmem:[#allocation3 + $0x8] sm:$0x1] %v870
    %v873 = vld [vmem:[%s1] sm:$0xff]
    %v874 = vld [vmem:[%s1 + $0x8] sm:$0x1]
    %s875 = scalar_lea.vmem %s1, 112
    %v876 = vld [vmem:[%s875] sm:$0xff]
    %v877 = vld [vmem:[%s875 + $0x8] sm:$0x1]
    %v878 = vsel %vm157, 1, 0
    %vm879 = vcmp.eq.s32.totalorder %v878, 1
    %881 = vset.pattern.permute.xlu0 0
    %882 = vperm.xlu0 %881, %v873
    %v883 = vpop.permute.xlu0 %882
    %886 = vset.pattern.permute.xlu0 0
    %887 = vperm.xlu0 %886, %v874
    %v888 = vpop.permute.xlu0 %887
    %891 = vset.pattern.permute.xlu0 0
    %892 = vperm.xlu0 %891, %v876
    %v893 = vpop.permute.xlu0 %892
    %896 = vset.pattern.permute.xlu0 0
    %897 = vperm.xlu0 %896, %v877
    %v898 = vpop.permute.xlu0 %897
    %v900 = vsel %vm879, %v883, %v893
    %v901 = vsel %vm879, %v888, %v898
    %902 = vst.msk [vmem:[#allocation4] sm:$0xff] %vm138, %v900
    %903 = vst.msk [vmem:[#allocation4 + $0x8] sm:$0x1] %vm140, %v901
    %v904 = vld [vmem:[%s338] sm:$0xff]
    %v905 = vld [vmem:[%s338 + $0x8] sm:$0x1]
    %v906 = vld [vmem:[%s773] sm:$0xff]
    %v907 = vld [vmem:[%s773 + $0x8] sm:$0x1]
    %v908 = vsel %vm868, %v904, %v906
    %v909 = vsel %vm868, %v905, %v907
    %s910 = scalar_lea.vmem [#allocation3], 16
    %911 = vst [vmem:[%s910] sm:$0xff] %v908
    %912 = vst [vmem:[%s910 + $0x8] sm:$0x1] %v909
    %s913 = scalar_lea.vmem %s1, 16
    %v914 = vld [vmem:[%s913] sm:$0xff]
    %v915 = vld [vmem:[%s913 + $0x8] sm:$0x1]
    %s916 = scalar_lea.vmem %s1, 96
    %v917 = vld [vmem:[%s916] sm:$0xff]
    %v918 = vld [vmem:[%s916 + $0x8] sm:$0x1]
    %920 = vset.pattern.permute.xlu0 0
    %921 = vperm.xlu0 %920, %v914
    %v922 = vpop.permute.xlu0 %921
    %925 = vset.pattern.permute.xlu0 0
    %926 = vperm.xlu0 %925, %v915
    %v927 = vpop.permute.xlu0 %926
    %930 = vset.pattern.permute.xlu0 0
    %931 = vperm.xlu0 %930, %v917
    %v932 = vpop.permute.xlu0 %931
    %935 = vset.pattern.permute.xlu0 0
    %936 = vperm.xlu0 %935, %v918
    %v937 = vpop.permute.xlu0 %936
    %v939 = vsel %vm879, %v922, %v932
    %v940 = vsel %vm879, %v927, %v937
    %s941 = scalar_lea.vmem [#allocation4], 16
    %942 = vst.msk [vmem:[%s941] sm:$0xff] %vm138, %v939
    %943 = vst.msk [vmem:[%s941 + $0x8] sm:$0x1] %vm140, %v940
    %v944 = vld [vmem:[%s425] sm:$0xff]
    %v945 = vld [vmem:[%s425 + $0x8] sm:$0x1]
    %v946 = vld [vmem:[%s686] sm:$0xff]
    %v947 = vld [vmem:[%s686 + $0x8] sm:$0x1]
    %v948 = vsel %vm868, %v944, %v946
    %v949 = vsel %vm868, %v945, %v947
    %s950 = scalar_lea.vmem [#allocation3], 32
    %951 = vst [vmem:[%s950] sm:$0xff] %v948
    %952 = vst [vmem:[%s950 + $0x8] sm:$0x1] %v949
    %s953 = scalar_lea.vmem %s1, 32
    %v954 = vld [vmem:[%s953] sm:$0xff]
    %v955 = vld [vmem:[%s953 + $0x8] sm:$0x1]
    %s956 = scalar_lea.vmem %s1, 80
    %v957 = vld [vmem:[%s956] sm:$0xff]
    %v958 = vld [vmem:[%s956 + $0x8] sm:$0x1]
    %960 = vset.pattern.permute.xlu0 0
    %961 = vperm.xlu0 %960, %v954
    %v962 = vpop.permute.xlu0 %961
    %965 = vset.pattern.permute.xlu0 0
    %966 = vperm.xlu0 %965, %v955
    %v967 = vpop.permute.xlu0 %966
    %970 = vset.pattern.permute.xlu0 0
    %971 = vperm.xlu0 %970, %v957
    %v972 = vpop.permute.xlu0 %971
    %975 = vset.pattern.permute.xlu0 0
    %976 = vperm.xlu0 %975, %v958
    %v977 = vpop.permute.xlu0 %976
    %v979 = vsel %vm879, %v962, %v972
    %v980 = vsel %vm879, %v967, %v977
    %s981 = scalar_lea.vmem [#allocation4], 32
    %982 = vst.msk [vmem:[%s981] sm:$0xff] %vm138, %v979
    %983 = vst.msk [vmem:[%s981 + $0x8] sm:$0x1] %vm140, %v980
    %v984 = vld [vmem:[%s512] sm:$0xff]
    %v985 = vld [vmem:[%s512 + $0x8] sm:$0x1]
    %v986 = vld [vmem:[%s599] sm:$0xff]
    %v987 = vld [vmem:[%s599 + $0x8] sm:$0x1]
    %v988 = vsel %vm868, %v984, %v986
    %v989 = vsel %vm868, %v985, %v987
    %s990 = scalar_lea.vmem [#allocation3], 48
    %991 = vst [vmem:[%s990] sm:$0xff] %v988
    %992 = vst [vmem:[%s990 + $0x8] sm:$0x1] %v989
    %s993 = scalar_lea.vmem %s1, 48
    %v994 = vld [vmem:[%s993] sm:$0xff]
    %v995 = vld [vmem:[%s993 + $0x8] sm:$0x1]
    %s996 = scalar_lea.vmem %s1, 64
    %v997 = vld [vmem:[%s996] sm:$0xff]
    %v998 = vld [vmem:[%s996 + $0x8] sm:$0x1]
    %1000 = vset.pattern.permute.xlu0 0
    %1001 = vperm.xlu0 %1000, %v994
    %v1002 = vpop.permute.xlu0 %1001
    %1005 = vset.pattern.permute.xlu0 0
    %1006 = vperm.xlu0 %1005, %v995
    %v1007 = vpop.permute.xlu0 %1006
    %1010 = vset.pattern.permute.xlu0 0
    %1011 = vperm.xlu0 %1010, %v997
    %v1012 = vpop.permute.xlu0 %1011
    %1015 = vset.pattern.permute.xlu0 0
    %1016 = vperm.xlu0 %1015, %v998
    %v1017 = vpop.permute.xlu0 %1016
    %v1019 = vsel %vm879, %v1002, %v1012
    %v1020 = vsel %vm879, %v1007, %v1017
    %s1021 = scalar_lea.vmem [#allocation4], 48
    %1022 = vst.msk [vmem:[%s1021] sm:$0xff] %vm138, %v1019
    %1023 = vst.msk [vmem:[%s1021 + $0x8] sm:$0x1] %vm140, %v1020
    %v1024 = vld [vmem:[%s599] sm:$0xff]
    %v1025 = vld [vmem:[%s599 + $0x8] sm:$0x1]
    %v1026 = vld [vmem:[%s512] sm:$0xff]
    %v1027 = vld [vmem:[%s512 + $0x8] sm:$0x1]
    %v1028 = vsel %vm868, %v1024, %v1026
    %v1029 = vsel %vm868, %v1025, %v1027
    %s1030 = scalar_lea.vmem [#allocation3], 64
    %1031 = vst [vmem:[%s1030] sm:$0xff] %v1028
    %1032 = vst [vmem:[%s1030 + $0x8] sm:$0x1] %v1029
    %v1033 = vld [vmem:[%s996] sm:$0xff]
    %v1034 = vld [vmem:[%s996 + $0x8] sm:$0x1]
    %v1035 = vld [vmem:[%s993] sm:$0xff]
    %v1036 = vld [vmem:[%s993 + $0x8] sm:$0x1]
    %1038 = vset.pattern.permute.xlu0 0
    %1039 = vperm.xlu0 %1038, %v1033
    %v1040 = vpop.permute.xlu0 %1039
    %1043 = vset.pattern.permute.xlu0 0
    %1044 = vperm.xlu0 %1043, %v1034
    %v1045 = vpop.permute.xlu0 %1044
    %1048 = vset.pattern.permute.xlu0 0
    %1049 = vperm.xlu0 %1048, %v1035
    %v1050 = vpop.permute.xlu0 %1049
    %1053 = vset.pattern.permute.xlu0 0
    %1054 = vperm.xlu0 %1053, %v1036
    %v1055 = vpop.permute.xlu0 %1054
    %v1057 = vsel %vm879, %v1040, %v1050
    %v1058 = vsel %vm879, %v1045, %v1055
    %s1059 = scalar_lea.vmem [#allocation4], 64
    %1060 = vst.msk [vmem:[%s1059] sm:$0xff] %vm138, %v1057
    %1061 = vst.msk [vmem:[%s1059 + $0x8] sm:$0x1] %vm140, %v1058
    %v1062 = vld [vmem:[%s686] sm:$0xff]
    %v1063 = vld [vmem:[%s686 + $0x8] sm:$0x1]
    %v1064 = vld [vmem:[%s425] sm:$0xff]
    %v1065 = vld [vmem:[%s425 + $0x8] sm:$0x1]
    %v1066 = vsel %vm868, %v1062, %v1064
    %v1067 = vsel %vm868, %v1063, %v1065
    %s1068 = scalar_lea.vmem [#allocation3], 80
    %1069 = vst [vmem:[%s1068] sm:$0xff] %v1066
    %1070 = vst [vmem:[%s1068 + $0x8] sm:$0x1] %v1067
    %v1071 = vld [vmem:[%s956] sm:$0xff]
    %v1072 = vld [vmem:[%s956 + $0x8] sm:$0x1]
    %v1073 = vld [vmem:[%s953] sm:$0xff]
    %v1074 = vld [vmem:[%s953 + $0x8] sm:$0x1]
    %1076 = vset.pattern.permute.xlu0 0
    %1077 = vperm.xlu0 %1076, %v1071
    %v1078 = vpop.permute.xlu0 %1077
    %1081 = vset.pattern.permute.xlu0 0
    %1082 = vperm.xlu0 %1081, %v1072
    %v1083 = vpop.permute.xlu0 %1082
    %1086 = vset.pattern.permute.xlu0 0
    %1087 = vperm.xlu0 %1086, %v1073
    %v1088 = vpop.permute.xlu0 %1087
    %1091 = vset.pattern.permute.xlu0 0
    %1092 = vperm.xlu0 %1091, %v1074
    %v1093 = vpop.permute.xlu0 %1092
    %v1095 = vsel %vm879, %v1078, %v1088
    %v1096 = vsel %vm879, %v1083, %v1093
    %s1097 = scalar_lea.vmem [#allocation4], 80
    %1098 = vst.msk [vmem:[%s1097] sm:$0xff] %vm138, %v1095
    %1099 = vst.msk [vmem:[%s1097 + $0x8] sm:$0x1] %vm140, %v1096
    %v1100 = vld [vmem:[%s773] sm:$0xff]
    %v1101 = vld [vmem:[%s773 + $0x8] sm:$0x1]
    %v1102 = vld [vmem:[%s338] sm:$0xff]
    %v1103 = vld [vmem:[%s338 + $0x8] sm:$0x1]
    %v1104 = vsel %vm868, %v1100, %v1102
    %v1105 = vsel %vm868, %v1101, %v1103
    %s1106 = scalar_lea.vmem [#allocation3], 96
    %1107 = vst [vmem:[%s1106] sm:$0xff] %v1104
    %1108 = vst [vmem:[%s1106 + $0x8] sm:$0x1] %v1105
    %v1109 = vld [vmem:[%s916] sm:$0xff]
    %v1110 = vld [vmem:[%s916 + $0x8] sm:$0x1]
    %v1111 = vld [vmem:[%s913] sm:$0xff]
    %v1112 = vld [vmem:[%s913 + $0x8] sm:$0x1]
    %1114 = vset.pattern.permute.xlu0 0
    %1115 = vperm.xlu0 %1114, %v1109
    %v1116 = vpop.permute.xlu0 %1115
    %1119 = vset.pattern.permute.xlu0 0
    %1120 = vperm.xlu0 %1119, %v1110
    %v1121 = vpop.permute.xlu0 %1120
    %1124 = vset.pattern.permute.xlu0 0
    %1125 = vperm.xlu0 %1124, %v1111
    %v1126 = vpop.permute.xlu0 %1125
    %1129 = vset.pattern.permute.xlu0 0
    %1130 = vperm.xlu0 %1129, %v1112
    %v1131 = vpop.permute.xlu0 %1130
    %v1133 = vsel %vm879, %v1116, %v1126
    %v1134 = vsel %vm879, %v1121, %v1131
    %s1135 = scalar_lea.vmem [#allocation4], 96
    %1136 = vst.msk [vmem:[%s1135] sm:$0xff] %vm138, %v1133
    %1137 = vst.msk [vmem:[%s1135 + $0x8] sm:$0x1] %vm140, %v1134
    %v1138 = vld [vmem:[%s860] sm:$0xff]
    %v1139 = vld [vmem:[%s860 + $0x8] sm:$0x1]
    %v1140 = vld [vmem:[#allocation2] sm:$0xff]
    %v1141 = vld [vmem:[#allocation2 + $0x8] sm:$0x1]
    %v1142 = vsel %vm868, %v1138, %v1140
    %v1143 = vsel %vm868, %v1139, %v1141
    %s1144 = scalar_lea.vmem [#allocation3], 112
    %1145 = vst [vmem:[%s1144] sm:$0xff] %v1142
    %1146 = vst [vmem:[%s1144 + $0x8] sm:$0x1] %v1143
    %v1147 = vld [vmem:[%s875] sm:$0xff]
    %v1148 = vld [vmem:[%s875 + $0x8] sm:$0x1]
    %v1149 = vld [vmem:[%s1] sm:$0xff]
    %v1150 = vld [vmem:[%s1 + $0x8] sm:$0x1]
    %1152 = vset.pattern.permute.xlu0 0
    %1153 = vperm.xlu0 %1152, %v1147
    %v1154 = vpop.permute.xlu0 %1153
    %1157 = vset.pattern.permute.xlu0 0
    %1158 = vperm.xlu0 %1157, %v1148
    %v1159 = vpop.permute.xlu0 %1158
    %1162 = vset.pattern.permute.xlu0 0
    %1163 = vperm.xlu0 %1162, %v1149
    %v1164 = vpop.permute.xlu0 %1163
    %1167 = vset.pattern.permute.xlu0 0
    %1168 = vperm.xlu0 %1167, %v1150
    %v1169 = vpop.permute.xlu0 %1168
    %v1171 = vsel %vm879, %v1154, %v1164
    %v1172 = vsel %vm879, %v1159, %v1169
    %s1173 = scalar_lea.vmem [#allocation4], 112
    %1174 = vst.msk [vmem:[%s1173] sm:$0xff] %vm138, %v1171
    %1175 = vst.msk [vmem:[%s1173 + $0x8] sm:$0x1] %vm140, %v1172
    %v1176 = vld [vmem:[%s4] sm:$0xff]
    %v1177 = vld [vmem:[%s4 + $0x8] sm:$0xff]
    %v1178 = vld [vmem:[%s4 + $0x10] sm:$0xff]
    %v1179 = vld [vmem:[%s4 + $0x18] sm:$0xff]
    %v1180 = vld [vmem:[#allocation3] sm:$0xff]
    %v1181 = vld [vmem:[#allocation3 + $0x8] sm:$0x1]
    %v1183 = vsel %vm138, 0.0, 0
    %1185 = vmatprep.subr.mxu0 0.0
    %1186 = vmatpush1.msra.mxu0 %v1176
    %1187 = vmatprep.subr.mxu0 0.0
    %1188 = vmatpush1.msra.mxu0 %v1177
    %1189 = vmatprep.subr.mxu0 0.0
    %1190 = vmatpush1.msra.mxu0 %v1178
    %1191 = vmatprep.subr.mxu0 0.0
    %1192 = vmatpush1.msra.mxu0 %v1179
    %1193 = vmatprep.subr.mxu0 0.0
    %1194 = vmatpush1.msra.mxu0 0.0
    %1195 = vmatprep.subr.mxu0 0.0
    %1196 = vmatpush1.msra.mxu0 0.0
    %1197 = vmatprep.subr.mxu0 0.0
    %1198 = vmatpush1.msra.mxu0 0.0
    %1199 = vmatprep.subr.mxu0 0.0
    %1200 = vmatpush1.msra.mxu0 0.0
    %1201 = vmatprep.subr.mxu0 0.0
    %1202 = vmatpush1.msra.mxu0 0.0
    %1203 = vmatprep.subr.mxu0 0.0
    %1204 = vmatpush1.msra.mxu0 0.0
    %1205 = vmatprep.subr.mxu0 0.0
    %1206 = vmatpush1.msra.mxu0 0.0
    %1207 = vmatprep.subr.mxu0 0.0
    %1208 = vmatpush1.msra.mxu0 0.0
    %1209 = vmatprep.subr.mxu0 0.0
    %1210 = vmatpush1.msra.mxu0 0.0
    %1211 = vmatprep.subr.mxu0 0.0
    %1212 = vmatpush1.msra.mxu0 0.0
    %1213 = vmatprep.subr.mxu0 0.0
    %1214 = vmatpush1.msra.mxu0 0.0
    %1215 = vmatprep.subr.mxu0 0.0
    %1216 = vmatpush1.msra.mxu0 0.0
    %1217 = vmatprep.subr.mxu0 0.0
    %1218 = vmatpush1.msra.mxu0 0.0
    %1219 = vmatprep.subr.mxu0 0.0
    %1220 = vmatpush1.msra.mxu0 0.0
    %1221 = vmatprep.subr.mxu0 0.0
    %1222 = vmatpush1.msra.mxu0 0.0
    %1223 = vmatprep.subr.mxu0 0.0
    %1224 = vmatpush1.msra.mxu0 0.0
    %1225 = vmatprep.subr.mxu0 0.0
    %1226 = vmatpush1.msra.mxu0 0.0
    %1227 = vmatprep.subr.mxu0 0.0
    %1228 = vmatpush1.msra.mxu0 0.0
    %1229 = vmatprep.subr.mxu0 0.0
    %1230 = vmatpush1.msra.mxu0 0.0
    %1231 = vmatprep.subr.mxu0 0.0
    %1232 = vmatpush1.msra.mxu0 0.0
    %1233 = vmatprep.subr.mxu0 0.0
    %1234 = vmatpush1.msra.mxu0 0.0
    %1235 = vmatprep.subr.mxu0 0.0
    %1236 = vmatpush1.msra.mxu0 0.0
    %1237 = vmatprep.subr.mxu0 0.0
    %1238 = vmatpush1.msra.mxu0 0.0
    %1239 = vmatprep.subr.mxu0 0.0
    %1240 = vmatpush1.msra.mxu0 0.0
    %1241 = vmatprep.subr.mxu0 0.0
    %1242 = vmatpush1.msra.mxu0 0.0
    %1243 = vmatprep.subr.mxu0 0.0
    %1244 = vmatpush1.msra.mxu0 0.0
    %1245 = vmatprep.subr.mxu0 0.0
    %1246 = vmatpush1.msra.mxu0 0.0
    %1247 = vmatprep.subr.mxu0 0.0
    %1248 = vmatpush1.msra.mxu0 0.0
    %1249 = vmatprep.mubr.f32.mxu0 0.0
    %1250 = vmatmul.mubr.f32.gmra.mrb[0].mxu0 %v1183
    %v1251 = vpop.f32.mrb[0].mxu0
    %v1252 = vadd.f32 0.0, %v1251
    %v1253 = vpop.f32.mrb[0].mxu0
    %1254 = vmatprep.mubr.f32.mxu0 0.0
    %1255 = vmatmul.mubr.f32.gmra.mrb[0].mxu0 %v1183
    %v1256 = vpop.f32.mrb[0].mxu0
    %v1257 = vadd.f32 0.0, %v1256
    %v1258 = vpop.f32.mrb[0].mxu0
    %1259 = vdwg.mxu0
    %v1260 = vadd.f32 %v1180, %v1252
    %v1261 = vadd.f32 %v1181, %v1257
    %v1262 = vxor.u32 %v1260, 2147483648
    %v1263 = vxor.u32 %v1261, 2147483648
    %v1264 = vmul.f32 %v1262, 1.442695
    %v1265 = vpow.pop %v1264
    %v1266 = vmul.f32 %v1263, 1.442695
    %v1267 = vpow.pop %v1266
    %v1268 = vadd.f32 %v1265, 1.0
    %v1269 = vadd.f32 %v1267, 1.0
    %v1270 = vrcp.pop %v1268
    %v1271 = vmul.f32 1.0, %v1270
    %v1272 = vrcp.pop %v1269
    %v1273 = vmul.f32 1.0, %v1272
    %v1274 = vtanh.pop %v1260
    %v1275 = vtanh.pop %v1261
    %v1276 = vmul.f32 %v1271, 0.0
    %v1277 = vmul.f32 %v1273, 0.0
    %1280 = vrot.lane.b32.xlu0 %v1274, 64
    %v1281 = vpop.permute.xlu0 %1280
    %1282 = vrot.lane.b32.xlu0 %v1275, 64
    %v1283 = vpop.permute.xlu0 %1282
    %v1286 = vmul.f32 %v1271, %v1281
    %v1287 = vmul.f32 %v1273, %v1283
    %1290 = vrot.lane.b32.xlu0 %v1286, 32
    %v1291 = vpop.permute.xlu0 %1290
    %1292 = vrot.lane.b32.xlu0 %v1287, 32
    %v1293 = vpop.permute.xlu0 %1292
    %v1296 = vadd.f32 %v1276, %v1291
    %v1297 = vadd.f32 %v1277, %v1293
    %v1298 = vtanh.pop %v1296
    %v1299 = vtanh.pop %v1297
    %1302 = vrot.lane.b32.xlu0 %v1298, 64
    %v1303 = vpop.permute.xlu0 %1302
    %1304 = vrot.lane.b32.xlu0 %v1299, 64
    %v1305 = vpop.permute.xlu0 %1304
    %v1308 = vmul.f32 %v1271, %v1303
    %v1309 = vmul.f32 %v1273, %v1305
    %v1310 = vld [vmem:[#allocation4] sm:$0xff]
    %v1311 = vld [vmem:[#allocation4 + $0x8] sm:$0x1]
    %1314 = vrot.lane.b32.xlu0 %v1308, 32
    %v1315 = vpop.permute.xlu0 %1314
    %1316 = vrot.lane.b32.xlu0 %v1309, 32
    %v1317 = vpop.permute.xlu0 %1316
    %v1320 = vmul.f32 %v1310, %v1315
    %v1321 = vmul.f32 %v1311, %v1317
    %1324 = vrot.lane.b32.xlu0 %v1296, 96
    %v1325 = vpop.permute.xlu0 %1324
    %1326 = vrot.lane.b32.xlu0 %v1297, 96
    %v1327 = vpop.permute.xlu0 %1326
    %v1330 = vmul.f32 %v1310, %v1325
    %v1331 = vmul.f32 %v1311, %v1327
    %v1332 = vsub.f32 1.0, %v1310
    %v1333 = vsub.f32 1.0, %v1311
    %v1334 = vmul.f32 %v1332, 0.0
    %v1335 = vmul.f32 %v1333, 0.0
    %v1336 = vadd.f32 %v1330, %v1334
    %v1337 = vadd.f32 %v1331, %v1335
    %v1338 = vadd.f32 %v1320, %v1334
    %v1339 = vadd.f32 %v1321, %v1335
    %vm1340 = vcmask 130048
    %1341 = vst.msk [vmem:[#allocation5] sm:$0xff] %vm1340, %v1320
    %vm1342 = vcmask 122880
    %1343 = vst.msk [vmem:[#allocation5 + $0x8] sm:$0x1] %vm1342, %v1321
    %s1344 = scalar_lea.vmem [#allocation5], 112
    %vm1345 = vcmask 261248
    %1346 = vst.msk [vmem:[%s1344] sm:$0xff] %vm1345, %v1320
    %vm1347 = vcmask 254080
    %1348 = vst.msk [vmem:[%s1344 + $0x8] sm:$0x1] %vm1347, %v1321
    %v1349 = vld [vmem:[%s910] sm:$0xff]
    %v1350 = vld [vmem:[%s910 + $0x8] sm:$0x1]
    %v1352 = vsel %vm138, %v1338, 0
    %v1355 = vsel %vm138, %v1339, 0
    %1357 = vmatprep.subr.mxu0 0.0
    %1358 = vmatpush1.msra.mxu0 %v1176
    %1359 = vmatprep.subr.mxu0 0.0
    %1360 = vmatpush1.msra.mxu0 %v1177
    %1361 = vmatprep.subr.mxu0 0.0
    %1362 = vmatpush1.msra.mxu0 %v1178
    %1363 = vmatprep.subr.mxu0 0.0
    %1364 = vmatpush1.msra.mxu0 %v1179
    %1365 = vmatprep.subr.mxu0 0.0
    %1366 = vmatpush1.msra.mxu0 0.0
    %1367 = vmatprep.subr.mxu0 0.0
    %1368 = vmatpush1.msra.mxu0 0.0
    %1369 = vmatprep.subr.mxu0 0.0
    %1370 = vmatpush1.msra.mxu0 0.0
    %1371 = vmatprep.subr.mxu0 0.0
    %1372 = vmatpush1.msra.mxu0 0.0
    %1373 = vmatprep.subr.mxu0 0.0
    %1374 = vmatpush1.msra.mxu0 0.0
    %1375 = vmatprep.subr.mxu0 0.0
    %1376 = vmatpush1.msra.mxu0 0.0
    %1377 = vmatprep.subr.mxu0 0.0
    %1378 = vmatpush1.msra.mxu0 0.0
    %1379 = vmatprep.subr.mxu0 0.0
    %1380 = vmatpush1.msra.mxu0 0.0
    %1381 = vmatprep.subr.mxu0 0.0
    %1382 = vmatpush1.msra.mxu0 0.0
    %1383 = vmatprep.subr.mxu0 0.0
    %1384 = vmatpush1.msra.mxu0 0.0
    %1385 = vmatprep.subr.mxu0 0.0
    %1386 = vmatpush1.msra.mxu0 0.0
    %1387 = vmatprep.subr.mxu0 0.0
    %1388 = vmatpush1.msra.mxu0 0.0
    %1389 = vmatprep.subr.mxu0 0.0
    %1390 = vmatpush1.msra.mxu0 0.0
    %1391 = vmatprep.subr.mxu0 0.0
    %1392 = vmatpush1.msra.mxu0 0.0
    %1393 = vmatprep.subr.mxu0 0.0
    %1394 = vmatpush1.msra.mxu0 0.0
    %1395 = vmatprep.subr.mxu0 0.0
    %1396 = vmatpush1.msra.mxu0 0.0
    %1397 = vmatprep.subr.mxu0 0.0
    %1398 = vmatpush1.msra.mxu0 0.0
    %1399 = vmatprep.subr.mxu0 0.0
    %1400 = vmatpush1.msra.mxu0 0.0
    %1401 = vmatprep.subr.mxu0 0.0
    %1402 = vmatpush1.msra.mxu0 0.0
    %1403 = vmatprep.subr.mxu0 0.0
    %1404 = vmatpush1.msra.mxu0 0.0
    %1405 = vmatprep.subr.mxu0 0.0
    %1406 = vmatpush1.msra.mxu0 0.0
    %1407 = vmatprep.subr.mxu0 0.0
    %1408 = vmatpush1.msra.mxu0 0.0
    %1409 = vmatprep.subr.mxu0 0.0
    %1410 = vmatpush1.msra.mxu0 0.0
    %1411 = vmatprep.subr.mxu0 0.0
    %1412 = vmatpush1.msra.mxu0 0.0
    %1413 = vmatprep.subr.mxu0 0.0
    %1414 = vmatpush1.msra.mxu0 0.0
    %1415 = vmatprep.subr.mxu0 0.0
    %1416 = vmatpush1.msra.mxu0 0.0
    %1417 = vmatprep.subr.mxu0 0.0
    %1418 = vmatpush1.msra.mxu0 0.0
    %1419 = vmatprep.subr.mxu0 0.0
    %1420 = vmatpush1.msra.mxu0 0.0
    %1421 = vmatprep.mubr.f32.mxu0 0.0
    %1422 = vmatmul.mubr.f32.gmra.mrb[0].mxu0 %v1352
    %v1423 = vpop.f32.mrb[0].mxu0
    %v1424 = vadd.f32 0.0, %v1423
    %v1425 = vpop.f32.mrb[0].mxu0
    %1426 = vmatprep.mubr.f32.mxu0 0.0
    %1427 = vmatmul.mubr.f32.gmra.mrb[0].mxu0 %v1355
    %v1428 = vpop.f32.mrb[0].mxu0
    %v1429 = vadd.f32 0.0, %v1428
    %v1430 = vpop.f32.mrb[0].mxu0
    %1431 = vdwg.mxu0
    %v1432 = vadd.f32 %v1349, %v1424
    %v1433 = vadd.f32 %v1350, %v1429
    %v1434 = vxor.u32 %v1432, 2147483648
    %v1435 = vxor.u32 %v1433, 2147483648
    %v1436 = vmul.f32 %v1434, 1.442695
    %v1437 = vpow.pop %v1436
    %v1438 = vmul.f32 %v1435, 1.442695
    %v1439 = vpow.pop %v1438
    %v1440 = vadd.f32 %v1437, 1.0
    %v1441 = vadd.f32 %v1439, 1.0
    %v1442 = vrcp.pop %v1440
    %v1443 = vmul.f32 1.0, %v1442
    %v1444 = vrcp.pop %v1441
    %v1445 = vmul.f32 1.0, %v1444
    %v1446 = vtanh.pop %v1432
    %v1447 = vtanh.pop %v1433
    %1450 = vrot.lane.b32.xlu0 %v1336, 32
    %v1451 = vpop.permute.xlu0 %1450
    %1452 = vrot.lane.b32.xlu0 %v1337, 32
    %v1453 = vpop.permute.xlu0 %1452
    %v1456 = vmul.f32 %v1443, %v1451
    %v1457 = vmul.f32 %v1445, %v1453
    %1460 = vrot.lane.b32.xlu0 %v1446, 64
    %v1461 = vpop.permute.xlu0 %1460
    %1462 = vrot.lane.b32.xlu0 %v1447, 64
    %v1463 = vpop.permute.xlu0 %1462
    %v1466 = vmul.f32 %v1443, %v1461
    %v1467 = vmul.f32 %v1445, %v1463
    %1470 = vrot.lane.b32.xlu0 %v1466, 32
    %v1471 = vpop.permute.xlu0 %1470
    %1472 = vrot.lane.b32.xlu0 %v1467, 32
    %v1473 = vpop.permute.xlu0 %1472
    %v1476 = vadd.f32 %v1456, %v1471
    %v1477 = vadd.f32 %v1457, %v1473
    %v1478 = vtanh.pop %v1476
    %v1479 = vtanh.pop %v1477
    %1482 = vrot.lane.b32.xlu0 %v1478, 64
    %v1483 = vpop.permute.xlu0 %1482
    %1484 = vrot.lane.b32.xlu0 %v1479, 64
    %v1485 = vpop.permute.xlu0 %1484
    %v1488 = vmul.f32 %v1443, %v1483
    %v1489 = vmul.f32 %v1445, %v1485
    %v1490 = vld [vmem:[%s941] sm:$0xff]
    %v1491 = vld [vmem:[%s941 + $0x8] sm:$0x1]
    %1494 = vrot.lane.b32.xlu0 %v1488, 32
    %v1495 = vpop.permute.xlu0 %1494
    %1496 = vrot.lane.b32.xlu0 %v1489, 32
    %v1497 = vpop.permute.xlu0 %1496
    %v1500 = vmul.f32 %v1490, %v1495
    %v1501 = vmul.f32 %v1491, %v1497
    %1504 = vrot.lane.b32.xlu0 %v1476, 96
    %v1505 = vpop.permute.xlu0 %1504
    %1506 = vrot.lane.b32.xlu0 %v1477, 96
    %v1507 = vpop.permute.xlu0 %1506
    %v1510 = vmul.f32 %v1490, %v1505
    %v1511 = vmul.f32 %v1491, %v1507
    %v1512 = vsub.f32 1.0, %v1490
    %v1513 = vsub.f32 1.0, %v1491
    %v1514 = vmul.f32 %v1512, %v1336
    %v1515 = vmul.f32 %v1513, %v1337
    %v1516 = vadd.f32 %v1510, %v1514
    %v1517 = vadd.f32 %v1511, %v1515
    %v1518 = vmul.f32 %v1512, %v1338
    %v1519 = vmul.f32 %v1513, %v1339
    %v1520 = vadd.f32 %v1500, %v1518
    %v1521 = vadd.f32 %v1501, %v1519
    %s1522 = scalar_lea.vmem [#allocation5], 16
    %1523 = vst.msk [vmem:[%s1522] sm:$0xff] %vm1340, %v1500
    %1524 = vst.msk [vmem:[%s1522 + $0x8] sm:$0x1] %vm1342, %v1501
    %s1525 = scalar_lea.vmem [#allocation5], 96
    %1526 = vst.msk [vmem:[%s1525] sm:$0xff] %vm1345, %v1500
    %1527 = vst.msk [vmem:[%s1525 + $0x8] sm:$0x1] %vm1347, %v1501
    %v1528 = vld [vmem:[%s950] sm:$0xff]
    %v1529 = vld [vmem:[%s950 + $0x8] sm:$0x1]
    %v1531 = vsel %vm138, %v1520, 0
    %v1534 = vsel %vm138, %v1521, 0
    %1536 = vmatprep.subr.mxu0 0.0
    %1537 = vmatpush1.msra.mxu0 %v1176
    %1538 = vmatprep.subr.mxu0 0.0
    %1539 = vmatpush1.msra.mxu0 %v1177
    %1540 = vmatprep.subr.mxu0 0.0
    %1541 = vmatpush1.msra.mxu0 %v1178
    %1542 = vmatprep.subr.mxu0 0.0
    %1543 = vmatpush1.msra.mxu0 %v1179
    %1544 = vmatprep.subr.mxu0 0.0
    %1545 = vmatpush1.msra.mxu0 0.0
    %1546 = vmatprep.subr.mxu0 0.0
    %1547 = vmatpush1.msra.mxu0 0.0
    %1548 = vmatprep.subr.mxu0 0.0
    %1549 = vmatpush1.msra.mxu0 0.0
    %1550 = vmatprep.subr.mxu0 0.0
    %1551 = vmatpush1.msra.mxu0 0.0
    %1552 = vmatprep.subr.mxu0 0.0
    %1553 = vmatpush1.msra.mxu0 0.0
    %1554 = vmatprep.subr.mxu0 0.0
    %1555 = vmatpush1.msra.mxu0 0.0
    %1556 = vmatprep.subr.mxu0 0.0
    %1557 = vmatpush1.msra.mxu0 0.0
    %1558 = vmatprep.subr.mxu0 0.0
    %1559 = vmatpush1.msra.mxu0 0.0
    %1560 = vmatprep.subr.mxu0 0.0
    %1561 = vmatpush1.msra.mxu0 0.0
    %1562 = vmatprep.subr.mxu0 0.0
    %1563 = vmatpush1.msra.mxu0 0.0
    %1564 = vmatprep.subr.mxu0 0.0
    %1565 = vmatpush1.msra.mxu0 0.0
    %1566 = vmatprep.subr.mxu0 0.0
    %1567 = vmatpush1.msra.mxu0 0.0
    %1568 = vmatprep.subr.mxu0 0.0
    %1569 = vmatpush1.msra.mxu0 0.0
    %1570 = vmatprep.subr.mxu0 0.0
    %1571 = vmatpush1.msra.mxu0 0.0
    %1572 = vmatprep.subr.mxu0 0.0
    %1573 = vmatpush1.msra.mxu0 0.0
    %1574 = vmatprep.subr.mxu0 0.0
    %1575 = vmatpush1.msra.mxu0 0.0
    %1576 = vmatprep.subr.mxu0 0.0
    %1577 = vmatpush1.msra.mxu0 0.0
    %1578 = vmatprep.subr.mxu0 0.0
    %1579 = vmatpush1.msra.mxu0 0.0
    %1580 = vmatprep.subr.mxu0 0.0
    %1581 = vmatpush1.msra.mxu0 0.0
    %1582 = vmatprep.subr.mxu0 0.0
    %1583 = vmatpush1.msra.mxu0 0.0
    %1584 = vmatprep.subr.mxu0 0.0
    %1585 = vmatpush1.msra.mxu0 0.0
    %1586 = vmatprep.subr.mxu0 0.0
    %1587 = vmatpush1.msra.mxu0 0.0
    %1588 = vmatprep.subr.mxu0 0.0
    %1589 = vmatpush1.msra.mxu0 0.0
    %1590 = vmatprep.subr.mxu0 0.0
    %1591 = vmatpush1.msra.mxu0 0.0
    %1592 = vmatprep.subr.mxu0 0.0
    %1593 = vmatpush1.msra.mxu0 0.0
    %1594 = vmatprep.subr.mxu0 0.0
    %1595 = vmatpush1.msra.mxu0 0.0
    %1596 = vmatprep.subr.mxu0 0.0
    %1597 = vmatpush1.msra.mxu0 0.0
    %1598 = vmatprep.subr.mxu0 0.0
    %1599 = vmatpush1.msra.mxu0 0.0
    %1600 = vmatprep.mubr.f32.mxu0 0.0
    %1601 = vmatmul.mubr.f32.gmra.mrb[0].mxu0 %v1531
    %v1602 = vpop.f32.mrb[0].mxu0
    %v1603 = vadd.f32 0.0, %v1602
    %v1604 = vpop.f32.mrb[0].mxu0
    %1605 = vmatprep.mubr.f32.mxu0 0.0
    %1606 = vmatmul.mubr.f32.gmra.mrb[0].mxu0 %v1534
    %v1607 = vpop.f32.mrb[0].mxu0
    %v1608 = vadd.f32 0.0, %v1607
    %v1609 = vpop.f32.mrb[0].mxu0
    %1610 = vdwg.mxu0
    %v1611 = vadd.f32 %v1528, %v1603
    %v1612 = vadd.f32 %v1529, %v1608
    %v1613 = vxor.u32 %v1611, 2147483648
    %v1614 = vxor.u32 %v1612, 2147483648
    %v1615 = vmul.f32 %v1613, 1.442695
    %v1616 = vpow.pop %v1615
    %v1617 = vmul.f32 %v1614, 1.442695
    %v1618 = vpow.pop %v1617
    %v1619 = vadd.f32 %v1616, 1.0
    %v1620 = vadd.f32 %v1618, 1.0
    %v1621 = vrcp.pop %v1619
    %v1622 = vmul.f32 1.0, %v1621
    %v1623 = vrcp.pop %v1620
    %v1624 = vmul.f32 1.0, %v1623
    %v1625 = vtanh.pop %v1611
    %v1626 = vtanh.pop %v1612
    %1629 = vrot.lane.b32.xlu0 %v1516, 32
    %v1630 = vpop.permute.xlu0 %1629
    %1631 = vrot.lane.b32.xlu0 %v1517, 32
    %v1632 = vpop.permute.xlu0 %1631
    %v1635 = vmul.f32 %v1622, %v1630
    %v1636 = vmul.f32 %v1624, %v1632
    %1639 = vrot.lane.b32.xlu0 %v1625, 64
    %v1640 = vpop.permute.xlu0 %1639
    %1641 = vrot.lane.b32.xlu0 %v1626, 64
    %v1642 = vpop.permute.xlu0 %1641
    %v1645 = vmul.f32 %v1622, %v1640
    %v1646 = vmul.f32 %v1624, %v1642
    %1649 = vrot.lane.b32.xlu0 %v1645, 32
    %v1650 = vpop.permute.xlu0 %1649
    %1651 = vrot.lane.b32.xlu0 %v1646, 32
    %v1652 = vpop.permute.xlu0 %1651
    %v1655 = vadd.f32 %v1635, %v1650
    %v1656 = vadd.f32 %v1636, %v1652
    %v1657 = vtanh.pop %v1655
    %v1658 = vtanh.pop %v1656
    %1661 = vrot.lane.b32.xlu0 %v1657, 64
    %v1662 = vpop.permute.xlu0 %1661
    %1663 = vrot.lane.b32.xlu0 %v1658, 64
    %v1664 = vpop.permute.xlu0 %1663
    %v1667 = vmul.f32 %v1622, %v1662
    %v1668 = vmul.f32 %v1624, %v1664
    %v1669 = vld [vmem:[%s981] sm:$0xff]
    %v1670 = vld [vmem:[%s981 + $0x8] sm:$0x1]
    %1673 = vrot.lane.b32.xlu0 %v1667, 32
    %v1674 = vpop.permute.xlu0 %1673
    %1675 = vrot.lane.b32.xlu0 %v1668, 32
    %v1676 = vpop.permute.xlu0 %1675
    %v1679 = vmul.f32 %v1669, %v1674
    %v1680 = vmul.f32 %v1670, %v1676
    %1683 = vrot.lane.b32.xlu0 %v1655, 96
    %v1684 = vpop.permute.xlu0 %1683
    %1685 = vrot.lane.b32.xlu0 %v1656, 96
    %v1686 = vpop.permute.xlu0 %1685
    %v1689 = vmul.f32 %v1669, %v1684
    %v1690 = vmul.f32 %v1670, %v1686
    %v1691 = vsub.f32 1.0, %v1669
    %v1692 = vsub.f32 1.0, %v1670
    %v1693 = vmul.f32 %v1691, %v1516
    %v1694 = vmul.f32 %v1692, %v1517
    %v1695 = vadd.f32 %v1689, %v1693
    %v1696 = vadd.f32 %v1690, %v1694
    %v1697 = vmul.f32 %v1691, %v1520
    %v1698 = vmul.f32 %v1692, %v1521
    %v1699 = vadd.f32 %v1679, %v1697
    %v1700 = vadd.f32 %v1680, %v1698
    %s1701 = scalar_lea.vmem [#allocation5], 32
    %1702 = vst.msk [vmem:[%s1701] sm:$0xff] %vm1340, %v1679
    %1703 = vst.msk [vmem:[%s1701 + $0x8] sm:$0x1] %vm1342, %v1680
    %s1704 = scalar_lea.vmem [#allocation5], 80
    %1705 = vst.msk [vmem:[%s1704] sm:$0xff] %vm1345, %v1679
    %1706 = vst.msk [vmem:[%s1704 + $0x8] sm:$0x1] %vm1347, %v1680
    %v1707 = vld [vmem:[%s990] sm:$0xff]
    %v1708 = vld [vmem:[%s990 + $0x8] sm:$0x1]
    %v1710 = vsel %vm138, %v1699, 0
    %v1713 = vsel %vm138, %v1700, 0
    %1715 = vmatprep.subr.mxu0 0.0
    %1716 = vmatpush1.msra.mxu0 %v1176
    %1717 = vmatprep.subr.mxu0 0.0
    %1718 = vmatpush1.msra.mxu0 %v1177
    %1719 = vmatprep.subr.mxu0 0.0
    %1720 = vmatpush1.msra.mxu0 %v1178
    %1721 = vmatprep.subr.mxu0 0.0
    %1722 = vmatpush1.msra.mxu0 %v1179
    %1723 = vmatprep.subr.mxu0 0.0
    %1724 = vmatpush1.msra.mxu0 0.0
    %1725 = vmatprep.subr.mxu0 0.0
    %1726 = vmatpush1.msra.mxu0 0.0
    %1727 = vmatprep.subr.mxu0 0.0
    %1728 = vmatpush1.msra.mxu0 0.0
    %1729 = vmatprep.subr.mxu0 0.0
    %1730 = vmatpush1.msra.mxu0 0.0
    %1731 = vmatprep.subr.mxu0 0.0
    %1732 = vmatpush1.msra.mxu0 0.0
    %1733 = vmatprep.subr.mxu0 0.0
    %1734 = vmatpush1.msra.mxu0 0.0
    %1735 = vmatprep.subr.mxu0 0.0
    %1736 = vmatpush1.msra.mxu0 0.0
    %1737 = vmatprep.subr.mxu0 0.0
    %1738 = vmatpush1.msra.mxu0 0.0
    %1739 = vmatprep.subr.mxu0 0.0
    %1740 = vmatpush1.msra.mxu0 0.0
    %1741 = vmatprep.subr.mxu0 0.0
    %1742 = vmatpush1.msra.mxu0 0.0
    %1743 = vmatprep.subr.mxu0 0.0
    %1744 = vmatpush1.msra.mxu0 0.0
    %1745 = vmatprep.subr.mxu0 0.0
    %1746 = vmatpush1.msra.mxu0 0.0
    %1747 = vmatprep.subr.mxu0 0.0
    %1748 = vmatpush1.msra.mxu0 0.0
    %1749 = vmatprep.subr.mxu0 0.0
    %1750 = vmatpush1.msra.mxu0 0.0
    %1751 = vmatprep.subr.mxu0 0.0
    %1752 = vmatpush1.msra.mxu0 0.0
    %1753 = vmatprep.subr.mxu0 0.0
    %1754 = vmatpush1.msra.mxu0 0.0
    %1755 = vmatprep.subr.mxu0 0.0
    %1756 = vmatpush1.msra.mxu0 0.0
    %1757 = vmatprep.subr.mxu0 0.0
    %1758 = vmatpush1.msra.mxu0 0.0
    %1759 = vmatprep.subr.mxu0 0.0
    %1760 = vmatpush1.msra.mxu0 0.0
    %1761 = vmatprep.subr.mxu0 0.0
    %1762 = vmatpush1.msra.mxu0 0.0
    %1763 = vmatprep.subr.mxu0 0.0
    %1764 = vmatpush1.msra.mxu0 0.0
    %1765 = vmatprep.subr.mxu0 0.0
    %1766 = vmatpush1.msra.mxu0 0.0
    %1767 = vmatprep.subr.mxu0 0.0
    %1768 = vmatpush1.msra.mxu0 0.0
    %1769 = vmatprep.subr.mxu0 0.0
    %1770 = vmatpush1.msra.mxu0 0.0
    %1771 = vmatprep.subr.mxu0 0.0
    %1772 = vmatpush1.msra.mxu0 0.0
    %1773 = vmatprep.subr.mxu0 0.0
    %1774 = vmatpush1.msra.mxu0 0.0
    %1775 = vmatprep.subr.mxu0 0.0
    %1776 = vmatpush1.msra.mxu0 0.0
    %1777 = vmatprep.subr.mxu0 0.0
    %1778 = vmatpush1.msra.mxu0 0.0
    %1779 = vmatprep.mubr.f32.mxu0 0.0
    %1780 = vmatmul.mubr.f32.gmra.mrb[0].mxu0 %v1710
    %v1781 = vpop.f32.mrb[0].mxu0
    %v1782 = vadd.f32 0.0, %v1781
    %v1783 = vpop.f32.mrb[0].mxu0
    %1784 = vmatprep.mubr.f32.mxu0 0.0
    %1785 = vmatmul.mubr.f32.gmra.mrb[0].mxu0 %v1713
    %v1786 = vpop.f32.mrb[0].mxu0
    %v1787 = vadd.f32 0.0, %v1786
    %v1788 = vpop.f32.mrb[0].mxu0
    %1789 = vdwg.mxu0
    %v1790 = vadd.f32 %v1707, %v1782
    %v1791 = vadd.f32 %v1708, %v1787
    %v1792 = vxor.u32 %v1790, 2147483648
    %v1793 = vxor.u32 %v1791, 2147483648
    %v1794 = vmul.f32 %v1792, 1.442695
    %v1795 = vpow.pop %v1794
    %v1796 = vmul.f32 %v1793, 1.442695
    %v1797 = vpow.pop %v1796
    %v1798 = vadd.f32 %v1795, 1.0
    %v1799 = vadd.f32 %v1797, 1.0
    %v1800 = vrcp.pop %v1798
    %v1801 = vmul.f32 1.0, %v1800
    %v1802 = vrcp.pop %v1799
    %v1803 = vmul.f32 1.0, %v1802
    %v1804 = vtanh.pop %v1790
    %v1805 = vtanh.pop %v1791
    %1808 = vrot.lane.b32.xlu0 %v1695, 32
    %v1809 = vpop.permute.xlu0 %1808
    %1810 = vrot.lane.b32.xlu0 %v1696, 32
    %v1811 = vpop.permute.xlu0 %1810
    %v1814 = vmul.f32 %v1801, %v1809
    %v1815 = vmul.f32 %v1803, %v1811
    %1818 = vrot.lane.b32.xlu0 %v1804, 64
    %v1819 = vpop.permute.xlu0 %1818
    %1820 = vrot.lane.b32.xlu0 %v1805, 64
    %v1821 = vpop.permute.xlu0 %1820
    %v1824 = vmul.f32 %v1801, %v1819
    %v1825 = vmul.f32 %v1803, %v1821
    %1828 = vrot.lane.b32.xlu0 %v1824, 32
    %v1829 = vpop.permute.xlu0 %1828
    %1830 = vrot.lane.b32.xlu0 %v1825, 32
    %v1831 = vpop.permute.xlu0 %1830
    %v1834 = vadd.f32 %v1814, %v1829
    %v1835 = vadd.f32 %v1815, %v1831
    %v1836 = vtanh.pop %v1834
    %v1837 = vtanh.pop %v1835
    %1840 = vrot.lane.b32.xlu0 %v1836, 64
    %v1841 = vpop.permute.xlu0 %1840
    %1842 = vrot.lane.b32.xlu0 %v1837, 64
    %v1843 = vpop.permute.xlu0 %1842
    %v1846 = vmul.f32 %v1801, %v1841
    %v1847 = vmul.f32 %v1803, %v1843
    %v1848 = vld [vmem:[%s1021] sm:$0xff]
    %v1849 = vld [vmem:[%s1021 + $0x8] sm:$0x1]
    %1852 = vrot.lane.b32.xlu0 %v1846, 32
    %v1853 = vpop.permute.xlu0 %1852
    %1854 = vrot.lane.b32.xlu0 %v1847, 32
    %v1855 = vpop.permute.xlu0 %1854
    %v1858 = vmul.f32 %v1848, %v1853
    %v1859 = vmul.f32 %v1849, %v1855
    %1862 = vrot.lane.b32.xlu0 %v1834, 96
    %v1863 = vpop.permute.xlu0 %1862
    %1864 = vrot.lane.b32.xlu0 %v1835, 96
    %v1865 = vpop.permute.xlu0 %1864
    %v1868 = vmul.f32 %v1848, %v1863
    %v1869 = vmul.f32 %v1849, %v1865
    %v1870 = vsub.f32 1.0, %v1848
    %v1871 = vsub.f32 1.0, %v1849
    %v1872 = vmul.f32 %v1870, %v1695
    %v1873 = vmul.f32 %v1871, %v1696
    %v1874 = vadd.f32 %v1868, %v1872
    %v1875 = vadd.f32 %v1869, %v1873
    %v1876 = vmul.f32 %v1870, %v1699
    %v1877 = vmul.f32 %v1871, %v1700
    %v1878 = vadd.f32 %v1858, %v1876
    %v1879 = vadd.f32 %v1859, %v1877
    %s1880 = scalar_lea.vmem [#allocation5], 48
    %1881 = vst.msk [vmem:[%s1880] sm:$0xff] %vm1340, %v1858
    %1882 = vst.msk [vmem:[%s1880 + $0x8] sm:$0x1] %vm1342, %v1859
    %s1883 = scalar_lea.vmem [#allocation5], 64
    %1884 = vst.msk [vmem:[%s1883] sm:$0xff] %vm1345, %v1858
    %1885 = vst.msk [vmem:[%s1883 + $0x8] sm:$0x1] %vm1347, %v1859
    %v1886 = vld [vmem:[%s1030] sm:$0xff]
    %v1887 = vld [vmem:[%s1030 + $0x8] sm:$0x1]
    %v1889 = vsel %vm138, %v1878, 0
    %v1892 = vsel %vm138, %v1879, 0
    %1894 = vmatprep.subr.mxu0 0.0
    %1895 = vmatpush1.msra.mxu0 %v1176
    %1896 = vmatprep.subr.mxu0 0.0
    %1897 = vmatpush1.msra.mxu0 %v1177
    %1898 = vmatprep.subr.mxu0 0.0
    %1899 = vmatpush1.msra.mxu0 %v1178
    %1900 = vmatprep.subr.mxu0 0.0
    %1901 = vmatpush1.msra.mxu0 %v1179
    %1902 = vmatprep.subr.mxu0 0.0
    %1903 = vmatpush1.msra.mxu0 0.0
    %1904 = vmatprep.subr.mxu0 0.0
    %1905 = vmatpush1.msra.mxu0 0.0
    %1906 = vmatprep.subr.mxu0 0.0
    %1907 = vmatpush1.msra.mxu0 0.0
    %1908 = vmatprep.subr.mxu0 0.0
    %1909 = vmatpush1.msra.mxu0 0.0
    %1910 = vmatprep.subr.mxu0 0.0
    %1911 = vmatpush1.msra.mxu0 0.0
    %1912 = vmatprep.subr.mxu0 0.0
    %1913 = vmatpush1.msra.mxu0 0.0
    %1914 = vmatprep.subr.mxu0 0.0
    %1915 = vmatpush1.msra.mxu0 0.0
    %1916 = vmatprep.subr.mxu0 0.0
    %1917 = vmatpush1.msra.mxu0 0.0
    %1918 = vmatprep.subr.mxu0 0.0
    %1919 = vmatpush1.msra.mxu0 0.0
    %1920 = vmatprep.subr.mxu0 0.0
    %1921 = vmatpush1.msra.mxu0 0.0
    %1922 = vmatprep.subr.mxu0 0.0
    %1923 = vmatpush1.msra.mxu0 0.0
    %1924 = vmatprep.subr.mxu0 0.0
    %1925 = vmatpush1.msra.mxu0 0.0
    %1926 = vmatprep.subr.mxu0 0.0
    %1927 = vmatpush1.msra.mxu0 0.0
    %1928 = vmatprep.subr.mxu0 0.0
    %1929 = vmatpush1.msra.mxu0 0.0
    %1930 = vmatprep.subr.mxu0 0.0
    %1931 = vmatpush1.msra.mxu0 0.0
    %1932 = vmatprep.subr.mxu0 0.0
    %1933 = vmatpush1.msra.mxu0 0.0
    %1934 = vmatprep.subr.mxu0 0.0
    %1935 = vmatpush1.msra.mxu0 0.0
    %1936 = vmatprep.subr.mxu0 0.0
    %1937 = vmatpush1.msra.mxu0 0.0
    %1938 = vmatprep.subr.mxu0 0.0
    %1939 = vmatpush1.msra.mxu0 0.0
    %1940 = vmatprep.subr.mxu0 0.0
    %1941 = vmatpush1.msra.mxu0 0.0
    %1942 = vmatprep.subr.mxu0 0.0
    %1943 = vmatpush1.msra.mxu0 0.0
    %1944 = vmatprep.subr.mxu0 0.0
    %1945 = vmatpush1.msra.mxu0 0.0
    %1946 = vmatprep.subr.mxu0 0.0
    %1947 = vmatpush1.msra.mxu0 0.0
    %1948 = vmatprep.subr.mxu0 0.0
    %1949 = vmatpush1.msra.mxu0 0.0
    %1950 = vmatprep.subr.mxu0 0.0
    %1951 = vmatpush1.msra.mxu0 0.0
    %1952 = vmatprep.subr.mxu0 0.0
    %1953 = vmatpush1.msra.mxu0 0.0
    %1954 = vmatprep.subr.mxu0 0.0
    %1955 = vmatpush1.msra.mxu0 0.0
    %1956 = vmatprep.subr.mxu0 0.0
    %1957 = vmatpush1.msra.mxu0 0.0
    %1958 = vmatprep.mubr.f32.mxu0 0.0
    %1959 = vmatmul.mubr.f32.gmra.mrb[0].mxu0 %v1889
    %v1960 = vpop.f32.mrb[0].mxu0
    %v1961 = vadd.f32 0.0, %v1960
    %v1962 = vpop.f32.mrb[0].mxu0
    %1963 = vmatprep.mubr.f32.mxu0 0.0
    %1964 = vmatmul.mubr.f32.gmra.mrb[0].mxu0 %v1892
    %v1965 = vpop.f32.mrb[0].mxu0
    %v1966 = vadd.f32 0.0, %v1965
    %v1967 = vpop.f32.mrb[0].mxu0
    %1968 = vdwg.mxu0
    %v1969 = vadd.f32 %v1886, %v1961
    %v1970 = vadd.f32 %v1887, %v1966
    %v1971 = vxor.u32 %v1969, 2147483648
    %v1972 = vxor.u32 %v1970, 2147483648
    %v1973 = vmul.f32 %v1971, 1.442695
    %v1974 = vpow.pop %v1973
    %v1975 = vmul.f32 %v1972, 1.442695
    %v1976 = vpow.pop %v1975
    %v1977 = vadd.f32 %v1974, 1.0
    %v1978 = vadd.f32 %v1976, 1.0
    %v1979 = vrcp.pop %v1977
    %v1980 = vmul.f32 1.0, %v1979
    %v1981 = vrcp.pop %v1978
    %v1982 = vmul.f32 1.0, %v1981
    %v1983 = vtanh.pop %v1969
    %v1984 = vtanh.pop %v1970
    %1987 = vrot.lane.b32.xlu0 %v1874, 32
    %v1988 = vpop.permute.xlu0 %1987
    %1989 = vrot.lane.b32.xlu0 %v1875, 32
    %v1990 = vpop.permute.xlu0 %1989
    %v1993 = vmul.f32 %v1980, %v1988
    %v1994 = vmul.f32 %v1982, %v1990
    %1997 = vrot.lane.b32.xlu0 %v1983, 64
    %v1998 = vpop.permute.xlu0 %1997
    %1999 = vrot.lane.b32.xlu0 %v1984, 64
    %v2000 = vpop.permute.xlu0 %1999
    %v2003 = vmul.f32 %v1980, %v1998
    %v2004 = vmul.f32 %v1982, %v2000
    %2007 = vrot.lane.b32.xlu0 %v2003, 32
    %v2008 = vpop.permute.xlu0 %2007
    %2009 = vrot.lane.b32.xlu0 %v2004, 32
    %v2010 = vpop.permute.xlu0 %2009
    %v2013 = vadd.f32 %v1993, %v2008
    %v2014 = vadd.f32 %v1994, %v2010
    %v2015 = vtanh.pop %v2013
    %v2016 = vtanh.pop %v2014
    %2019 = vrot.lane.b32.xlu0 %v2015, 64
    %v2020 = vpop.permute.xlu0 %2019
    %2021 = vrot.lane.b32.xlu0 %v2016, 64
    %v2022 = vpop.permute.xlu0 %2021
    %v2025 = vmul.f32 %v1980, %v2020
    %v2026 = vmul.f32 %v1982, %v2022
    %v2027 = vld [vmem:[%s1059] sm:$0xff]
    %v2028 = vld [vmem:[%s1059 + $0x8] sm:$0x1]
    %2031 = vrot.lane.b32.xlu0 %v2025, 32
    %v2032 = vpop.permute.xlu0 %2031
    %2033 = vrot.lane.b32.xlu0 %v2026, 32
    %v2034 = vpop.permute.xlu0 %2033
    %v2037 = vmul.f32 %v2027, %v2032
    %v2038 = vmul.f32 %v2028, %v2034
    %2041 = vrot.lane.b32.xlu0 %v2013, 96
    %v2042 = vpop.permute.xlu0 %2041
    %2043 = vrot.lane.b32.xlu0 %v2014, 96
    %v2044 = vpop.permute.xlu0 %2043
    %v2047 = vmul.f32 %v2027, %v2042
    %v2048 = vmul.f32 %v2028, %v2044
    %v2049 = vsub.f32 1.0, %v2027
    %v2050 = vsub.f32 1.0, %v2028
    %v2051 = vmul.f32 %v2049, %v1874
    %v2052 = vmul.f32 %v2050, %v1875
    %v2053 = vadd.f32 %v2047, %v2051
    %v2054 = vadd.f32 %v2048, %v2052
    %v2055 = vmul.f32 %v2049, %v1878
    %v2056 = vmul.f32 %v2050, %v1879
    %v2057 = vadd.f32 %v2037, %v2055
    %v2058 = vadd.f32 %v2038, %v2056
    %2059 = vst.msk [vmem:[%s1883] sm:$0xff] %vm1340, %v2037
    %2060 = vst.msk [vmem:[%s1883 + $0x8] sm:$0x1] %vm1342, %v2038
    %2061 = vst.msk [vmem:[%s1880] sm:$0xff] %vm1345, %v2037
    %2062 = vst.msk [vmem:[%s1880 + $0x8] sm:$0x1] %vm1347, %v2038
    %v2063 = vld [vmem:[%s1068] sm:$0xff]
    %v2064 = vld [vmem:[%s1068 + $0x8] sm:$0x1]
    %v2066 = vsel %vm138, %v2057, 0
    %v2069 = vsel %vm138, %v2058, 0
    %2071 = vmatprep.subr.mxu0 0.0
    %2072 = vmatpush1.msra.mxu0 %v1176
    %2073 = vmatprep.subr.mxu0 0.0
    %2074 = vmatpush1.msra.mxu0 %v1177
    %2075 = vmatprep.subr.mxu0 0.0
    %2076 = vmatpush1.msra.mxu0 %v1178
    %2077 = vmatprep.subr.mxu0 0.0
    %2078 = vmatpush1.msra.mxu0 %v1179
    %2079 = vmatprep.subr.mxu0 0.0
    %2080 = vmatpush1.msra.mxu0 0.0
    %2081 = vmatprep.subr.mxu0 0.0
    %2082 = vmatpush1.msra.mxu0 0.0
    %2083 = vmatprep.subr.mxu0 0.0
    %2084 = vmatpush1.msra.mxu0 0.0
    %2085 = vmatprep.subr.mxu0 0.0
    %2086 = vmatpush1.msra.mxu0 0.0
    %2087 = vmatprep.subr.mxu0 0.0
    %2088 = vmatpush1.msra.mxu0 0.0
    %2089 = vmatprep.subr.mxu0 0.0
    %2090 = vmatpush1.msra.mxu0 0.0
    %2091 = vmatprep.subr.mxu0 0.0
    %2092 = vmatpush1.msra.mxu0 0.0
    %2093 = vmatprep.subr.mxu0 0.0
    %2094 = vmatpush1.msra.mxu0 0.0
    %2095 = vmatprep.subr.mxu0 0.0
    %2096 = vmatpush1.msra.mxu0 0.0
    %2097 = vmatprep.subr.mxu0 0.0
    %2098 = vmatpush1.msra.mxu0 0.0
    %2099 = vmatprep.subr.mxu0 0.0
    %2100 = vmatpush1.msra.mxu0 0.0
    %2101 = vmatprep.subr.mxu0 0.0
    %2102 = vmatpush1.msra.mxu0 0.0
    %2103 = vmatprep.subr.mxu0 0.0
    %2104 = vmatpush1.msra.mxu0 0.0
    %2105 = vmatprep.subr.mxu0 0.0
    %2106 = vmatpush1.msra.mxu0 0.0
    %2107 = vmatprep.subr.mxu0 0.0
    %2108 = vmatpush1.msra.mxu0 0.0
    %2109 = vmatprep.subr.mxu0 0.0
    %2110 = vmatpush1.msra.mxu0 0.0
    %2111 = vmatprep.subr.mxu0 0.0
    %2112 = vmatpush1.msra.mxu0 0.0
    %2113 = vmatprep.subr.mxu0 0.0
    %2114 = vmatpush1.msra.mxu0 0.0
    %2115 = vmatprep.subr.mxu0 0.0
    %2116 = vmatpush1.msra.mxu0 0.0
    %2117 = vmatprep.subr.mxu0 0.0
    %2118 = vmatpush1.msra.mxu0 0.0
    %2119 = vmatprep.subr.mxu0 0.0
    %2120 = vmatpush1.msra.mxu0 0.0
    %2121 = vmatprep.subr.mxu0 0.0
    %2122 = vmatpush1.msra.mxu0 0.0
    %2123 = vmatprep.subr.mxu0 0.0
    %2124 = vmatpush1.msra.mxu0 0.0
    %2125 = vmatprep.subr.mxu0 0.0
    %2126 = vmatpush1.msra.mxu0 0.0
    %2127 = vmatprep.subr.mxu0 0.0
    %2128 = vmatpush1.msra.mxu0 0.0
    %2129 = vmatprep.subr.mxu0 0.0
    %2130 = vmatpush1.msra.mxu0 0.0
    %2131 = vmatprep.subr.mxu0 0.0
    %2132 = vmatpush1.msra.mxu0 0.0
    %2133 = vmatprep.subr.mxu0 0.0
    %2134 = vmatpush1.msra.mxu0 0.0
    %2135 = vmatprep.mubr.f32.mxu0 0.0
    %2136 = vmatmul.mubr.f32.gmra.mrb[0].mxu0 %v2066
    %v2137 = vpop.f32.mrb[0].mxu0
    %v2138 = vadd.f32 0.0, %v2137
    %v2139 = vpop.f32.mrb[0].mxu0
    %2140 = vmatprep.mubr.f32.mxu0 0.0
    %2141 = vmatmul.mubr.f32.gmra.mrb[0].mxu0 %v2069
    %v2142 = vpop.f32.mrb[0].mxu0
    %v2143 = vadd.f32 0.0, %v2142
    %v2144 = vpop.f32.mrb[0].mxu0
    %2145 = vdwg.mxu0
    %v2146 = vadd.f32 %v2063, %v2138
    %v2147 = vadd.f32 %v2064, %v2143
    %v2148 = vxor.u32 %v2146, 2147483648
    %v2149 = vxor.u32 %v2147, 2147483648
    %v2150 = vmul.f32 %v2148, 1.442695
    %v2151 = vpow.pop %v2150
    %v2152 = vmul.f32 %v2149, 1.442695
    %v2153 = vpow.pop %v2152
    %v2154 = vadd.f32 %v2151, 1.0
    %v2155 = vadd.f32 %v2153, 1.0
    %v2156 = vrcp.pop %v2154
    %v2157 = vmul.f32 1.0, %v2156
    %v2158 = vrcp.pop %v2155
    %v2159 = vmul.f32 1.0, %v2158
    %v2160 = vtanh.pop %v2146
    %v2161 = vtanh.pop %v2147
    %2164 = vrot.lane.b32.xlu0 %v2053, 32
    %v2165 = vpop.permute.xlu0 %2164
    %2166 = vrot.lane.b32.xlu0 %v2054, 32
    %v2167 = vpop.permute.xlu0 %2166
    %v2170 = vmul.f32 %v2157, %v2165
    %v2171 = vmul.f32 %v2159, %v2167
    %2174 = vrot.lane.b32.xlu0 %v2160, 64
    %v2175 = vpop.permute.xlu0 %2174
    %2176 = vrot.lane.b32.xlu0 %v2161, 64
    %v2177 = vpop.permute.xlu0 %2176
    %v2180 = vmul.f32 %v2157, %v2175
    %v2181 = vmul.f32 %v2159, %v2177
    %2184 = vrot.lane.b32.xlu0 %v2180, 32
    %v2185 = vpop.permute.xlu0 %2184
    %2186 = vrot.lane.b32.xlu0 %v2181, 32
    %v2187 = vpop.permute.xlu0 %2186
    %v2190 = vadd.f32 %v2170, %v2185
    %v2191 = vadd.f32 %v2171, %v2187
    %v2192 = vtanh.pop %v2190
    %v2193 = vtanh.pop %v2191
    %2196 = vrot.lane.b32.xlu0 %v2192, 64
    %v2197 = vpop.permute.xlu0 %2196
    %2198 = vrot.lane.b32.xlu0 %v2193, 64
    %v2199 = vpop.permute.xlu0 %2198
    %v2202 = vmul.f32 %v2157, %v2197
    %v2203 = vmul.f32 %v2159, %v2199
    %v2204 = vld [vmem:[%s1097] sm:$0xff]
    %v2205 = vld [vmem:[%s1097 + $0x8] sm:$0x1]
    %2208 = vrot.lane.b32.xlu0 %v2202, 32
    %v2209 = vpop.permute.xlu0 %2208
    %2210 = vrot.lane.b32.xlu0 %v2203, 32
    %v2211 = vpop.permute.xlu0 %2210
    %v2214 = vmul.f32 %v2204, %v2209
    %v2215 = vmul.f32 %v2205, %v2211
    %2218 = vrot.lane.b32.xlu0 %v2190, 96
    %v2219 = vpop.permute.xlu0 %2218
    %2220 = vrot.lane.b32.xlu0 %v2191, 96
    %v2221 = vpop.permute.xlu0 %2220
    %v2224 = vmul.f32 %v2204, %v2219
    %v2225 = vmul.f32 %v2205, %v2221
    %v2226 = vsub.f32 1.0, %v2204
    %v2227 = vsub.f32 1.0, %v2205
    %v2228 = vmul.f32 %v2226, %v2053
    %v2229 = vmul.f32 %v2227, %v2054
    %v2230 = vadd.f32 %v2224, %v2228
    %v2231 = vadd.f32 %v2225, %v2229
    %v2232 = vmul.f32 %v2226, %v2057
    %v2233 = vmul.f32 %v2227, %v2058
    %v2234 = vadd.f32 %v2214, %v2232
    %v2235 = vadd.f32 %v2215, %v2233
    %2236 = vst.msk [vmem:[%s1704] sm:$0xff] %vm1340, %v2214
    %2237 = vst.msk [vmem:[%s1704 + $0x8] sm:$0x1] %vm1342, %v2215
    %2238 = vst.msk [vmem:[%s1701] sm:$0xff] %vm1345, %v2214
    %2239 = vst.msk [vmem:[%s1701 + $0x8] sm:$0x1] %vm1347, %v2215
    %v2240 = vld [vmem:[%s1106] sm:$0xff]
    %v2241 = vld [vmem:[%s1106 + $0x8] sm:$0x1]
    %v2243 = vsel %vm138, %v2234, 0
    %v2246 = vsel %vm138, %v2235, 0
    %2248 = vmatprep.subr.mxu0 0.0
    %2249 = vmatpush1.msra.mxu0 %v1176
    %2250 = vmatprep.subr.mxu0 0.0
    %2251 = vmatpush1.msra.mxu0 %v1177
    %2252 = vmatprep.subr.mxu0 0.0
    %2253 = vmatpush1.msra.mxu0 %v1178
    %2254 = vmatprep.subr.mxu0 0.0
    %2255 = vmatpush1.msra.mxu0 %v1179
    %2256 = vmatprep.subr.mxu0 0.0
    %2257 = vmatpush1.msra.mxu0 0.0
    %2258 = vmatprep.subr.mxu0 0.0
    %2259 = vmatpush1.msra.mxu0 0.0
    %2260 = vmatprep.subr.mxu0 0.0
    %2261 = vmatpush1.msra.mxu0 0.0
    %2262 = vmatprep.subr.mxu0 0.0
    %2263 = vmatpush1.msra.mxu0 0.0
    %2264 = vmatprep.subr.mxu0 0.0
    %2265 = vmatpush1.msra.mxu0 0.0
    %2266 = vmatprep.subr.mxu0 0.0
    %2267 = vmatpush1.msra.mxu0 0.0
    %2268 = vmatprep.subr.mxu0 0.0
    %2269 = vmatpush1.msra.mxu0 0.0
    %2270 = vmatprep.subr.mxu0 0.0
    %2271 = vmatpush1.msra.mxu0 0.0
    %2272 = vmatprep.subr.mxu0 0.0
    %2273 = vmatpush1.msra.mxu0 0.0
    %2274 = vmatprep.subr.mxu0 0.0
    %2275 = vmatpush1.msra.mxu0 0.0
    %2276 = vmatprep.subr.mxu0 0.0
    %2277 = vmatpush1.msra.mxu0 0.0
    %2278 = vmatprep.subr.mxu0 0.0
    %2279 = vmatpush1.msra.mxu0 0.0
    %2280 = vmatprep.subr.mxu0 0.0
    %2281 = vmatpush1.msra.mxu0 0.0
    %2282 = vmatprep.subr.mxu0 0.0
    %2283 = vmatpush1.msra.mxu0 0.0
    %2284 = vmatprep.subr.mxu0 0.0
    %2285 = vmatpush1.msra.mxu0 0.0
    %2286 = vmatprep.subr.mxu0 0.0
    %2287 = vmatpush1.msra.mxu0 0.0
    %2288 = vmatprep.subr.mxu0 0.0
    %2289 = vmatpush1.msra.mxu0 0.0
    %2290 = vmatprep.subr.mxu0 0.0
    %2291 = vmatpush1.msra.mxu0 0.0
    %2292 = vmatprep.subr.mxu0 0.0
    %2293 = vmatpush1.msra.mxu0 0.0
    %2294 = vmatprep.subr.mxu0 0.0
    %2295 = vmatpush1.msra.mxu0 0.0
    %2296 = vmatprep.subr.mxu0 0.0
    %2297 = vmatpush1.msra.mxu0 0.0
    %2298 = vmatprep.subr.mxu0 0.0
    %2299 = vmatpush1.msra.mxu0 0.0
    %2300 = vmatprep.subr.mxu0 0.0
    %2301 = vmatpush1.msra.mxu0 0.0
    %2302 = vmatprep.subr.mxu0 0.0
    %2303 = vmatpush1.msra.mxu0 0.0
    %2304 = vmatprep.subr.mxu0 0.0
    %2305 = vmatpush1.msra.mxu0 0.0
    %2306 = vmatprep.subr.mxu0 0.0
    %2307 = vmatpush1.msra.mxu0 0.0
    %2308 = vmatprep.subr.mxu0 0.0
    %2309 = vmatpush1.msra.mxu0 0.0
    %2310 = vmatprep.subr.mxu0 0.0
    %2311 = vmatpush1.msra.mxu0 0.0
    %2312 = vmatprep.mubr.f32.mxu0 0.0
    %2313 = vmatmul.mubr.f32.gmra.mrb[0].mxu0 %v2243
    %v2314 = vpop.f32.mrb[0].mxu0
    %v2315 = vadd.f32 0.0, %v2314
    %v2316 = vpop.f32.mrb[0].mxu0
    %2317 = vmatprep.mubr.f32.mxu0 0.0
    %2318 = vmatmul.mubr.f32.gmra.mrb[0].mxu0 %v2246
    %v2319 = vpop.f32.mrb[0].mxu0
    %v2320 = vadd.f32 0.0, %v2319
    %v2321 = vpop.f32.mrb[0].mxu0
    %2322 = vdwg.mxu0
    %v2323 = vadd.f32 %v2240, %v2315
    %v2324 = vadd.f32 %v2241, %v2320
    %v2325 = vxor.u32 %v2323, 2147483648
    %v2326 = vxor.u32 %v2324, 2147483648
    %v2327 = vmul.f32 %v2325, 1.442695
    %v2328 = vpow.pop %v2327
    %v2329 = vmul.f32 %v2326, 1.442695
    %v2330 = vpow.pop %v2329
    %v2331 = vadd.f32 %v2328, 1.0
    %v2332 = vadd.f32 %v2330, 1.0
    %v2333 = vrcp.pop %v2331
    %v2334 = vmul.f32 1.0, %v2333
    %v2335 = vrcp.pop %v2332
    %v2336 = vmul.f32 1.0, %v2335
    %v2337 = vtanh.pop %v2323
    %v2338 = vtanh.pop %v2324
    %2341 = vrot.lane.b32.xlu0 %v2230, 32
    %v2342 = vpop.permute.xlu0 %2341
    %2343 = vrot.lane.b32.xlu0 %v2231, 32
    %v2344 = vpop.permute.xlu0 %2343
    %v2347 = vmul.f32 %v2334, %v2342
    %v2348 = vmul.f32 %v2336, %v2344
    %2351 = vrot.lane.b32.xlu0 %v2337, 64
    %v2352 = vpop.permute.xlu0 %2351
    %2353 = vrot.lane.b32.xlu0 %v2338, 64
    %v2354 = vpop.permute.xlu0 %2353
    %v2357 = vmul.f32 %v2334, %v2352
    %v2358 = vmul.f32 %v2336, %v2354
    %2361 = vrot.lane.b32.xlu0 %v2357, 32
    %v2362 = vpop.permute.xlu0 %2361
    %2363 = vrot.lane.b32.xlu0 %v2358, 32
    %v2364 = vpop.permute.xlu0 %2363
    %v2367 = vadd.f32 %v2347, %v2362
    %v2368 = vadd.f32 %v2348, %v2364
    %v2369 = vtanh.pop %v2367
    %v2370 = vtanh.pop %v2368
    %2373 = vrot.lane.b32.xlu0 %v2369, 64
    %v2374 = vpop.permute.xlu0 %2373
    %2375 = vrot.lane.b32.xlu0 %v2370, 64
    %v2376 = vpop.permute.xlu0 %2375
    %v2379 = vmul.f32 %v2334, %v2374
    %v2380 = vmul.f32 %v2336, %v2376
    %v2381 = vld [vmem:[%s1135] sm:$0xff]
    %v2382 = vld [vmem:[%s1135 + $0x8] sm:$0x1]
    %2385 = vrot.lane.b32.xlu0 %v2379, 32
    %v2386 = vpop.permute.xlu0 %2385
    %2387 = vrot.lane.b32.xlu0 %v2380, 32
    %v2388 = vpop.permute.xlu0 %2387
    %v2391 = vmul.f32 %v2381, %v2386
    %v2392 = vmul.f32 %v2382, %v2388
    %2395 = vrot.lane.b32.xlu0 %v2367, 96
    %v2396 = vpop.permute.xlu0 %2395
    %2397 = vrot.lane.b32.xlu0 %v2368, 96
    %v2398 = vpop.permute.xlu0 %2397
    %v2401 = vmul.f32 %v2381, %v2396
    %v2402 = vmul.f32 %v2382, %v2398
    %v2403 = vsub.f32 1.0, %v2381
    %v2404 = vsub.f32 1.0, %v2382
    %v2405 = vmul.f32 %v2403, %v2230
    %v2406 = vmul.f32 %v2404, %v2231
    %v2407 = vadd.f32 %v2401, %v2405
    %v2408 = vadd.f32 %v2402, %v2406
    %v2409 = vmul.f32 %v2403, %v2234
    %v2410 = vmul.f32 %v2404, %v2235
    %v2411 = vadd.f32 %v2391, %v2409
    %v2412 = vadd.f32 %v2392, %v2410
    %2413 = vst.msk [vmem:[%s1525] sm:$0xff] %vm1340, %v2391
    %2414 = vst.msk [vmem:[%s1525 + $0x8] sm:$0x1] %vm1342, %v2392
    %2415 = vst.msk [vmem:[%s1522] sm:$0xff] %vm1345, %v2391
    %2416 = vst.msk [vmem:[%s1522 + $0x8] sm:$0x1] %vm1347, %v2392
    %v2417 = vld [vmem:[%s1144] sm:$0xff]
    %v2418 = vld [vmem:[%s1144 + $0x8] sm:$0x1]
    %v2420 = vsel %vm138, %v2411, 0
    %v2423 = vsel %vm138, %v2412, 0
    %2425 = vmatprep.subr.mxu0 0.0
    %2426 = vmatpush1.msra.mxu0 %v1176
    %2427 = vmatprep.subr.mxu0 0.0
    %2428 = vmatpush1.msra.mxu0 %v1177
    %2429 = vmatprep.subr.mxu0 0.0
    %2430 = vmatpush1.msra.mxu0 %v1178
    %2431 = vmatprep.subr.mxu0 0.0
    %2432 = vmatpush1.msra.mxu0 %v1179
    %2433 = vmatprep.subr.mxu0 0.0
    %2434 = vmatpush1.msra.mxu0 0.0
    %2435 = vmatprep.subr.mxu0 0.0
    %2436 = vmatpush1.msra.mxu0 0.0
    %2437 = vmatprep.subr.mxu0 0.0
    %2438 = vmatpush1.msra.mxu0 0.0
    %2439 = vmatprep.subr.mxu0 0.0
    %2440 = vmatpush1.msra.mxu0 0.0
    %2441 = vmatprep.subr.mxu0 0.0
    %2442 = vmatpush1.msra.mxu0 0.0
    %2443 = vmatprep.subr.mxu0 0.0
    %2444 = vmatpush1.msra.mxu0 0.0
    %2445 = vmatprep.subr.mxu0 0.0
    %2446 = vmatpush1.msra.mxu0 0.0
    %2447 = vmatprep.subr.mxu0 0.0
    %2448 = vmatpush1.msra.mxu0 0.0
    %2449 = vmatprep.subr.mxu0 0.0
    %2450 = vmatpush1.msra.mxu0 0.0
    %2451 = vmatprep.subr.mxu0 0.0
    %2452 = vmatpush1.msra.mxu0 0.0
    %2453 = vmatprep.subr.mxu0 0.0
    %2454 = vmatpush1.msra.mxu0 0.0
    %2455 = vmatprep.subr.mxu0 0.0
    %2456 = vmatpush1.msra.mxu0 0.0
    %2457 = vmatprep.subr.mxu0 0.0
    %2458 = vmatpush1.msra.mxu0 0.0
    %2459 = vmatprep.subr.mxu0 0.0
    %2460 = vmatpush1.msra.mxu0 0.0
    %2461 = vmatprep.subr.mxu0 0.0
    %2462 = vmatpush1.msra.mxu0 0.0
    %2463 = vmatprep.subr.mxu0 0.0
    %2464 = vmatpush1.msra.mxu0 0.0
    %2465 = vmatprep.subr.mxu0 0.0
    %2466 = vmatpush1.msra.mxu0 0.0
    %2467 = vmatprep.subr.mxu0 0.0
    %2468 = vmatpush1.msra.mxu0 0.0
    %2469 = vmatprep.subr.mxu0 0.0
    %2470 = vmatpush1.msra.mxu0 0.0
    %2471 = vmatprep.subr.mxu0 0.0
    %2472 = vmatpush1.msra.mxu0 0.0
    %2473 = vmatprep.subr.mxu0 0.0
    %2474 = vmatpush1.msra.mxu0 0.0
    %2475 = vmatprep.subr.mxu0 0.0
    %2476 = vmatpush1.msra.mxu0 0.0
    %2477 = vmatprep.subr.mxu0 0.0
    %2478 = vmatpush1.msra.mxu0 0.0
    %2479 = vmatprep.subr.mxu0 0.0
    %2480 = vmatpush1.msra.mxu0 0.0
    %2481 = vmatprep.subr.mxu0 0.0
    %2482 = vmatpush1.msra.mxu0 0.0
    %2483 = vmatprep.subr.mxu0 0.0
    %2484 = vmatpush1.msra.mxu0 0.0
    %2485 = vmatprep.subr.mxu0 0.0
    %2486 = vmatpush1.msra.mxu0 0.0
    %2487 = vmatprep.subr.mxu0 0.0
    %2488 = vmatpush1.msra.mxu0 0.0
    %2489 = vmatprep.mubr.f32.mxu0 0.0
    %2490 = vmatmul.mubr.f32.gmra.mrb[0].mxu0 %v2420
    %v2491 = vpop.f32.mrb[0].mxu0
    %v2492 = vadd.f32 0.0, %v2491
    %v2493 = vpop.f32.mrb[0].mxu0
    %2494 = vmatprep.mubr.f32.mxu0 0.0
    %2495 = vmatmul.mubr.f32.gmra.mrb[0].mxu0 %v2423
    %v2496 = vpop.f32.mrb[0].mxu0
    %v2497 = vadd.f32 0.0, %v2496
    %v2498 = vpop.f32.mrb[0].mxu0
    %2499 = vdwg.mxu0
    %v2500 = vadd.f32 %v2417, %v2492
    %v2501 = vadd.f32 %v2418, %v2497
    %v2502 = vxor.u32 %v2500, 2147483648
    %v2503 = vxor.u32 %v2501, 2147483648
    %v2504 = vmul.f32 %v2502, 1.442695
    %v2505 = vpow.pop %v2504
    %v2506 = vmul.f32 %v2503, 1.442695
    %v2507 = vpow.pop %v2506
    %v2508 = vadd.f32 %v2505, 1.0
    %v2509 = vadd.f32 %v2507, 1.0
    %v2510 = vrcp.pop %v2508
    %v2511 = vmul.f32 1.0, %v2510
    %v2512 = vrcp.pop %v2509
    %v2513 = vmul.f32 1.0, %v2512
    %v2514 = vtanh.pop %v2500
    %v2515 = vtanh.pop %v2501
    %2518 = vrot.lane.b32.xlu0 %v2407, 32
    %v2519 = vpop.permute.xlu0 %2518
    %2520 = vrot.lane.b32.xlu0 %v2408, 32
    %v2521 = vpop.permute.xlu0 %2520
    %v2524 = vmul.f32 %v2511, %v2519
    %v2525 = vmul.f32 %v2513, %v2521
    %2528 = vrot.lane.b32.xlu0 %v2514, 64
    %v2529 = vpop.permute.xlu0 %2528
    %2530 = vrot.lane.b32.xlu0 %v2515, 64
    %v2531 = vpop.permute.xlu0 %2530
    %v2534 = vmul.f32 %v2511, %v2529
    %v2535 = vmul.f32 %v2513, %v2531
    %2538 = vrot.lane.b32.xlu0 %v2534, 32
    %v2539 = vpop.permute.xlu0 %2538
    %2540 = vrot.lane.b32.xlu0 %v2535, 32
    %v2541 = vpop.permute.xlu0 %2540
    %v2544 = vadd.f32 %v2524, %v2539
    %v2545 = vadd.f32 %v2525, %v2541
    %v2546 = vtanh.pop %v2544
    %v2547 = vtanh.pop %v2545
    %2550 = vrot.lane.b32.xlu0 %v2546, 64
    %v2551 = vpop.permute.xlu0 %2550
    %2552 = vrot.lane.b32.xlu0 %v2547, 64
    %v2553 = vpop.permute.xlu0 %2552
    %v2556 = vmul.f32 %v2511, %v2551
    %v2557 = vmul.f32 %v2513, %v2553
    %v2558 = vld [vmem:[%s1173] sm:$0xff]
    %v2559 = vld [vmem:[%s1173 + $0x8] sm:$0x1]
    %2562 = vrot.lane.b32.xlu0 %v2556, 32
    %v2563 = vpop.permute.xlu0 %2562
    %2564 = vrot.lane.b32.xlu0 %v2557, 32
    %v2565 = vpop.permute.xlu0 %2564
    %v2568 = vmul.f32 %v2558, %v2563
    %v2569 = vmul.f32 %v2559, %v2565
    %2570 = vst.msk [vmem:[%s1344] sm:$0xff] %vm1340, %v2568
    %2571 = vst.msk [vmem:[%s1344 + $0x8] sm:$0x1] %vm1342, %v2569
    %2572 = vst.msk [vmem:[#allocation5] sm:$0xff] %vm1345, %v2568
    %2573 = vst.msk [vmem:[#allocation5 + $0x8] sm:$0x1] %vm1347, %v2569
    %v2574 = vld [vmem:[#allocation5] sm:$0xff]
    %v2575 = vld [vmem:[#allocation5 + $0x8] sm:$0x1]
    %v2576 = vld [vmem:[#allocation5 + $0x10] sm:$0xff]
    %v2577 = vld [vmem:[#allocation5 + $0x18] sm:$0x1]
    %v2578 = vld [vmem:[#allocation5 + $0x20] sm:$0xff]
    %v2579 = vld [vmem:[#allocation5 + $0x28] sm:$0x1]
    %v2580 = vld [vmem:[#allocation5 + $0x30] sm:$0xff]
    %v2581 = vld [vmem:[#allocation5 + $0x38] sm:$0x1]
    %v2582 = vld [vmem:[#allocation5 + $0x40] sm:$0xff]
    %v2583 = vld [vmem:[#allocation5 + $0x48] sm:$0x1]
    %v2584 = vld [vmem:[#allocation5 + $0x50] sm:$0xff]
    %v2585 = vld [vmem:[#allocation5 + $0x58] sm:$0x1]
    %v2586 = vld [vmem:[#allocation5 + $0x60] sm:$0xff]
    %v2587 = vld [vmem:[#allocation5 + $0x68] sm:$0x1]
    %v2588 = vld [vmem:[#allocation5 + $0x70] sm:$0xff]
    %v2589 = vld [vmem:[#allocation5 + $0x78] sm:$0x1]
    %v2590 = vtanh.pop %v2574
    %v2591 = vtanh.pop %v2575
    %v2592 = vtanh.pop %v2576
    %v2593 = vtanh.pop %v2577
    %v2594 = vtanh.pop %v2578
    %v2595 = vtanh.pop %v2579
    %v2596 = vtanh.pop %v2580
    %v2597 = vtanh.pop %v2581
    %v2598 = vtanh.pop %v2582
    %v2599 = vtanh.pop %v2583
    %v2600 = vtanh.pop %v2584
    %v2601 = vtanh.pop %v2585
    %v2602 = vtanh.pop %v2586
    %v2603 = vtanh.pop %v2587
    %v2604 = vtanh.pop %v2588
    %v2605 = vtanh.pop %v2589
    %v2606 = vld [vmem:[%s6] sm:$0xff]
    %v2607 = vld [vmem:[%s6 + $0x8] sm:$0xff]
    %v2608 = vld [vmem:[%s6 + $0x10] sm:$0xff]
    %v2609 = vld [vmem:[%s6 + $0x18] sm:$0xff]
    %v2610 = vld [vmem:[%s7] sm:$0x1]
    %v2612 = vlaneseq
    %v2613 = vshrl.u32 %v2612, 7
    %v2614 = vsub.s32 0, %v2613
    %v2615 = vrot.slane %v2610, %v2614
    %v2618 = vsel %vm138, %v2590, 0
    %v2621 = vsel %vm138, %v2591, 0
    %2623 = vmatprep.subr.mxu0 0.0
    %2624 = vmatpush1.msra.mxu0 %v2606
    %2625 = vmatprep.subr.mxu0 0.0
    %2626 = vmatpush1.msra.mxu0 %v2607
    %2627 = vmatprep.subr.mxu0 0.0
    %2628 = vmatpush1.msra.mxu0 %v2608
    %2629 = vmatprep.subr.mxu0 0.0
    %2630 = vmatpush1.msra.mxu0 %v2609
    %2631 = vmatprep.subr.mxu0 0.0
    %2632 = vmatpush1.msra.mxu0 0.0
    %2633 = vmatprep.subr.mxu0 0.0
    %2634 = vmatpush1.msra.mxu0 0.0
    %2635 = vmatprep.subr.mxu0 0.0
    %2636 = vmatpush1.msra.mxu0 0.0
    %2637 = vmatprep.subr.mxu0 0.0
    %2638 = vmatpush1.msra.mxu0 0.0
    %2639 = vmatprep.subr.mxu0 0.0
    %2640 = vmatpush1.msra.mxu0 0.0
    %2641 = vmatprep.subr.mxu0 0.0
    %2642 = vmatpush1.msra.mxu0 0.0
    %2643 = vmatprep.subr.mxu0 0.0
    %2644 = vmatpush1.msra.mxu0 0.0
    %2645 = vmatprep.subr.mxu0 0.0
    %2646 = vmatpush1.msra.mxu0 0.0
    %2647 = vmatprep.subr.mxu0 0.0
    %2648 = vmatpush1.msra.mxu0 0.0
    %2649 = vmatprep.subr.mxu0 0.0
    %2650 = vmatpush1.msra.mxu0 0.0
    %2651 = vmatprep.subr.mxu0 0.0
    %2652 = vmatpush1.msra.mxu0 0.0
    %2653 = vmatprep.subr.mxu0 0.0
    %2654 = vmatpush1.msra.mxu0 0.0
    %2655 = vmatprep.subr.mxu0 0.0
    %2656 = vmatpush1.msra.mxu0 0.0
    %2657 = vmatprep.subr.mxu0 0.0
    %2658 = vmatpush1.msra.mxu0 0.0
    %2659 = vmatprep.subr.mxu0 0.0
    %2660 = vmatpush1.msra.mxu0 0.0
    %2661 = vmatprep.subr.mxu0 0.0
    %2662 = vmatpush1.msra.mxu0 0.0
    %2663 = vmatprep.subr.mxu0 0.0
    %2664 = vmatpush1.msra.mxu0 0.0
    %2665 = vmatprep.subr.mxu0 0.0
    %2666 = vmatpush1.msra.mxu0 0.0
    %2667 = vmatprep.subr.mxu0 0.0
    %2668 = vmatpush1.msra.mxu0 0.0
    %2669 = vmatprep.subr.mxu0 0.0
    %2670 = vmatpush1.msra.mxu0 0.0
    %2671 = vmatprep.subr.mxu0 0.0
    %2672 = vmatpush1.msra.mxu0 0.0
    %2673 = vmatprep.subr.mxu0 0.0
    %2674 = vmatpush1.msra.mxu0 0.0
    %2675 = vmatprep.subr.mxu0 0.0
    %2676 = vmatpush1.msra.mxu0 0.0
    %2677 = vmatprep.subr.mxu0 0.0
    %2678 = vmatpush1.msra.mxu0 0.0
    %2679 = vmatprep.subr.mxu0 0.0
    %2680 = vmatpush1.msra.mxu0 0.0
    %2681 = vmatprep.subr.mxu0 0.0
    %2682 = vmatpush1.msra.mxu0 0.0
    %2683 = vmatprep.subr.mxu0 0.0
    %2684 = vmatpush1.msra.mxu0 0.0
    %2685 = vmatprep.subr.mxu0 0.0
    %2686 = vmatpush1.msra.mxu0 0.0
    %2687 = vmatprep.mubr.f32.mxu0 0.0
    %2688 = vmatmul.mubr.f32.gmra.mrb[0].mxu0 %v2618
    %v2689 = vpop.f32.mrb[0].mxu0
    %v2690 = vadd.f32 %v2615, %v2689
    %v2691 = vpop.f32.mrb[0].mxu0
    %2692 = vmatprep.mubr.f32.mxu0 0.0
    %2693 = vmatmul.mubr.f32.gmra.mrb[0].mxu0 %v2621
    %v2694 = vpop.f32.mrb[0].mxu0
    %v2695 = vadd.f32 %v2615, %v2694
    %v2696 = vpop.f32.mrb[0].mxu0
    %2697 = vdwg.mxu0
    %v2698 = vtanh.pop %v2690
    %v2699 = vtanh.pop %v2695
    %2700 = vst.msk [vmem:[%s12] sm:$0xff] %vm138, %v2698
    %2701 = vst.msk [vmem:[%s12 + $0x8] sm:$0x1] %vm140, %v2699
    %v2703 = vsel %vm138, %v2592, 0
    %v2706 = vsel %vm138, %v2593, 0
    %2708 = vmatprep.subr.mxu0 0.0
    %2709 = vmatpush1.msra.mxu0 %v2606
    %2710 = vmatprep.subr.mxu0 0.0
    %2711 = vmatpush1.msra.mxu0 %v2607
    %2712 = vmatprep.subr.mxu0 0.0
    %2713 = vmatpush1.msra.mxu0 %v2608
    %2714 = vmatprep.subr.mxu0 0.0
    %2715 = vmatpush1.msra.mxu0 %v2609
    %2716 = vmatprep.subr.mxu0 0.0
    %2717 = vmatpush1.msra.mxu0 0.0
    %2718 = vmatprep.subr.mxu0 0.0
    %2719 = vmatpush1.msra.mxu0 0.0
    %2720 = vmatprep.subr.mxu0 0.0
    %2721 = vmatpush1.msra.mxu0 0.0
    %2722 = vmatprep.subr.mxu0 0.0
    %2723 = vmatpush1.msra.mxu0 0.0
    %2724 = vmatprep.subr.mxu0 0.0
    %2725 = vmatpush1.msra.mxu0 0.0
    %2726 = vmatprep.subr.mxu0 0.0
    %2727 = vmatpush1.msra.mxu0 0.0
    %2728 = vmatprep.subr.mxu0 0.0
    %2729 = vmatpush1.msra.mxu0 0.0
    %2730 = vmatprep.subr.mxu0 0.0
    %2731 = vmatpush1.msra.mxu0 0.0
    %2732 = vmatprep.subr.mxu0 0.0
    %2733 = vmatpush1.msra.mxu0 0.0
    %2734 = vmatprep.subr.mxu0 0.0
    %2735 = vmatpush1.msra.mxu0 0.0
    %2736 = vmatprep.subr.mxu0 0.0
    %2737 = vmatpush1.msra.mxu0 0.0
    %2738 = vmatprep.subr.mxu0 0.0
    %2739 = vmatpush1.msra.mxu0 0.0
    %2740 = vmatprep.subr.mxu0 0.0
    %2741 = vmatpush1.msra.mxu0 0.0
    %2742 = vmatprep.subr.mxu0 0.0
    %2743 = vmatpush1.msra.mxu0 0.0
    %2744 = vmatprep.subr.mxu0 0.0
    %2745 = vmatpush1.msra.mxu0 0.0
    %2746 = vmatprep.subr.mxu0 0.0
    %2747 = vmatpush1.msra.mxu0 0.0
    %2748 = vmatprep.subr.mxu0 0.0
    %2749 = vmatpush1.msra.mxu0 0.0
    %2750 = vmatprep.subr.mxu0 0.0
    %2751 = vmatpush1.msra.mxu0 0.0
    %2752 = vmatprep.subr.mxu0 0.0
    %2753 = vmatpush1.msra.mxu0 0.0
    %2754 = vmatprep.subr.mxu0 0.0
    %2755 = vmatpush1.msra.mxu0 0.0
    %2756 = vmatprep.subr.mxu0 0.0
    %2757 = vmatpush1.msra.mxu0 0.0
    %2758 = vmatprep.subr.mxu0 0.0
    %2759 = vmatpush1.msra.mxu0 0.0
    %2760 = vmatprep.subr.mxu0 0.0
    %2761 = vmatpush1.msra.mxu0 0.0
    %2762 = vmatprep.subr.mxu0 0.0
    %2763 = vmatpush1.msra.mxu0 0.0
    %2764 = vmatprep.subr.mxu0 0.0
    %2765 = vmatpush1.msra.mxu0 0.0
    %2766 = vmatprep.subr.mxu0 0.0
    %2767 = vmatpush1.msra.mxu0 0.0
    %2768 = vmatprep.subr.mxu0 0.0
    %2769 = vmatpush1.msra.mxu0 0.0
    %2770 = vmatprep.subr.mxu0 0.0
    %2771 = vmatpush1.msra.mxu0 0.0
    %2772 = vmatprep.mubr.f32.mxu0 0.0
    %2773 = vmatmul.mubr.f32.gmra.mrb[0].mxu0 %v2703
    %v2774 = vpop.f32.mrb[0].mxu0
    %v2775 = vadd.f32 %v2615, %v2774
    %v2776 = vpop.f32.mrb[0].mxu0
    %2777 = vmatprep.mubr.f32.mxu0 0.0
    %2778 = vmatmul.mubr.f32.gmra.mrb[0].mxu0 %v2706
    %v2779 = vpop.f32.mrb[0].mxu0
    %v2780 = vadd.f32 %v2615, %v2779
    %v2781 = vpop.f32.mrb[0].mxu0
    %2782 = vdwg.mxu0
    %v2783 = vtanh.pop %v2775
    %v2784 = vtanh.pop %v2780
    %s2785 = scalar_lea.vmem %s12, 16
    %2786 = vst.msk [vmem:[%s2785] sm:$0xff] %vm138, %v2783
    %2787 = vst.msk [vmem:[%s2785 + $0x8] sm:$0x1] %vm140, %v2784
    %v2789 = vsel %vm138, %v2594, 0
    %v2792 = vsel %vm138, %v2595, 0
    %2794 = vmatprep.subr.mxu0 0.0
    %2795 = vmatpush1.msra.mxu0 %v2606
    %2796 = vmatprep.subr.mxu0 0.0
    %2797 = vmatpush1.msra.mxu0 %v2607
    %2798 = vmatprep.subr.mxu0 0.0
    %2799 = vmatpush1.msra.mxu0 %v2608
    %2800 = vmatprep.subr.mxu0 0.0
    %2801 = vmatpush1.msra.mxu0 %v2609
    %2802 = vmatprep.subr.mxu0 0.0
    %2803 = vmatpush1.msra.mxu0 0.0
    %2804 = vmatprep.subr.mxu0 0.0
    %2805 = vmatpush1.msra.mxu0 0.0
    %2806 = vmatprep.subr.mxu0 0.0
    %2807 = vmatpush1.msra.mxu0 0.0
    %2808 = vmatprep.subr.mxu0 0.0
    %2809 = vmatpush1.msra.mxu0 0.0
    %2810 = vmatprep.subr.mxu0 0.0
    %2811 = vmatpush1.msra.mxu0 0.0
    %2812 = vmatprep.subr.mxu0 0.0
    %2813 = vmatpush1.msra.mxu0 0.0
    %2814 = vmatprep.subr.mxu0 0.0
    %2815 = vmatpush1.msra.mxu0 0.0
    %2816 = vmatprep.subr.mxu0 0.0
    %2817 = vmatpush1.msra.mxu0 0.0
    %2818 = vmatprep.subr.mxu0 0.0
    %2819 = vmatpush1.msra.mxu0 0.0
    %2820 = vmatprep.subr.mxu0 0.0
    %2821 = vmatpush1.msra.mxu0 0.0
    %2822 = vmatprep.subr.mxu0 0.0
    %2823 = vmatpush1.msra.mxu0 0.0
    %2824 = vmatprep.subr.mxu0 0.0
    %2825 = vmatpush1.msra.mxu0 0.0
    %2826 = vmatprep.subr.mxu0 0.0
    %2827 = vmatpush1.msra.mxu0 0.0
    %2828 = vmatprep.subr.mxu0 0.0
    %2829 = vmatpush1.msra.mxu0 0.0
    %2830 = vmatprep.subr.mxu0 0.0
    %2831 = vmatpush1.msra.mxu0 0.0
    %2832 = vmatprep.subr.mxu0 0.0
    %2833 = vmatpush1.msra.mxu0 0.0
    %2834 = vmatprep.subr.mxu0 0.0
    %2835 = vmatpush1.msra.mxu0 0.0
    %2836 = vmatprep.subr.mxu0 0.0
    %2837 = vmatpush1.msra.mxu0 0.0
    %2838 = vmatprep.subr.mxu0 0.0
    %2839 = vmatpush1.msra.mxu0 0.0
    %2840 = vmatprep.subr.mxu0 0.0
    %2841 = vmatpush1.msra.mxu0 0.0
    %2842 = vmatprep.subr.mxu0 0.0
    %2843 = vmatpush1.msra.mxu0 0.0
    %2844 = vmatprep.subr.mxu0 0.0
    %2845 = vmatpush1.msra.mxu0 0.0
    %2846 = vmatprep.subr.mxu0 0.0
    %2847 = vmatpush1.msra.mxu0 0.0
    %2848 = vmatprep.subr.mxu0 0.0
    %2849 = vmatpush1.msra.mxu0 0.0
    %2850 = vmatprep.subr.mxu0 0.0
    %2851 = vmatpush1.msra.mxu0 0.0
    %2852 = vmatprep.subr.mxu0 0.0
    %2853 = vmatpush1.msra.mxu0 0.0
    %2854 = vmatprep.subr.mxu0 0.0
    %2855 = vmatpush1.msra.mxu0 0.0
    %2856 = vmatprep.subr.mxu0 0.0
    %2857 = vmatpush1.msra.mxu0 0.0
    %2858 = vmatprep.mubr.f32.mxu0 0.0
    %2859 = vmatmul.mubr.f32.gmra.mrb[0].mxu0 %v2789
    %v2860 = vpop.f32.mrb[0].mxu0
    %v2861 = vadd.f32 %v2615, %v2860
    %v2862 = vpop.f32.mrb[0].mxu0
    %2863 = vmatprep.mubr.f32.mxu0 0.0
    %2864 = vmatmul.mubr.f32.gmra.mrb[0].mxu0 %v2792
    %v2865 = vpop.f32.mrb[0].mxu0
    %v2866 = vadd.f32 %v2615, %v2865
    %v2867 = vpop.f32.mrb[0].mxu0
    %2868 = vdwg.mxu0
    %v2869 = vtanh.pop %v2861
    %v2870 = vtanh.pop %v2866
    %s2871 = scalar_lea.vmem %s12, 32
    %2872 = vst.msk [vmem:[%s2871] sm:$0xff] %vm138, %v2869
    %2873 = vst.msk [vmem:[%s2871 + $0x8] sm:$0x1] %vm140, %v2870
    %v2875 = vsel %vm138, %v2596, 0
    %v2878 = vsel %vm138, %v2597, 0
    %2880 = vmatprep.subr.mxu0 0.0
    %2881 = vmatpush1.msra.mxu0 %v2606
    %2882 = vmatprep.subr.mxu0 0.0
    %2883 = vmatpush1.msra.mxu0 %v2607
    %2884 = vmatprep.subr.mxu0 0.0
    %2885 = vmatpush1.msra.mxu0 %v2608
    %2886 = vmatprep.subr.mxu0 0.0
    %2887 = vmatpush1.msra.mxu0 %v2609
    %2888 = vmatprep.subr.mxu0 0.0
    %2889 = vmatpush1.msra.mxu0 0.0
    %2890 = vmatprep.subr.mxu0 0.0
    %2891 = vmatpush1.msra.mxu0 0.0
    %2892 = vmatprep.subr.mxu0 0.0
    %2893 = vmatpush1.msra.mxu0 0.0
    %2894 = vmatprep.subr.mxu0 0.0
    %2895 = vmatpush1.msra.mxu0 0.0
    %2896 = vmatprep.subr.mxu0 0.0
    %2897 = vmatpush1.msra.mxu0 0.0
    %2898 = vmatprep.subr.mxu0 0.0
    %2899 = vmatpush1.msra.mxu0 0.0
    %2900 = vmatprep.subr.mxu0 0.0
    %2901 = vmatpush1.msra.mxu0 0.0
    %2902 = vmatprep.subr.mxu0 0.0
    %2903 = vmatpush1.msra.mxu0 0.0
    %2904 = vmatprep.subr.mxu0 0.0
    %2905 = vmatpush1.msra.mxu0 0.0
    %2906 = vmatprep.subr.mxu0 0.0
    %2907 = vmatpush1.msra.mxu0 0.0
    %2908 = vmatprep.subr.mxu0 0.0
    %2909 = vmatpush1.msra.mxu0 0.0
    %2910 = vmatprep.subr.mxu0 0.0
    %2911 = vmatpush1.msra.mxu0 0.0
    %2912 = vmatprep.subr.mxu0 0.0
    %2913 = vmatpush1.msra.mxu0 0.0
    %2914 = vmatprep.subr.mxu0 0.0
    %2915 = vmatpush1.msra.mxu0 0.0
    %2916 = vmatprep.subr.mxu0 0.0
    %2917 = vmatpush1.msra.mxu0 0.0
    %2918 = vmatprep.subr.mxu0 0.0
    %2919 = vmatpush1.msra.mxu0 0.0
    %2920 = vmatprep.subr.mxu0 0.0
    %2921 = vmatpush1.msra.mxu0 0.0
    %2922 = vmatprep.subr.mxu0 0.0
    %2923 = vmatpush1.msra.mxu0 0.0
    %2924 = vmatprep.subr.mxu0 0.0
    %2925 = vmatpush1.msra.mxu0 0.0
    %2926 = vmatprep.subr.mxu0 0.0
    %2927 = vmatpush1.msra.mxu0 0.0
    %2928 = vmatprep.subr.mxu0 0.0
    %2929 = vmatpush1.msra.mxu0 0.0
    %2930 = vmatprep.subr.mxu0 0.0
    %2931 = vmatpush1.msra.mxu0 0.0
    %2932 = vmatprep.subr.mxu0 0.0
    %2933 = vmatpush1.msra.mxu0 0.0
    %2934 = vmatprep.subr.mxu0 0.0
    %2935 = vmatpush1.msra.mxu0 0.0
    %2936 = vmatprep.subr.mxu0 0.0
    %2937 = vmatpush1.msra.mxu0 0.0
    %2938 = vmatprep.subr.mxu0 0.0
    %2939 = vmatpush1.msra.mxu0 0.0
    %2940 = vmatprep.subr.mxu0 0.0
    %2941 = vmatpush1.msra.mxu0 0.0
    %2942 = vmatprep.subr.mxu0 0.0
    %2943 = vmatpush1.msra.mxu0 0.0
    %2944 = vmatprep.mubr.f32.mxu0 0.0
    %2945 = vmatmul.mubr.f32.gmra.mrb[0].mxu0 %v2875
    %v2946 = vpop.f32.mrb[0].mxu0
    %v2947 = vadd.f32 %v2615, %v2946
    %v2948 = vpop.f32.mrb[0].mxu0
    %2949 = vmatprep.mubr.f32.mxu0 0.0
    %2950 = vmatmul.mubr.f32.gmra.mrb[0].mxu0 %v2878
    %v2951 = vpop.f32.mrb[0].mxu0
    %v2952 = vadd.f32 %v2615, %v2951
    %v2953 = vpop.f32.mrb[0].mxu0
    %2954 = vdwg.mxu0
    %v2955 = vtanh.pop %v2947
    %v2956 = vtanh.pop %v2952
    %s2957 = scalar_lea.vmem %s12, 48
    %2958 = vst.msk [vmem:[%s2957] sm:$0xff] %vm138, %v2955
    %2959 = vst.msk [vmem:[%s2957 + $0x8] sm:$0x1] %vm140, %v2956
    %v2961 = vsel %vm138, %v2598, 0
    %v2964 = vsel %vm138, %v2599, 0
    %2966 = vmatprep.subr.mxu0 0.0
    %2967 = vmatpush1.msra.mxu0 %v2606
    %2968 = vmatprep.subr.mxu0 0.0
    %2969 = vmatpush1.msra.mxu0 %v2607
    %2970 = vmatprep.subr.mxu0 0.0
    %2971 = vmatpush1.msra.mxu0 %v2608
    %2972 = vmatprep.subr.mxu0 0.0
    %2973 = vmatpush1.msra.mxu0 %v2609
    %2974 = vmatprep.subr.mxu0 0.0
    %2975 = vmatpush1.msra.mxu0 0.0
    %2976 = vmatprep.subr.mxu0 0.0
    %2977 = vmatpush1.msra.mxu0 0.0
    %2978 = vmatprep.subr.mxu0 0.0
    %2979 = vmatpush1.msra.mxu0 0.0
    %2980 = vmatprep.subr.mxu0 0.0
    %2981 = vmatpush1.msra.mxu0 0.0
    %2982 = vmatprep.subr.mxu0 0.0
    %2983 = vmatpush1.msra.mxu0 0.0
    %2984 = vmatprep.subr.mxu0 0.0
    %2985 = vmatpush1.msra.mxu0 0.0
    %2986 = vmatprep.subr.mxu0 0.0
    %2987 = vmatpush1.msra.mxu0 0.0
    %2988 = vmatprep.subr.mxu0 0.0
    %2989 = vmatpush1.msra.mxu0 0.0
    %2990 = vmatprep.subr.mxu0 0.0
    %2991 = vmatpush1.msra.mxu0 0.0
    %2992 = vmatprep.subr.mxu0 0.0
    %2993 = vmatpush1.msra.mxu0 0.0
    %2994 = vmatprep.subr.mxu0 0.0
    %2995 = vmatpush1.msra.mxu0 0.0
    %2996 = vmatprep.subr.mxu0 0.0
    %2997 = vmatpush1.msra.mxu0 0.0
    %2998 = vmatprep.subr.mxu0 0.0
    %2999 = vmatpush1.msra.mxu0 0.0
    %3000 = vmatprep.subr.mxu0 0.0
    %3001 = vmatpush1.msra.mxu0 0.0
    %3002 = vmatprep.subr.mxu0 0.0
    %3003 = vmatpush1.msra.mxu0 0.0
    %3004 = vmatprep.subr.mxu0 0.0
    %3005 = vmatpush1.msra.mxu0 0.0
    %3006 = vmatprep.subr.mxu0 0.0
    %3007 = vmatpush1.msra.mxu0 0.0
    %3008 = vmatprep.subr.mxu0 0.0
    %3009 = vmatpush1.msra.mxu0 0.0
    %3010 = vmatprep.subr.mxu0 0.0
    %3011 = vmatpush1.msra.mxu0 0.0
    %3012 = vmatprep.subr.mxu0 0.0
    %3013 = vmatpush1.msra.mxu0 0.0
    %3014 = vmatprep.subr.mxu0 0.0
    %3015 = vmatpush1.msra.mxu0 0.0
    %3016 = vmatprep.subr.mxu0 0.0
    %3017 = vmatpush1.msra.mxu0 0.0
    %3018 = vmatprep.subr.mxu0 0.0
    %3019 = vmatpush1.msra.mxu0 0.0
    %3020 = vmatprep.subr.mxu0 0.0
    %3021 = vmatpush1.msra.mxu0 0.0
    %3022 = vmatprep.subr.mxu0 0.0
    %3023 = vmatpush1.msra.mxu0 0.0
    %3024 = vmatprep.subr.mxu0 0.0
    %3025 = vmatpush1.msra.mxu0 0.0
    %3026 = vmatprep.subr.mxu0 0.0
    %3027 = vmatpush1.msra.mxu0 0.0
    %3028 = vmatprep.subr.mxu0 0.0
    %3029 = vmatpush1.msra.mxu0 0.0
    %3030 = vmatprep.mubr.f32.mxu0 0.0
    %3031 = vmatmul.mubr.f32.gmra.mrb[0].mxu0 %v2961
    %v3032 = vpop.f32.mrb[0].mxu0
    %v3033 = vadd.f32 %v2615, %v3032
    %v3034 = vpop.f32.mrb[0].mxu0
    %3035 = vmatprep.mubr.f32.mxu0 0.0
    %3036 = vmatmul.mubr.f32.gmra.mrb[0].mxu0 %v2964
    %v3037 = vpop.f32.mrb[0].mxu0
    %v3038 = vadd.f32 %v2615, %v3037
    %v3039 = vpop.f32.mrb[0].mxu0
    %3040 = vdwg.mxu0
    %v3041 = vtanh.pop %v3033
    %v3042 = vtanh.pop %v3038
    %s3043 = scalar_lea.vmem %s12, 64
    %3044 = vst.msk [vmem:[%s3043] sm:$0xff] %vm138, %v3041
    %3045 = vst.msk [vmem:[%s3043 + $0x8] sm:$0x1] %vm140, %v3042
    %v3047 = vsel %vm138, %v2600, 0
    %v3050 = vsel %vm138, %v2601, 0
    %3052 = vmatprep.subr.mxu0 0.0
    %3053 = vmatpush1.msra.mxu0 %v2606
    %3054 = vmatprep.subr.mxu0 0.0
    %3055 = vmatpush1.msra.mxu0 %v2607
    %3056 = vmatprep.subr.mxu0 0.0
    %3057 = vmatpush1.msra.mxu0 %v2608
    %3058 = vmatprep.subr.mxu0 0.0
    %3059 = vmatpush1.msra.mxu0 %v2609
    %3060 = vmatprep.subr.mxu0 0.0
    %3061 = vmatpush1.msra.mxu0 0.0
    %3062 = vmatprep.subr.mxu0 0.0
    %3063 = vmatpush1.msra.mxu0 0.0
    %3064 = vmatprep.subr.mxu0 0.0
    %3065 = vmatpush1.msra.mxu0 0.0
    %3066 = vmatprep.subr.mxu0 0.0
    %3067 = vmatpush1.msra.mxu0 0.0
    %3068 = vmatprep.subr.mxu0 0.0
    %3069 = vmatpush1.msra.mxu0 0.0
    %3070 = vmatprep.subr.mxu0 0.0
    %3071 = vmatpush1.msra.mxu0 0.0
    %3072 = vmatprep.subr.mxu0 0.0
    %3073 = vmatpush1.msra.mxu0 0.0
    %3074 = vmatprep.subr.mxu0 0.0
    %3075 = vmatpush1.msra.mxu0 0.0
    %3076 = vmatprep.subr.mxu0 0.0
    %3077 = vmatpush1.msra.mxu0 0.0
    %3078 = vmatprep.subr.mxu0 0.0
    %3079 = vmatpush1.msra.mxu0 0.0
    %3080 = vmatprep.subr.mxu0 0.0
    %3081 = vmatpush1.msra.mxu0 0.0
    %3082 = vmatprep.subr.mxu0 0.0
    %3083 = vmatpush1.msra.mxu0 0.0
    %3084 = vmatprep.subr.mxu0 0.0
    %3085 = vmatpush1.msra.mxu0 0.0
    %3086 = vmatprep.subr.mxu0 0.0
    %3087 = vmatpush1.msra.mxu0 0.0
    %3088 = vmatprep.subr.mxu0 0.0
    %3089 = vmatpush1.msra.mxu0 0.0
    %3090 = vmatprep.subr.mxu0 0.0
    %3091 = vmatpush1.msra.mxu0 0.0
    %3092 = vmatprep.subr.mxu0 0.0
    %3093 = vmatpush1.msra.mxu0 0.0
    %3094 = vmatprep.subr.mxu0 0.0
    %3095 = vmatpush1.msra.mxu0 0.0
    %3096 = vmatprep.subr.mxu0 0.0
    %3097 = vmatpush1.msra.mxu0 0.0
    %3098 = vmatprep.subr.mxu0 0.0
    %3099 = vmatpush1.msra.mxu0 0.0
    %3100 = vmatprep.subr.mxu0 0.0
    %3101 = vmatpush1.msra.mxu0 0.0
    %3102 = vmatprep.subr.mxu0 0.0
    %3103 = vmatpush1.msra.mxu0 0.0
    %3104 = vmatprep.subr.mxu0 0.0
    %3105 = vmatpush1.msra.mxu0 0.0
    %3106 = vmatprep.subr.mxu0 0.0
    %3107 = vmatpush1.msra.mxu0 0.0
    %3108 = vmatprep.subr.mxu0 0.0
    %3109 = vmatpush1.msra.mxu0 0.0
    %3110 = vmatprep.subr.mxu0 0.0
    %3111 = vmatpush1.msra.mxu0 0.0
    %3112 = vmatprep.subr.mxu0 0.0
    %3113 = vmatpush1.msra.mxu0 0.0
    %3114 = vmatprep.subr.mxu0 0.0
    %3115 = vmatpush1.msra.mxu0 0.0
    %3116 = vmatprep.mubr.f32.mxu0 0.0
    %3117 = vmatmul.mubr.f32.gmra.mrb[0].mxu0 %v3047
    %v3118 = vpop.f32.mrb[0].mxu0
    %v3119 = vadd.f32 %v2615, %v3118
    %v3120 = vpop.f32.mrb[0].mxu0
    %3121 = vmatprep.mubr.f32.mxu0 0.0
    %3122 = vmatmul.mubr.f32.gmra.mrb[0].mxu0 %v3050
    %v3123 = vpop.f32.mrb[0].mxu0
    %v3124 = vadd.f32 %v2615, %v3123
    %v3125 = vpop.f32.mrb[0].mxu0
    %3126 = vdwg.mxu0
    %v3127 = vtanh.pop %v3119
    %v3128 = vtanh.pop %v3124
    %s3129 = scalar_lea.vmem %s12, 80
    %3130 = vst.msk [vmem:[%s3129] sm:$0xff] %vm138, %v3127
    %3131 = vst.msk [vmem:[%s3129 + $0x8] sm:$0x1] %vm140, %v3128
    %v3133 = vsel %vm138, %v2602, 0
    %v3136 = vsel %vm138, %v2603, 0
    %3138 = vmatprep.subr.mxu0 0.0
    %3139 = vmatpush1.msra.mxu0 %v2606
    %3140 = vmatprep.subr.mxu0 0.0
    %3141 = vmatpush1.msra.mxu0 %v2607
    %3142 = vmatprep.subr.mxu0 0.0
    %3143 = vmatpush1.msra.mxu0 %v2608
    %3144 = vmatprep.subr.mxu0 0.0
    %3145 = vmatpush1.msra.mxu0 %v2609
    %3146 = vmatprep.subr.mxu0 0.0
    %3147 = vmatpush1.msra.mxu0 0.0
    %3148 = vmatprep.subr.mxu0 0.0
    %3149 = vmatpush1.msra.mxu0 0.0
    %3150 = vmatprep.subr.mxu0 0.0
    %3151 = vmatpush1.msra.mxu0 0.0
    %3152 = vmatprep.subr.mxu0 0.0
    %3153 = vmatpush1.msra.mxu0 0.0
    %3154 = vmatprep.subr.mxu0 0.0
    %3155 = vmatpush1.msra.mxu0 0.0
    %3156 = vmatprep.subr.mxu0 0.0
    %3157 = vmatpush1.msra.mxu0 0.0
    %3158 = vmatprep.subr.mxu0 0.0
    %3159 = vmatpush1.msra.mxu0 0.0
    %3160 = vmatprep.subr.mxu0 0.0
    %3161 = vmatpush1.msra.mxu0 0.0
    %3162 = vmatprep.subr.mxu0 0.0
    %3163 = vmatpush1.msra.mxu0 0.0
    %3164 = vmatprep.subr.mxu0 0.0
    %3165 = vmatpush1.msra.mxu0 0.0
    %3166 = vmatprep.subr.mxu0 0.0
    %3167 = vmatpush1.msra.mxu0 0.0
    %3168 = vmatprep.subr.mxu0 0.0
    %3169 = vmatpush1.msra.mxu0 0.0
    %3170 = vmatprep.subr.mxu0 0.0
    %3171 = vmatpush1.msra.mxu0 0.0
    %3172 = vmatprep.subr.mxu0 0.0
    %3173 = vmatpush1.msra.mxu0 0.0
    %3174 = vmatprep.subr.mxu0 0.0
    %3175 = vmatpush1.msra.mxu0 0.0
    %3176 = vmatprep.subr.mxu0 0.0
    %3177 = vmatpush1.msra.mxu0 0.0
    %3178 = vmatprep.subr.mxu0 0.0
    %3179 = vmatpush1.msra.mxu0 0.0
    %3180 = vmatprep.subr.mxu0 0.0
    %3181 = vmatpush1.msra.mxu0 0.0
    %3182 = vmatprep.subr.mxu0 0.0
    %3183 = vmatpush1.msra.mxu0 0.0
    %3184 = vmatprep.subr.mxu0 0.0
    %3185 = vmatpush1.msra.mxu0 0.0
    %3186 = vmatprep.subr.mxu0 0.0
    %3187 = vmatpush1.msra.mxu0 0.0
    %3188 = vmatprep.subr.mxu0 0.0
    %3189 = vmatpush1.msra.mxu0 0.0
    %3190 = vmatprep.subr.mxu0 0.0
    %3191 = vmatpush1.msra.mxu0 0.0
    %3192 = vmatprep.subr.mxu0 0.0
    %3193 = vmatpush1.msra.mxu0 0.0
    %3194 = vmatprep.subr.mxu0 0.0
    %3195 = vmatpush1.msra.mxu0 0.0
    %3196 = vmatprep.subr.mxu0 0.0
    %3197 = vmatpush1.msra.mxu0 0.0
    %3198 = vmatprep.subr.mxu0 0.0
    %3199 = vmatpush1.msra.mxu0 0.0
    %3200 = vmatprep.subr.mxu0 0.0
    %3201 = vmatpush1.msra.mxu0 0.0
    %3202 = vmatprep.mubr.f32.mxu0 0.0
    %3203 = vmatmul.mubr.f32.gmra.mrb[0].mxu0 %v3133
    %v3204 = vpop.f32.mrb[0].mxu0
    %v3205 = vadd.f32 %v2615, %v3204
    %v3206 = vpop.f32.mrb[0].mxu0
    %3207 = vmatprep.mubr.f32.mxu0 0.0
    %3208 = vmatmul.mubr.f32.gmra.mrb[0].mxu0 %v3136
    %v3209 = vpop.f32.mrb[0].mxu0
    %v3210 = vadd.f32 %v2615, %v3209
    %v3211 = vpop.f32.mrb[0].mxu0
    %3212 = vdwg.mxu0
    %v3213 = vtanh.pop %v3205
    %v3214 = vtanh.pop %v3210
    %s3215 = scalar_lea.vmem %s12, 96
    %3216 = vst.msk [vmem:[%s3215] sm:$0xff] %vm138, %v3213
    %3217 = vst.msk [vmem:[%s3215 + $0x8] sm:$0x1] %vm140, %v3214
    %v3219 = vsel %vm138, %v2604, 0
    %v3222 = vsel %vm138, %v2605, 0
    %3224 = vmatprep.subr.mxu0 0.0
    %3225 = vmatpush1.msra.mxu0 %v2606
    %3226 = vmatprep.subr.mxu0 0.0
    %3227 = vmatpush1.msra.mxu0 %v2607
    %3228 = vmatprep.subr.mxu0 0.0
    %3229 = vmatpush1.msra.mxu0 %v2608
    %3230 = vmatprep.subr.mxu0 0.0
    %3231 = vmatpush1.msra.mxu0 %v2609
    %3232 = vmatprep.subr.mxu0 0.0
    %3233 = vmatpush1.msra.mxu0 0.0
    %3234 = vmatprep.subr.mxu0 0.0
    %3235 = vmatpush1.msra.mxu0 0.0
    %3236 = vmatprep.subr.mxu0 0.0
    %3237 = vmatpush1.msra.mxu0 0.0
    %3238 = vmatprep.subr.mxu0 0.0
    %3239 = vmatpush1.msra.mxu0 0.0
    %3240 = vmatprep.subr.mxu0 0.0
    %3241 = vmatpush1.msra.mxu0 0.0
    %3242 = vmatprep.subr.mxu0 0.0
    %3243 = vmatpush1.msra.mxu0 0.0
    %3244 = vmatprep.subr.mxu0 0.0
    %3245 = vmatpush1.msra.mxu0 0.0
    %3246 = vmatprep.subr.mxu0 0.0
    %3247 = vmatpush1.msra.mxu0 0.0
    %3248 = vmatprep.subr.mxu0 0.0
    %3249 = vmatpush1.msra.mxu0 0.0
    %3250 = vmatprep.subr.mxu0 0.0
    %3251 = vmatpush1.msra.mxu0 0.0
    %3252 = vmatprep.subr.mxu0 0.0
    %3253 = vmatpush1.msra.mxu0 0.0
    %3254 = vmatprep.subr.mxu0 0.0
    %3255 = vmatpush1.msra.mxu0 0.0
    %3256 = vmatprep.subr.mxu0 0.0
    %3257 = vmatpush1.msra.mxu0 0.0
    %3258 = vmatprep.subr.mxu0 0.0
    %3259 = vmatpush1.msra.mxu0 0.0
    %3260 = vmatprep.subr.mxu0 0.0
    %3261 = vmatpush1.msra.mxu0 0.0
    %3262 = vmatprep.subr.mxu0 0.0
    %3263 = vmatpush1.msra.mxu0 0.0
    %3264 = vmatprep.subr.mxu0 0.0
    %3265 = vmatpush1.msra.mxu0 0.0
    %3266 = vmatprep.subr.mxu0 0.0
    %3267 = vmatpush1.msra.mxu0 0.0
    %3268 = vmatprep.subr.mxu0 0.0
    %3269 = vmatpush1.msra.mxu0 0.0
    %3270 = vmatprep.subr.mxu0 0.0
    %3271 = vmatpush1.msra.mxu0 0.0
    %3272 = vmatprep.subr.mxu0 0.0
    %3273 = vmatpush1.msra.mxu0 0.0
    %3274 = vmatprep.subr.mxu0 0.0
    %3275 = vmatpush1.msra.mxu0 0.0
    %3276 = vmatprep.subr.mxu0 0.0
    %3277 = vmatpush1.msra.mxu0 0.0
    %3278 = vmatprep.subr.mxu0 0.0
    %3279 = vmatpush1.msra.mxu0 0.0
    %3280 = vmatprep.subr.mxu0 0.0
    %3281 = vmatpush1.msra.mxu0 0.0
    %3282 = vmatprep.subr.mxu0 0.0
    %3283 = vmatpush1.msra.mxu0 0.0
    %3284 = vmatprep.subr.mxu0 0.0
    %3285 = vmatpush1.msra.mxu0 0.0
    %3286 = vmatprep.subr.mxu0 0.0
    %3287 = vmatpush1.msra.mxu0 0.0
    %3288 = vmatprep.mubr.f32.mxu0 0.0
    %3289 = vmatmul.mubr.f32.gmra.mrb[0].mxu0 %v3219
    %v3290 = vpop.f32.mrb[0].mxu0
    %v3291 = vadd.f32 %v2615, %v3290
    %v3292 = vpop.f32.mrb[0].mxu0
    %3293 = vmatprep.mubr.f32.mxu0 0.0
    %3294 = vmatmul.mubr.f32.gmra.mrb[0].mxu0 %v3222
    %v3295 = vpop.f32.mrb[0].mxu0
    %v3296 = vadd.f32 %v2615, %v3295
    %v3297 = vpop.f32.mrb[0].mxu0
    %3298 = vdwg.mxu0
    %v3299 = vtanh.pop %v3291
    %v3300 = vtanh.pop %v3296
    %s3301 = scalar_lea.vmem %s12, 112
    %3302 = vst.msk [vmem:[%s3301] sm:$0xff] %vm138, %v3299
    %3303 = vst.msk [vmem:[%s3301 + $0x8] sm:$0x1] %vm140, %v3300
    %v3304 = vld [vmem:[%s12] sm:$0xff]
    %v3305 = vld [vmem:[%s12 + $0x8] sm:$0x1]
    %v3306 = vld [vmem:[%s12 + $0x10] sm:$0xff]
    %v3307 = vld [vmem:[%s12 + $0x18] sm:$0x1]
    %v3308 = vld [vmem:[%s12 + $0x20] sm:$0xff]
    %v3309 = vld [vmem:[%s12 + $0x28] sm:$0x1]
    %v3310 = vld [vmem:[%s12 + $0x30] sm:$0xff]
    %v3311 = vld [vmem:[%s12 + $0x38] sm:$0x1]
    %v3312 = vld [vmem:[%s12 + $0x40] sm:$0xff]
    %v3313 = vld [vmem:[%s12 + $0x48] sm:$0x1]
    %v3314 = vld [vmem:[%s12 + $0x50] sm:$0xff]
    %v3315 = vld [vmem:[%s12 + $0x58] sm:$0x1]
    %v3316 = vld [vmem:[%s12 + $0x60] sm:$0xff]
    %v3317 = vld [vmem:[%s12 + $0x68] sm:$0x1]
    %v3318 = vld [vmem:[%s12 + $0x70] sm:$0xff]
    %v3319 = vld [vmem:[%s12 + $0x78] sm:$0x1]
    %v3320 = vmul.f32 %v3304, %v136
    %v3321 = vmul.f32 %v3305, %v137
    %v3322 = vmul.f32 %v3306, %v136
    %v3323 = vmul.f32 %v3307, %v137
    %v3324 = vmul.f32 %v3308, %v136
    %v3325 = vmul.f32 %v3309, %v137
    %v3326 = vmul.f32 %v3310, %v136
    %v3327 = vmul.f32 %v3311, %v137
    %v3328 = vmul.f32 %v3312, %v136
    %v3329 = vmul.f32 %v3313, %v137
    %v3330 = vmul.f32 %v3314, %v136
    %v3331 = vmul.f32 %v3315, %v137
    %v3332 = vmul.f32 %v3316, %v136
    %v3333 = vmul.f32 %v3317, %v137
    %v3334 = vmul.f32 %v3318, %v136
    %v3335 = vmul.f32 %v3319, %v137
    %v3336 = vsel %vm138, %v3320, 0.0
    %3337 = vadd.xlane.f32.xlu0 %v3336
    %v3338 = vpop.xlane.xlu0 %3337
    %v3339 = vsel %vm140, %v3321, 0.0
    %3340 = vadd.xlane.f32.xlu0 %v3339
    %v3341 = vpop.xlane.xlu0 %3340
    %v3342 = vsel %vm138, %v3322, 0.0
    %3343 = vadd.xlane.f32.xlu0 %v3342
    %v3344 = vpop.xlane.xlu0 %3343
    %v3345 = vsel %vm140, %v3323, 0.0
    %3346 = vadd.xlane.f32.xlu0 %v3345
    %v3347 = vpop.xlane.xlu0 %3346
    %v3348 = vsel %vm138, %v3324, 0.0
    %3349 = vadd.xlane.f32.xlu0 %v3348
    %v3350 = vpop.xlane.xlu0 %3349
    %v3351 = vsel %vm140, %v3325, 0.0
    %3352 = vadd.xlane.f32.xlu0 %v3351
    %v3353 = vpop.xlane.xlu0 %3352
    %v3354 = vsel %vm138, %v3326, 0.0
    %3355 = vadd.xlane.f32.xlu0 %v3354
    %v3356 = vpop.xlane.xlu0 %3355
    %v3357 = vsel %vm140, %v3327, 0.0
    %3358 = vadd.xlane.f32.xlu0 %v3357
    %v3359 = vpop.xlane.xlu0 %3358
    %v3360 = vsel %vm138, %v3328, 0.0
    %3361 = vadd.xlane.f32.xlu0 %v3360
    %v3362 = vpop.xlane.xlu0 %3361
    %v3363 = vsel %vm140, %v3329, 0.0
    %3364 = vadd.xlane.f32.xlu0 %v3363
    %v3365 = vpop.xlane.xlu0 %3364
    %v3366 = vsel %vm138, %v3330, 0.0
    %3367 = vadd.xlane.f32.xlu0 %v3366
    %v3368 = vpop.xlane.xlu0 %3367
    %v3369 = vsel %vm140, %v3331, 0.0
    %3370 = vadd.xlane.f32.xlu0 %v3369
    %v3371 = vpop.xlane.xlu0 %3370
    %v3372 = vsel %vm138, %v3332, 0.0
    %3373 = vadd.xlane.f32.xlu0 %v3372
    %v3374 = vpop.xlane.xlu0 %3373
    %v3375 = vsel %vm140, %v3333, 0.0
    %3376 = vadd.xlane.f32.xlu0 %v3375
    %v3377 = vpop.xlane.xlu0 %3376
    %v3378 = vsel %vm138, %v3334, 0.0
    %3379 = vadd.xlane.f32.xlu0 %v3378
    %v3380 = vpop.xlane.xlu0 %3379
    %v3381 = vsel %vm140, %v3335, 0.0
    %3382 = vadd.xlane.f32.xlu0 %v3381
    %v3383 = vpop.xlane.xlu0 %3382
    %v3384 = vrcp.pop 32.0
    %v3385 = vmul.f32 %v3338, %v3384
    %v3386 = vmul.f32 %v3341, %v3384
    %v3387 = vmul.f32 %v3344, %v3384
    %v3388 = vmul.f32 %v3347, %v3384
    %v3389 = vmul.f32 %v3350, %v3384
    %v3390 = vmul.f32 %v3353, %v3384
    %v3391 = vmul.f32 %v3356, %v3384
    %v3392 = vmul.f32 %v3359, %v3384
    %v3393 = vmul.f32 %v3362, %v3384
    %v3394 = vmul.f32 %v3365, %v3384
    %v3395 = vmul.f32 %v3368, %v3384
    %v3396 = vmul.f32 %v3371, %v3384
    %v3397 = vmul.f32 %v3374, %v3384
    %v3398 = vmul.f32 %v3377, %v3384
    %v3399 = vmul.f32 %v3380, %v3384
    %v3400 = vmul.f32 %v3383, %v3384
    %v3401 = vmul.f32 %v3385, 1.442695
    %v3402 = vpow.pop %v3401
    %v3403 = vmul.f32 %v3386, 1.442695
    %v3404 = vpow.pop %v3403
    %v3405 = vmul.f32 %v3387, 1.442695
    %v3406 = vpow.pop %v3405
    %v3407 = vmul.f32 %v3388, 1.442695
    %v3408 = vpow.pop %v3407
    %v3409 = vmul.f32 %v3389, 1.442695
    %v3410 = vpow.pop %v3409
    %v3411 = vmul.f32 %v3390, 1.442695
    %v3412 = vpow.pop %v3411
    %v3413 = vmul.f32 %v3391, 1.442695
    %v3414 = vpow.pop %v3413
    %v3415 = vmul.f32 %v3392, 1.442695
    %v3416 = vpow.pop %v3415
    %v3417 = vmul.f32 %v3393, 1.442695
    %v3418 = vpow.pop %v3417
    %v3419 = vmul.f32 %v3394, 1.442695
    %v3420 = vpow.pop %v3419
    %v3421 = vmul.f32 %v3395, 1.442695
    %v3422 = vpow.pop %v3421
    %v3423 = vmul.f32 %v3396, 1.442695
    %v3424 = vpow.pop %v3423
    %v3425 = vmul.f32 %v3397, 1.442695
    %v3426 = vpow.pop %v3425
    %v3427 = vmul.f32 %v3398, 1.442695
    %v3428 = vpow.pop %v3427
    %v3429 = vmul.f32 %v3399, 1.442695
    %v3430 = vpow.pop %v3429
    %v3431 = vmul.f32 %v3400, 1.442695
    %v3432 = vpow.pop %v3431
    %v3433 = vld [vmem:[%s1] sm:$0xff]
    %v3434 = vld [vmem:[%s1 + $0x8] sm:$0x1]
    %v3435 = vld [vmem:[%s1 + $0x10] sm:$0xff]
    %v3436 = vld [vmem:[%s1 + $0x18] sm:$0x1]
    %v3437 = vld [vmem:[%s1 + $0x20] sm:$0xff]
    %v3438 = vld [vmem:[%s1 + $0x28] sm:$0x1]
    %v3439 = vld [vmem:[%s1 + $0x30] sm:$0xff]
    %v3440 = vld [vmem:[%s1 + $0x38] sm:$0x1]
    %v3441 = vld [vmem:[%s1 + $0x40] sm:$0xff]
    %v3442 = vld [vmem:[%s1 + $0x48] sm:$0x1]
    %v3443 = vld [vmem:[%s1 + $0x50] sm:$0xff]
    %v3444 = vld [vmem:[%s1 + $0x58] sm:$0x1]
    %v3445 = vld [vmem:[%s1 + $0x60] sm:$0xff]
    %v3446 = vld [vmem:[%s1 + $0x68] sm:$0x1]
    %v3447 = vld [vmem:[%s1 + $0x70] sm:$0xff]
    %v3448 = vld [vmem:[%s1 + $0x78] sm:$0x1]
    %v3449 = vmul.f32 %v3402, %v3433
    %v3450 = vmul.f32 %v3404, %v3434
    %v3451 = vmul.f32 %v3406, %v3435
    %v3452 = vmul.f32 %v3408, %v3436
    %v3453 = vmul.f32 %v3410, %v3437
    %v3454 = vmul.f32 %v3412, %v3438
    %v3455 = vmul.f32 %v3414, %v3439
    %v3456 = vmul.f32 %v3416, %v3440
    %v3457 = vmul.f32 %v3418, %v3441
    %v3458 = vmul.f32 %v3420, %v3442
    %v3459 = vmul.f32 %v3422, %v3443
    %v3460 = vmul.f32 %v3424, %v3444
    %v3461 = vmul.f32 %v3426, %v3445
    %v3462 = vmul.f32 %v3428, %v3446
    %v3463 = vmul.f32 %v3430, %v3447
    %v3464 = vmul.f32 %v3432, %v3448
    %vm3465 = vcmask 7168
    %v3466 = vsel %vm3465, %v3449, 0.0
    %v3467 = vsel %vm3465, %v3451, 0.0
    %v3468 = vadd.f32 %v3466, %v3467
    %v3469 = vsel %vm3465, %v3453, 0.0
    %v3470 = vadd.f32 %v3468, %v3469
    %v3471 = vsel %vm3465, %v3455, 0.0
    %v3472 = vadd.f32 %v3470, %v3471
    %v3473 = vsel %vm3465, %v3457, 0.0
    %v3474 = vadd.f32 %v3472, %v3473
    %v3475 = vsel %vm3465, %v3459, 0.0
    %v3476 = vadd.f32 %v3474, %v3475
    %v3477 = vsel %vm3465, %v3461, 0.0
    %v3478 = vadd.f32 %v3476, %v3477
    %v3479 = vsel %vm3465, %v3463, 0.0
    %v3480 = vadd.f32 %v3478, %v3479
    %vm3481 = vcmask 0
    %v3482 = vsel %vm3481, %v3450, 0.0
    %v3483 = vsel %vm3481, %v3452, 0.0
    %v3484 = vadd.f32 %v3482, %v3483
    %v3485 = vsel %vm3481, %v3454, 0.0
    %v3486 = vadd.f32 %v3484, %v3485
    %v3487 = vsel %vm3481, %v3456, 0.0
    %v3488 = vadd.f32 %v3486, %v3487
    %v3489 = vsel %vm3481, %v3458, 0.0
    %v3490 = vadd.f32 %v3488, %v3489
    %v3491 = vsel %vm3481, %v3460, 0.0
    %v3492 = vadd.f32 %v3490, %v3491
    %v3493 = vsel %vm3481, %v3462, 0.0
    %v3494 = vadd.f32 %v3492, %v3493
    %v3495 = vsel %vm3481, %v3464, 0.0
    %v3496 = vadd.f32 %v3494, %v3495
    %v3497 = vadd.f32 %v3480, 0.0001
    %v3498 = vadd.f32 %v3496, 0.0001
    %v3499 = vrcp.pop %v3497
    %v3500 = vmul.f32 %v3449, %v3499
    %v3501 = vrcp.pop %v3498
    %v3502 = vmul.f32 %v3450, %v3501
    %v3503 = vmul.f32 %v3451, %v3499
    %v3504 = vmul.f32 %v3452, %v3501
    %v3505 = vmul.f32 %v3453, %v3499
    %v3506 = vmul.f32 %v3454, %v3501
    %v3507 = vmul.f32 %v3455, %v3499
    %v3508 = vmul.f32 %v3456, %v3501
    %v3509 = vmul.f32 %v3457, %v3499
    %v3510 = vmul.f32 %v3458, %v3501
    %v3511 = vmul.f32 %v3459, %v3499
    %v3512 = vmul.f32 %v3460, %v3501
    %v3513 = vmul.f32 %v3461, %v3499
    %v3514 = vmul.f32 %v3462, %v3501
    %v3515 = vmul.f32 %v3463, %v3499
    %v3516 = vmul.f32 %v3464, %v3501
    %3517 = vst.msk [vmem:[%s11] sm:$0xff] %vm3465, %v3500
    %3518 = vst.msk [vmem:[%s11 + $0x8] sm:$0x1] %vm3481, %v3502
    %3519 = vst.msk [vmem:[%s11 + $0x10] sm:$0xff] %vm3465, %v3503
    %3520 = vst.msk [vmem:[%s11 + $0x18] sm:$0x1] %vm3481, %v3504
    %3521 = vst.msk [vmem:[%s11 + $0x20] sm:$0xff] %vm3465, %v3505
    %3522 = vst.msk [vmem:[%s11 + $0x28] sm:$0x1] %vm3481, %v3506
    %3523 = vst.msk [vmem:[%s11 + $0x30] sm:$0xff] %vm3465, %v3507
    %3524 = vst.msk [vmem:[%s11 + $0x38] sm:$0x1] %vm3481, %v3508
    %3525 = vst.msk [vmem:[%s11 + $0x40] sm:$0xff] %vm3465, %v3509
    %3526 = vst.msk [vmem:[%s11 + $0x48] sm:$0x1] %vm3481, %v3510
    %3527 = vst.msk [vmem:[%s11 + $0x50] sm:$0xff] %vm3465, %v3511
    %3528 = vst.msk [vmem:[%s11 + $0x58] sm:$0x1] %vm3481, %v3512
    %3529 = vst.msk [vmem:[%s11 + $0x60] sm:$0xff] %vm3465, %v3513
    %3530 = vst.msk [vmem:[%s11 + $0x68] sm:$0x1] %vm3481, %v3514
    %3531 = vst.msk [vmem:[%s11 + $0x70] sm:$0xff] %vm3465, %v3515
    %3532 = vst.msk [vmem:[%s11 + $0x78] sm:$0x1] %vm3481, %v3516
    %3534 = vset.pattern.permute.xlu0 0
    %3535 = vperm.xlu0 %3534, %v3500
    %v3536 = vpop.permute.xlu0 %3535
    %3539 = vset.pattern.permute.xlu0 0
    %3540 = vperm.xlu0 %3539, %v3502
    %v3541 = vpop.permute.xlu0 %3540
    %3544 = vset.pattern.permute.xlu0 0
    %3545 = vperm.xlu0 %3544, %v3503
    %v3546 = vpop.permute.xlu0 %3545
    %3549 = vset.pattern.permute.xlu0 0
    %3550 = vperm.xlu0 %3549, %v3504
    %v3551 = vpop.permute.xlu0 %3550
    %3554 = vset.pattern.permute.xlu0 0
    %3555 = vperm.xlu0 %3554, %v3505
    %v3556 = vpop.permute.xlu0 %3555
    %3559 = vset.pattern.permute.xlu0 0
    %3560 = vperm.xlu0 %3559, %v3506
    %v3561 = vpop.permute.xlu0 %3560
    %3564 = vset.pattern.permute.xlu0 0
    %3565 = vperm.xlu0 %3564, %v3507
    %v3566 = vpop.permute.xlu0 %3565
    %3569 = vset.pattern.permute.xlu0 0
    %3570 = vperm.xlu0 %3569, %v3508
    %v3571 = vpop.permute.xlu0 %3570
    %3574 = vset.pattern.permute.xlu0 0
    %3575 = vperm.xlu0 %3574, %v3509
    %v3576 = vpop.permute.xlu0 %3575
    %3579 = vset.pattern.permute.xlu0 0
    %3580 = vperm.xlu0 %3579, %v3510
    %v3581 = vpop.permute.xlu0 %3580
    %3584 = vset.pattern.permute.xlu0 0
    %3585 = vperm.xlu0 %3584, %v3511
    %v3586 = vpop.permute.xlu0 %3585
    %3589 = vset.pattern.permute.xlu0 0
    %3590 = vperm.xlu0 %3589, %v3512
    %v3591 = vpop.permute.xlu0 %3590
    %3594 = vset.pattern.permute.xlu0 0
    %3595 = vperm.xlu0 %3594, %v3513
    %v3596 = vpop.permute.xlu0 %3595
    %3599 = vset.pattern.permute.xlu0 0
    %3600 = vperm.xlu0 %3599, %v3514
    %v3601 = vpop.permute.xlu0 %3600
    %3604 = vset.pattern.permute.xlu0 0
    %3605 = vperm.xlu0 %3604, %v3515
    %v3606 = vpop.permute.xlu0 %3605
    %3609 = vset.pattern.permute.xlu0 0
    %3610 = vperm.xlu0 %3609, %v3516
    %v3611 = vpop.permute.xlu0 %3610
    %v3613 = vmul.f32 %v2590, %v3536
    %v3614 = vmul.f32 %v2591, %v3541
    %v3615 = vmul.f32 %v2592, %v3546
    %v3616 = vmul.f32 %v2593, %v3551
    %v3617 = vmul.f32 %v2594, %v3556
    %v3618 = vmul.f32 %v2595, %v3561
    %v3619 = vmul.f32 %v2596, %v3566
    %v3620 = vmul.f32 %v2597, %v3571
    %v3621 = vmul.f32 %v2598, %v3576
    %v3622 = vmul.f32 %v2599, %v3581
    %v3623 = vmul.f32 %v2600, %v3586
    %v3624 = vmul.f32 %v2601, %v3591
    %v3625 = vmul.f32 %v2602, %v3596
    %v3626 = vmul.f32 %v2603, %v3601
    %v3627 = vmul.f32 %v2604, %v3606
    %v3628 = vmul.f32 %v2605, %v3611
    %v3629 = vsel %vm138, %v3613, 0.0
    %v3630 = vsel %vm138, %v3615, 0.0
    %v3631 = vadd.f32 %v3629, %v3630
    %v3632 = vsel %vm138, %v3617, 0.0
    %v3633 = vadd.f32 %v3631, %v3632
    %v3634 = vsel %vm138, %v3619, 0.0
    %v3635 = vadd.f32 %v3633, %v3634
    %v3636 = vsel %vm138, %v3621, 0.0
    %v3637 = vadd.f32 %v3635, %v3636
    %v3638 = vsel %vm138, %v3623, 0.0
    %v3639 = vadd.f32 %v3637, %v3638
    %v3640 = vsel %vm138, %v3625, 0.0
    %v3641 = vadd.f32 %v3639, %v3640
    %v3642 = vsel %vm138, %v3627, 0.0
    %v3643 = vadd.f32 %v3641, %v3642
    %v3644 = vsel %vm140, %v3614, 0.0
    %v3645 = vsel %vm140, %v3616, 0.0
    %v3646 = vadd.f32 %v3644, %v3645
    %v3647 = vsel %vm140, %v3618, 0.0
    %v3648 = vadd.f32 %v3646, %v3647
    %v3649 = vsel %vm140, %v3620, 0.0
    %v3650 = vadd.f32 %v3648, %v3649
    %v3651 = vsel %vm140, %v3622, 0.0
    %v3652 = vadd.f32 %v3650, %v3651
    %v3653 = vsel %vm140, %v3624, 0.0
    %v3654 = vadd.f32 %v3652, %v3653
    %v3655 = vsel %vm140, %v3626, 0.0
    %v3656 = vadd.f32 %v3654, %v3655
    %v3657 = vsel %vm140, %v3628, 0.0
    %v3658 = vadd.f32 %v3656, %v3657
    %3659 = vst.msk [vmem:[%s10] sm:$0xff] %vm138, %v3643
    %3660 = vst.msk [vmem:[%s10 + $0x8] sm:$0x1] %vm140, %v3658
    // Predicated region
    $region42: #{hnar_forward.2} parent=1 // pred_check
      _
    $region43: #{hnar_forward.2} parent=1 // pred_check_branch
      %3662 = sbr.rel (0) target = $region45
    $region44: #{hnar_forward.2} parent=1 // pred_region
      _
    $region45: #{hnar_forward.2} parent=1 // pred_fallthru
      _
    // Predicated region
    $region46: #{hnar_forward.2} parent=1 // pred_check
      _
    $region47: #{hnar_forward.2} parent=1 // pred_check_branch
      %3664 = sbr.rel (0) target = $region49
    $region48: #{hnar_forward.2} parent=1 // pred_region
      _
    $region49: #{hnar_forward.2} parent=1 // pred_fallthru
      _
    // Predicated region
    $region50: #{hnar_forward.2} parent=1 // pred_check
      _
    $region51: #{hnar_forward.2} parent=1 // pred_check_branch
      %3666 = sbr.rel (0) target = $region53
    $region52: #{hnar_forward.2} parent=1 // pred_region
      _
    $region53: #{hnar_forward.2} parent=1 // pred_fallthru
      _
    // Predicated region
    $region54: #{hnar_forward.2} parent=1 // pred_check
      _
    $region55: #{hnar_forward.2} parent=1 // pred_check_branch
      %3668 = sbr.rel (0) target = $region57
    $region56: #{hnar_forward.2} parent=1 // pred_region
      %s3670 = ssub.s32 256, 256
      %3671 = vsyncadd [#allocation7], %s3670
      %s3672 = sshll.u32 [#allocation6], 4
      %s3673 = int_to_ptr.vmem [resolvable:$true] %s3672
      %3678 = dma.vmem_to_hbm [thread:$0]  %s3673, 256, %s13, [#allocation7], 128, 128, 8
    $region57: #{hnar_forward.2} parent=1 // pred_fallthru
      _
    // Predicated region
    $region58: #{hnar_forward.2} parent=1 // pred_check
      _
    $region59: #{hnar_forward.2} parent=1 // pred_check_branch
      %3680 = sbr.rel (0) target = $region61
    $region60: #{hnar_forward.2} parent=1 // pred_region
      _
    $region61: #{hnar_forward.2} parent=1 // pred_fallthru
      _
    // Predicated region
    $region62: #{hnar_forward.2} parent=1 // pred_check
      _
    $region63: #{hnar_forward.2} parent=1 // pred_check_branch
      %3682 = sbr.rel (0) target = $region65
    $region64: #{hnar_forward.2} parent=1 // pred_region
      _
    $region65: #{hnar_forward.2} parent=1 // pred_fallthru
      _
    // Predicated region
    $region66: #{hnar_forward.2} parent=1 // pred_check
      _
    $region67: #{hnar_forward.2} parent=1 // pred_check_branch
      %3684 = sbr.rel (0) target = $region69
    $region68: #{hnar_forward.2} parent=1 // pred_region
      _
    $region69: #{hnar_forward.2} parent=1 // pred_fallthru
      _
    // Predicated region
    $region70: #{hnar_forward.2} parent=1 // pred_check
      _
    $region71: #{hnar_forward.2} parent=1 // pred_check_branch
      %3686 = sbr.rel (0) target = $region73
    $region72: #{hnar_forward.2} parent=1 // pred_region
      %3687 = dma.done [#allocation7], 256
    $region73: #{hnar_forward.2} parent=1 // pred_fallthru
      _
    %3688 = vsyncpa [#allocation7], 1

</llo_original>
